<compile_context>
chip_gen: v6e
topology: v6e:2x2x1
jax: 0.10.0
libtpu: 0.0.40
codegen_flags: <defaults>
</compile_context>

<pallas_src>
import jax
import jax.numpy as jnp
from jax import lax
from jax.experimental import pallas as pl
from jax.experimental.pallas import tpu as pltpu
import numpy as np


# ----------------------------------------------------------------------------
# Fused Pallas kernel: one image per grid step, everything stays in VMEM.
#
# Layouts (sublanes x lanes):
#   conv1 out  acc1 : (384, 24)  row block 16*h      + co  = conv1[co, h, :]
#   pooled1    y1   : (368, 12)  row block 32*r      + ci  = pool1[ci, r, :]
#   conv2 out  acc2 : (320, 10)  row block 32*h      + co  = conv2[co, h, :]
#   pooled2    y2   : (288,  5)  row block 64*r      + c   = pool2[c,  r, :]
# (the "gaps" in y1 / y2 hold pool garbage; the stacked weights have zero
#  columns there, so no de-interleave is needed.)
# ----------------------------------------------------------------------------
def _convnet_kernel(x_ref, w1_ref, b1_ref, w2_ref, b2_ref,
                    wf1_ref, bf1_ref, wf2_ref, bf2_ref, o_ref):
    f32 = jnp.float32

    def dotf(a, b):
        return jnp.dot(a, b, preferred_element_type=f32)

    # Exact 0/1 selection matrices (2n, n) picking even / odd lane positions
    # (stride-2 lane selection without strided slices).
    def lane_sel(n2, n, parity):
        r = lax.broadcasted_iota(jnp.int32, (n2, n), 0)
        c = lax.broadcasted_iota(jnp.int32, (n2, n), 1)
        return (r == 2 * c + parity).astype(f32)

    x = x_ref[0]                                              # (28, 28)

    # ---- conv1: 5x5, 1 -> 16.  All 24 output rows at once, one matmul per kw
    acc1 = b1_ref[...] + dotf(w1_ref[0], x[:, 0:24])          # (384, 24)
    for kw in range(1, 5):
        acc1 = acc1 + dotf(w1_ref[kw], x[:, kw:kw + 24])

    # ---- maxpool 2x2/2 then ReLU ------------------------------------------
    wmax = jnp.maximum(dotf(acc1, lane_sel(24, 12, 0)),
                       dotf(acc1, lane_sel(24, 12, 1)))       # (384, 12)
    # H-pairs: conv rows 2r / 2r+1 live at sublane blocks 32r / 32r+16.
    y1 = jnp.maximum(jnp.maximum(wmax[0:368], wmax[16:384]), 0.0)   # (368, 12)

    # ---- conv2: 3x3, 16 -> 32.  All 10 output rows at once, one matmul per kw
    acc2 = b2_ref[...] + dotf(w2_ref[0], y1[:, 0:10])         # (320, 10)
    for kw in range(1, 3):
        acc2 = acc2 + dotf(w2_ref[kw], y1[:, kw:kw + 10])

    # (Dropout2d: identity in eval mode.)
    # ---- maxpool 2x2/2 then ReLU ------------------------------------------
    pmax = jnp.maximum(dotf(acc2, lane_sel(10, 5, 0)),
                       dotf(acc2, lane_sel(10, 5, 1)))        # (320, 5)
    y2 = jnp.maximum(jnp.maximum(pmax[0:288], pmax[32:320]), 0.0)   # (288, 5)

    # ---- fc1 (+ReLU): NCHW flatten + interleaved layout absorbed in weights
    h1 = bf1_ref[...] + dotf(wf1_ref[0], y2[:, 0:1])          # (64, 1)
    for w in range(1, 5):
        h1 = h1 + dotf(wf1_ref[w], y2[:, w:w + 1])
    h1 = jnp.maximum(h1, 0.0)

    # (Dropout: identity in eval mode.)
    # ---- fc2 + log_softmax over the 16 classes (sublane axis) ---------------
    logits = dotf(wf2_ref[...], h1) + bf2_ref[...]            # (16, 1)
    mx = jnp.max(logits, axis=0, keepdims=True)
    z = logits - mx
    lse = jnp.log(jnp.sum(jnp.exp(z), axis=0, keepdims=True))
    o_ref[0] = z - lse


# ----------------------------------------------------------------------------
# Trace-time weight repacking into row-stacked block-sparse matrices.
# ----------------------------------------------------------------------------
def _pack_params(p):
    f32 = jnp.float32

    # conv1 stacked: W1s[kw, 16h+co, h+kh] = conv1_w[co, 0, kh, kw]
    w1 = p["conv1_w"].astype(f32)[:, 0, :, :]                 # (16, 5, 5)
    H, CO, KH, KW = np.meshgrid(np.arange(24), np.arange(16),
                                np.arange(5), np.arange(5), indexing="ij")
    w1s = jnp.zeros((5, 384, 28), f32).at[
        KW.ravel(), (16 * H + CO).ravel(), (H + KH).ravel()
    ].set(w1[CO.ravel(), KH.ravel(), KW.ravel()])
    b1s = jnp.tile(p["conv1_b"].astype(f32), 24).reshape(384, 1)

    # conv2 stacked: W2s[kw, 32h+co, 32(h+kh)+ci] = conv2_w[co, ci, kh, kw]
    w2 = p["conv2_w"].astype(f32)                             # (32, 16, 3, 3)
    H, CO, CI, KH, KW = np.meshgrid(np.arange(10), np.arange(32), np.arange(16),
                                    np.arange(3), np.arange(3), indexing="ij")
    w2s = jnp.zeros((3, 320, 368), f32).at[
        KW.ravel(), (32 * H + CO).ravel(), (32 * (H + KH) + CI).ravel()
    ].set(w2[CO.ravel(), CI.ravel(), KH.ravel(), KW.ravel()])
    b2s = jnp.tile(p["conv2_b"].astype(f32), 10).reshape(320, 1)

    # fc1 stacked: Wf1s[w, j, 64r+c] = fc1_w[j, c*25 + r*5 + w]  (torch NCHW flatten)
    fw = p["fc1_w"].astype(f32)                               # (64, 800)
    W_, J, R, C = np.meshgrid(np.arange(5), np.arange(64), np.arange(5),
                              np.arange(32), indexing="ij")
    wf1s = jnp.zeros((5, 64, 288), f32).at[
        W_.ravel(), J.ravel(), (64 * R + C).ravel()
    ].set(fw[J.ravel(), (C * 25 + R * 5 + W_).ravel()])
    bf1 = p["fc1_b"].astype(f32).reshape(64, 1)
    wf2 = p["fc2_w"].astype(f32)                              # (16, 64)
    bf2 = p["fc2_b"].astype(f32).reshape(16, 1)
    return w1s, b1s, w2s, b2s, wf1s, bf1, wf2, bf2


# ----------------------------------------------------------------------------
# Wrapper: single batch-parallel pallas_call.
# ----------------------------------------------------------------------------
@jax.jit
def convnet_forward(x_nchw, p):
    N = x_nchw.shape[0]
    x2d = x_nchw[:, 0, :, :].astype(jnp.float32)              # (N, 28, 28), Cin == 1
    w1s, b1s, w2s, b2s, wf1s, bf1, wf2, bf2 = _pack_params(p)

    def full(shape):
        return pl.BlockSpec(shape, lambda i, _n=len(shape): (0,) * _n)

    out = pl.pallas_call(
        _convnet_kernel,
        out_shape=jax.ShapeDtypeStruct((N, 16, 1), jnp.float32),
        grid=(N,),
        in_specs=[
            pl.BlockSpec((1, 28, 28), lambda i: (i, 0, 0)),
            full((5, 384, 28)), full((384, 1)),
            full((3, 320, 368)), full((320, 1)),
            full((5, 64, 288)), full((64, 1)),
            full((16, 64)), full((16, 1)),
        ],
        out_specs=pl.BlockSpec((1, 16, 1), lambda i: (i, 0, 0)),
        compiler_params=pltpu.CompilerParams(
            dimension_semantics=("parallel",),
            vmem_limit_bytes=32 * 1024 * 1024),
    )(x2d, w1s, b1s, w2s, b2s, wf1s, bf1, wf2, bf2)
    return out[:, :, 0]


# ----------------------------------------------------------------------------
# Pure-JAX reference (mirrors PyTorch NCHW semantics) for a correctness check
# ----------------------------------------------------------------------------
def convnet_reference(x, p):
    dn = ("NCHW", "OIHW", "NCHW")
    y = lax.conv_general_dilated(x, p["conv1_w"], (1, 1), "VALID",
                                 dimension_numbers=dn) + p["conv1_b"][None, :, None, None]
    y = lax.reduce_window(y, -jnp.inf, lax.max, (1, 1, 2, 2), (1, 1, 2, 2), "VALID")
    y = jnp.maximum(y, 0.0)
    y = lax.conv_general_dilated(y, p["conv2_w"], (1, 1), "VALID",
                                 dimension_numbers=dn) + p["conv2_b"][None, :, None, None]
    y = lax.reduce_window(y, -jnp.inf, lax.max, (1, 1, 2, 2), (1, 1, 2, 2), "VALID")
    y = jnp.maximum(y, 0.0)
    y = y.reshape(y.shape[0], -1)
    y = jnp.maximum(y @ p["fc1_w"].T + p["fc1_b"], 0.0)
    y = y @ p["fc2_w"].T + p["fc2_b"]
    return jax.nn.log_softmax(y, axis=1)


# ----------------------------------------------------------------------------
if __name__ == "__main__":
    key = jax.random.PRNGKey(0)
    ks = jax.random.split(key, 9)

    # deterministic synthetic parameters (PyTorch shape conventions)
    params = {
        "conv1_w": 0.10 * jax.random.normal(ks[1], (16, 1, 5, 5), jnp.float32),
        "conv1_b": 0.10 * jax.random.normal(ks[2], (16,), jnp.float32),
        "conv2_w": 0.05 * jax.random.normal(ks[3], (32, 16, 3, 3), jnp.float32),
        "conv2_b": 0.05 * jax.random.normal(ks[4], (32,), jnp.float32),
        "fc1_w": 0.03 * jax.random.normal(ks[5], (64, 800), jnp.float32),
        "fc1_b": 0.03 * jax.random.normal(ks[6], (64,), jnp.float32),
        "fc2_w": 0.10 * jax.random.normal(ks[7], (16, 64), jnp.float32),
        "fc2_b": 0.10 * jax.random.normal(ks[8], (16,), jnp.float32),
    }

    # input: NCHW; 28x28 is required by the module's fixed 5*5*32 flatten
    x = jax.random.normal(ks[0], (2, 1, 28, 28), jnp.float32)

    out = jax.block_until_ready(convnet_forward(x, params))

    # sanity checks: shape, valid log-probabilities, and match vs pure-JAX ref
    assert out.shape == (2, 16)
    np.testing.assert_allclose(np.sum(np.exp(np.asarray(out)), axis=1),
                               np.ones(2), rtol=1e-3, atol=1e-3)
    ref = jax.block_until_ready(convnet_reference(x, params))
    np.testing.assert_allclose(np.asarray(out), np.asarray(ref), rtol=2e-2, atol=2e-2)

    print("KERNEL_OK")
</pallas_src>

<mosaic_0001>
module attributes {stable_mosaic.version = 11 : i64} {
  func.func @_convnet_kernel(%arg0: i32, %arg1: memref<1x28x28xf32, #tpu.memory_space<vmem>>, %arg2: memref<5x384x28xf32, #tpu.memory_space<vmem>>, %arg3: memref<384x1xf32, #tpu.memory_space<vmem>>, %arg4: memref<3x320x368xf32, #tpu.memory_space<vmem>>, %arg5: memref<320x1xf32, #tpu.memory_space<vmem>>, %arg6: memref<5x64x288xf32, #tpu.memory_space<vmem>>, %arg7: memref<64x1xf32, #tpu.memory_space<vmem>>, %arg8: memref<16x64xf32, #tpu.memory_space<vmem>>, %arg9: memref<16x1xf32, #tpu.memory_space<vmem>>, %arg10: memref<1x16x1xf32, #tpu.memory_space<vmem>>) attributes {dimension_semantics = [#tpu.dimension_semantics<parallel>], iteration_bounds = array<i64: 2>, scalar_prefetch = 0 : i64, scratch_operands = 0 : i64, tpu.core_type = #tpu.core_type<tc>, window_params = [{transform_indices = @transform_0, window_bounds = array<i64: 1, 28, 28>}, {pipeline_mode = #tpu.pipeline_mode<synchronous>, transform_indices = @transform_1, window_bounds = array<i64: 5, 384, 28>}, {pipeline_mode = #tpu.pipeline_mode<synchronous>, transform_indices = @transform_2, window_bounds = array<i64: 384, 1>}, {pipeline_mode = #tpu.pipeline_mode<synchronous>, transform_indices = @transform_3, window_bounds = array<i64: 3, 320, 368>}, {pipeline_mode = #tpu.pipeline_mode<synchronous>, transform_indices = @transform_4, window_bounds = array<i64: 320, 1>}, {pipeline_mode = #tpu.pipeline_mode<synchronous>, transform_indices = @transform_5, window_bounds = array<i64: 5, 64, 288>}, {pipeline_mode = #tpu.pipeline_mode<synchronous>, transform_indices = @transform_6, window_bounds = array<i64: 64, 1>}, {pipeline_mode = #tpu.pipeline_mode<synchronous>, transform_indices = @transform_7, window_bounds = array<i64: 16, 64>}, {pipeline_mode = #tpu.pipeline_mode<synchronous>, transform_indices = @transform_8, window_bounds = array<i64: 16, 1>}, {transform_indices = @transform_9, window_bounds = array<i64: 1, 16, 1>}]} {
    %c0 = arith.constant 0 : index
    %c0_0 = arith.constant 0 : index
    %c0_1 = arith.constant 0 : index
    %0 = vector.load %arg1[%c0, %c0_0, %c0_1] : memref<1x28x28xf32, #tpu.memory_space<vmem>>, vector<1x28x28xf32>
    %1 = vector.shape_cast %0 : vector<1x28x28xf32> to vector<28x28xf32>
    %c0_2 = arith.constant 0 : index
    %c0_3 = arith.constant 0 : index
    %2 = vector.load %arg3[%c0_2, %c0_3] : memref<384x1xf32, #tpu.memory_space<vmem>>, vector<384x1xf32>
    %c0_4 = arith.constant 0 : index
    %c0_5 = arith.constant 0 : index
    %c0_6 = arith.constant 0 : index
    %3 = vector.load %arg2[%c0_4, %c0_5, %c0_6] : memref<5x384x28xf32, #tpu.memory_space<vmem>>, vector<1x384x28xf32>
    %4 = vector.shape_cast %3 : vector<1x384x28xf32> to vector<384x28xf32>
    %5 = vector.extract_strided_slice %1 {offsets = [0, 0], sizes = [28, 24], strides = [1, 1]} : vector<28x28xf32> to vector<28x24xf32>
    %cst = arith.constant dense<0.000000e+00> : vector<384x24xf32>
    %6 = tpu.matmul %4, %5, %cst {dimension_numbers = #tpu.dot_dimension_numbers<[1], [0], [0], [1], [0, 0, 1, 1], [], []>} : vector<384x28xf32>, vector<28x24xf32>, vector<384x24xf32> -> vector<384x24xf32>
    %7 = vector.broadcast %2 : vector<384x1xf32> to vector<384x24xf32>
    %8 = arith.addf %7, %6 : vector<384x24xf32>
    %c1 = arith.constant 1 : index
    %c0_7 = arith.constant 0 : index
    %c0_8 = arith.constant 0 : index
    %9 = vector.load %arg2[%c1, %c0_7, %c0_8] : memref<5x384x28xf32, #tpu.memory_space<vmem>>, vector<1x384x28xf32>
    %10 = vector.shape_cast %9 : vector<1x384x28xf32> to vector<384x28xf32>
    %11 = vector.extract_strided_slice %1 {offsets = [0, 1], sizes = [28, 24], strides = [1, 1]} : vector<28x28xf32> to vector<28x24xf32>
    %cst_9 = arith.constant dense<0.000000e+00> : vector<384x24xf32>
    %12 = tpu.matmul %10, %11, %cst_9 {dimension_numbers = #tpu.dot_dimension_numbers<[1], [0], [0], [1], [0, 0, 1, 1], [], []>} : vector<384x28xf32>, vector<28x24xf32>, vector<384x24xf32> -> vector<384x24xf32>
    %13 = arith.addf %8, %12 : vector<384x24xf32>
    %c2 = arith.constant 2 : index
    %c0_10 = arith.constant 0 : index
    %c0_11 = arith.constant 0 : index
    %14 = vector.load %arg2[%c2, %c0_10, %c0_11] : memref<5x384x28xf32, #tpu.memory_space<vmem>>, vector<1x384x28xf32>
    %15 = vector.shape_cast %14 : vector<1x384x28xf32> to vector<384x28xf32>
    %16 = vector.extract_strided_slice %1 {offsets = [0, 2], sizes = [28, 24], strides = [1, 1]} : vector<28x28xf32> to vector<28x24xf32>
    %cst_12 = arith.constant dense<0.000000e+00> : vector<384x24xf32>
    %17 = tpu.matmul %15, %16, %cst_12 {dimension_numbers = #tpu.dot_dimension_numbers<[1], [0], [0], [1], [0, 0, 1, 1], [], []>} : vector<384x28xf32>, vector<28x24xf32>, vector<384x24xf32> -> vector<384x24xf32>
    %18 = arith.addf %13, %17 : vector<384x24xf32>
    %c3 = arith.constant 3 : index
    %c0_13 = arith.constant 0 : index
    %c0_14 = arith.constant 0 : index
    %19 = vector.load %arg2[%c3, %c0_13, %c0_14] : memref<5x384x28xf32, #tpu.memory_space<vmem>>, vector<1x384x28xf32>
    %20 = vector.shape_cast %19 : vector<1x384x28xf32> to vector<384x28xf32>
    %21 = vector.extract_strided_slice %1 {offsets = [0, 3], sizes = [28, 24], strides = [1, 1]} : vector<28x28xf32> to vector<28x24xf32>
    %cst_15 = arith.constant dense<0.000000e+00> : vector<384x24xf32>
    %22 = tpu.matmul %20, %21, %cst_15 {dimension_numbers = #tpu.dot_dimension_numbers<[1], [0], [0], [1], [0, 0, 1, 1], [], []>} : vector<384x28xf32>, vector<28x24xf32>, vector<384x24xf32> -> vector<384x24xf32>
    %23 = arith.addf %18, %22 : vector<384x24xf32>
    %c4 = arith.constant 4 : index
    %c0_16 = arith.constant 0 : index
    %c0_17 = arith.constant 0 : index
    %24 = vector.load %arg2[%c4, %c0_16, %c0_17] : memref<5x384x28xf32, #tpu.memory_space<vmem>>, vector<1x384x28xf32>
    %25 = vector.shape_cast %24 : vector<1x384x28xf32> to vector<384x28xf32>
    %26 = vector.extract_strided_slice %1 {offsets = [0, 4], sizes = [28, 24], strides = [1, 1]} : vector<28x28xf32> to vector<28x24xf32>
    %cst_18 = arith.constant dense<0.000000e+00> : vector<384x24xf32>
    %27 = tpu.matmul %25, %26, %cst_18 {dimension_numbers = #tpu.dot_dimension_numbers<[1], [0], [0], [1], [0, 0, 1, 1], [], []>} : vector<384x28xf32>, vector<28x24xf32>, vector<384x24xf32> -> vector<384x24xf32>
    %28 = arith.addf %23, %27 : vector<384x24xf32>
    %29 = tpu.iota {dimensions = array<i32: 0>} : vector<24x12xi32>
    %30 = tpu.iota {dimensions = array<i32: 1>} : vector<24x12xi32>
    %c2_i32 = arith.constant 2 : i32
    %31 = vector.broadcast %c2_i32 : i32 to vector<24x12xi32>
    %32 = arith.muli %31, %30 : vector<24x12xi32>
    %c0_i32 = arith.constant 0 : i32
    %33 = vector.broadcast %c0_i32 : i32 to vector<24x12xi32>
    %34 = arith.addi %32, %33 : vector<24x12xi32>
    %35 = arith.cmpi eq, %29, %34 : vector<24x12xi32>
    %36 = arith.extui %35 : vector<24x12xi1> to vector<24x12xi32>
    %37 = arith.sitofp %36 : vector<24x12xi32> to vector<24x12xf32>
    %cst_19 = arith.constant dense<0.000000e+00> : vector<384x12xf32>
    %38 = tpu.matmul %28, %37, %cst_19 {dimension_numbers = #tpu.dot_dimension_numbers<[1], [0], [0], [1], [0, 0, 1, 1], [], []>} : vector<384x24xf32>, vector<24x12xf32>, vector<384x12xf32> -> vector<384x12xf32>
    %39 = tpu.iota {dimensions = array<i32: 0>} : vector<24x12xi32>
    %40 = tpu.iota {dimensions = array<i32: 1>} : vector<24x12xi32>
    %c2_i32_20 = arith.constant 2 : i32
    %41 = vector.broadcast %c2_i32_20 : i32 to vector<24x12xi32>
    %42 = arith.muli %41, %40 : vector<24x12xi32>
    %c1_i32 = arith.constant 1 : i32
    %43 = vector.broadcast %c1_i32 : i32 to vector<24x12xi32>
    %44 = arith.addi %42, %43 : vector<24x12xi32>
    %45 = arith.cmpi eq, %39, %44 : vector<24x12xi32>
    %46 = arith.extui %45 : vector<24x12xi1> to vector<24x12xi32>
    %47 = arith.sitofp %46 : vector<24x12xi32> to vector<24x12xf32>
    %cst_21 = arith.constant dense<0.000000e+00> : vector<384x12xf32>
    %48 = tpu.matmul %28, %47, %cst_21 {dimension_numbers = #tpu.dot_dimension_numbers<[1], [0], [0], [1], [0, 0, 1, 1], [], []>} : vector<384x24xf32>, vector<24x12xf32>, vector<384x12xf32> -> vector<384x12xf32>
    %49 = arith.maximumf %38, %48 : vector<384x12xf32>
    %50 = vector.extract_strided_slice %49 {offsets = [0, 0], sizes = [368, 12], strides = [1, 1]} : vector<384x12xf32> to vector<368x12xf32>
    %51 = vector.extract_strided_slice %49 {offsets = [16, 0], sizes = [368, 12], strides = [1, 1]} : vector<384x12xf32> to vector<368x12xf32>
    %52 = arith.maximumf %50, %51 : vector<368x12xf32>
    %cst_22 = arith.constant 0.000000e+00 : f32
    %53 = vector.broadcast %cst_22 : f32 to vector<368x12xf32>
    %54 = arith.maximumf %52, %53 : vector<368x12xf32>
    %c0_23 = arith.constant 0 : index
    %c0_24 = arith.constant 0 : index
    %55 = vector.load %arg5[%c0_23, %c0_24] : memref<320x1xf32, #tpu.memory_space<vmem>>, vector<320x1xf32>
    %c0_25 = arith.constant 0 : index
    %c0_26 = arith.constant 0 : index
    %c0_27 = arith.constant 0 : index
    %56 = vector.load %arg4[%c0_25, %c0_26, %c0_27] : memref<3x320x368xf32, #tpu.memory_space<vmem>>, vector<1x320x368xf32>
    %57 = vector.shape_cast %56 : vector<1x320x368xf32> to vector<320x368xf32>
    %58 = vector.extract_strided_slice %54 {offsets = [0, 0], sizes = [368, 10], strides = [1, 1]} : vector<368x12xf32> to vector<368x10xf32>
    %cst_28 = arith.constant dense<0.000000e+00> : vector<320x10xf32>
    %59 = tpu.matmul %57, %58, %cst_28 {dimension_numbers = #tpu.dot_dimension_numbers<[1], [0], [0], [1], [0, 0, 1, 1], [], []>} : vector<320x368xf32>, vector<368x10xf32>, vector<320x10xf32> -> vector<320x10xf32>
    %60 = vector.broadcast %55 : vector<320x1xf32> to vector<320x10xf32>
    %61 = arith.addf %60, %59 : vector<320x10xf32>
    %c1_29 = arith.constant 1 : index
    %c0_30 = arith.constant 0 : index
    %c0_31 = arith.constant 0 : index
    %62 = vector.load %arg4[%c1_29, %c0_30, %c0_31] : memref<3x320x368xf32, #tpu.memory_space<vmem>>, vector<1x320x368xf32>
    %63 = vector.shape_cast %62 : vector<1x320x368xf32> to vector<320x368xf32>
    %64 = vector.extract_strided_slice %54 {offsets = [0, 1], sizes = [368, 10], strides = [1, 1]} : vector<368x12xf32> to vector<368x10xf32>
    %cst_32 = arith.constant dense<0.000000e+00> : vector<320x10xf32>
    %65 = tpu.matmul %63, %64, %cst_32 {dimension_numbers = #tpu.dot_dimension_numbers<[1], [0], [0], [1], [0, 0, 1, 1], [], []>} : vector<320x368xf32>, vector<368x10xf32>, vector<320x10xf32> -> vector<320x10xf32>
    %66 = arith.addf %61, %65 : vector<320x10xf32>
    %c2_33 = arith.constant 2 : index
    %c0_34 = arith.constant 0 : index
    %c0_35 = arith.constant 0 : index
    %67 = vector.load %arg4[%c2_33, %c0_34, %c0_35] : memref<3x320x368xf32, #tpu.memory_space<vmem>>, vector<1x320x368xf32>
    %68 = vector.shape_cast %67 : vector<1x320x368xf32> to vector<320x368xf32>
    %69 = vector.extract_strided_slice %54 {offsets = [0, 2], sizes = [368, 10], strides = [1, 1]} : vector<368x12xf32> to vector<368x10xf32>
    %cst_36 = arith.constant dense<0.000000e+00> : vector<320x10xf32>
    %70 = tpu.matmul %68, %69, %cst_36 {dimension_numbers = #tpu.dot_dimension_numbers<[1], [0], [0], [1], [0, 0, 1, 1], [], []>} : vector<320x368xf32>, vector<368x10xf32>, vector<320x10xf32> -> vector<320x10xf32>
    %71 = arith.addf %66, %70 : vector<320x10xf32>
    %72 = tpu.iota {dimensions = array<i32: 0>} : vector<10x5xi32>
    %73 = tpu.iota {dimensions = array<i32: 1>} : vector<10x5xi32>
    %c2_i32_37 = arith.constant 2 : i32
    %74 = vector.broadcast %c2_i32_37 : i32 to vector<10x5xi32>
    %75 = arith.muli %74, %73 : vector<10x5xi32>
    %c0_i32_38 = arith.constant 0 : i32
    %76 = vector.broadcast %c0_i32_38 : i32 to vector<10x5xi32>
    %77 = arith.addi %75, %76 : vector<10x5xi32>
    %78 = arith.cmpi eq, %72, %77 : vector<10x5xi32>
    %79 = arith.extui %78 : vector<10x5xi1> to vector<10x5xi32>
    %80 = arith.sitofp %79 : vector<10x5xi32> to vector<10x5xf32>
    %cst_39 = arith.constant dense<0.000000e+00> : vector<320x5xf32>
    %81 = tpu.matmul %71, %80, %cst_39 {dimension_numbers = #tpu.dot_dimension_numbers<[1], [0], [0], [1], [0, 0, 1, 1], [], []>} : vector<320x10xf32>, vector<10x5xf32>, vector<320x5xf32> -> vector<320x5xf32>
    %82 = tpu.iota {dimensions = array<i32: 0>} : vector<10x5xi32>
    %83 = tpu.iota {dimensions = array<i32: 1>} : vector<10x5xi32>
    %c2_i32_40 = arith.constant 2 : i32
    %84 = vector.broadcast %c2_i32_40 : i32 to vector<10x5xi32>
    %85 = arith.muli %84, %83 : vector<10x5xi32>
    %c1_i32_41 = arith.constant 1 : i32
    %86 = vector.broadcast %c1_i32_41 : i32 to vector<10x5xi32>
    %87 = arith.addi %85, %86 : vector<10x5xi32>
    %88 = arith.cmpi eq, %82, %87 : vector<10x5xi32>
    %89 = arith.extui %88 : vector<10x5xi1> to vector<10x5xi32>
    %90 = arith.sitofp %89 : vector<10x5xi32> to vector<10x5xf32>
    %cst_42 = arith.constant dense<0.000000e+00> : vector<320x5xf32>
    %91 = tpu.matmul %71, %90, %cst_42 {dimension_numbers = #tpu.dot_dimension_numbers<[1], [0], [0], [1], [0, 0, 1, 1], [], []>} : vector<320x10xf32>, vector<10x5xf32>, vector<320x5xf32> -> vector<320x5xf32>
    %92 = arith.maximumf %81, %91 : vector<320x5xf32>
    %93 = vector.extract_strided_slice %92 {offsets = [0, 0], sizes = [288, 5], strides = [1, 1]} : vector<320x5xf32> to vector<288x5xf32>
    %94 = vector.extract_strided_slice %92 {offsets = [32, 0], sizes = [288, 5], strides = [1, 1]} : vector<320x5xf32> to vector<288x5xf32>
    %95 = arith.maximumf %93, %94 : vector<288x5xf32>
    %cst_43 = arith.constant 0.000000e+00 : f32
    %96 = vector.broadcast %cst_43 : f32 to vector<288x5xf32>
    %97 = arith.maximumf %95, %96 : vector<288x5xf32>
    %c0_44 = arith.constant 0 : index
    %c0_45 = arith.constant 0 : index
    %98 = vector.load %arg7[%c0_44, %c0_45] : memref<64x1xf32, #tpu.memory_space<vmem>>, vector<64x1xf32>
    %c0_46 = arith.constant 0 : index
    %c0_47 = arith.constant 0 : index
    %c0_48 = arith.constant 0 : index
    %99 = vector.load %arg6[%c0_46, %c0_47, %c0_48] : memref<5x64x288xf32, #tpu.memory_space<vmem>>, vector<1x64x288xf32>
    %100 = vector.shape_cast %99 : vector<1x64x288xf32> to vector<64x288xf32>
    %101 = vector.extract_strided_slice %97 {offsets = [0, 0], sizes = [288, 1], strides = [1, 1]} : vector<288x5xf32> to vector<288x1xf32>
    %cst_49 = arith.constant dense<0.000000e+00> : vector<64x1xf32>
    %102 = tpu.matmul %100, %101, %cst_49 {dimension_numbers = #tpu.dot_dimension_numbers<[1], [0], [0], [1], [0, 0, 1, 1], [], []>} : vector<64x288xf32>, vector<288x1xf32>, vector<64x1xf32> -> vector<64x1xf32>
    %103 = arith.addf %98, %102 : vector<64x1xf32>
    %c1_50 = arith.constant 1 : index
    %c0_51 = arith.constant 0 : index
    %c0_52 = arith.constant 0 : index
    %104 = vector.load %arg6[%c1_50, %c0_51, %c0_52] : memref<5x64x288xf32, #tpu.memory_space<vmem>>, vector<1x64x288xf32>
    %105 = vector.shape_cast %104 : vector<1x64x288xf32> to vector<64x288xf32>
    %106 = vector.extract_strided_slice %97 {offsets = [0, 1], sizes = [288, 1], strides = [1, 1]} : vector<288x5xf32> to vector<288x1xf32>
    %cst_53 = arith.constant dense<0.000000e+00> : vector<64x1xf32>
    %107 = tpu.matmul %105, %106, %cst_53 {dimension_numbers = #tpu.dot_dimension_numbers<[1], [0], [0], [1], [0, 0, 1, 1], [], []>} : vector<64x288xf32>, vector<288x1xf32>, vector<64x1xf32> -> vector<64x1xf32>
    %108 = arith.addf %103, %107 : vector<64x1xf32>
    %c2_54 = arith.constant 2 : index
    %c0_55 = arith.constant 0 : index
    %c0_56 = arith.constant 0 : index
    %109 = vector.load %arg6[%c2_54, %c0_55, %c0_56] : memref<5x64x288xf32, #tpu.memory_space<vmem>>, vector<1x64x288xf32>
    %110 = vector.shape_cast %109 : vector<1x64x288xf32> to vector<64x288xf32>
    %111 = vector.extract_strided_slice %97 {offsets = [0, 2], sizes = [288, 1], strides = [1, 1]} : vector<288x5xf32> to vector<288x1xf32>
    %cst_57 = arith.constant dense<0.000000e+00> : vector<64x1xf32>
    %112 = tpu.matmul %110, %111, %cst_57 {dimension_numbers = #tpu.dot_dimension_numbers<[1], [0], [0], [1], [0, 0, 1, 1], [], []>} : vector<64x288xf32>, vector<288x1xf32>, vector<64x1xf32> -> vector<64x1xf32>
    %113 = arith.addf %108, %112 : vector<64x1xf32>
    %c3_58 = arith.constant 3 : index
    %c0_59 = arith.constant 0 : index
    %c0_60 = arith.constant 0 : index
    %114 = vector.load %arg6[%c3_58, %c0_59, %c0_60] : memref<5x64x288xf32, #tpu.memory_space<vmem>>, vector<1x64x288xf32>
    %115 = vector.shape_cast %114 : vector<1x64x288xf32> to vector<64x288xf32>
    %116 = vector.extract_strided_slice %97 {offsets = [0, 3], sizes = [288, 1], strides = [1, 1]} : vector<288x5xf32> to vector<288x1xf32>
    %cst_61 = arith.constant dense<0.000000e+00> : vector<64x1xf32>
    %117 = tpu.matmul %115, %116, %cst_61 {dimension_numbers = #tpu.dot_dimension_numbers<[1], [0], [0], [1], [0, 0, 1, 1], [], []>} : vector<64x288xf32>, vector<288x1xf32>, vector<64x1xf32> -> vector<64x1xf32>
    %118 = arith.addf %113, %117 : vector<64x1xf32>
    %c4_62 = arith.constant 4 : index
    %c0_63 = arith.constant 0 : index
    %c0_64 = arith.constant 0 : index
    %119 = vector.load %arg6[%c4_62, %c0_63, %c0_64] : memref<5x64x288xf32, #tpu.memory_space<vmem>>, vector<1x64x288xf32>
    %120 = vector.shape_cast %119 : vector<1x64x288xf32> to vector<64x288xf32>
    %121 = vector.extract_strided_slice %97 {offsets = [0, 4], sizes = [288, 1], strides = [1, 1]} : vector<288x5xf32> to vector<288x1xf32>
    %cst_65 = arith.constant dense<0.000000e+00> : vector<64x1xf32>
    %122 = tpu.matmul %120, %121, %cst_65 {dimension_numbers = #tpu.dot_dimension_numbers<[1], [0], [0], [1], [0, 0, 1, 1], [], []>} : vector<64x288xf32>, vector<288x1xf32>, vector<64x1xf32> -> vector<64x1xf32>
    %123 = arith.addf %118, %122 : vector<64x1xf32>
    %cst_66 = arith.constant 0.000000e+00 : f32
    %124 = vector.broadcast %cst_66 : f32 to vector<64x1xf32>
    %125 = arith.maximumf %123, %124 : vector<64x1xf32>
    %c0_67 = arith.constant 0 : index
    %c0_68 = arith.constant 0 : index
    %126 = vector.load %arg8[%c0_67, %c0_68] : memref<16x64xf32, #tpu.memory_space<vmem>>, vector<16x64xf32>
    %cst_69 = arith.constant dense<0.000000e+00> : vector<16x1xf32>
    %127 = tpu.matmul %126, %125, %cst_69 {dimension_numbers = #tpu.dot_dimension_numbers<[1], [0], [0], [1], [0, 0, 1, 1], [], []>} : vector<16x64xf32>, vector<64x1xf32>, vector<16x1xf32> -> vector<16x1xf32>
    %c0_70 = arith.constant 0 : index
    %c0_71 = arith.constant 0 : index
    %128 = vector.load %arg9[%c0_70, %c0_71] : memref<16x1xf32, #tpu.memory_space<vmem>>, vector<16x1xf32>
    %129 = arith.addf %127, %128 : vector<16x1xf32>
    %cst_72 = arith.constant dense<0xFF800000> : vector<1xf32>
    %130 = vector.multi_reduction <maximumf>, %129, %cst_72 [0] : vector<16x1xf32> to vector<1xf32>
    %131 = vector.shape_cast %130 : vector<1xf32> to vector<1x1xf32>
    %132 = vector.broadcast %131 : vector<1x1xf32> to vector<16x1xf32>
    %133 = arith.subf %129, %132 : vector<16x1xf32>
    %134 = math.exp %133 : vector<16x1xf32>
    %cst_73 = arith.constant dense<0.000000e+00> : vector<1xf32>
    %135 = vector.multi_reduction <add>, %134, %cst_73 [0] : vector<16x1xf32> to vector<1xf32>
    %136 = vector.shape_cast %135 : vector<1xf32> to vector<1x1xf32>
    %137 = math.log %136 : vector<1x1xf32>
    %138 = vector.broadcast %137 : vector<1x1xf32> to vector<16x1xf32>
    %139 = arith.subf %133, %138 : vector<16x1xf32>
    %c0_74 = arith.constant 0 : index
    %c0_75 = arith.constant 0 : index
    %c0_76 = arith.constant 0 : index
    %140 = vector.load %arg10[%c0_74, %c0_75, %c0_76] : memref<1x16x1xf32, #tpu.memory_space<vmem>>, vector<1x16x1xf32>
    %141 = vector.shape_cast %140 : vector<1x16x1xf32> to vector<16x1xf32>
    %142 = vector.shape_cast %139 : vector<16x1xf32> to vector<1x16x1xf32>
    tpu.vector_store %arg10[%c0_74, %c0_75, %c0_76], %142 {strides = array<i32>} : memref<1x16x1xf32, #tpu.memory_space<vmem>>, vector<1x16x1xf32>,
    return
  }
  func.func @transform_0(%arg0: i32) -> (i32, i32, i32) {
    %c0_i32 = arith.constant 0 : i32
    %c0_i32_0 = arith.constant 0 : i32
    %c0_i32_1 = arith.constant 0 : i32
    return %arg0, %c0_i32, %c0_i32_0 : i32, i32, i32
  }
  func.func @transform_1(%arg0: i32) -> (i32, i32, i32) {
    %c0_i32 = arith.constant 0 : i32
    %c0_i32_0 = arith.constant 0 : i32
    %c0_i32_1 = arith.constant 0 : i32
    %c0_i32_2 = arith.constant 0 : i32
    return %c0_i32, %c0_i32_0, %c0_i32_1 : i32, i32, i32
  }
  func.func @transform_2(%arg0: i32) -> (i32, i32) {
    %c0_i32 = arith.constant 0 : i32
    %c0_i32_0 = arith.constant 0 : i32
    %c0_i32_1 = arith.constant 0 : i32
    return %c0_i32, %c0_i32_0 : i32, i32
  }
  func.func @transform_3(%arg0: i32) -> (i32, i32, i32) {
    %c0_i32 = arith.constant 0 : i32
    %c0_i32_0 = arith.constant 0 : i32
    %c0_i32_1 = arith.constant 0 : i32
    %c0_i32_2 = arith.constant 0 : i32
    return %c0_i32, %c0_i32_0, %c0_i32_1 : i32, i32, i32
  }
  func.func @transform_4(%arg0: i32) -> (i32, i32) {
    %c0_i32 = arith.constant 0 : i32
    %c0_i32_0 = arith.constant 0 : i32
    %c0_i32_1 = arith.constant 0 : i32
    return %c0_i32, %c0_i32_0 : i32, i32
  }
  func.func @transform_5(%arg0: i32) -> (i32, i32, i32) {
    %c0_i32 = arith.constant 0 : i32
    %c0_i32_0 = arith.constant 0 : i32
    %c0_i32_1 = arith.constant 0 : i32
    %c0_i32_2 = arith.constant 0 : i32
    return %c0_i32, %c0_i32_0, %c0_i32_1 : i32, i32, i32
  }
  func.func @transform_6(%arg0: i32) -> (i32, i32) {
    %c0_i32 = arith.constant 0 : i32
    %c0_i32_0 = arith.constant 0 : i32
    %c0_i32_1 = arith.constant 0 : i32
    return %c0_i32, %c0_i32_0 : i32, i32
  }
  func.func @transform_7(%arg0: i32) -> (i32, i32) {
    %c0_i32 = arith.constant 0 : i32
    %c0_i32_0 = arith.constant 0 : i32
    %c0_i32_1 = arith.constant 0 : i32
    return %c0_i32, %c0_i32_0 : i32, i32
  }
  func.func @transform_8(%arg0: i32) -> (i32, i32) {
    %c0_i32 = arith.constant 0 : i32
    %c0_i32_0 = arith.constant 0 : i32
    %c0_i32_1 = arith.constant 0 : i32
    return %c0_i32, %c0_i32_0 : i32, i32
  }
  func.func @transform_9(%arg0: i32) -> (i32, i32, i32) {
    %c0_i32 = arith.constant 0 : i32
    %c0_i32_0 = arith.constant 0 : i32
    %c0_i32_1 = arith.constant 0 : i32
    return %arg0, %c0_i32, %c0_i32_0 : i32, i32, i32
  }
}

</mosaic_0001>

<llo_original>
// kernel: tile.13
$region0: #{tile.13}
  #allocation0 [shape = 's32[1]{0}', space=sflag, size = 0x4, scoped, tag = 'scoped memory for tile.13']
  %s0 = inlined_call_operand.vmem [shape: f32[16], index: 0, kind: input, shape index: {}]
  %s1 = inlined_call_operand.vmem [shape: f32[24,16], index: 1, kind: output, shape index: {}]
  // Predicated region
  $region2: #{tile.13} parent=0 // pred_check
    _
  $region3: #{tile.13} parent=0 // pred_check_branch
    %3 = sbr.rel (0) target = $region5
  $region4: #{tile.13} parent=0 // pred_region
    _
  $region5: #{tile.13} parent=0 // pred_fallthru
    _
  %v4 = vld [vmem:[%s0] ss:$0 sm:$0xff]
  %5 = vst [vmem:[%s1] sm:$0xff] %v4
  %s6 = scalar_lea.vmem %s1, 8
  %7 = vst [vmem:[%s6] sm:$0xff] %v4
  %s8 = scalar_lea.vmem %s1, 16
  %9 = vst [vmem:[%s8] sm:$0xff] %v4

// kernel: tile.0
$region0: #{tile.0}
  %s0 = inlined_call_operand.vmem [shape: f32[24,16], index: 0, kind: input, shape index: {}]
  %s1 = inlined_call_operand.vmem [shape: f32[384,1], index: 1, kind: output, shape index: {}]
  %v2 = vld [vmem:[%s0] sm:$0xff]
  %vm3 = vcmask 7168
  %4 = vst.msk [vmem:[%s1] ss:$16 sm:$0x3] %vm3, %v2
  %5 = vst.msk [vmem:[%s1] ss:$16 sm:$0xc] %vm3, %v2
  %6 = vst.msk [vmem:[%s1] ss:$16 sm:$0x30] %vm3, %v2
  %7 = vst.msk [vmem:[%s1] ss:$16 sm:$0xc0] %vm3, %v2
  %s8 = scalar_lea.vmem %s0, 8
  %v9 = vld [vmem:[%s8] sm:$0xff]
  %vm10 = vcmask 7168
  %s11 = scalar_lea.vmem %s1, 128
  %12 = vst.msk [vmem:[%s11] ss:$16 sm:$0x3] %vm10, %v9
  %s13 = scalar_lea.vmem %s1, 128
  %14 = vst.msk [vmem:[%s13] ss:$16 sm:$0xc] %vm10, %v9
  %s15 = scalar_lea.vmem %s1, 128
  %16 = vst.msk [vmem:[%s15] ss:$16 sm:$0x30] %vm10, %v9
  %s17 = scalar_lea.vmem %s1, 128
  %18 = vst.msk [vmem:[%s17] ss:$16 sm:$0xc0] %vm10, %v9
  %s19 = scalar_lea.vmem %s0, 16
  %v20 = vld [vmem:[%s19] sm:$0xff]
  %vm21 = vcmask 7168
  %s22 = scalar_lea.vmem %s1, 256
  %23 = vst.msk [vmem:[%s22] ss:$16 sm:$0x3] %vm21, %v20
  %s24 = scalar_lea.vmem %s1, 256
  %25 = vst.msk [vmem:[%s24] ss:$16 sm:$0xc] %vm21, %v20
  %s26 = scalar_lea.vmem %s1, 256
  %27 = vst.msk [vmem:[%s26] ss:$16 sm:$0x30] %vm21, %v20
  %s28 = scalar_lea.vmem %s1, 256
  %29 = vst.msk [vmem:[%s28] ss:$16 sm:$0xc0] %vm21, %v20
  %v30 = vld [vmem:[%s0] sm:$0xff]
  %31 = vrot.lane.b32.xlu0 %v30, 127
  %v32 = vpop.permute.xlu0 %31
  %vm33 = vcmask 7168
  %s34 = scalar_lea.vmem %s1, 1
  %35 = vst.msk [vmem:[%s34] ss:$16 sm:$0x3] %vm33, %v32
  %s36 = scalar_lea.vmem %s1, 1
  %37 = vst.msk [vmem:[%s36] ss:$16 sm:$0xc] %vm33, %v32
  %s38 = scalar_lea.vmem %s1, 1
  %39 = vst.msk [vmem:[%s38] ss:$16 sm:$0x30] %vm33, %v32
  %s40 = scalar_lea.vmem %s1, 1
  %41 = vst.msk [vmem:[%s40] ss:$16 sm:$0xc0] %vm33, %v32
  %s42 = scalar_lea.vmem %s0, 8
  %v43 = vld [vmem:[%s42] sm:$0xff]
  %44 = vrot.lane.b32.xlu0 %v43, 127
  %v45 = vpop.permute.xlu0 %44
  %vm46 = vcmask 7168
  %s47 = scalar_lea.vmem %s1, 129
  %48 = vst.msk [vmem:[%s47] ss:$16 sm:$0x3] %vm46, %v45
  %s49 = scalar_lea.vmem %s1, 129
  %50 = vst.msk [vmem:[%s49] ss:$16 sm:$0xc] %vm46, %v45
  %s51 = scalar_lea.vmem %s1, 129
  %52 = vst.msk [vmem:[%s51] ss:$16 sm:$0x30] %vm46, %v45
  %s53 = scalar_lea.vmem %s1, 129
  %54 = vst.msk [vmem:[%s53] ss:$16 sm:$0xc0] %vm46, %v45
  %s55 = scalar_lea.vmem %s0, 16
  %v56 = vld [vmem:[%s55] sm:$0xff]
  %57 = vrot.lane.b32.xlu0 %v56, 127
  %v58 = vpop.permute.xlu0 %57
  %vm59 = vcmask 7168
  %s60 = scalar_lea.vmem %s1, 257
  %61 = vst.msk [vmem:[%s60] ss:$16 sm:$0x3] %vm59, %v58
  %s62 = scalar_lea.vmem %s1, 257
  %63 = vst.msk [vmem:[%s62] ss:$16 sm:$0xc] %vm59, %v58
  %s64 = scalar_lea.vmem %s1, 257
  %65 = vst.msk [vmem:[%s64] ss:$16 sm:$0x30] %vm59, %v58
  %s66 = scalar_lea.vmem %s1, 257
  %67 = vst.msk [vmem:[%s66] ss:$16 sm:$0xc0] %vm59, %v58
  %v68 = vld [vmem:[%s0] sm:$0xff]
  %69 = vrot.lane.b32.xlu0 %v68, 126
  %v70 = vpop.permute.xlu0 %69
  %vm71 = vcmask 7168
  %s72 = scalar_lea.vmem %s1, 2
  %73 = vst.msk [vmem:[%s72] ss:$16 sm:$0x3] %vm71, %v70
  %s74 = scalar_lea.vmem %s1, 2
  %75 = vst.msk [vmem:[%s74] ss:$16 sm:$0xc] %vm71, %v70
  %s76 = scalar_lea.vmem %s1, 2
  %77 = vst.msk [vmem:[%s76] ss:$16 sm:$0x30] %vm71, %v70
  %s78 = scalar_lea.vmem %s1, 2
  %79 = vst.msk [vmem:[%s78] ss:$16 sm:$0xc0] %vm71, %v70
  %s80 = scalar_lea.vmem %s0, 8
  %v81 = vld [vmem:[%s80] sm:$0xff]
  %82 = vrot.lane.b32.xlu0 %v81, 126
  %v83 = vpop.permute.xlu0 %82
  %vm84 = vcmask 7168
  %s85 = scalar_lea.vmem %s1, 130
  %86 = vst.msk [vmem:[%s85] ss:$16 sm:$0x3] %vm84, %v83
  %s87 = scalar_lea.vmem %s1, 130
  %88 = vst.msk [vmem:[%s87] ss:$16 sm:$0xc] %vm84, %v83
  %s89 = scalar_lea.vmem %s1, 130
  %90 = vst.msk [vmem:[%s89] ss:$16 sm:$0x30] %vm84, %v83
  %s91 = scalar_lea.vmem %s1, 130
  %92 = vst.msk [vmem:[%s91] ss:$16 sm:$0xc0] %vm84, %v83
  %s93 = scalar_lea.vmem %s0, 16
  %v94 = vld [vmem:[%s93] sm:$0xff]
  %95 = vrot.lane.b32.xlu0 %v94, 126
  %v96 = vpop.permute.xlu0 %95
  %vm97 = vcmask 7168
  %s98 = scalar_lea.vmem %s1, 258
  %99 = vst.msk [vmem:[%s98] ss:$16 sm:$0x3] %vm97, %v96
  %s100 = scalar_lea.vmem %s1, 258
  %101 = vst.msk [vmem:[%s100] ss:$16 sm:$0xc] %vm97, %v96
  %s102 = scalar_lea.vmem %s1, 258
  %103 = vst.msk [vmem:[%s102] ss:$16 sm:$0x30] %vm97, %v96
  %s104 = scalar_lea.vmem %s1, 258
  %105 = vst.msk [vmem:[%s104] ss:$16 sm:$0xc0] %vm97, %v96
  %v106 = vld [vmem:[%s0] sm:$0xff]
  %107 = vrot.lane.b32.xlu0 %v106, 125
  %v108 = vpop.permute.xlu0 %107
  %vm109 = vcmask 7168
  %s110 = scalar_lea.vmem %s1, 3
  %111 = vst.msk [vmem:[%s110] ss:$16 sm:$0x3] %vm109, %v108
  %s112 = scalar_lea.vmem %s1, 3
  %113 = vst.msk [vmem:[%s112] ss:$16 sm:$0xc] %vm109, %v108
  %s114 = scalar_lea.vmem %s1, 3
  %115 = vst.msk [vmem:[%s114] ss:$16 sm:$0x30] %vm109, %v108
  %s116 = scalar_lea.vmem %s1, 3
  %117 = vst.msk [vmem:[%s116] ss:$16 sm:$0xc0] %vm109, %v108
  %s118 = scalar_lea.vmem %s0, 8
  %v119 = vld [vmem:[%s118] sm:$0xff]
  %120 = vrot.lane.b32.xlu0 %v119, 125
  %v121 = vpop.permute.xlu0 %120
  %vm122 = vcmask 7168
  %s123 = scalar_lea.vmem %s1, 131
  %124 = vst.msk [vmem:[%s123] ss:$16 sm:$0x3] %vm122, %v121
  %s125 = scalar_lea.vmem %s1, 131
  %126 = vst.msk [vmem:[%s125] ss:$16 sm:$0xc] %vm122, %v121
  %s127 = scalar_lea.vmem %s1, 131
  %128 = vst.msk [vmem:[%s127] ss:$16 sm:$0x30] %vm122, %v121
  %s129 = scalar_lea.vmem %s1, 131
  %130 = vst.msk [vmem:[%s129] ss:$16 sm:$0xc0] %vm122, %v121
  %s131 = scalar_lea.vmem %s0, 16
  %v132 = vld [vmem:[%s131] sm:$0xff]
  %133 = vrot.lane.b32.xlu0 %v132, 125
  %v134 = vpop.permute.xlu0 %133
  %vm135 = vcmask 7168
  %s136 = scalar_lea.vmem %s1, 259
  %137 = vst.msk [vmem:[%s136] ss:$16 sm:$0x3] %vm135, %v134
  %s138 = scalar_lea.vmem %s1, 259
  %139 = vst.msk [vmem:[%s138] ss:$16 sm:$0xc] %vm135, %v134
  %s140 = scalar_lea.vmem %s1, 259
  %141 = vst.msk [vmem:[%s140] ss:$16 sm:$0x30] %vm135, %v134
  %s142 = scalar_lea.vmem %s1, 259
  %143 = vst.msk [vmem:[%s142] ss:$16 sm:$0xc0] %vm135, %v134
  %v144 = vld [vmem:[%s0] sm:$0xff]
  %145 = vrot.lane.b32.xlu0 %v144, 124
  %v146 = vpop.permute.xlu0 %145
  %vm147 = vcmask 7168
  %s148 = scalar_lea.vmem %s1, 4
  %149 = vst.msk [vmem:[%s148] ss:$16 sm:$0x3] %vm147, %v146
  %s150 = scalar_lea.vmem %s1, 4
  %151 = vst.msk [vmem:[%s150] ss:$16 sm:$0xc] %vm147, %v146
  %s152 = scalar_lea.vmem %s1, 4
  %153 = vst.msk [vmem:[%s152] ss:$16 sm:$0x30] %vm147, %v146
  %s154 = scalar_lea.vmem %s1, 4
  %155 = vst.msk [vmem:[%s154] ss:$16 sm:$0xc0] %vm147, %v146
  %s156 = scalar_lea.vmem %s0, 8
  %v157 = vld [vmem:[%s156] sm:$0xff]
  %158 = vrot.lane.b32.xlu0 %v157, 124
  %v159 = vpop.permute.xlu0 %158
  %vm160 = vcmask 7168
  %s161 = scalar_lea.vmem %s1, 132
  %162 = vst.msk [vmem:[%s161] ss:$16 sm:$0x3] %vm160, %v159
  %s163 = scalar_lea.vmem %s1, 132
  %164 = vst.msk [vmem:[%s163] ss:$16 sm:$0xc] %vm160, %v159
  %s165 = scalar_lea.vmem %s1, 132
  %166 = vst.msk [vmem:[%s165] ss:$16 sm:$0x30] %vm160, %v159
  %s167 = scalar_lea.vmem %s1, 132
  %168 = vst.msk [vmem:[%s167] ss:$16 sm:$0xc0] %vm160, %v159
  %s169 = scalar_lea.vmem %s0, 16
  %v170 = vld [vmem:[%s169] sm:$0xff]
  %171 = vrot.lane.b32.xlu0 %v170, 124
  %v172 = vpop.permute.xlu0 %171
  %vm173 = vcmask 7168
  %s174 = scalar_lea.vmem %s1, 260
  %175 = vst.msk [vmem:[%s174] ss:$16 sm:$0x3] %vm173, %v172
  %s176 = scalar_lea.vmem %s1, 260
  %177 = vst.msk [vmem:[%s176] ss:$16 sm:$0xc] %vm173, %v172
  %s178 = scalar_lea.vmem %s1, 260
  %179 = vst.msk [vmem:[%s178] ss:$16 sm:$0x30] %vm173, %v172
  %s180 = scalar_lea.vmem %s1, 260
  %181 = vst.msk [vmem:[%s180] ss:$16 sm:$0xc0] %vm173, %v172
  %v182 = vld [vmem:[%s0] sm:$0xff]
  %183 = vrot.lane.b32.xlu0 %v182, 123
  %v184 = vpop.permute.xlu0 %183
  %vm185 = vcmask 7168
  %s186 = scalar_lea.vmem %s1, 5
  %187 = vst.msk [vmem:[%s186] ss:$16 sm:$0x3] %vm185, %v184
  %s188 = scalar_lea.vmem %s1, 5
  %189 = vst.msk [vmem:[%s188] ss:$16 sm:$0xc] %vm185, %v184
  %s190 = scalar_lea.vmem %s1, 5
  %191 = vst.msk [vmem:[%s190] ss:$16 sm:$0x30] %vm185, %v184
  %s192 = scalar_lea.vmem %s1, 5
  %193 = vst.msk [vmem:[%s192] ss:$16 sm:$0xc0] %vm185, %v184
  %s194 = scalar_lea.vmem %s0, 8
  %v195 = vld [vmem:[%s194] sm:$0xff]
  %196 = vrot.lane.b32.xlu0 %v195, 123
  %v197 = vpop.permute.xlu0 %196
  %vm198 = vcmask 7168
  %s199 = scalar_lea.vmem %s1, 133
  %200 = vst.msk [vmem:[%s199] ss:$16 sm:$0x3] %vm198, %v197
  %s201 = scalar_lea.vmem %s1, 133
  %202 = vst.msk [vmem:[%s201] ss:$16 sm:$0xc] %vm198, %v197
  %s203 = scalar_lea.vmem %s1, 133
  %204 = vst.msk [vmem:[%s203] ss:$16 sm:$0x30] %vm198, %v197
  %s205 = scalar_lea.vmem %s1, 133
  %206 = vst.msk [vmem:[%s205] ss:$16 sm:$0xc0] %vm198, %v197
  %s207 = scalar_lea.vmem %s0, 16
  %v208 = vld [vmem:[%s207] sm:$0xff]
  %209 = vrot.lane.b32.xlu0 %v208, 123
  %v210 = vpop.permute.xlu0 %209
  %vm211 = vcmask 7168
  %s212 = scalar_lea.vmem %s1, 261
  %213 = vst.msk [vmem:[%s212] ss:$16 sm:$0x3] %vm211, %v210
  %s214 = scalar_lea.vmem %s1, 261
  %215 = vst.msk [vmem:[%s214] ss:$16 sm:$0xc] %vm211, %v210
  %s216 = scalar_lea.vmem %s1, 261
  %217 = vst.msk [vmem:[%s216] ss:$16 sm:$0x30] %vm211, %v210
  %s218 = scalar_lea.vmem %s1, 261
  %219 = vst.msk [vmem:[%s218] ss:$16 sm:$0xc0] %vm211, %v210
  %v220 = vld [vmem:[%s0] sm:$0xff]
  %221 = vrot.lane.b32.xlu0 %v220, 122
  %v222 = vpop.permute.xlu0 %221
  %vm223 = vcmask 7168
  %s224 = scalar_lea.vmem %s1, 6
  %225 = vst.msk [vmem:[%s224] ss:$16 sm:$0x3] %vm223, %v222
  %s226 = scalar_lea.vmem %s1, 6
  %227 = vst.msk [vmem:[%s226] ss:$16 sm:$0xc] %vm223, %v222
  %s228 = scalar_lea.vmem %s1, 6
  %229 = vst.msk [vmem:[%s228] ss:$16 sm:$0x30] %vm223, %v222
  %s230 = scalar_lea.vmem %s1, 6
  %231 = vst.msk [vmem:[%s230] ss:$16 sm:$0xc0] %vm223, %v222
  %s232 = scalar_lea.vmem %s0, 8
  %v233 = vld [vmem:[%s232] sm:$0xff]
  %234 = vrot.lane.b32.xlu0 %v233, 122
  %v235 = vpop.permute.xlu0 %234
  %vm236 = vcmask 7168
  %s237 = scalar_lea.vmem %s1, 134
  %238 = vst.msk [vmem:[%s237] ss:$16 sm:$0x3] %vm236, %v235
  %s239 = scalar_lea.vmem %s1, 134
  %240 = vst.msk [vmem:[%s239] ss:$16 sm:$0xc] %vm236, %v235
  %s241 = scalar_lea.vmem %s1, 134
  %242 = vst.msk [vmem:[%s241] ss:$16 sm:$0x30] %vm236, %v235
  %s243 = scalar_lea.vmem %s1, 134
  %244 = vst.msk [vmem:[%s243] ss:$16 sm:$0xc0] %vm236, %v235
  %s245 = scalar_lea.vmem %s0, 16
  %v246 = vld [vmem:[%s245] sm:$0xff]
  %247 = vrot.lane.b32.xlu0 %v246, 122
  %v248 = vpop.permute.xlu0 %247
  %vm249 = vcmask 7168
  %s250 = scalar_lea.vmem %s1, 262
  %251 = vst.msk [vmem:[%s250] ss:$16 sm:$0x3] %vm249, %v248
  %s252 = scalar_lea.vmem %s1, 262
  %253 = vst.msk [vmem:[%s252] ss:$16 sm:$0xc] %vm249, %v248
  %s254 = scalar_lea.vmem %s1, 262
  %255 = vst.msk [vmem:[%s254] ss:$16 sm:$0x30] %vm249, %v248
  %s256 = scalar_lea.vmem %s1, 262
  %257 = vst.msk [vmem:[%s256] ss:$16 sm:$0xc0] %vm249, %v248
  %v258 = vld [vmem:[%s0] sm:$0xff]
  %259 = vrot.lane.b32.xlu0 %v258, 121
  %v260 = vpop.permute.xlu0 %259
  %vm261 = vcmask 7168
  %s262 = scalar_lea.vmem %s1, 7
  %263 = vst.msk [vmem:[%s262] ss:$16 sm:$0x3] %vm261, %v260
  %s264 = scalar_lea.vmem %s1, 7
  %265 = vst.msk [vmem:[%s264] ss:$16 sm:$0xc] %vm261, %v260
  %s266 = scalar_lea.vmem %s1, 7
  %267 = vst.msk [vmem:[%s266] ss:$16 sm:$0x30] %vm261, %v260
  %s268 = scalar_lea.vmem %s1, 7
  %269 = vst.msk [vmem:[%s268] ss:$16 sm:$0xc0] %vm261, %v260
  %s270 = scalar_lea.vmem %s0, 8
  %v271 = vld [vmem:[%s270] sm:$0xff]
  %272 = vrot.lane.b32.xlu0 %v271, 121
  %v273 = vpop.permute.xlu0 %272
  %vm274 = vcmask 7168
  %s275 = scalar_lea.vmem %s1, 135
  %276 = vst.msk [vmem:[%s275] ss:$16 sm:$0x3] %vm274, %v273
  %s277 = scalar_lea.vmem %s1, 135
  %278 = vst.msk [vmem:[%s277] ss:$16 sm:$0xc] %vm274, %v273
  %s279 = scalar_lea.vmem %s1, 135
  %280 = vst.msk [vmem:[%s279] ss:$16 sm:$0x30] %vm274, %v273
  %s281 = scalar_lea.vmem %s1, 135
  %282 = vst.msk [vmem:[%s281] ss:$16 sm:$0xc0] %vm274, %v273
  %s283 = scalar_lea.vmem %s0, 16
  %v284 = vld [vmem:[%s283] sm:$0xff]
  %285 = vrot.lane.b32.xlu0 %v284, 121
  %v286 = vpop.permute.xlu0 %285
  %vm287 = vcmask 7168
  %s288 = scalar_lea.vmem %s1, 263
  %289 = vst.msk [vmem:[%s288] ss:$16 sm:$0x3] %vm287, %v286
  %s290 = scalar_lea.vmem %s1, 263
  %291 = vst.msk [vmem:[%s290] ss:$16 sm:$0xc] %vm287, %v286
  %s292 = scalar_lea.vmem %s1, 263
  %293 = vst.msk [vmem:[%s292] ss:$16 sm:$0x30] %vm287, %v286
  %s294 = scalar_lea.vmem %s1, 263
  %295 = vst.msk [vmem:[%s294] ss:$16 sm:$0xc0] %vm287, %v286
  %v296 = vld [vmem:[%s0] sm:$0xff]
  %297 = vrot.lane.b32.xlu0 %v296, 120
  %v298 = vpop.permute.xlu0 %297
  %vm299 = vcmask 7168
  %s300 = scalar_lea.vmem %s1, 8
  %301 = vst.msk [vmem:[%s300] ss:$16 sm:$0x3] %vm299, %v298
  %s302 = scalar_lea.vmem %s1, 8
  %303 = vst.msk [vmem:[%s302] ss:$16 sm:$0xc] %vm299, %v298
  %s304 = scalar_lea.vmem %s1, 8
  %305 = vst.msk [vmem:[%s304] ss:$16 sm:$0x30] %vm299, %v298
  %s306 = scalar_lea.vmem %s1, 8
  %307 = vst.msk [vmem:[%s306] ss:$16 sm:$0xc0] %vm299, %v298
  %s308 = scalar_lea.vmem %s0, 8
  %v309 = vld [vmem:[%s308] sm:$0xff]
  %310 = vrot.lane.b32.xlu0 %v309, 120
  %v311 = vpop.permute.xlu0 %310
  %vm312 = vcmask 7168
  %s313 = scalar_lea.vmem %s1, 136
  %314 = vst.msk [vmem:[%s313] ss:$16 sm:$0x3] %vm312, %v311
  %s315 = scalar_lea.vmem %s1, 136
  %316 = vst.msk [vmem:[%s315] ss:$16 sm:$0xc] %vm312, %v311
  %s317 = scalar_lea.vmem %s1, 136
  %318 = vst.msk [vmem:[%s317] ss:$16 sm:$0x30] %vm312, %v311
  %s319 = scalar_lea.vmem %s1, 136
  %320 = vst.msk [vmem:[%s319] ss:$16 sm:$0xc0] %vm312, %v311
  %s321 = scalar_lea.vmem %s0, 16
  %v322 = vld [vmem:[%s321] sm:$0xff]
  %323 = vrot.lane.b32.xlu0 %v322, 120
  %v324 = vpop.permute.xlu0 %323
  %vm325 = vcmask 7168
  %s326 = scalar_lea.vmem %s1, 264
  %327 = vst.msk [vmem:[%s326] ss:$16 sm:$0x3] %vm325, %v324
  %s328 = scalar_lea.vmem %s1, 264
  %329 = vst.msk [vmem:[%s328] ss:$16 sm:$0xc] %vm325, %v324
  %s330 = scalar_lea.vmem %s1, 264
  %331 = vst.msk [vmem:[%s330] ss:$16 sm:$0x30] %vm325, %v324
  %s332 = scalar_lea.vmem %s1, 264
  %333 = vst.msk [vmem:[%s332] ss:$16 sm:$0xc0] %vm325, %v324
  %v334 = vld [vmem:[%s0] sm:$0xff]
  %335 = vrot.lane.b32.xlu0 %v334, 119
  %v336 = vpop.permute.xlu0 %335
  %vm337 = vcmask 7168
  %s338 = scalar_lea.vmem %s1, 9
  %339 = vst.msk [vmem:[%s338] ss:$16 sm:$0x3] %vm337, %v336
  %s340 = scalar_lea.vmem %s1, 9
  %341 = vst.msk [vmem:[%s340] ss:$16 sm:$0xc] %vm337, %v336
  %s342 = scalar_lea.vmem %s1, 9
  %343 = vst.msk [vmem:[%s342] ss:$16 sm:$0x30] %vm337, %v336
  %s344 = scalar_lea.vmem %s1, 9
  %345 = vst.msk [vmem:[%s344] ss:$16 sm:$0xc0] %vm337, %v336
  %s346 = scalar_lea.vmem %s0, 8
  %v347 = vld [vmem:[%s346] sm:$0xff]
  %348 = vrot.lane.b32.xlu0 %v347, 119
  %v349 = vpop.permute.xlu0 %348
  %vm350 = vcmask 7168
  %s351 = scalar_lea.vmem %s1, 137
  %352 = vst.msk [vmem:[%s351] ss:$16 sm:$0x3] %vm350, %v349
  %s353 = scalar_lea.vmem %s1, 137
  %354 = vst.msk [vmem:[%s353] ss:$16 sm:$0xc] %vm350, %v349
  %s355 = scalar_lea.vmem %s1, 137
  %356 = vst.msk [vmem:[%s355] ss:$16 sm:$0x30] %vm350, %v349
  %s357 = scalar_lea.vmem %s1, 137
  %358 = vst.msk [vmem:[%s357] ss:$16 sm:$0xc0] %vm350, %v349
  %s359 = scalar_lea.vmem %s0, 16
  %v360 = vld [vmem:[%s359] sm:$0xff]
  %361 = vrot.lane.b32.xlu0 %v360, 119
  %v362 = vpop.permute.xlu0 %361
  %vm363 = vcmask 7168
  %s364 = scalar_lea.vmem %s1, 265
  %365 = vst.msk [vmem:[%s364] ss:$16 sm:$0x3] %vm363, %v362
  %s366 = scalar_lea.vmem %s1, 265
  %367 = vst.msk [vmem:[%s366] ss:$16 sm:$0xc] %vm363, %v362
  %s368 = scalar_lea.vmem %s1, 265
  %369 = vst.msk [vmem:[%s368] ss:$16 sm:$0x30] %vm363, %v362
  %s370 = scalar_lea.vmem %s1, 265
  %371 = vst.msk [vmem:[%s370] ss:$16 sm:$0xc0] %vm363, %v362
  %v372 = vld [vmem:[%s0] sm:$0xff]
  %373 = vrot.lane.b32.xlu0 %v372, 118
  %v374 = vpop.permute.xlu0 %373
  %vm375 = vcmask 7168
  %s376 = scalar_lea.vmem %s1, 10
  %377 = vst.msk [vmem:[%s376] ss:$16 sm:$0x3] %vm375, %v374
  %s378 = scalar_lea.vmem %s1, 10
  %379 = vst.msk [vmem:[%s378] ss:$16 sm:$0xc] %vm375, %v374
  %s380 = scalar_lea.vmem %s1, 10
  %381 = vst.msk [vmem:[%s380] ss:$16 sm:$0x30] %vm375, %v374
  %s382 = scalar_lea.vmem %s1, 10
  %383 = vst.msk [vmem:[%s382] ss:$16 sm:$0xc0] %vm375, %v374
  %s384 = scalar_lea.vmem %s0, 8
  %v385 = vld [vmem:[%s384] sm:$0xff]
  %386 = vrot.lane.b32.xlu0 %v385, 118
  %v387 = vpop.permute.xlu0 %386
  %vm388 = vcmask 7168
  %s389 = scalar_lea.vmem %s1, 138
  %390 = vst.msk [vmem:[%s389] ss:$16 sm:$0x3] %vm388, %v387
  %s391 = scalar_lea.vmem %s1, 138
  %392 = vst.msk [vmem:[%s391] ss:$16 sm:$0xc] %vm388, %v387
  %s393 = scalar_lea.vmem %s1, 138
  %394 = vst.msk [vmem:[%s393] ss:$16 sm:$0x30] %vm388, %v387
  %s395 = scalar_lea.vmem %s1, 138
  %396 = vst.msk [vmem:[%s395] ss:$16 sm:$0xc0] %vm388, %v387
  %s397 = scalar_lea.vmem %s0, 16
  %v398 = vld [vmem:[%s397] sm:$0xff]
  %399 = vrot.lane.b32.xlu0 %v398, 118
  %v400 = vpop.permute.xlu0 %399
  %vm401 = vcmask 7168
  %s402 = scalar_lea.vmem %s1, 266
  %403 = vst.msk [vmem:[%s402] ss:$16 sm:$0x3] %vm401, %v400
  %s404 = scalar_lea.vmem %s1, 266
  %405 = vst.msk [vmem:[%s404] ss:$16 sm:$0xc] %vm401, %v400
  %s406 = scalar_lea.vmem %s1, 266
  %407 = vst.msk [vmem:[%s406] ss:$16 sm:$0x30] %vm401, %v400
  %s408 = scalar_lea.vmem %s1, 266
  %409 = vst.msk [vmem:[%s408] ss:$16 sm:$0xc0] %vm401, %v400
  %v410 = vld [vmem:[%s0] sm:$0xff]
  %411 = vrot.lane.b32.xlu0 %v410, 117
  %v412 = vpop.permute.xlu0 %411
  %vm413 = vcmask 7168
  %s414 = scalar_lea.vmem %s1, 11
  %415 = vst.msk [vmem:[%s414] ss:$16 sm:$0x3] %vm413, %v412
  %s416 = scalar_lea.vmem %s1, 11
  %417 = vst.msk [vmem:[%s416] ss:$16 sm:$0xc] %vm413, %v412
  %s418 = scalar_lea.vmem %s1, 11
  %419 = vst.msk [vmem:[%s418] ss:$16 sm:$0x30] %vm413, %v412
  %s420 = scalar_lea.vmem %s1, 11
  %421 = vst.msk [vmem:[%s420] ss:$16 sm:$0xc0] %vm413, %v412
  %s422 = scalar_lea.vmem %s0, 8
  %v423 = vld [vmem:[%s422] sm:$0xff]
  %424 = vrot.lane.b32.xlu0 %v423, 117
  %v425 = vpop.permute.xlu0 %424
  %vm426 = vcmask 7168
  %s427 = scalar_lea.vmem %s1, 139
  %428 = vst.msk [vmem:[%s427] ss:$16 sm:$0x3] %vm426, %v425
  %s429 = scalar_lea.vmem %s1, 139
  %430 = vst.msk [vmem:[%s429] ss:$16 sm:$0xc] %vm426, %v425
  %s431 = scalar_lea.vmem %s1, 139
  %432 = vst.msk [vmem:[%s431] ss:$16 sm:$0x30] %vm426, %v425
  %s433 = scalar_lea.vmem %s1, 139
  %434 = vst.msk [vmem:[%s433] ss:$16 sm:$0xc0] %vm426, %v425
  %s435 = scalar_lea.vmem %s0, 16
  %v436 = vld [vmem:[%s435] sm:$0xff]
  %437 = vrot.lane.b32.xlu0 %v436, 117
  %v438 = vpop.permute.xlu0 %437
  %vm439 = vcmask 7168
  %s440 = scalar_lea.vmem %s1, 267
  %441 = vst.msk [vmem:[%s440] ss:$16 sm:$0x3] %vm439, %v438
  %s442 = scalar_lea.vmem %s1, 267
  %443 = vst.msk [vmem:[%s442] ss:$16 sm:$0xc] %vm439, %v438
  %s444 = scalar_lea.vmem %s1, 267
  %445 = vst.msk [vmem:[%s444] ss:$16 sm:$0x30] %vm439, %v438
  %s446 = scalar_lea.vmem %s1, 267
  %447 = vst.msk [vmem:[%s446] ss:$16 sm:$0xc0] %vm439, %v438
  %v448 = vld [vmem:[%s0] sm:$0xff]
  %449 = vrot.lane.b32.xlu0 %v448, 116
  %v450 = vpop.permute.xlu0 %449
  %vm451 = vcmask 7168
  %s452 = scalar_lea.vmem %s1, 12
  %453 = vst.msk [vmem:[%s452] ss:$16 sm:$0x3] %vm451, %v450
  %s454 = scalar_lea.vmem %s1, 12
  %455 = vst.msk [vmem:[%s454] ss:$16 sm:$0xc] %vm451, %v450
  %s456 = scalar_lea.vmem %s1, 12
  %457 = vst.msk [vmem:[%s456] ss:$16 sm:$0x30] %vm451, %v450
  %s458 = scalar_lea.vmem %s1, 12
  %459 = vst.msk [vmem:[%s458] ss:$16 sm:$0xc0] %vm451, %v450
  %s460 = scalar_lea.vmem %s0, 8
  %v461 = vld [vmem:[%s460] sm:$0xff]
  %462 = vrot.lane.b32.xlu0 %v461, 116
  %v463 = vpop.permute.xlu0 %462
  %vm464 = vcmask 7168
  %s465 = scalar_lea.vmem %s1, 140
  %466 = vst.msk [vmem:[%s465] ss:$16 sm:$0x3] %vm464, %v463
  %s467 = scalar_lea.vmem %s1, 140
  %468 = vst.msk [vmem:[%s467] ss:$16 sm:$0xc] %vm464, %v463
  %s469 = scalar_lea.vmem %s1, 140
  %470 = vst.msk [vmem:[%s469] ss:$16 sm:$0x30] %vm464, %v463
  %s471 = scalar_lea.vmem %s1, 140
  %472 = vst.msk [vmem:[%s471] ss:$16 sm:$0xc0] %vm464, %v463
  %s473 = scalar_lea.vmem %s0, 16
  %v474 = vld [vmem:[%s473] sm:$0xff]
  %475 = vrot.lane.b32.xlu0 %v474, 116
  %v476 = vpop.permute.xlu0 %475
  %vm477 = vcmask 7168
  %s478 = scalar_lea.vmem %s1, 268
  %479 = vst.msk [vmem:[%s478] ss:$16 sm:$0x3] %vm477, %v476
  %s480 = scalar_lea.vmem %s1, 268
  %481 = vst.msk [vmem:[%s480] ss:$16 sm:$0xc] %vm477, %v476
  %s482 = scalar_lea.vmem %s1, 268
  %483 = vst.msk [vmem:[%s482] ss:$16 sm:$0x30] %vm477, %v476
  %s484 = scalar_lea.vmem %s1, 268
  %485 = vst.msk [vmem:[%s484] ss:$16 sm:$0xc0] %vm477, %v476
  %v486 = vld [vmem:[%s0] sm:$0xff]
  %487 = vrot.lane.b32.xlu0 %v486, 115
  %v488 = vpop.permute.xlu0 %487
  %vm489 = vcmask 7168
  %s490 = scalar_lea.vmem %s1, 13
  %491 = vst.msk [vmem:[%s490] ss:$16 sm:$0x3] %vm489, %v488
  %s492 = scalar_lea.vmem %s1, 13
  %493 = vst.msk [vmem:[%s492] ss:$16 sm:$0xc] %vm489, %v488
  %s494 = scalar_lea.vmem %s1, 13
  %495 = vst.msk [vmem:[%s494] ss:$16 sm:$0x30] %vm489, %v488
  %s496 = scalar_lea.vmem %s1, 13
  %497 = vst.msk [vmem:[%s496] ss:$16 sm:$0xc0] %vm489, %v488
  %s498 = scalar_lea.vmem %s0, 8
  %v499 = vld [vmem:[%s498] sm:$0xff]
  %500 = vrot.lane.b32.xlu0 %v499, 115
  %v501 = vpop.permute.xlu0 %500
  %vm502 = vcmask 7168
  %s503 = scalar_lea.vmem %s1, 141
  %504 = vst.msk [vmem:[%s503] ss:$16 sm:$0x3] %vm502, %v501
  %s505 = scalar_lea.vmem %s1, 141
  %506 = vst.msk [vmem:[%s505] ss:$16 sm:$0xc] %vm502, %v501
  %s507 = scalar_lea.vmem %s1, 141
  %508 = vst.msk [vmem:[%s507] ss:$16 sm:$0x30] %vm502, %v501
  %s509 = scalar_lea.vmem %s1, 141
  %510 = vst.msk [vmem:[%s509] ss:$16 sm:$0xc0] %vm502, %v501
  %s511 = scalar_lea.vmem %s0, 16
  %v512 = vld [vmem:[%s511] sm:$0xff]
  %513 = vrot.lane.b32.xlu0 %v512, 115
  %v514 = vpop.permute.xlu0 %513
  %vm515 = vcmask 7168
  %s516 = scalar_lea.vmem %s1, 269
  %517 = vst.msk [vmem:[%s516] ss:$16 sm:$0x3] %vm515, %v514
  %s518 = scalar_lea.vmem %s1, 269
  %519 = vst.msk [vmem:[%s518] ss:$16 sm:$0xc] %vm515, %v514
  %s520 = scalar_lea.vmem %s1, 269
  %521 = vst.msk [vmem:[%s520] ss:$16 sm:$0x30] %vm515, %v514
  %s522 = scalar_lea.vmem %s1, 269
  %523 = vst.msk [vmem:[%s522] ss:$16 sm:$0xc0] %vm515, %v514
  %v524 = vld [vmem:[%s0] sm:$0xff]
  %525 = vrot.lane.b32.xlu0 %v524, 114
  %v526 = vpop.permute.xlu0 %525
  %vm527 = vcmask 7168
  %s528 = scalar_lea.vmem %s1, 14
  %529 = vst.msk [vmem:[%s528] ss:$16 sm:$0x3] %vm527, %v526
  %s530 = scalar_lea.vmem %s1, 14
  %531 = vst.msk [vmem:[%s530] ss:$16 sm:$0xc] %vm527, %v526
  %s532 = scalar_lea.vmem %s1, 14
  %533 = vst.msk [vmem:[%s532] ss:$16 sm:$0x30] %vm527, %v526
  %s534 = scalar_lea.vmem %s1, 14
  %535 = vst.msk [vmem:[%s534] ss:$16 sm:$0xc0] %vm527, %v526
  %s536 = scalar_lea.vmem %s0, 8
  %v537 = vld [vmem:[%s536] sm:$0xff]
  %538 = vrot.lane.b32.xlu0 %v537, 114
  %v539 = vpop.permute.xlu0 %538
  %vm540 = vcmask 7168
  %s541 = scalar_lea.vmem %s1, 142
  %542 = vst.msk [vmem:[%s541] ss:$16 sm:$0x3] %vm540, %v539
  %s543 = scalar_lea.vmem %s1, 142
  %544 = vst.msk [vmem:[%s543] ss:$16 sm:$0xc] %vm540, %v539
  %s545 = scalar_lea.vmem %s1, 142
  %546 = vst.msk [vmem:[%s545] ss:$16 sm:$0x30] %vm540, %v539
  %s547 = scalar_lea.vmem %s1, 142
  %548 = vst.msk [vmem:[%s547] ss:$16 sm:$0xc0] %vm540, %v539
  %s549 = scalar_lea.vmem %s0, 16
  %v550 = vld [vmem:[%s549] sm:$0xff]
  %551 = vrot.lane.b32.xlu0 %v550, 114
  %v552 = vpop.permute.xlu0 %551
  %vm553 = vcmask 7168
  %s554 = scalar_lea.vmem %s1, 270
  %555 = vst.msk [vmem:[%s554] ss:$16 sm:$0x3] %vm553, %v552
  %s556 = scalar_lea.vmem %s1, 270
  %557 = vst.msk [vmem:[%s556] ss:$16 sm:$0xc] %vm553, %v552
  %s558 = scalar_lea.vmem %s1, 270
  %559 = vst.msk [vmem:[%s558] ss:$16 sm:$0x30] %vm553, %v552
  %s560 = scalar_lea.vmem %s1, 270
  %561 = vst.msk [vmem:[%s560] ss:$16 sm:$0xc0] %vm553, %v552
  %v562 = vld [vmem:[%s0] sm:$0xff]
  %563 = vrot.lane.b32.xlu0 %v562, 113
  %v564 = vpop.permute.xlu0 %563
  %vm565 = vcmask 7168
  %s566 = scalar_lea.vmem %s1, 15
  %567 = vst.msk [vmem:[%s566] ss:$16 sm:$0x3] %vm565, %v564
  %s568 = scalar_lea.vmem %s1, 15
  %569 = vst.msk [vmem:[%s568] ss:$16 sm:$0xc] %vm565, %v564
  %s570 = scalar_lea.vmem %s1, 15
  %571 = vst.msk [vmem:[%s570] ss:$16 sm:$0x30] %vm565, %v564
  %s572 = scalar_lea.vmem %s1, 15
  %573 = vst.msk [vmem:[%s572] ss:$16 sm:$0xc0] %vm565, %v564
  %s574 = scalar_lea.vmem %s0, 8
  %v575 = vld [vmem:[%s574] sm:$0xff]
  %576 = vrot.lane.b32.xlu0 %v575, 113
  %v577 = vpop.permute.xlu0 %576
  %vm578 = vcmask 7168
  %s579 = scalar_lea.vmem %s1, 143
  %580 = vst.msk [vmem:[%s579] ss:$16 sm:$0x3] %vm578, %v577
  %s581 = scalar_lea.vmem %s1, 143
  %582 = vst.msk [vmem:[%s581] ss:$16 sm:$0xc] %vm578, %v577
  %s583 = scalar_lea.vmem %s1, 143
  %584 = vst.msk [vmem:[%s583] ss:$16 sm:$0x30] %vm578, %v577
  %s585 = scalar_lea.vmem %s1, 143
  %586 = vst.msk [vmem:[%s585] ss:$16 sm:$0xc0] %vm578, %v577
  %s587 = scalar_lea.vmem %s0, 16
  %v588 = vld [vmem:[%s587] sm:$0xff]
  %589 = vrot.lane.b32.xlu0 %v588, 113
  %v590 = vpop.permute.xlu0 %589
  %vm591 = vcmask 7168
  %s592 = scalar_lea.vmem %s1, 271
  %593 = vst.msk [vmem:[%s592] ss:$16 sm:$0x3] %vm591, %v590
  %s594 = scalar_lea.vmem %s1, 271
  %595 = vst.msk [vmem:[%s594] ss:$16 sm:$0xc] %vm591, %v590
  %s596 = scalar_lea.vmem %s1, 271
  %597 = vst.msk [vmem:[%s596] ss:$16 sm:$0x30] %vm591, %v590
  %s598 = scalar_lea.vmem %s1, 271
  %599 = vst.msk [vmem:[%s598] ss:$16 sm:$0xc0] %vm591, %v590

// kernel: tile.18
$region0: #{tile.18}
  #allocation0 [shape = 's32[1]{0}', space=sflag, size = 0x4, scoped, tag = 'scoped memory for tile.18']
  %s0 = inlined_call_operand.vmem [shape: f32[32], index: 0, kind: input, shape index: {}]
  %s1 = inlined_call_operand.vmem [shape: f32[10,32], index: 1, kind: output, shape index: {}]
  // Predicated region
  $region2: #{tile.18} parent=0 // pred_check
    _
  $region3: #{tile.18} parent=0 // pred_check_branch
    %3 = sbr.rel (0) target = $region5
  $region4: #{tile.18} parent=0 // pred_region
    _
  $region5: #{tile.18} parent=0 // pred_fallthru
    _
  %v4 = vld [vmem:[%s0] ss:$0 sm:$0xff]
  %5 = vst [vmem:[%s1] sm:$0xff] %v4
  %s6 = scalar_lea.vmem %s1, 8
  %7 = vst [vmem:[%s6] sm:$0xff] %v4

// kernel: tile.1
$region0: #{tile.1}
  %s0 = inlined_call_operand.vmem [shape: f32[10,32], index: 0, kind: input, shape index: {}]
  %s1 = inlined_call_operand.vmem [shape: f32[320,1], index: 1, kind: output, shape index: {}]
  %v2 = vld [vmem:[%s0] sm:$0xff]
  %vm3 = vcmask 7168
  %4 = vst.msk [vmem:[%s1] sm:$0x1] %vm3, %v2
  %s5 = scalar_lea.vmem %s1, 31
  %6 = vst.msk [vmem:[%s5] sm:$0x2] %vm3, %v2
  %s7 = scalar_lea.vmem %s1, 62
  %8 = vst.msk [vmem:[%s7] sm:$0x4] %vm3, %v2
  %s9 = scalar_lea.vmem %s1, 93
  %10 = vst.msk [vmem:[%s9] sm:$0x8] %vm3, %v2
  %s11 = scalar_lea.vmem %s1, 124
  %12 = vst.msk [vmem:[%s11] sm:$0x10] %vm3, %v2
  %s13 = scalar_lea.vmem %s1, 155
  %14 = vst.msk [vmem:[%s13] sm:$0x20] %vm3, %v2
  %s15 = scalar_lea.vmem %s1, 186
  %16 = vst.msk [vmem:[%s15] sm:$0x40] %vm3, %v2
  %s17 = scalar_lea.vmem %s1, 217
  %18 = vst.msk [vmem:[%s17] sm:$0x80] %vm3, %v2
  %s19 = scalar_lea.vmem %s0, 8
  %v20 = vld [vmem:[%s19] sm:$0x3]
  %vm21 = vcmask 7168
  %s22 = scalar_lea.vmem %s1, 256
  %23 = vst.msk [vmem:[%s22] sm:$0x1] %vm21, %v20
  %s24 = scalar_lea.vmem %s1, 287
  %25 = vst.msk [vmem:[%s24] sm:$0x2] %vm21, %v20
  %v26 = vld [vmem:[%s0] sm:$0xff]
  %27 = vrot.lane.b32.xlu0 %v26, 127
  %v28 = vpop.permute.xlu0 %27
  %vm29 = vcmask 7168
  %s30 = scalar_lea.vmem %s1, 1
  %31 = vst.msk [vmem:[%s30] sm:$0x1] %vm29, %v28
  %s32 = scalar_lea.vmem %s1, 32
  %33 = vst.msk [vmem:[%s32] sm:$0x2] %vm29, %v28
  %s34 = scalar_lea.vmem %s1, 63
  %35 = vst.msk [vmem:[%s34] sm:$0x4] %vm29, %v28
  %s36 = scalar_lea.vmem %s1, 94
  %37 = vst.msk [vmem:[%s36] sm:$0x8] %vm29, %v28
  %s38 = scalar_lea.vmem %s1, 125
  %39 = vst.msk [vmem:[%s38] sm:$0x10] %vm29, %v28
  %s40 = scalar_lea.vmem %s1, 156
  %41 = vst.msk [vmem:[%s40] sm:$0x20] %vm29, %v28
  %s42 = scalar_lea.vmem %s1, 187
  %43 = vst.msk [vmem:[%s42] sm:$0x40] %vm29, %v28
  %s44 = scalar_lea.vmem %s1, 218
  %45 = vst.msk [vmem:[%s44] sm:$0x80] %vm29, %v28
  %s46 = scalar_lea.vmem %s0, 8
  %v47 = vld [vmem:[%s46] sm:$0x3]
  %48 = vrot.lane.b32.xlu0 %v47, 127
  %v49 = vpop.permute.xlu0 %48
  %vm50 = vcmask 7168
  %s51 = scalar_lea.vmem %s1, 257
  %52 = vst.msk [vmem:[%s51] sm:$0x1] %vm50, %v49
  %s53 = scalar_lea.vmem %s1, 288
  %54 = vst.msk [vmem:[%s53] sm:$0x2] %vm50, %v49
  %v55 = vld [vmem:[%s0] sm:$0xff]
  %56 = vrot.lane.b32.xlu0 %v55, 126
  %v57 = vpop.permute.xlu0 %56
  %vm58 = vcmask 7168
  %s59 = scalar_lea.vmem %s1, 2
  %60 = vst.msk [vmem:[%s59] sm:$0x1] %vm58, %v57
  %s61 = scalar_lea.vmem %s1, 33
  %62 = vst.msk [vmem:[%s61] sm:$0x2] %vm58, %v57
  %s63 = scalar_lea.vmem %s1, 64
  %64 = vst.msk [vmem:[%s63] sm:$0x4] %vm58, %v57
  %s65 = scalar_lea.vmem %s1, 95
  %66 = vst.msk [vmem:[%s65] sm:$0x8] %vm58, %v57
  %s67 = scalar_lea.vmem %s1, 126
  %68 = vst.msk [vmem:[%s67] sm:$0x10] %vm58, %v57
  %s69 = scalar_lea.vmem %s1, 157
  %70 = vst.msk [vmem:[%s69] sm:$0x20] %vm58, %v57
  %s71 = scalar_lea.vmem %s1, 188
  %72 = vst.msk [vmem:[%s71] sm:$0x40] %vm58, %v57
  %s73 = scalar_lea.vmem %s1, 219
  %74 = vst.msk [vmem:[%s73] sm:$0x80] %vm58, %v57
  %s75 = scalar_lea.vmem %s0, 8
  %v76 = vld [vmem:[%s75] sm:$0x3]
  %77 = vrot.lane.b32.xlu0 %v76, 126
  %v78 = vpop.permute.xlu0 %77
  %vm79 = vcmask 7168
  %s80 = scalar_lea.vmem %s1, 258
  %81 = vst.msk [vmem:[%s80] sm:$0x1] %vm79, %v78
  %s82 = scalar_lea.vmem %s1, 289
  %83 = vst.msk [vmem:[%s82] sm:$0x2] %vm79, %v78
  %v84 = vld [vmem:[%s0] sm:$0xff]
  %85 = vrot.lane.b32.xlu0 %v84, 125
  %v86 = vpop.permute.xlu0 %85
  %vm87 = vcmask 7168
  %s88 = scalar_lea.vmem %s1, 3
  %89 = vst.msk [vmem:[%s88] sm:$0x1] %vm87, %v86
  %s90 = scalar_lea.vmem %s1, 34
  %91 = vst.msk [vmem:[%s90] sm:$0x2] %vm87, %v86
  %s92 = scalar_lea.vmem %s1, 65
  %93 = vst.msk [vmem:[%s92] sm:$0x4] %vm87, %v86
  %s94 = scalar_lea.vmem %s1, 96
  %95 = vst.msk [vmem:[%s94] sm:$0x8] %vm87, %v86
  %s96 = scalar_lea.vmem %s1, 127
  %97 = vst.msk [vmem:[%s96] sm:$0x10] %vm87, %v86
  %s98 = scalar_lea.vmem %s1, 158
  %99 = vst.msk [vmem:[%s98] sm:$0x20] %vm87, %v86
  %s100 = scalar_lea.vmem %s1, 189
  %101 = vst.msk [vmem:[%s100] sm:$0x40] %vm87, %v86
  %s102 = scalar_lea.vmem %s1, 220
  %103 = vst.msk [vmem:[%s102] sm:$0x80] %vm87, %v86
  %s104 = scalar_lea.vmem %s0, 8
  %v105 = vld [vmem:[%s104] sm:$0x3]
  %106 = vrot.lane.b32.xlu0 %v105, 125
  %v107 = vpop.permute.xlu0 %106
  %vm108 = vcmask 7168
  %s109 = scalar_lea.vmem %s1, 259
  %110 = vst.msk [vmem:[%s109] sm:$0x1] %vm108, %v107
  %s111 = scalar_lea.vmem %s1, 290
  %112 = vst.msk [vmem:[%s111] sm:$0x2] %vm108, %v107
  %v113 = vld [vmem:[%s0] sm:$0xff]
  %114 = vrot.lane.b32.xlu0 %v113, 124
  %v115 = vpop.permute.xlu0 %114
  %vm116 = vcmask 7168
  %s117 = scalar_lea.vmem %s1, 4
  %118 = vst.msk [vmem:[%s117] sm:$0x1] %vm116, %v115
  %s119 = scalar_lea.vmem %s1, 35
  %120 = vst.msk [vmem:[%s119] sm:$0x2] %vm116, %v115
  %s121 = scalar_lea.vmem %s1, 66
  %122 = vst.msk [vmem:[%s121] sm:$0x4] %vm116, %v115
  %s123 = scalar_lea.vmem %s1, 97
  %124 = vst.msk [vmem:[%s123] sm:$0x8] %vm116, %v115
  %s125 = scalar_lea.vmem %s1, 128
  %126 = vst.msk [vmem:[%s125] sm:$0x10] %vm116, %v115
  %s127 = scalar_lea.vmem %s1, 159
  %128 = vst.msk [vmem:[%s127] sm:$0x20] %vm116, %v115
  %s129 = scalar_lea.vmem %s1, 190
  %130 = vst.msk [vmem:[%s129] sm:$0x40] %vm116, %v115
  %s131 = scalar_lea.vmem %s1, 221
  %132 = vst.msk [vmem:[%s131] sm:$0x80] %vm116, %v115
  %s133 = scalar_lea.vmem %s0, 8
  %v134 = vld [vmem:[%s133] sm:$0x3]
  %135 = vrot.lane.b32.xlu0 %v134, 124
  %v136 = vpop.permute.xlu0 %135
  %vm137 = vcmask 7168
  %s138 = scalar_lea.vmem %s1, 260
  %139 = vst.msk [vmem:[%s138] sm:$0x1] %vm137, %v136
  %s140 = scalar_lea.vmem %s1, 291
  %141 = vst.msk [vmem:[%s140] sm:$0x2] %vm137, %v136
  %v142 = vld [vmem:[%s0] sm:$0xff]
  %143 = vrot.lane.b32.xlu0 %v142, 123
  %v144 = vpop.permute.xlu0 %143
  %vm145 = vcmask 7168
  %s146 = scalar_lea.vmem %s1, 5
  %147 = vst.msk [vmem:[%s146] sm:$0x1] %vm145, %v144
  %s148 = scalar_lea.vmem %s1, 36
  %149 = vst.msk [vmem:[%s148] sm:$0x2] %vm145, %v144
  %s150 = scalar_lea.vmem %s1, 67
  %151 = vst.msk [vmem:[%s150] sm:$0x4] %vm145, %v144
  %s152 = scalar_lea.vmem %s1, 98
  %153 = vst.msk [vmem:[%s152] sm:$0x8] %vm145, %v144
  %s154 = scalar_lea.vmem %s1, 129
  %155 = vst.msk [vmem:[%s154] sm:$0x10] %vm145, %v144
  %s156 = scalar_lea.vmem %s1, 160
  %157 = vst.msk [vmem:[%s156] sm:$0x20] %vm145, %v144
  %s158 = scalar_lea.vmem %s1, 191
  %159 = vst.msk [vmem:[%s158] sm:$0x40] %vm145, %v144
  %s160 = scalar_lea.vmem %s1, 222
  %161 = vst.msk [vmem:[%s160] sm:$0x80] %vm145, %v144
  %s162 = scalar_lea.vmem %s0, 8
  %v163 = vld [vmem:[%s162] sm:$0x3]
  %164 = vrot.lane.b32.xlu0 %v163, 123
  %v165 = vpop.permute.xlu0 %164
  %vm166 = vcmask 7168
  %s167 = scalar_lea.vmem %s1, 261
  %168 = vst.msk [vmem:[%s167] sm:$0x1] %vm166, %v165
  %s169 = scalar_lea.vmem %s1, 292
  %170 = vst.msk [vmem:[%s169] sm:$0x2] %vm166, %v165
  %v171 = vld [vmem:[%s0] sm:$0xff]
  %172 = vrot.lane.b32.xlu0 %v171, 122
  %v173 = vpop.permute.xlu0 %172
  %vm174 = vcmask 7168
  %s175 = scalar_lea.vmem %s1, 6
  %176 = vst.msk [vmem:[%s175] sm:$0x1] %vm174, %v173
  %s177 = scalar_lea.vmem %s1, 37
  %178 = vst.msk [vmem:[%s177] sm:$0x2] %vm174, %v173
  %s179 = scalar_lea.vmem %s1, 68
  %180 = vst.msk [vmem:[%s179] sm:$0x4] %vm174, %v173
  %s181 = scalar_lea.vmem %s1, 99
  %182 = vst.msk [vmem:[%s181] sm:$0x8] %vm174, %v173
  %s183 = scalar_lea.vmem %s1, 130
  %184 = vst.msk [vmem:[%s183] sm:$0x10] %vm174, %v173
  %s185 = scalar_lea.vmem %s1, 161
  %186 = vst.msk [vmem:[%s185] sm:$0x20] %vm174, %v173
  %s187 = scalar_lea.vmem %s1, 192
  %188 = vst.msk [vmem:[%s187] sm:$0x40] %vm174, %v173
  %s189 = scalar_lea.vmem %s1, 223
  %190 = vst.msk [vmem:[%s189] sm:$0x80] %vm174, %v173
  %s191 = scalar_lea.vmem %s0, 8
  %v192 = vld [vmem:[%s191] sm:$0x3]
  %193 = vrot.lane.b32.xlu0 %v192, 122
  %v194 = vpop.permute.xlu0 %193
  %vm195 = vcmask 7168
  %s196 = scalar_lea.vmem %s1, 262
  %197 = vst.msk [vmem:[%s196] sm:$0x1] %vm195, %v194
  %s198 = scalar_lea.vmem %s1, 293
  %199 = vst.msk [vmem:[%s198] sm:$0x2] %vm195, %v194
  %v200 = vld [vmem:[%s0] sm:$0xff]
  %201 = vrot.lane.b32.xlu0 %v200, 121
  %v202 = vpop.permute.xlu0 %201
  %vm203 = vcmask 7168
  %s204 = scalar_lea.vmem %s1, 7
  %205 = vst.msk [vmem:[%s204] sm:$0x1] %vm203, %v202
  %s206 = scalar_lea.vmem %s1, 38
  %207 = vst.msk [vmem:[%s206] sm:$0x2] %vm203, %v202
  %s208 = scalar_lea.vmem %s1, 69
  %209 = vst.msk [vmem:[%s208] sm:$0x4] %vm203, %v202
  %s210 = scalar_lea.vmem %s1, 100
  %211 = vst.msk [vmem:[%s210] sm:$0x8] %vm203, %v202
  %s212 = scalar_lea.vmem %s1, 131
  %213 = vst.msk [vmem:[%s212] sm:$0x10] %vm203, %v202
  %s214 = scalar_lea.vmem %s1, 162
  %215 = vst.msk [vmem:[%s214] sm:$0x20] %vm203, %v202
  %s216 = scalar_lea.vmem %s1, 193
  %217 = vst.msk [vmem:[%s216] sm:$0x40] %vm203, %v202
  %s218 = scalar_lea.vmem %s1, 224
  %219 = vst.msk [vmem:[%s218] sm:$0x80] %vm203, %v202
  %s220 = scalar_lea.vmem %s0, 8
  %v221 = vld [vmem:[%s220] sm:$0x3]
  %222 = vrot.lane.b32.xlu0 %v221, 121
  %v223 = vpop.permute.xlu0 %222
  %vm224 = vcmask 7168
  %s225 = scalar_lea.vmem %s1, 263
  %226 = vst.msk [vmem:[%s225] sm:$0x1] %vm224, %v223
  %s227 = scalar_lea.vmem %s1, 294
  %228 = vst.msk [vmem:[%s227] sm:$0x2] %vm224, %v223
  %v229 = vld [vmem:[%s0] sm:$0xff]
  %230 = vrot.lane.b32.xlu0 %v229, 120
  %v231 = vpop.permute.xlu0 %230
  %vm232 = vcmask 7168
  %s233 = scalar_lea.vmem %s1, 8
  %234 = vst.msk [vmem:[%s233] sm:$0x1] %vm232, %v231
  %s235 = scalar_lea.vmem %s1, 39
  %236 = vst.msk [vmem:[%s235] sm:$0x2] %vm232, %v231
  %s237 = scalar_lea.vmem %s1, 70
  %238 = vst.msk [vmem:[%s237] sm:$0x4] %vm232, %v231
  %s239 = scalar_lea.vmem %s1, 101
  %240 = vst.msk [vmem:[%s239] sm:$0x8] %vm232, %v231
  %s241 = scalar_lea.vmem %s1, 132
  %242 = vst.msk [vmem:[%s241] sm:$0x10] %vm232, %v231
  %s243 = scalar_lea.vmem %s1, 163
  %244 = vst.msk [vmem:[%s243] sm:$0x20] %vm232, %v231
  %s245 = scalar_lea.vmem %s1, 194
  %246 = vst.msk [vmem:[%s245] sm:$0x40] %vm232, %v231
  %s247 = scalar_lea.vmem %s1, 225
  %248 = vst.msk [vmem:[%s247] sm:$0x80] %vm232, %v231
  %s249 = scalar_lea.vmem %s0, 8
  %v250 = vld [vmem:[%s249] sm:$0x3]
  %251 = vrot.lane.b32.xlu0 %v250, 120
  %v252 = vpop.permute.xlu0 %251
  %vm253 = vcmask 7168
  %s254 = scalar_lea.vmem %s1, 264
  %255 = vst.msk [vmem:[%s254] sm:$0x1] %vm253, %v252
  %s256 = scalar_lea.vmem %s1, 295
  %257 = vst.msk [vmem:[%s256] sm:$0x2] %vm253, %v252
  %v258 = vld [vmem:[%s0] sm:$0xff]
  %259 = vrot.lane.b32.xlu0 %v258, 119
  %v260 = vpop.permute.xlu0 %259
  %vm261 = vcmask 7168
  %s262 = scalar_lea.vmem %s1, 9
  %263 = vst.msk [vmem:[%s262] sm:$0x1] %vm261, %v260
  %s264 = scalar_lea.vmem %s1, 40
  %265 = vst.msk [vmem:[%s264] sm:$0x2] %vm261, %v260
  %s266 = scalar_lea.vmem %s1, 71
  %267 = vst.msk [vmem:[%s266] sm:$0x4] %vm261, %v260
  %s268 = scalar_lea.vmem %s1, 102
  %269 = vst.msk [vmem:[%s268] sm:$0x8] %vm261, %v260
  %s270 = scalar_lea.vmem %s1, 133
  %271 = vst.msk [vmem:[%s270] sm:$0x10] %vm261, %v260
  %s272 = scalar_lea.vmem %s1, 164
  %273 = vst.msk [vmem:[%s272] sm:$0x20] %vm261, %v260
  %s274 = scalar_lea.vmem %s1, 195
  %275 = vst.msk [vmem:[%s274] sm:$0x40] %vm261, %v260
  %s276 = scalar_lea.vmem %s1, 226
  %277 = vst.msk [vmem:[%s276] sm:$0x80] %vm261, %v260
  %s278 = scalar_lea.vmem %s0, 8
  %v279 = vld [vmem:[%s278] sm:$0x3]
  %280 = vrot.lane.b32.xlu0 %v279, 119
  %v281 = vpop.permute.xlu0 %280
  %vm282 = vcmask 7168
  %s283 = scalar_lea.vmem %s1, 265
  %284 = vst.msk [vmem:[%s283] sm:$0x1] %vm282, %v281
  %s285 = scalar_lea.vmem %s1, 296
  %286 = vst.msk [vmem:[%s285] sm:$0x2] %vm282, %v281
  %v287 = vld [vmem:[%s0] sm:$0xff]
  %288 = vrot.lane.b32.xlu0 %v287, 118
  %v289 = vpop.permute.xlu0 %288
  %vm290 = vcmask 7168
  %s291 = scalar_lea.vmem %s1, 10
  %292 = vst.msk [vmem:[%s291] sm:$0x1] %vm290, %v289
  %s293 = scalar_lea.vmem %s1, 41
  %294 = vst.msk [vmem:[%s293] sm:$0x2] %vm290, %v289
  %s295 = scalar_lea.vmem %s1, 72
  %296 = vst.msk [vmem:[%s295] sm:$0x4] %vm290, %v289
  %s297 = scalar_lea.vmem %s1, 103
  %298 = vst.msk [vmem:[%s297] sm:$0x8] %vm290, %v289
  %s299 = scalar_lea.vmem %s1, 134
  %300 = vst.msk [vmem:[%s299] sm:$0x10] %vm290, %v289
  %s301 = scalar_lea.vmem %s1, 165
  %302 = vst.msk [vmem:[%s301] sm:$0x20] %vm290, %v289
  %s303 = scalar_lea.vmem %s1, 196
  %304 = vst.msk [vmem:[%s303] sm:$0x40] %vm290, %v289
  %s305 = scalar_lea.vmem %s1, 227
  %306 = vst.msk [vmem:[%s305] sm:$0x80] %vm290, %v289
  %s307 = scalar_lea.vmem %s0, 8
  %v308 = vld [vmem:[%s307] sm:$0x3]
  %309 = vrot.lane.b32.xlu0 %v308, 118
  %v310 = vpop.permute.xlu0 %309
  %vm311 = vcmask 7168
  %s312 = scalar_lea.vmem %s1, 266
  %313 = vst.msk [vmem:[%s312] sm:$0x1] %vm311, %v310
  %s314 = scalar_lea.vmem %s1, 297
  %315 = vst.msk [vmem:[%s314] sm:$0x2] %vm311, %v310
  %v316 = vld [vmem:[%s0] sm:$0xff]
  %317 = vrot.lane.b32.xlu0 %v316, 117
  %v318 = vpop.permute.xlu0 %317
  %vm319 = vcmask 7168
  %s320 = scalar_lea.vmem %s1, 11
  %321 = vst.msk [vmem:[%s320] sm:$0x1] %vm319, %v318
  %s322 = scalar_lea.vmem %s1, 42
  %323 = vst.msk [vmem:[%s322] sm:$0x2] %vm319, %v318
  %s324 = scalar_lea.vmem %s1, 73
  %325 = vst.msk [vmem:[%s324] sm:$0x4] %vm319, %v318
  %s326 = scalar_lea.vmem %s1, 104
  %327 = vst.msk [vmem:[%s326] sm:$0x8] %vm319, %v318
  %s328 = scalar_lea.vmem %s1, 135
  %329 = vst.msk [vmem:[%s328] sm:$0x10] %vm319, %v318
  %s330 = scalar_lea.vmem %s1, 166
  %331 = vst.msk [vmem:[%s330] sm:$0x20] %vm319, %v318
  %s332 = scalar_lea.vmem %s1, 197
  %333 = vst.msk [vmem:[%s332] sm:$0x40] %vm319, %v318
  %s334 = scalar_lea.vmem %s1, 228
  %335 = vst.msk [vmem:[%s334] sm:$0x80] %vm319, %v318
  %s336 = scalar_lea.vmem %s0, 8
  %v337 = vld [vmem:[%s336] sm:$0x3]
  %338 = vrot.lane.b32.xlu0 %v337, 117
  %v339 = vpop.permute.xlu0 %338
  %vm340 = vcmask 7168
  %s341 = scalar_lea.vmem %s1, 267
  %342 = vst.msk [vmem:[%s341] sm:$0x1] %vm340, %v339
  %s343 = scalar_lea.vmem %s1, 298
  %344 = vst.msk [vmem:[%s343] sm:$0x2] %vm340, %v339
  %v345 = vld [vmem:[%s0] sm:$0xff]
  %346 = vrot.lane.b32.xlu0 %v345, 116
  %v347 = vpop.permute.xlu0 %346
  %vm348 = vcmask 7168
  %s349 = scalar_lea.vmem %s1, 12
  %350 = vst.msk [vmem:[%s349] sm:$0x1] %vm348, %v347
  %s351 = scalar_lea.vmem %s1, 43
  %352 = vst.msk [vmem:[%s351] sm:$0x2] %vm348, %v347
  %s353 = scalar_lea.vmem %s1, 74
  %354 = vst.msk [vmem:[%s353] sm:$0x4] %vm348, %v347
  %s355 = scalar_lea.vmem %s1, 105
  %356 = vst.msk [vmem:[%s355] sm:$0x8] %vm348, %v347
  %s357 = scalar_lea.vmem %s1, 136
  %358 = vst.msk [vmem:[%s357] sm:$0x10] %vm348, %v347
  %s359 = scalar_lea.vmem %s1, 167
  %360 = vst.msk [vmem:[%s359] sm:$0x20] %vm348, %v347
  %s361 = scalar_lea.vmem %s1, 198
  %362 = vst.msk [vmem:[%s361] sm:$0x40] %vm348, %v347
  %s363 = scalar_lea.vmem %s1, 229
  %364 = vst.msk [vmem:[%s363] sm:$0x80] %vm348, %v347
  %s365 = scalar_lea.vmem %s0, 8
  %v366 = vld [vmem:[%s365] sm:$0x3]
  %367 = vrot.lane.b32.xlu0 %v366, 116
  %v368 = vpop.permute.xlu0 %367
  %vm369 = vcmask 7168
  %s370 = scalar_lea.vmem %s1, 268
  %371 = vst.msk [vmem:[%s370] sm:$0x1] %vm369, %v368
  %s372 = scalar_lea.vmem %s1, 299
  %373 = vst.msk [vmem:[%s372] sm:$0x2] %vm369, %v368
  %v374 = vld [vmem:[%s0] sm:$0xff]
  %375 = vrot.lane.b32.xlu0 %v374, 115
  %v376 = vpop.permute.xlu0 %375
  %vm377 = vcmask 7168
  %s378 = scalar_lea.vmem %s1, 13
  %379 = vst.msk [vmem:[%s378] sm:$0x1] %vm377, %v376
  %s380 = scalar_lea.vmem %s1, 44
  %381 = vst.msk [vmem:[%s380] sm:$0x2] %vm377, %v376
  %s382 = scalar_lea.vmem %s1, 75
  %383 = vst.msk [vmem:[%s382] sm:$0x4] %vm377, %v376
  %s384 = scalar_lea.vmem %s1, 106
  %385 = vst.msk [vmem:[%s384] sm:$0x8] %vm377, %v376
  %s386 = scalar_lea.vmem %s1, 137
  %387 = vst.msk [vmem:[%s386] sm:$0x10] %vm377, %v376
  %s388 = scalar_lea.vmem %s1, 168
  %389 = vst.msk [vmem:[%s388] sm:$0x20] %vm377, %v376
  %s390 = scalar_lea.vmem %s1, 199
  %391 = vst.msk [vmem:[%s390] sm:$0x40] %vm377, %v376
  %s392 = scalar_lea.vmem %s1, 230
  %393 = vst.msk [vmem:[%s392] sm:$0x80] %vm377, %v376
  %s394 = scalar_lea.vmem %s0, 8
  %v395 = vld [vmem:[%s394] sm:$0x3]
  %396 = vrot.lane.b32.xlu0 %v395, 115
  %v397 = vpop.permute.xlu0 %396
  %vm398 = vcmask 7168
  %s399 = scalar_lea.vmem %s1, 269
  %400 = vst.msk [vmem:[%s399] sm:$0x1] %vm398, %v397
  %s401 = scalar_lea.vmem %s1, 300
  %402 = vst.msk [vmem:[%s401] sm:$0x2] %vm398, %v397
  %v403 = vld [vmem:[%s0] sm:$0xff]
  %404 = vrot.lane.b32.xlu0 %v403, 114
  %v405 = vpop.permute.xlu0 %404
  %vm406 = vcmask 7168
  %s407 = scalar_lea.vmem %s1, 14
  %408 = vst.msk [vmem:[%s407] sm:$0x1] %vm406, %v405
  %s409 = scalar_lea.vmem %s1, 45
  %410 = vst.msk [vmem:[%s409] sm:$0x2] %vm406, %v405
  %s411 = scalar_lea.vmem %s1, 76
  %412 = vst.msk [vmem:[%s411] sm:$0x4] %vm406, %v405
  %s413 = scalar_lea.vmem %s1, 107
  %414 = vst.msk [vmem:[%s413] sm:$0x8] %vm406, %v405
  %s415 = scalar_lea.vmem %s1, 138
  %416 = vst.msk [vmem:[%s415] sm:$0x10] %vm406, %v405
  %s417 = scalar_lea.vmem %s1, 169
  %418 = vst.msk [vmem:[%s417] sm:$0x20] %vm406, %v405
  %s419 = scalar_lea.vmem %s1, 200
  %420 = vst.msk [vmem:[%s419] sm:$0x40] %vm406, %v405
  %s421 = scalar_lea.vmem %s1, 231
  %422 = vst.msk [vmem:[%s421] sm:$0x80] %vm406, %v405
  %s423 = scalar_lea.vmem %s0, 8
  %v424 = vld [vmem:[%s423] sm:$0x3]
  %425 = vrot.lane.b32.xlu0 %v424, 114
  %v426 = vpop.permute.xlu0 %425
  %vm427 = vcmask 7168
  %s428 = scalar_lea.vmem %s1, 270
  %429 = vst.msk [vmem:[%s428] sm:$0x1] %vm427, %v426
  %s430 = scalar_lea.vmem %s1, 301
  %431 = vst.msk [vmem:[%s430] sm:$0x2] %vm427, %v426
  %v432 = vld [vmem:[%s0] sm:$0xff]
  %433 = vrot.lane.b32.xlu0 %v432, 113
  %v434 = vpop.permute.xlu0 %433
  %vm435 = vcmask 7168
  %s436 = scalar_lea.vmem %s1, 15
  %437 = vst.msk [vmem:[%s436] sm:$0x1] %vm435, %v434
  %s438 = scalar_lea.vmem %s1, 46
  %439 = vst.msk [vmem:[%s438] sm:$0x2] %vm435, %v434
  %s440 = scalar_lea.vmem %s1, 77
  %441 = vst.msk [vmem:[%s440] sm:$0x4] %vm435, %v434
  %s442 = scalar_lea.vmem %s1, 108
  %443 = vst.msk [vmem:[%s442] sm:$0x8] %vm435, %v434
  %s444 = scalar_lea.vmem %s1, 139
  %445 = vst.msk [vmem:[%s444] sm:$0x10] %vm435, %v434
  %s446 = scalar_lea.vmem %s1, 170
  %447 = vst.msk [vmem:[%s446] sm:$0x20] %vm435, %v434
  %s448 = scalar_lea.vmem %s1, 201
  %449 = vst.msk [vmem:[%s448] sm:$0x40] %vm435, %v434
  %s450 = scalar_lea.vmem %s1, 232
  %451 = vst.msk [vmem:[%s450] sm:$0x80] %vm435, %v434
  %s452 = scalar_lea.vmem %s0, 8
  %v453 = vld [vmem:[%s452] sm:$0x3]
  %454 = vrot.lane.b32.xlu0 %v453, 113
  %v455 = vpop.permute.xlu0 %454
  %vm456 = vcmask 7168
  %s457 = scalar_lea.vmem %s1, 271
  %458 = vst.msk [vmem:[%s457] sm:$0x1] %vm456, %v455
  %s459 = scalar_lea.vmem %s1, 302
  %460 = vst.msk [vmem:[%s459] sm:$0x2] %vm456, %v455
  %v461 = vld [vmem:[%s0] sm:$0xff]
  %462 = vrot.lane.b32.xlu0 %v461, 112
  %v463 = vpop.permute.xlu0 %462
  %vm464 = vcmask 7168
  %s465 = scalar_lea.vmem %s1, 16
  %466 = vst.msk [vmem:[%s465] sm:$0x1] %vm464, %v463
  %s467 = scalar_lea.vmem %s1, 47
  %468 = vst.msk [vmem:[%s467] sm:$0x2] %vm464, %v463
  %s469 = scalar_lea.vmem %s1, 78
  %470 = vst.msk [vmem:[%s469] sm:$0x4] %vm464, %v463
  %s471 = scalar_lea.vmem %s1, 109
  %472 = vst.msk [vmem:[%s471] sm:$0x8] %vm464, %v463
  %s473 = scalar_lea.vmem %s1, 140
  %474 = vst.msk [vmem:[%s473] sm:$0x10] %vm464, %v463
  %s475 = scalar_lea.vmem %s1, 171
  %476 = vst.msk [vmem:[%s475] sm:$0x20] %vm464, %v463
  %s477 = scalar_lea.vmem %s1, 202
  %478 = vst.msk [vmem:[%s477] sm:$0x40] %vm464, %v463
  %s479 = scalar_lea.vmem %s1, 233
  %480 = vst.msk [vmem:[%s479] sm:$0x80] %vm464, %v463
  %s481 = scalar_lea.vmem %s0, 8
  %v482 = vld [vmem:[%s481] sm:$0x3]
  %483 = vrot.lane.b32.xlu0 %v482, 112
  %v484 = vpop.permute.xlu0 %483
  %vm485 = vcmask 7168
  %s486 = scalar_lea.vmem %s1, 272
  %487 = vst.msk [vmem:[%s486] sm:$0x1] %vm485, %v484
  %s488 = scalar_lea.vmem %s1, 303
  %489 = vst.msk [vmem:[%s488] sm:$0x2] %vm485, %v484
  %v490 = vld [vmem:[%s0] sm:$0xff]
  %491 = vrot.lane.b32.xlu0 %v490, 111
  %v492 = vpop.permute.xlu0 %491
  %vm493 = vcmask 7168
  %s494 = scalar_lea.vmem %s1, 17
  %495 = vst.msk [vmem:[%s494] sm:$0x1] %vm493, %v492
  %s496 = scalar_lea.vmem %s1, 48
  %497 = vst.msk [vmem:[%s496] sm:$0x2] %vm493, %v492
  %s498 = scalar_lea.vmem %s1, 79
  %499 = vst.msk [vmem:[%s498] sm:$0x4] %vm493, %v492
  %s500 = scalar_lea.vmem %s1, 110
  %501 = vst.msk [vmem:[%s500] sm:$0x8] %vm493, %v492
  %s502 = scalar_lea.vmem %s1, 141
  %503 = vst.msk [vmem:[%s502] sm:$0x10] %vm493, %v492
  %s504 = scalar_lea.vmem %s1, 172
  %505 = vst.msk [vmem:[%s504] sm:$0x20] %vm493, %v492
  %s506 = scalar_lea.vmem %s1, 203
  %507 = vst.msk [vmem:[%s506] sm:$0x40] %vm493, %v492
  %s508 = scalar_lea.vmem %s1, 234
  %509 = vst.msk [vmem:[%s508] sm:$0x80] %vm493, %v492
  %s510 = scalar_lea.vmem %s0, 8
  %v511 = vld [vmem:[%s510] sm:$0x3]
  %512 = vrot.lane.b32.xlu0 %v511, 111
  %v513 = vpop.permute.xlu0 %512
  %vm514 = vcmask 7168
  %s515 = scalar_lea.vmem %s1, 273
  %516 = vst.msk [vmem:[%s515] sm:$0x1] %vm514, %v513
  %s517 = scalar_lea.vmem %s1, 304
  %518 = vst.msk [vmem:[%s517] sm:$0x2] %vm514, %v513
  %v519 = vld [vmem:[%s0] sm:$0xff]
  %520 = vrot.lane.b32.xlu0 %v519, 110
  %v521 = vpop.permute.xlu0 %520
  %vm522 = vcmask 7168
  %s523 = scalar_lea.vmem %s1, 18
  %524 = vst.msk [vmem:[%s523] sm:$0x1] %vm522, %v521
  %s525 = scalar_lea.vmem %s1, 49
  %526 = vst.msk [vmem:[%s525] sm:$0x2] %vm522, %v521
  %s527 = scalar_lea.vmem %s1, 80
  %528 = vst.msk [vmem:[%s527] sm:$0x4] %vm522, %v521
  %s529 = scalar_lea.vmem %s1, 111
  %530 = vst.msk [vmem:[%s529] sm:$0x8] %vm522, %v521
  %s531 = scalar_lea.vmem %s1, 142
  %532 = vst.msk [vmem:[%s531] sm:$0x10] %vm522, %v521
  %s533 = scalar_lea.vmem %s1, 173
  %534 = vst.msk [vmem:[%s533] sm:$0x20] %vm522, %v521
  %s535 = scalar_lea.vmem %s1, 204
  %536 = vst.msk [vmem:[%s535] sm:$0x40] %vm522, %v521
  %s537 = scalar_lea.vmem %s1, 235
  %538 = vst.msk [vmem:[%s537] sm:$0x80] %vm522, %v521
  %s539 = scalar_lea.vmem %s0, 8
  %v540 = vld [vmem:[%s539] sm:$0x3]
  %541 = vrot.lane.b32.xlu0 %v540, 110
  %v542 = vpop.permute.xlu0 %541
  %vm543 = vcmask 7168
  %s544 = scalar_lea.vmem %s1, 274
  %545 = vst.msk [vmem:[%s544] sm:$0x1] %vm543, %v542
  %s546 = scalar_lea.vmem %s1, 305
  %547 = vst.msk [vmem:[%s546] sm:$0x2] %vm543, %v542
  %v548 = vld [vmem:[%s0] sm:$0xff]
  %549 = vrot.lane.b32.xlu0 %v548, 109
  %v550 = vpop.permute.xlu0 %549
  %vm551 = vcmask 7168
  %s552 = scalar_lea.vmem %s1, 19
  %553 = vst.msk [vmem:[%s552] sm:$0x1] %vm551, %v550
  %s554 = scalar_lea.vmem %s1, 50
  %555 = vst.msk [vmem:[%s554] sm:$0x2] %vm551, %v550
  %s556 = scalar_lea.vmem %s1, 81
  %557 = vst.msk [vmem:[%s556] sm:$0x4] %vm551, %v550
  %s558 = scalar_lea.vmem %s1, 112
  %559 = vst.msk [vmem:[%s558] sm:$0x8] %vm551, %v550
  %s560 = scalar_lea.vmem %s1, 143
  %561 = vst.msk [vmem:[%s560] sm:$0x10] %vm551, %v550
  %s562 = scalar_lea.vmem %s1, 174
  %563 = vst.msk [vmem:[%s562] sm:$0x20] %vm551, %v550
  %s564 = scalar_lea.vmem %s1, 205
  %565 = vst.msk [vmem:[%s564] sm:$0x40] %vm551, %v550
  %s566 = scalar_lea.vmem %s1, 236
  %567 = vst.msk [vmem:[%s566] sm:$0x80] %vm551, %v550
  %s568 = scalar_lea.vmem %s0, 8
  %v569 = vld [vmem:[%s568] sm:$0x3]
  %570 = vrot.lane.b32.xlu0 %v569, 109
  %v571 = vpop.permute.xlu0 %570
  %vm572 = vcmask 7168
  %s573 = scalar_lea.vmem %s1, 275
  %574 = vst.msk [vmem:[%s573] sm:$0x1] %vm572, %v571
  %s575 = scalar_lea.vmem %s1, 306
  %576 = vst.msk [vmem:[%s575] sm:$0x2] %vm572, %v571
  %v577 = vld [vmem:[%s0] sm:$0xff]
  %578 = vrot.lane.b32.xlu0 %v577, 108
  %v579 = vpop.permute.xlu0 %578
  %vm580 = vcmask 7168
  %s581 = scalar_lea.vmem %s1, 20
  %582 = vst.msk [vmem:[%s581] sm:$0x1] %vm580, %v579
  %s583 = scalar_lea.vmem %s1, 51
  %584 = vst.msk [vmem:[%s583] sm:$0x2] %vm580, %v579
  %s585 = scalar_lea.vmem %s1, 82
  %586 = vst.msk [vmem:[%s585] sm:$0x4] %vm580, %v579
  %s587 = scalar_lea.vmem %s1, 113
  %588 = vst.msk [vmem:[%s587] sm:$0x8] %vm580, %v579
  %s589 = scalar_lea.vmem %s1, 144
  %590 = vst.msk [vmem:[%s589] sm:$0x10] %vm580, %v579
  %s591 = scalar_lea.vmem %s1, 175
  %592 = vst.msk [vmem:[%s591] sm:$0x20] %vm580, %v579
  %s593 = scalar_lea.vmem %s1, 206
  %594 = vst.msk [vmem:[%s593] sm:$0x40] %vm580, %v579
  %s595 = scalar_lea.vmem %s1, 237
  %596 = vst.msk [vmem:[%s595] sm:$0x80] %vm580, %v579
  %s597 = scalar_lea.vmem %s0, 8
  %v598 = vld [vmem:[%s597] sm:$0x3]
  %599 = vrot.lane.b32.xlu0 %v598, 108
  %v600 = vpop.permute.xlu0 %599
  %vm601 = vcmask 7168
  %s602 = scalar_lea.vmem %s1, 276
  %603 = vst.msk [vmem:[%s602] sm:$0x1] %vm601, %v600
  %s604 = scalar_lea.vmem %s1, 307
  %605 = vst.msk [vmem:[%s604] sm:$0x2] %vm601, %v600
  %v606 = vld [vmem:[%s0] sm:$0xff]
  %607 = vrot.lane.b32.xlu0 %v606, 107
  %v608 = vpop.permute.xlu0 %607
  %vm609 = vcmask 7168
  %s610 = scalar_lea.vmem %s1, 21
  %611 = vst.msk [vmem:[%s610] sm:$0x1] %vm609, %v608
  %s612 = scalar_lea.vmem %s1, 52
  %613 = vst.msk [vmem:[%s612] sm:$0x2] %vm609, %v608
  %s614 = scalar_lea.vmem %s1, 83
  %615 = vst.msk [vmem:[%s614] sm:$0x4] %vm609, %v608
  %s616 = scalar_lea.vmem %s1, 114
  %617 = vst.msk [vmem:[%s616] sm:$0x8] %vm609, %v608
  %s618 = scalar_lea.vmem %s1, 145
  %619 = vst.msk [vmem:[%s618] sm:$0x10] %vm609, %v608
  %s620 = scalar_lea.vmem %s1, 176
  %621 = vst.msk [vmem:[%s620] sm:$0x20] %vm609, %v608
  %s622 = scalar_lea.vmem %s1, 207
  %623 = vst.msk [vmem:[%s622] sm:$0x40] %vm609, %v608
  %s624 = scalar_lea.vmem %s1, 238
  %625 = vst.msk [vmem:[%s624] sm:$0x80] %vm609, %v608
  %s626 = scalar_lea.vmem %s0, 8
  %v627 = vld [vmem:[%s626] sm:$0x3]
  %628 = vrot.lane.b32.xlu0 %v627, 107
  %v629 = vpop.permute.xlu0 %628
  %vm630 = vcmask 7168
  %s631 = scalar_lea.vmem %s1, 277
  %632 = vst.msk [vmem:[%s631] sm:$0x1] %vm630, %v629
  %s633 = scalar_lea.vmem %s1, 308
  %634 = vst.msk [vmem:[%s633] sm:$0x2] %vm630, %v629
  %v635 = vld [vmem:[%s0] sm:$0xff]
  %636 = vrot.lane.b32.xlu0 %v635, 106
  %v637 = vpop.permute.xlu0 %636
  %vm638 = vcmask 7168
  %s639 = scalar_lea.vmem %s1, 22
  %640 = vst.msk [vmem:[%s639] sm:$0x1] %vm638, %v637
  %s641 = scalar_lea.vmem %s1, 53
  %642 = vst.msk [vmem:[%s641] sm:$0x2] %vm638, %v637
  %s643 = scalar_lea.vmem %s1, 84
  %644 = vst.msk [vmem:[%s643] sm:$0x4] %vm638, %v637
  %s645 = scalar_lea.vmem %s1, 115
  %646 = vst.msk [vmem:[%s645] sm:$0x8] %vm638, %v637
  %s647 = scalar_lea.vmem %s1, 146
  %648 = vst.msk [vmem:[%s647] sm:$0x10] %vm638, %v637
  %s649 = scalar_lea.vmem %s1, 177
  %650 = vst.msk [vmem:[%s649] sm:$0x20] %vm638, %v637
  %s651 = scalar_lea.vmem %s1, 208
  %652 = vst.msk [vmem:[%s651] sm:$0x40] %vm638, %v637
  %s653 = scalar_lea.vmem %s1, 239
  %654 = vst.msk [vmem:[%s653] sm:$0x80] %vm638, %v637
  %s655 = scalar_lea.vmem %s0, 8
  %v656 = vld [vmem:[%s655] sm:$0x3]
  %657 = vrot.lane.b32.xlu0 %v656, 106
  %v658 = vpop.permute.xlu0 %657
  %vm659 = vcmask 7168
  %s660 = scalar_lea.vmem %s1, 278
  %661 = vst.msk [vmem:[%s660] sm:$0x1] %vm659, %v658
  %s662 = scalar_lea.vmem %s1, 309
  %663 = vst.msk [vmem:[%s662] sm:$0x2] %vm659, %v658
  %v664 = vld [vmem:[%s0] sm:$0xff]
  %665 = vrot.lane.b32.xlu0 %v664, 105
  %v666 = vpop.permute.xlu0 %665
  %vm667 = vcmask 7168
  %s668 = scalar_lea.vmem %s1, 23
  %669 = vst.msk [vmem:[%s668] sm:$0x1] %vm667, %v666
  %s670 = scalar_lea.vmem %s1, 54
  %671 = vst.msk [vmem:[%s670] sm:$0x2] %vm667, %v666
  %s672 = scalar_lea.vmem %s1, 85
  %673 = vst.msk [vmem:[%s672] sm:$0x4] %vm667, %v666
  %s674 = scalar_lea.vmem %s1, 116
  %675 = vst.msk [vmem:[%s674] sm:$0x8] %vm667, %v666
  %s676 = scalar_lea.vmem %s1, 147
  %677 = vst.msk [vmem:[%s676] sm:$0x10] %vm667, %v666
  %s678 = scalar_lea.vmem %s1, 178
  %679 = vst.msk [vmem:[%s678] sm:$0x20] %vm667, %v666
  %s680 = scalar_lea.vmem %s1, 209
  %681 = vst.msk [vmem:[%s680] sm:$0x40] %vm667, %v666
  %s682 = scalar_lea.vmem %s1, 240
  %683 = vst.msk [vmem:[%s682] sm:$0x80] %vm667, %v666
  %s684 = scalar_lea.vmem %s0, 8
  %v685 = vld [vmem:[%s684] sm:$0x3]
  %686 = vrot.lane.b32.xlu0 %v685, 105
  %v687 = vpop.permute.xlu0 %686
  %vm688 = vcmask 7168
  %s689 = scalar_lea.vmem %s1, 279
  %690 = vst.msk [vmem:[%s689] sm:$0x1] %vm688, %v687
  %s691 = scalar_lea.vmem %s1, 310
  %692 = vst.msk [vmem:[%s691] sm:$0x2] %vm688, %v687
  %v693 = vld [vmem:[%s0] sm:$0xff]
  %694 = vrot.lane.b32.xlu0 %v693, 104
  %v695 = vpop.permute.xlu0 %694
  %vm696 = vcmask 7168
  %s697 = scalar_lea.vmem %s1, 24
  %698 = vst.msk [vmem:[%s697] sm:$0x1] %vm696, %v695
  %s699 = scalar_lea.vmem %s1, 55
  %700 = vst.msk [vmem:[%s699] sm:$0x2] %vm696, %v695
  %s701 = scalar_lea.vmem %s1, 86
  %702 = vst.msk [vmem:[%s701] sm:$0x4] %vm696, %v695
  %s703 = scalar_lea.vmem %s1, 117
  %704 = vst.msk [vmem:[%s703] sm:$0x8] %vm696, %v695
  %s705 = scalar_lea.vmem %s1, 148
  %706 = vst.msk [vmem:[%s705] sm:$0x10] %vm696, %v695
  %s707 = scalar_lea.vmem %s1, 179
  %708 = vst.msk [vmem:[%s707] sm:$0x20] %vm696, %v695
  %s709 = scalar_lea.vmem %s1, 210
  %710 = vst.msk [vmem:[%s709] sm:$0x40] %vm696, %v695
  %s711 = scalar_lea.vmem %s1, 241
  %712 = vst.msk [vmem:[%s711] sm:$0x80] %vm696, %v695
  %s713 = scalar_lea.vmem %s0, 8
  %v714 = vld [vmem:[%s713] sm:$0x3]
  %715 = vrot.lane.b32.xlu0 %v714, 104
  %v716 = vpop.permute.xlu0 %715
  %vm717 = vcmask 7168
  %s718 = scalar_lea.vmem %s1, 280
  %719 = vst.msk [vmem:[%s718] sm:$0x1] %vm717, %v716
  %s720 = scalar_lea.vmem %s1, 311
  %721 = vst.msk [vmem:[%s720] sm:$0x2] %vm717, %v716
  %v722 = vld [vmem:[%s0] sm:$0xff]
  %723 = vrot.lane.b32.xlu0 %v722, 103
  %v724 = vpop.permute.xlu0 %723
  %vm725 = vcmask 7168
  %s726 = scalar_lea.vmem %s1, 25
  %727 = vst.msk [vmem:[%s726] sm:$0x1] %vm725, %v724
  %s728 = scalar_lea.vmem %s1, 56
  %729 = vst.msk [vmem:[%s728] sm:$0x2] %vm725, %v724
  %s730 = scalar_lea.vmem %s1, 87
  %731 = vst.msk [vmem:[%s730] sm:$0x4] %vm725, %v724
  %s732 = scalar_lea.vmem %s1, 118
  %733 = vst.msk [vmem:[%s732] sm:$0x8] %vm725, %v724
  %s734 = scalar_lea.vmem %s1, 149
  %735 = vst.msk [vmem:[%s734] sm:$0x10] %vm725, %v724
  %s736 = scalar_lea.vmem %s1, 180
  %737 = vst.msk [vmem:[%s736] sm:$0x20] %vm725, %v724
  %s738 = scalar_lea.vmem %s1, 211
  %739 = vst.msk [vmem:[%s738] sm:$0x40] %vm725, %v724
  %s740 = scalar_lea.vmem %s1, 242
  %741 = vst.msk [vmem:[%s740] sm:$0x80] %vm725, %v724
  %s742 = scalar_lea.vmem %s0, 8
  %v743 = vld [vmem:[%s742] sm:$0x3]
  %744 = vrot.lane.b32.xlu0 %v743, 103
  %v745 = vpop.permute.xlu0 %744
  %vm746 = vcmask 7168
  %s747 = scalar_lea.vmem %s1, 281
  %748 = vst.msk [vmem:[%s747] sm:$0x1] %vm746, %v745
  %s749 = scalar_lea.vmem %s1, 312
  %750 = vst.msk [vmem:[%s749] sm:$0x2] %vm746, %v745
  %v751 = vld [vmem:[%s0] sm:$0xff]
  %752 = vrot.lane.b32.xlu0 %v751, 102
  %v753 = vpop.permute.xlu0 %752
  %vm754 = vcmask 7168
  %s755 = scalar_lea.vmem %s1, 26
  %756 = vst.msk [vmem:[%s755] sm:$0x1] %vm754, %v753
  %s757 = scalar_lea.vmem %s1, 57
  %758 = vst.msk [vmem:[%s757] sm:$0x2] %vm754, %v753
  %s759 = scalar_lea.vmem %s1, 88
  %760 = vst.msk [vmem:[%s759] sm:$0x4] %vm754, %v753
  %s761 = scalar_lea.vmem %s1, 119
  %762 = vst.msk [vmem:[%s761] sm:$0x8] %vm754, %v753
  %s763 = scalar_lea.vmem %s1, 150
  %764 = vst.msk [vmem:[%s763] sm:$0x10] %vm754, %v753
  %s765 = scalar_lea.vmem %s1, 181
  %766 = vst.msk [vmem:[%s765] sm:$0x20] %vm754, %v753
  %s767 = scalar_lea.vmem %s1, 212
  %768 = vst.msk [vmem:[%s767] sm:$0x40] %vm754, %v753
  %s769 = scalar_lea.vmem %s1, 243
  %770 = vst.msk [vmem:[%s769] sm:$0x80] %vm754, %v753
  %s771 = scalar_lea.vmem %s0, 8
  %v772 = vld [vmem:[%s771] sm:$0x3]
  %773 = vrot.lane.b32.xlu0 %v772, 102
  %v774 = vpop.permute.xlu0 %773
  %vm775 = vcmask 7168
  %s776 = scalar_lea.vmem %s1, 282
  %777 = vst.msk [vmem:[%s776] sm:$0x1] %vm775, %v774
  %s778 = scalar_lea.vmem %s1, 313
  %779 = vst.msk [vmem:[%s778] sm:$0x2] %vm775, %v774
  %v780 = vld [vmem:[%s0] sm:$0xff]
  %781 = vrot.lane.b32.xlu0 %v780, 101
  %v782 = vpop.permute.xlu0 %781
  %vm783 = vcmask 7168
  %s784 = scalar_lea.vmem %s1, 27
  %785 = vst.msk [vmem:[%s784] sm:$0x1] %vm783, %v782
  %s786 = scalar_lea.vmem %s1, 58
  %787 = vst.msk [vmem:[%s786] sm:$0x2] %vm783, %v782
  %s788 = scalar_lea.vmem %s1, 89
  %789 = vst.msk [vmem:[%s788] sm:$0x4] %vm783, %v782
  %s790 = scalar_lea.vmem %s1, 120
  %791 = vst.msk [vmem:[%s790] sm:$0x8] %vm783, %v782
  %s792 = scalar_lea.vmem %s1, 151
  %793 = vst.msk [vmem:[%s792] sm:$0x10] %vm783, %v782
  %s794 = scalar_lea.vmem %s1, 182
  %795 = vst.msk [vmem:[%s794] sm:$0x20] %vm783, %v782
  %s796 = scalar_lea.vmem %s1, 213
  %797 = vst.msk [vmem:[%s796] sm:$0x40] %vm783, %v782
  %s798 = scalar_lea.vmem %s1, 244
  %799 = vst.msk [vmem:[%s798] sm:$0x80] %vm783, %v782
  %s800 = scalar_lea.vmem %s0, 8
  %v801 = vld [vmem:[%s800] sm:$0x3]
  %802 = vrot.lane.b32.xlu0 %v801, 101
  %v803 = vpop.permute.xlu0 %802
  %vm804 = vcmask 7168
  %s805 = scalar_lea.vmem %s1, 283
  %806 = vst.msk [vmem:[%s805] sm:$0x1] %vm804, %v803
  %s807 = scalar_lea.vmem %s1, 314
  %808 = vst.msk [vmem:[%s807] sm:$0x2] %vm804, %v803
  %v809 = vld [vmem:[%s0] sm:$0xff]
  %810 = vrot.lane.b32.xlu0 %v809, 100
  %v811 = vpop.permute.xlu0 %810
  %vm812 = vcmask 7168
  %s813 = scalar_lea.vmem %s1, 28
  %814 = vst.msk [vmem:[%s813] sm:$0x1] %vm812, %v811
  %s815 = scalar_lea.vmem %s1, 59
  %816 = vst.msk [vmem:[%s815] sm:$0x2] %vm812, %v811
  %s817 = scalar_lea.vmem %s1, 90
  %818 = vst.msk [vmem:[%s817] sm:$0x4] %vm812, %v811
  %s819 = scalar_lea.vmem %s1, 121
  %820 = vst.msk [vmem:[%s819] sm:$0x8] %vm812, %v811
  %s821 = scalar_lea.vmem %s1, 152
  %822 = vst.msk [vmem:[%s821] sm:$0x10] %vm812, %v811
  %s823 = scalar_lea.vmem %s1, 183
  %824 = vst.msk [vmem:[%s823] sm:$0x20] %vm812, %v811
  %s825 = scalar_lea.vmem %s1, 214
  %826 = vst.msk [vmem:[%s825] sm:$0x40] %vm812, %v811
  %s827 = scalar_lea.vmem %s1, 245
  %828 = vst.msk [vmem:[%s827] sm:$0x80] %vm812, %v811
  %s829 = scalar_lea.vmem %s0, 8
  %v830 = vld [vmem:[%s829] sm:$0x3]
  %831 = vrot.lane.b32.xlu0 %v830, 100
  %v832 = vpop.permute.xlu0 %831
  %vm833 = vcmask 7168
  %s834 = scalar_lea.vmem %s1, 284
  %835 = vst.msk [vmem:[%s834] sm:$0x1] %vm833, %v832
  %s836 = scalar_lea.vmem %s1, 315
  %837 = vst.msk [vmem:[%s836] sm:$0x2] %vm833, %v832
  %v838 = vld [vmem:[%s0] sm:$0xff]
  %839 = vrot.lane.b32.xlu0 %v838, 99
  %v840 = vpop.permute.xlu0 %839
  %vm841 = vcmask 7168
  %s842 = scalar_lea.vmem %s1, 29
  %843 = vst.msk [vmem:[%s842] sm:$0x1] %vm841, %v840
  %s844 = scalar_lea.vmem %s1, 60
  %845 = vst.msk [vmem:[%s844] sm:$0x2] %vm841, %v840
  %s846 = scalar_lea.vmem %s1, 91
  %847 = vst.msk [vmem:[%s846] sm:$0x4] %vm841, %v840
  %s848 = scalar_lea.vmem %s1, 122
  %849 = vst.msk [vmem:[%s848] sm:$0x8] %vm841, %v840
  %s850 = scalar_lea.vmem %s1, 153
  %851 = vst.msk [vmem:[%s850] sm:$0x10] %vm841, %v840
  %s852 = scalar_lea.vmem %s1, 184
  %853 = vst.msk [vmem:[%s852] sm:$0x20] %vm841, %v840
  %s854 = scalar_lea.vmem %s1, 215
  %855 = vst.msk [vmem:[%s854] sm:$0x40] %vm841, %v840
  %s856 = scalar_lea.vmem %s1, 246
  %857 = vst.msk [vmem:[%s856] sm:$0x80] %vm841, %v840
  %s858 = scalar_lea.vmem %s0, 8
  %v859 = vld [vmem:[%s858] sm:$0x3]
  %860 = vrot.lane.b32.xlu0 %v859, 99
  %v861 = vpop.permute.xlu0 %860
  %vm862 = vcmask 7168
  %s863 = scalar_lea.vmem %s1, 285
  %864 = vst.msk [vmem:[%s863] sm:$0x1] %vm862, %v861
  %s865 = scalar_lea.vmem %s1, 316
  %866 = vst.msk [vmem:[%s865] sm:$0x2] %vm862, %v861
  %v867 = vld [vmem:[%s0] sm:$0xff]
  %868 = vrot.lane.b32.xlu0 %v867, 98
  %v869 = vpop.permute.xlu0 %868
  %vm870 = vcmask 7168
  %s871 = scalar_lea.vmem %s1, 30
  %872 = vst.msk [vmem:[%s871] sm:$0x1] %vm870, %v869
  %s873 = scalar_lea.vmem %s1, 61
  %874 = vst.msk [vmem:[%s873] sm:$0x2] %vm870, %v869
  %s875 = scalar_lea.vmem %s1, 92
  %876 = vst.msk [vmem:[%s875] sm:$0x4] %vm870, %v869
  %s877 = scalar_lea.vmem %s1, 123
  %878 = vst.msk [vmem:[%s877] sm:$0x8] %vm870, %v869
  %s879 = scalar_lea.vmem %s1, 154
  %880 = vst.msk [vmem:[%s879] sm:$0x10] %vm870, %v869
  %s881 = scalar_lea.vmem %s1, 185
  %882 = vst.msk [vmem:[%s881] sm:$0x20] %vm870, %v869
  %s883 = scalar_lea.vmem %s1, 216
  %884 = vst.msk [vmem:[%s883] sm:$0x40] %vm870, %v869
  %s885 = scalar_lea.vmem %s1, 247
  %886 = vst.msk [vmem:[%s885] sm:$0x80] %vm870, %v869
  %s887 = scalar_lea.vmem %s0, 8
  %v888 = vld [vmem:[%s887] sm:$0x3]
  %889 = vrot.lane.b32.xlu0 %v888, 98
  %v890 = vpop.permute.xlu0 %889
  %vm891 = vcmask 7168
  %s892 = scalar_lea.vmem %s1, 286
  %893 = vst.msk [vmem:[%s892] sm:$0x1] %vm891, %v890
  %s894 = scalar_lea.vmem %s1, 317
  %895 = vst.msk [vmem:[%s894] sm:$0x2] %vm891, %v890
  %v896 = vld [vmem:[%s0] sm:$0xff]
  %897 = vrot.lane.b32.xlu0 %v896, 97
  %v898 = vpop.permute.xlu0 %897
  %vm899 = vcmask 7168
  %s900 = scalar_lea.vmem %s1, 31
  %901 = vst.msk [vmem:[%s900] sm:$0x1] %vm899, %v898
  %s902 = scalar_lea.vmem %s1, 62
  %903 = vst.msk [vmem:[%s902] sm:$0x2] %vm899, %v898
  %s904 = scalar_lea.vmem %s1, 93
  %905 = vst.msk [vmem:[%s904] sm:$0x4] %vm899, %v898
  %s906 = scalar_lea.vmem %s1, 124
  %907 = vst.msk [vmem:[%s906] sm:$0x8] %vm899, %v898
  %s908 = scalar_lea.vmem %s1, 155
  %909 = vst.msk [vmem:[%s908] sm:$0x10] %vm899, %v898
  %s910 = scalar_lea.vmem %s1, 186
  %911 = vst.msk [vmem:[%s910] sm:$0x20] %vm899, %v898
  %s912 = scalar_lea.vmem %s1, 217
  %913 = vst.msk [vmem:[%s912] sm:$0x40] %vm899, %v898
  %s914 = scalar_lea.vmem %s1, 248
  %915 = vst.msk [vmem:[%s914] sm:$0x80] %vm899, %v898
  %s916 = scalar_lea.vmem %s0, 8
  %v917 = vld [vmem:[%s916] sm:$0x3]
  %918 = vrot.lane.b32.xlu0 %v917, 97
  %v919 = vpop.permute.xlu0 %918
  %vm920 = vcmask 7168
  %s921 = scalar_lea.vmem %s1, 287
  %922 = vst.msk [vmem:[%s921] sm:$0x1] %vm920, %v919
  %s923 = scalar_lea.vmem %s1, 318
  %924 = vst.msk [vmem:[%s923] sm:$0x2] %vm920, %v919

// kernel: convnet_forward.1
$region0: #{convnet_forward.1}
  #allocation0 [shape = 'u32[]', space=smem, size = 0x4, offset = 0x4, fixed_abs, tag = 'smem constant byte address 0x4 - core index']
  #allocation1 [shape = 'u32[144,128]{1,0:T(1,128)}', space=vmem, size = 0x12000, scoped, tag = 'internal scratch']
  %s0 = inlined_call_operand.vmem [shape: f32[2,28,28], index: 0, kind: input, shape index: {}]
  %s1 = inlined_call_operand.vmem [shape: f32[5,384,28], index: 1, kind: input, shape index: {}]
  %s2 = inlined_call_operand.vmem [shape: f32[384,1], index: 2, kind: input, shape index: {}]
  %s3 = inlined_call_operand.vmem [shape: f32[3,320,368], index: 3, kind: input, shape index: {}]
  %s4 = inlined_call_operand.vmem [shape: f32[320,1], index: 4, kind: input, shape index: {}]
  %s5 = inlined_call_operand.vmem [shape: f32[5,64,288], index: 5, kind: input, shape index: {}]
  %s6 = inlined_call_operand.vmem [shape: f32[64,1], index: 6, kind: input, shape index: {}]
  %s7 = inlined_call_operand.vmem [shape: f32[16,64], index: 7, kind: input, shape index: {}]
  %s8 = inlined_call_operand.vmem [shape: f32[16,1], index: 8, kind: input, shape index: {}]
  %s9 = inlined_call_operand.vmem [shape: f32[2,16,1], index: 9, kind: output, shape index: {}]
  %s10 = sld [smem:[#allocation0]]
  $region69: #{convnet_forward.1} parent=0
    _
  %s12 = ssub.s32 1, %s10
  %s13 = scalar_select 0, %s12, %s10
  loop: start=0, step=1, limit=4
  $region2: #{convnet_forward.1} parent=0 // loop_pre_header
    _
  $region3: #{convnet_forward.1} parent=0 // loop_header
    %s15 = sphi 0, %s19
    %p16 = scmp.ge.s32.totalorder %s15, 4
    %s25 = sphi 0, %s27
    %s28 = sphi 0, %s25
    %s29 = sphi 0, %s28
    %s45 = sphi 0, %s29
    %s49 = sphi 0, %s49
    %s51 = sphi 0, %s49
    %s52 = sphi 0, %s51
    %s66 = sphi 0, %s52
    %s70 = sphi 0, %s70
    %s72 = sphi 0, %s70
    %s73 = sphi 0, %s72
    %s87 = sphi 0, %s73
    %s91 = sphi 0, %s91
    %s93 = sphi 0, %s91
    %s94 = sphi 0, %s93
    %s108 = sphi 0, %s94
    %s112 = sphi 0, %s112
    %s114 = sphi 0, %s112
    %s115 = sphi 0, %s114
    %s129 = sphi 0, %s115
    %s133 = sphi 0, %s133
    %s135 = sphi 0, %s133
    %s136 = sphi 0, %s135
    %s150 = sphi 0, %s136
    %s154 = sphi 0, %s154
    %s156 = sphi 0, %s154
    %s157 = sphi 0, %s156
    %s171 = sphi 0, %s157
    %s175 = sphi 0, %s175
    %s177 = sphi 0, %s175
    %s178 = sphi 0, %s177
    %s192 = sphi 0, %s178
    %s196 = sphi 0, %s196
    %s198 = sphi 0, %s196
    %s199 = sphi 0, %s198
    %s213 = sphi 0, %s199
    %s219 = sphi 0, %s221
    %s222 = sphi 0, %s219
    %s223 = sphi 0, %s222
    %s239 = sphi 0, %s223
  $region4: #{convnet_forward.1} parent=0 // loop_header_branch
    %18 = sbr.rel (%p16) target = $region8
  $region5: #{convnet_forward.1} parent=0 // loop_body
    %s20 = ssub.s32 %s15, 1
    %s21 = ssub.s32 %s15, 2
    %s22 = sadd.s32 %s15, 1
    %s23 = ssub.s32 %s15, %s22
    %p24 = scmp.eq.s32.totalorder %s23, 0
    %s26 = sadd.s32 %s25, 1
    %s27 = scalar_select %p24, %s25, %s26
    %p30 = pneg %p24
    %p31 = scmp.eq.s32.totalorder %s15, 1
    %p32 = por %p30, %p31
    %p33 = scmp.ne.s32.totalorder %s25, %s28
    %p34 = scmp.eq.s32.totalorder %s15, 0
    %p35 = por %p33, %p34
    %p36 = scmp.ne.s32.totalorder %s25, %s28
    %p37 = scmp.eq.s32.totalorder %s20, 1
    %p38 = por %p36, %p37
    %p39 = scmp.ne.s32.totalorder %s28, %s29
    %p40 = scmp.eq.s32.totalorder %s20, 0
    %p41 = por %p39, %p40
    %p42 = scmp.ne.s32.totalorder %s28, %s29
    %p43 = scmp.eq.s32.totalorder %s21, 1
    %p44 = por %p42, %p43
    %p46 = scmp.ne.s32.totalorder %s29, %s45
    %p47 = scmp.eq.s32.totalorder %s21, 0
    %p48 = por %p46, %p47
    %s50 = sadd.s32 %s49, 1
    %p53 = scmp.eq.s32.totalorder %s15, 1
    %p54 = scmp.ne.s32.totalorder %s49, %s51
    %p55 = scmp.eq.s32.totalorder %s15, 0
    %p56 = por %p54, %p55
    %p57 = scmp.ne.s32.totalorder %s49, %s51
    %p58 = scmp.eq.s32.totalorder %s20, 1
    %p59 = por %p57, %p58
    %p60 = scmp.ne.s32.totalorder %s51, %s52
    %p61 = scmp.eq.s32.totalorder %s20, 0
    %p62 = por %p60, %p61
    %p63 = scmp.ne.s32.totalorder %s51, %s52
    %p64 = scmp.eq.s32.totalorder %s21, 1
    %p65 = por %p63, %p64
    %p67 = scmp.ne.s32.totalorder %s52, %s66
    %p68 = scmp.eq.s32.totalorder %s21, 0
    %p69 = por %p67, %p68
    %s71 = sadd.s32 %s70, 1
    %p74 = scmp.eq.s32.totalorder %s15, 1
    %p75 = scmp.ne.s32.totalorder %s70, %s72
    %p76 = scmp.eq.s32.totalorder %s15, 0
    %p77 = por %p75, %p76
    %p78 = scmp.ne.s32.totalorder %s70, %s72
    %p79 = scmp.eq.s32.totalorder %s20, 1
    %p80 = por %p78, %p79
    %p81 = scmp.ne.s32.totalorder %s72, %s73
    %p82 = scmp.eq.s32.totalorder %s20, 0
    %p83 = por %p81, %p82
    %p84 = scmp.ne.s32.totalorder %s72, %s73
    %p85 = scmp.eq.s32.totalorder %s21, 1
    %p86 = por %p84, %p85
    %p88 = scmp.ne.s32.totalorder %s73, %s87
    %p89 = scmp.eq.s32.totalorder %s21, 0
    %p90 = por %p88, %p89
    %s92 = sadd.s32 %s91, 1
    %p95 = scmp.eq.s32.totalorder %s15, 1
    %p96 = scmp.ne.s32.totalorder %s91, %s93
    %p97 = scmp.eq.s32.totalorder %s15, 0
    %p98 = por %p96, %p97
    %p99 = scmp.ne.s32.totalorder %s91, %s93
    %p100 = scmp.eq.s32.totalorder %s20, 1
    %p101 = por %p99, %p100
    %p102 = scmp.ne.s32.totalorder %s93, %s94
    %p103 = scmp.eq.s32.totalorder %s20, 0
    %p104 = por %p102, %p103
    %p105 = scmp.ne.s32.totalorder %s93, %s94
    %p106 = scmp.eq.s32.totalorder %s21, 1
    %p107 = por %p105, %p106
    %p109 = scmp.ne.s32.totalorder %s94, %s108
    %p110 = scmp.eq.s32.totalorder %s21, 0
    %p111 = por %p109, %p110
    %s113 = sadd.s32 %s112, 1
    %p116 = scmp.eq.s32.totalorder %s15, 1
    %p117 = scmp.ne.s32.totalorder %s112, %s114
    %p118 = scmp.eq.s32.totalorder %s15, 0
    %p119 = por %p117, %p118
    %p120 = scmp.ne.s32.totalorder %s112, %s114
    %p121 = scmp.eq.s32.totalorder %s20, 1
    %p122 = por %p120, %p121
    %p123 = scmp.ne.s32.totalorder %s114, %s115
    %p124 = scmp.eq.s32.totalorder %s20, 0
    %p125 = por %p123, %p124
    %p126 = scmp.ne.s32.totalorder %s114, %s115
    %p127 = scmp.eq.s32.totalorder %s21, 1
    %p128 = por %p126, %p127
    %p130 = scmp.ne.s32.totalorder %s115, %s129
    %p131 = scmp.eq.s32.totalorder %s21, 0
    %p132 = por %p130, %p131
    %s134 = sadd.s32 %s133, 1
    %p137 = scmp.eq.s32.totalorder %s15, 1
    %p138 = scmp.ne.s32.totalorder %s133, %s135
    %p139 = scmp.eq.s32.totalorder %s15, 0
    %p140 = por %p138, %p139
    %p141 = scmp.ne.s32.totalorder %s133, %s135
    %p142 = scmp.eq.s32.totalorder %s20, 1
    %p143 = por %p141, %p142
    %p144 = scmp.ne.s32.totalorder %s135, %s136
    %p145 = scmp.eq.s32.totalorder %s20, 0
    %p146 = por %p144, %p145
    %p147 = scmp.ne.s32.totalorder %s135, %s136
    %p148 = scmp.eq.s32.totalorder %s21, 1
    %p149 = por %p147, %p148
    %p151 = scmp.ne.s32.totalorder %s136, %s150
    %p152 = scmp.eq.s32.totalorder %s21, 0
    %p153 = por %p151, %p152
    %s155 = sadd.s32 %s154, 1
    %p158 = scmp.eq.s32.totalorder %s15, 1
    %p159 = scmp.ne.s32.totalorder %s154, %s156
    %p160 = scmp.eq.s32.totalorder %s15, 0
    %p161 = por %p159, %p160
    %p162 = scmp.ne.s32.totalorder %s154, %s156
    %p163 = scmp.eq.s32.totalorder %s20, 1
    %p164 = por %p162, %p163
    %p165 = scmp.ne.s32.totalorder %s156, %s157
    %p166 = scmp.eq.s32.totalorder %s20, 0
    %p167 = por %p165, %p166
    %p168 = scmp.ne.s32.totalorder %s156, %s157
    %p169 = scmp.eq.s32.totalorder %s21, 1
    %p170 = por %p168, %p169
    %p172 = scmp.ne.s32.totalorder %s157, %s171
    %p173 = scmp.eq.s32.totalorder %s21, 0
    %p174 = por %p172, %p173
    %s176 = sadd.s32 %s175, 1
    %p179 = scmp.eq.s32.totalorder %s15, 1
    %p180 = scmp.ne.s32.totalorder %s175, %s177
    %p181 = scmp.eq.s32.totalorder %s15, 0
    %p182 = por %p180, %p181
    %p183 = scmp.ne.s32.totalorder %s175, %s177
    %p184 = scmp.eq.s32.totalorder %s20, 1
    %p185 = por %p183, %p184
    %p186 = scmp.ne.s32.totalorder %s177, %s178
    %p187 = scmp.eq.s32.totalorder %s20, 0
    %p188 = por %p186, %p187
    %p189 = scmp.ne.s32.totalorder %s177, %s178
    %p190 = scmp.eq.s32.totalorder %s21, 1
    %p191 = por %p189, %p190
    %p193 = scmp.ne.s32.totalorder %s178, %s192
    %p194 = scmp.eq.s32.totalorder %s21, 0
    %p195 = por %p193, %p194
    %s197 = sadd.s32 %s196, 1
    %p200 = scmp.eq.s32.totalorder %s15, 1
    %p201 = scmp.ne.s32.totalorder %s196, %s198
    %p202 = scmp.eq.s32.totalorder %s15, 0
    %p203 = por %p201, %p202
    %p204 = scmp.ne.s32.totalorder %s196, %s198
    %p205 = scmp.eq.s32.totalorder %s20, 1
    %p206 = por %p204, %p205
    %p207 = scmp.ne.s32.totalorder %s198, %s199
    %p208 = scmp.eq.s32.totalorder %s20, 0
    %p209 = por %p207, %p208
    %p210 = scmp.ne.s32.totalorder %s198, %s199
    %p211 = scmp.eq.s32.totalorder %s21, 1
    %p212 = por %p210, %p211
    %p214 = scmp.ne.s32.totalorder %s199, %s213
    %p215 = scmp.eq.s32.totalorder %s21, 0
    %p216 = por %p214, %p215
    %s217 = ssub.s32 %s15, %s22
    %p218 = scmp.eq.s32.totalorder %s217, 0
    %s220 = sadd.s32 %s219, 1
    %s221 = scalar_select %p218, %s219, %s220
    %p224 = pneg %p218
    %p225 = scmp.eq.s32.totalorder %s15, 1
    %p226 = por %p224, %p225
    %p227 = scmp.ne.s32.totalorder %s219, %s222
    %p228 = scmp.eq.s32.totalorder %s15, 0
    %p229 = por %p227, %p228
    %p230 = scmp.ne.s32.totalorder %s219, %s222
    %p231 = scmp.eq.s32.totalorder %s20, 1
    %p232 = por %p230, %p231
    %p233 = scmp.ne.s32.totalorder %s222, %s223
    %p234 = scmp.eq.s32.totalorder %s20, 0
    %p235 = por %p233, %p234
    %p236 = scmp.ne.s32.totalorder %s222, %s223
    %p237 = scmp.eq.s32.totalorder %s21, 1
    %p238 = por %p236, %p237
    %p240 = scmp.ne.s32.totalorder %s223, %s239
    %p241 = scmp.eq.s32.totalorder %s21, 0
    %p242 = por %p240, %p241
    %p243 = scmp.le.s32.totalorder 1, %s15
    %p244 = scmp.lt.s32.totalorder %s15, 3
    %p245 = pnand %p243, %p244
    %p246 = pneg %p245
    // Predicated region
    $region9: #{convnet_forward.1} parent=5 // pred_check
      _
    $region10: #{convnet_forward.1} parent=5 // pred_check_branch
      %248 = sbr.rel (%p245) target = $region12
    $region11: #{convnet_forward.1} parent=5 // pred_region
      %s249 = ssub.s32 %s15, 1
      // Predicated region
      $region13: #{convnet_forward.1} parent=11 // pred_check
        %p250 = pneg %p62
      $region14: #{convnet_forward.1} parent=11 // pred_check_branch
        %252 = sbr.rel (%p250) target = $region16
      $region15: #{convnet_forward.1} parent=11 // pred_region
        _
      $region16: #{convnet_forward.1} parent=11 // pred_fallthru
        _
      // Predicated region
      $region17: #{convnet_forward.1} parent=11 // pred_check
        %p253 = pneg %p83
      $region18: #{convnet_forward.1} parent=11 // pred_check_branch
        %255 = sbr.rel (%p253) target = $region20
      $region19: #{convnet_forward.1} parent=11 // pred_region
        _
      $region20: #{convnet_forward.1} parent=11 // pred_fallthru
        _
      // Predicated region
      $region21: #{convnet_forward.1} parent=11 // pred_check
        %p256 = pneg %p104
      $region22: #{convnet_forward.1} parent=11 // pred_check_branch
        %258 = sbr.rel (%p256) target = $region24
      $region23: #{convnet_forward.1} parent=11 // pred_region
        _
      $region24: #{convnet_forward.1} parent=11 // pred_fallthru
        _
      // Predicated region
      $region25: #{convnet_forward.1} parent=11 // pred_check
        %p259 = pneg %p125
      $region26: #{convnet_forward.1} parent=11 // pred_check_branch
        %261 = sbr.rel (%p259) target = $region28
      $region27: #{convnet_forward.1} parent=11 // pred_region
        _
      $region28: #{convnet_forward.1} parent=11 // pred_fallthru
        _
      // Predicated region
      $region29: #{convnet_forward.1} parent=11 // pred_check
        %p262 = pneg %p146
      $region30: #{convnet_forward.1} parent=11 // pred_check_branch
        %264 = sbr.rel (%p262) target = $region32
      $region31: #{convnet_forward.1} parent=11 // pred_region
        _
      $region32: #{convnet_forward.1} parent=11 // pred_fallthru
        _
      // Predicated region
      $region33: #{convnet_forward.1} parent=11 // pred_check
        %p265 = pneg %p167
      $region34: #{convnet_forward.1} parent=11 // pred_check_branch
        %267 = sbr.rel (%p265) target = $region36
      $region35: #{convnet_forward.1} parent=11 // pred_region
        _
      $region36: #{convnet_forward.1} parent=11 // pred_fallthru
        _
      // Predicated region
      $region37: #{convnet_forward.1} parent=11 // pred_check
        %p268 = pneg %p188
      $region38: #{convnet_forward.1} parent=11 // pred_check_branch
        %270 = sbr.rel (%p268) target = $region40
      $region39: #{convnet_forward.1} parent=11 // pred_region
        _
      $region40: #{convnet_forward.1} parent=11 // pred_fallthru
        _
      // Predicated region
      $region41: #{convnet_forward.1} parent=11 // pred_check
        %p271 = pneg %p209
      $region42: #{convnet_forward.1} parent=11 // pred_check_branch
        %273 = sbr.rel (%p271) target = $region44
      $region43: #{convnet_forward.1} parent=11 // pred_region
        _
      $region44: #{convnet_forward.1} parent=11 // pred_fallthru
        _
    $region12: #{convnet_forward.1} parent=5 // pred_fallthru
      _
    %p274 = scmp.lt.s32.totalorder %s15, 2
    // Predicated region
    $region45: #{convnet_forward.1} parent=5 // pred_check
      %p275 = pneg %p274
    $region46: #{convnet_forward.1} parent=5 // pred_check_branch
      %277 = sbr.rel (%p275) target = $region48
    $region47: #{convnet_forward.1} parent=5 // pred_region
      // Predicated region
      $region49: #{convnet_forward.1} parent=47 // pred_check
        %p278 = pneg %p35
      $region50: #{convnet_forward.1} parent=47 // pred_check_branch
        %280 = sbr.rel (%p278) target = $region52
      $region51: #{convnet_forward.1} parent=47 // pred_region
        %p281 = scmp.lt.s32.totalorder %s15, 1
        %s282 = scalar_select %p281, %s15, 1
        %s283 = smul.addr %s282, 4
        %s284 = smul.addr %s283, 8
        %s285 = scalar_lea.vmem %s0, %s284
      $region52: #{convnet_forward.1} parent=47 // pred_fallthru
        _
    $region48: #{convnet_forward.1} parent=5 // pred_fallthru
      _
    %p286 = scmp.le.s32.totalorder 1, %s15
    %p287 = scmp.lt.s32.totalorder %s15, 3
    %p288 = pnand %p286, %p287
    %p289 = pneg %p288
    // Predicated region
    $region53: #{convnet_forward.1} parent=5 // pred_check
      _
    $region54: #{convnet_forward.1} parent=5 // pred_check_branch
      %291 = sbr.rel (%p288) target = $region56
    $region55: #{convnet_forward.1} parent=5 // pred_region
      %s292 = ssub.s32 %s15, 1
      %p293 = scmp.lt.s32.totalorder %s20, 1
      %s294 = scalar_select %p293, %s20, 1
      %s295 = smul.addr %s294, 4
      %s296 = smul.addr %s295, 8
      %s297 = scalar_lea.vmem %s0, %s296
      %p298 = pneg %p41
      %p299 = pneg %p38
      %p300 = pneg %p62
      %p301 = pneg %p59
      %p302 = pneg %p83
      %p303 = pneg %p80
      %p304 = pneg %p104
      %p305 = pneg %p101
      %p306 = pneg %p125
      %p307 = pneg %p122
      %p308 = pneg %p146
      %p309 = pneg %p143
      %p310 = pneg %p167
      %p311 = pneg %p164
      %p312 = pneg %p188
      %p313 = pneg %p185
      %p314 = pneg %p209
      %p315 = pneg %p206
      %p316 = pneg %p235
      %p317 = pneg %p232
      %p318 = scmp.lt.s32.totalorder %s20, 1
      %s319 = scalar_select %p318, %s20, 1
      %s320 = smul.addr %s319, 2
      %s321 = smul.addr %s320, 8
      %s322 = scalar_lea.vmem %s9, %s321
      %p323 = scmp.lt.s32.totalorder %s20, 1
      %s324 = scalar_select %p323, %s20, 1
      %s325 = smul.addr %s324, 4
      %s326 = smul.addr %s325, 8
      %s327 = scalar_lea.vmem %s0, %s326
      %p328 = scmp.lt.s32.totalorder %s20, 1
      %s329 = scalar_select %p328, %s20, 1
      %s330 = smul.addr %s329, 2
      %s331 = smul.addr %s330, 8
      %s332 = scalar_lea.vmem %s9, %s331
      %v333 = vld [vmem:[%s327] sm:$0xff]
      %v334 = vld [vmem:[%s327 + $0x8] sm:$0xff]
      %v335 = vld [vmem:[%s327 + $0x10] sm:$0xff]
      %v336 = vld [vmem:[%s327 + $0x18] sm:$0xf]
      %v337 = vld [vmem:[%s2] sm:$0xff]
      %v338 = vld [vmem:[%s2 + $0x8] sm:$0xff]
      %v339 = vld [vmem:[%s2 + $0x10] sm:$0xff]
      %v340 = vld [vmem:[%s2 + $0x18] sm:$0xff]
      %v341 = vld [vmem:[%s2 + $0x20] sm:$0xff]
      %v342 = vld [vmem:[%s2 + $0x28] sm:$0xff]
      %v343 = vld [vmem:[%s2 + $0x30] sm:$0xff]
      %v344 = vld [vmem:[%s2 + $0x38] sm:$0xff]
      %v345 = vld [vmem:[%s2 + $0x40] sm:$0xff]
      %v346 = vld [vmem:[%s2 + $0x48] sm:$0xff]
      %v347 = vld [vmem:[%s2 + $0x50] sm:$0xff]
      %v348 = vld [vmem:[%s2 + $0x58] sm:$0xff]
      %v349 = vld [vmem:[%s2 + $0x60] sm:$0xff]
      %v350 = vld [vmem:[%s2 + $0x68] sm:$0xff]
      %v351 = vld [vmem:[%s2 + $0x70] sm:$0xff]
      %v352 = vld [vmem:[%s2 + $0x78] sm:$0xff]
      %v353 = vld [vmem:[%s2 + $0x80] sm:$0xff]
      %v354 = vld [vmem:[%s2 + $0x88] sm:$0xff]
      %v355 = vld [vmem:[%s2 + $0x90] sm:$0xff]
      %v356 = vld [vmem:[%s2 + $0x98] sm:$0xff]
      %v357 = vld [vmem:[%s2 + $0xa0] sm:$0xff]
      %v358 = vld [vmem:[%s2 + $0xa8] sm:$0xff]
      %v359 = vld [vmem:[%s2 + $0xb0] sm:$0xff]
      %v360 = vld [vmem:[%s2 + $0xb8] sm:$0xff]
      %v361 = vld [vmem:[%s2 + $0xc0] sm:$0xff]
      %v362 = vld [vmem:[%s2 + $0xc8] sm:$0xff]
      %v363 = vld [vmem:[%s2 + $0xd0] sm:$0xff]
      %v364 = vld [vmem:[%s2 + $0xd8] sm:$0xff]
      %v365 = vld [vmem:[%s2 + $0xe0] sm:$0xff]
      %v366 = vld [vmem:[%s2 + $0xe8] sm:$0xff]
      %v367 = vld [vmem:[%s2 + $0xf0] sm:$0xff]
      %v368 = vld [vmem:[%s2 + $0xf8] sm:$0xff]
      %v369 = vld [vmem:[%s2 + $0x100] sm:$0xff]
      %v370 = vld [vmem:[%s2 + $0x108] sm:$0xff]
      %v371 = vld [vmem:[%s2 + $0x110] sm:$0xff]
      %v372 = vld [vmem:[%s2 + $0x118] sm:$0xff]
      %v373 = vld [vmem:[%s2 + $0x120] sm:$0xff]
      %v374 = vld [vmem:[%s2 + $0x128] sm:$0xff]
      %v375 = vld [vmem:[%s2 + $0x130] sm:$0xff]
      %v376 = vld [vmem:[%s2 + $0x138] sm:$0xff]
      %v377 = vld [vmem:[%s2 + $0x140] sm:$0xff]
      %v378 = vld [vmem:[%s2 + $0x148] sm:$0xff]
      %v379 = vld [vmem:[%s2 + $0x150] sm:$0xff]
      %v380 = vld [vmem:[%s2 + $0x158] sm:$0xff]
      %v381 = vld [vmem:[%s2 + $0x160] sm:$0xff]
      %v382 = vld [vmem:[%s2 + $0x168] sm:$0xff]
      %v383 = vld [vmem:[%s2 + $0x170] sm:$0xff]
      %v384 = vld [vmem:[%s2 + $0x178] sm:$0xff]
      %v385 = vld [vmem:[%s1] sm:$0xff]
      %v386 = vld [vmem:[%s1 + $0x8] sm:$0xff]
      %v387 = vld [vmem:[%s1 + $0x10] sm:$0xff]
      %v388 = vld [vmem:[%s1 + $0x18] sm:$0xff]
      %v389 = vld [vmem:[%s1 + $0x20] sm:$0xff]
      %v390 = vld [vmem:[%s1 + $0x28] sm:$0xff]
      %v391 = vld [vmem:[%s1 + $0x30] sm:$0xff]
      %v392 = vld [vmem:[%s1 + $0x38] sm:$0xff]
      %v393 = vld [vmem:[%s1 + $0x40] sm:$0xff]
      %v394 = vld [vmem:[%s1 + $0x48] sm:$0xff]
      %v395 = vld [vmem:[%s1 + $0x50] sm:$0xff]
      %v396 = vld [vmem:[%s1 + $0x58] sm:$0xff]
      %v397 = vld [vmem:[%s1 + $0x60] sm:$0xff]
      %v398 = vld [vmem:[%s1 + $0x68] sm:$0xff]
      %v399 = vld [vmem:[%s1 + $0x70] sm:$0xff]
      %v400 = vld [vmem:[%s1 + $0x78] sm:$0xff]
      %v401 = vld [vmem:[%s1 + $0x80] sm:$0xff]
      %v402 = vld [vmem:[%s1 + $0x88] sm:$0xff]
      %v403 = vld [vmem:[%s1 + $0x90] sm:$0xff]
      %v404 = vld [vmem:[%s1 + $0x98] sm:$0xff]
      %v405 = vld [vmem:[%s1 + $0xa0] sm:$0xff]
      %v406 = vld [vmem:[%s1 + $0xa8] sm:$0xff]
      %v407 = vld [vmem:[%s1 + $0xb0] sm:$0xff]
      %v408 = vld [vmem:[%s1 + $0xb8] sm:$0xff]
      %v409 = vld [vmem:[%s1 + $0xc0] sm:$0xff]
      %v410 = vld [vmem:[%s1 + $0xc8] sm:$0xff]
      %v411 = vld [vmem:[%s1 + $0xd0] sm:$0xff]
      %v412 = vld [vmem:[%s1 + $0xd8] sm:$0xff]
      %v413 = vld [vmem:[%s1 + $0xe0] sm:$0xff]
      %v414 = vld [vmem:[%s1 + $0xe8] sm:$0xff]
      %v415 = vld [vmem:[%s1 + $0xf0] sm:$0xff]
      %v416 = vld [vmem:[%s1 + $0xf8] sm:$0xff]
      %v417 = vld [vmem:[%s1 + $0x100] sm:$0xff]
      %v418 = vld [vmem:[%s1 + $0x108] sm:$0xff]
      %v419 = vld [vmem:[%s1 + $0x110] sm:$0xff]
      %v420 = vld [vmem:[%s1 + $0x118] sm:$0xff]
      %v421 = vld [vmem:[%s1 + $0x120] sm:$0xff]
      %v422 = vld [vmem:[%s1 + $0x128] sm:$0xff]
      %v423 = vld [vmem:[%s1 + $0x130] sm:$0xff]
      %v424 = vld [vmem:[%s1 + $0x138] sm:$0xff]
      %v425 = vld [vmem:[%s1 + $0x140] sm:$0xff]
      %v426 = vld [vmem:[%s1 + $0x148] sm:$0xff]
      %v427 = vld [vmem:[%s1 + $0x150] sm:$0xff]
      %v428 = vld [vmem:[%s1 + $0x158] sm:$0xff]
      %v429 = vld [vmem:[%s1 + $0x160] sm:$0xff]
      %v430 = vld [vmem:[%s1 + $0x168] sm:$0xff]
      %v431 = vld [vmem:[%s1 + $0x170] sm:$0xff]
      %v432 = vld [vmem:[%s1 + $0x178] sm:$0xff]
      %vm433 = vcmask 228352
      %v435 = vsel %vm433, %v385, 0
      %v438 = vsel %vm433, %v386, 0
      %v441 = vsel %vm433, %v387, 0
      %v444 = vsel %vm433, %v388, 0
      %v447 = vsel %vm433, %v389, 0
      %v450 = vsel %vm433, %v390, 0
      %v453 = vsel %vm433, %v391, 0
      %v456 = vsel %vm433, %v392, 0
      %v459 = vsel %vm433, %v393, 0
      %v462 = vsel %vm433, %v394, 0
      %v465 = vsel %vm433, %v395, 0
      %v468 = vsel %vm433, %v396, 0
      %v471 = vsel %vm433, %v397, 0
      %v474 = vsel %vm433, %v398, 0
      %v477 = vsel %vm433, %v399, 0
      %v480 = vsel %vm433, %v400, 0
      %v483 = vsel %vm433, %v401, 0
      %v486 = vsel %vm433, %v402, 0
      %v489 = vsel %vm433, %v403, 0
      %v492 = vsel %vm433, %v404, 0
      %v495 = vsel %vm433, %v405, 0
      %v498 = vsel %vm433, %v406, 0
      %v501 = vsel %vm433, %v407, 0
      %v504 = vsel %vm433, %v408, 0
      %v507 = vsel %vm433, %v409, 0
      %v510 = vsel %vm433, %v410, 0
      %v513 = vsel %vm433, %v411, 0
      %v516 = vsel %vm433, %v412, 0
      %v519 = vsel %vm433, %v413, 0
      %v522 = vsel %vm433, %v414, 0
      %v525 = vsel %vm433, %v415, 0
      %v528 = vsel %vm433, %v416, 0
      %v531 = vsel %vm433, %v417, 0
      %v534 = vsel %vm433, %v418, 0
      %v537 = vsel %vm433, %v419, 0
      %v540 = vsel %vm433, %v420, 0
      %v543 = vsel %vm433, %v421, 0
      %v546 = vsel %vm433, %v422, 0
      %v549 = vsel %vm433, %v423, 0
      %v552 = vsel %vm433, %v424, 0
      %v555 = vsel %vm433, %v425, 0
      %v558 = vsel %vm433, %v426, 0
      %v561 = vsel %vm433, %v427, 0
      %v564 = vsel %vm433, %v428, 0
      %v567 = vsel %vm433, %v429, 0
      %v570 = vsel %vm433, %v430, 0
      %v573 = vsel %vm433, %v431, 0
      %v576 = vsel %vm433, %v432, 0
      %vm578 = vcmask 1043456
      %v580 = vsel %vm578, %v336, 0
      %582 = vmatprep.subr.mxu0 0.0
      %583 = vmatpush1.msra.mxu0 0.0
      %584 = vmatprep.subr.mxu0 0.0
      %585 = vmatpush1.msra.mxu0 0.0
      %586 = vmatprep.subr.mxu0 0.0
      %587 = vmatpush1.msra.mxu0 0.0
      %588 = vmatprep.subr.mxu0 0.0
      %589 = vmatpush1.msra.mxu0 0.0
      %590 = vmatprep.subr.mxu0 0.0
      %591 = vmatpush1.msra.mxu0 0.0
      %592 = vmatprep.subr.mxu0 0.0
      %593 = vmatpush1.msra.mxu0 0.0
      %594 = vmatprep.subr.mxu0 0.0
      %595 = vmatpush1.msra.mxu0 0.0
      %596 = vmatprep.subr.mxu0 0.0
      %597 = vmatpush1.msra.mxu0 0.0
      %598 = vmatprep.subr.mxu0 0.0
      %599 = vmatpush1.msra.mxu0 0.0
      %600 = vmatprep.subr.mxu0 0.0
      %601 = vmatpush1.msra.mxu0 0.0
      %602 = vmatprep.subr.mxu0 0.0
      %603 = vmatpush1.msra.mxu0 0.0
      %604 = vmatprep.subr.mxu0 0.0
      %605 = vmatpush1.msra.mxu0 0.0
      %606 = vmatprep.subr.mxu0 0.0
      %607 = vmatpush1.msra.mxu0 %v580
      %608 = vmatprep.subr.mxu0 0.0
      %609 = vmatpush1.msra.mxu0 %v335
      %610 = vmatprep.subr.mxu0 0.0
      %611 = vmatpush1.msra.mxu0 %v334
      %612 = vmatprep.subr.mxu0 0.0
      %613 = vmatpush1.msra.mxu0 %v333
      %614 = vmatprep.subr.mxu0 0.0
      %615 = vmatpush2.msra.mxu0 0.0
      %616 = vmatprep.subr.mxu0 0.0
      %617 = vmatpush2.msra.mxu0 0.0
      %618 = vmatprep.subr.mxu0 0.0
      %619 = vmatpush2.msra.mxu0 0.0
      %620 = vmatprep.subr.mxu0 0.0
      %621 = vmatpush2.msra.mxu0 0.0
      %622 = vmatprep.subr.mxu0 0.0
      %623 = vmatpush2.msra.mxu0 0.0
      %624 = vmatprep.subr.mxu0 0.0
      %625 = vmatpush2.msra.mxu0 0.0
      %626 = vmatprep.subr.mxu0 0.0
      %627 = vmatpush2.msra.mxu0 0.0
      %628 = vmatprep.subr.mxu0 0.0
      %629 = vmatpush2.msra.mxu0 0.0
      %630 = vmatprep.subr.mxu0 0.0
      %631 = vmatpush2.msra.mxu0 0.0
      %632 = vmatprep.subr.mxu0 0.0
      %633 = vmatpush2.msra.mxu0 0.0
      %634 = vmatprep.subr.mxu0 0.0
      %635 = vmatpush2.msra.mxu0 0.0
      %636 = vmatprep.subr.mxu0 0.0
      %637 = vmatpush2.msra.mxu0 0.0
      %638 = vmatprep.subr.mxu0 0.0
      %639 = vmatpush2.msra.mxu0 0.0
      %640 = vmatprep.subr.mxu0 0.0
      %641 = vmatpush2.msra.mxu0 0.0
      %642 = vmatprep.subr.mxu0 0.0
      %643 = vmatpush2.msra.mxu0 0.0
      %644 = vmatprep.subr.mxu0 0.0
      %645 = vmatpush2.msra.mxu0 0.0
      %646 = vmatprep.mubr.f32.mxu0 0.0
      %647 = vmatmul.mubr.f32.gmra.mxu0 %v435
      %v648 = vpop.f32.mrf.mxu0
      %v649 = vadd.f32 0.0, %v648
      %v650 = vpop.f32.mrf.mxu0
      %651 = vmatprep.mubr.f32.mxu0 0.0
      %652 = vmatmul.mubr.f32.gmra.mxu0 %v438
      %v653 = vpop.f32.mrf.mxu0
      %v654 = vadd.f32 0.0, %v653
      %v655 = vpop.f32.mrf.mxu0
      %656 = vmatprep.mubr.f32.mxu0 0.0
      %657 = vmatmul.mubr.f32.gmra.mxu0 %v441
      %v658 = vpop.f32.mrf.mxu0
      %v659 = vadd.f32 0.0, %v658
      %v660 = vpop.f32.mrf.mxu0
      %661 = vmatprep.mubr.f32.mxu0 0.0
      %662 = vmatmul.mubr.f32.gmra.mxu0 %v444
      %v663 = vpop.f32.mrf.mxu0
      %v664 = vadd.f32 0.0, %v663
      %v665 = vpop.f32.mrf.mxu0
      %666 = vmatprep.mubr.f32.mxu0 0.0
      %667 = vmatmul.mubr.f32.gmra.mxu0 %v447
      %v668 = vpop.f32.mrf.mxu0
      %v669 = vadd.f32 0.0, %v668
      %v670 = vpop.f32.mrf.mxu0
      %671 = vmatprep.mubr.f32.mxu0 0.0
      %672 = vmatmul.mubr.f32.gmra.mxu0 %v450
      %v673 = vpop.f32.mrf.mxu0
      %v674 = vadd.f32 0.0, %v673
      %v675 = vpop.f32.mrf.mxu0
      %676 = vmatprep.mubr.f32.mxu0 0.0
      %677 = vmatmul.mubr.f32.gmra.mxu0 %v453
      %v678 = vpop.f32.mrf.mxu0
      %v679 = vadd.f32 0.0, %v678
      %v680 = vpop.f32.mrf.mxu0
      %681 = vmatprep.mubr.f32.mxu0 0.0
      %682 = vmatmul.mubr.f32.gmra.mxu0 %v456
      %v683 = vpop.f32.mrf.mxu0
      %v684 = vadd.f32 0.0, %v683
      %v685 = vpop.f32.mrf.mxu0
      %686 = vmatprep.mubr.f32.mxu0 0.0
      %687 = vmatmul.mubr.f32.gmra.mxu0 %v459
      %v688 = vpop.f32.mrf.mxu0
      %v689 = vadd.f32 0.0, %v688
      %v690 = vpop.f32.mrf.mxu0
      %691 = vmatprep.mubr.f32.mxu0 0.0
      %692 = vmatmul.mubr.f32.gmra.mxu0 %v462
      %v693 = vpop.f32.mrf.mxu0
      %v694 = vadd.f32 0.0, %v693
      %v695 = vpop.f32.mrf.mxu0
      %696 = vmatprep.mubr.f32.mxu0 0.0
      %697 = vmatmul.mubr.f32.gmra.mxu0 %v465
      %v698 = vpop.f32.mrf.mxu0
      %v699 = vadd.f32 0.0, %v698
      %v700 = vpop.f32.mrf.mxu0
      %701 = vmatprep.mubr.f32.mxu0 0.0
      %702 = vmatmul.mubr.f32.gmra.mxu0 %v468
      %v703 = vpop.f32.mrf.mxu0
      %v704 = vadd.f32 0.0, %v703
      %v705 = vpop.f32.mrf.mxu0
      %706 = vmatprep.mubr.f32.mxu0 0.0
      %707 = vmatmul.mubr.f32.gmra.mxu0 %v471
      %v708 = vpop.f32.mrf.mxu0
      %v709 = vadd.f32 0.0, %v708
      %v710 = vpop.f32.mrf.mxu0
      %711 = vmatprep.mubr.f32.mxu0 0.0
      %712 = vmatmul.mubr.f32.gmra.mxu0 %v474
      %v713 = vpop.f32.mrf.mxu0
      %v714 = vadd.f32 0.0, %v713
      %v715 = vpop.f32.mrf.mxu0
      %716 = vmatprep.mubr.f32.mxu0 0.0
      %717 = vmatmul.mubr.f32.gmra.mxu0 %v477
      %v718 = vpop.f32.mrf.mxu0
      %v719 = vadd.f32 0.0, %v718
      %v720 = vpop.f32.mrf.mxu0
      %721 = vmatprep.mubr.f32.mxu0 0.0
      %722 = vmatmul.mubr.f32.gmra.mxu0 %v480
      %v723 = vpop.f32.mrf.mxu0
      %v724 = vadd.f32 0.0, %v723
      %v725 = vpop.f32.mrf.mxu0
      %726 = vmatprep.mubr.f32.mxu0 0.0
      %727 = vmatmul.mubr.f32.gmra.mxu0 %v483
      %v728 = vpop.f32.mrf.mxu0
      %v729 = vadd.f32 0.0, %v728
      %v730 = vpop.f32.mrf.mxu0
      %731 = vmatprep.mubr.f32.mxu0 0.0
      %732 = vmatmul.mubr.f32.gmra.mxu0 %v486
      %v733 = vpop.f32.mrf.mxu0
      %v734 = vadd.f32 0.0, %v733
      %v735 = vpop.f32.mrf.mxu0
      %736 = vmatprep.mubr.f32.mxu0 0.0
      %737 = vmatmul.mubr.f32.gmra.mxu0 %v489
      %v738 = vpop.f32.mrf.mxu0
      %v739 = vadd.f32 0.0, %v738
      %v740 = vpop.f32.mrf.mxu0
      %741 = vmatprep.mubr.f32.mxu0 0.0
      %742 = vmatmul.mubr.f32.gmra.mxu0 %v492
      %v743 = vpop.f32.mrf.mxu0
      %v744 = vadd.f32 0.0, %v743
      %v745 = vpop.f32.mrf.mxu0
      %746 = vmatprep.mubr.f32.mxu0 0.0
      %747 = vmatmul.mubr.f32.gmra.mxu0 %v495
      %v748 = vpop.f32.mrf.mxu0
      %v749 = vadd.f32 0.0, %v748
      %v750 = vpop.f32.mrf.mxu0
      %751 = vmatprep.mubr.f32.mxu0 0.0
      %752 = vmatmul.mubr.f32.gmra.mxu0 %v498
      %v753 = vpop.f32.mrf.mxu0
      %v754 = vadd.f32 0.0, %v753
      %v755 = vpop.f32.mrf.mxu0
      %756 = vmatprep.mubr.f32.mxu0 0.0
      %757 = vmatmul.mubr.f32.gmra.mxu0 %v501
      %v758 = vpop.f32.mrf.mxu0
      %v759 = vadd.f32 0.0, %v758
      %v760 = vpop.f32.mrf.mxu0
      %761 = vmatprep.mubr.f32.mxu0 0.0
      %762 = vmatmul.mubr.f32.gmra.mxu0 %v504
      %v763 = vpop.f32.mrf.mxu0
      %v764 = vadd.f32 0.0, %v763
      %v765 = vpop.f32.mrf.mxu0
      %766 = vmatprep.mubr.f32.mxu0 0.0
      %767 = vmatmul.mubr.f32.gmra.mxu0 %v507
      %v768 = vpop.f32.mrf.mxu0
      %v769 = vadd.f32 0.0, %v768
      %v770 = vpop.f32.mrf.mxu0
      %771 = vmatprep.mubr.f32.mxu0 0.0
      %772 = vmatmul.mubr.f32.gmra.mxu0 %v510
      %v773 = vpop.f32.mrf.mxu0
      %v774 = vadd.f32 0.0, %v773
      %v775 = vpop.f32.mrf.mxu0
      %776 = vmatprep.mubr.f32.mxu0 0.0
      %777 = vmatmul.mubr.f32.gmra.mxu0 %v513
      %v778 = vpop.f32.mrf.mxu0
      %v779 = vadd.f32 0.0, %v778
      %v780 = vpop.f32.mrf.mxu0
      %781 = vmatprep.mubr.f32.mxu0 0.0
      %782 = vmatmul.mubr.f32.gmra.mxu0 %v516
      %v783 = vpop.f32.mrf.mxu0
      %v784 = vadd.f32 0.0, %v783
      %v785 = vpop.f32.mrf.mxu0
      %786 = vmatprep.mubr.f32.mxu0 0.0
      %787 = vmatmul.mubr.f32.gmra.mxu0 %v519
      %v788 = vpop.f32.mrf.mxu0
      %v789 = vadd.f32 0.0, %v788
      %v790 = vpop.f32.mrf.mxu0
      %791 = vmatprep.mubr.f32.mxu0 0.0
      %792 = vmatmul.mubr.f32.gmra.mxu0 %v522
      %v793 = vpop.f32.mrf.mxu0
      %v794 = vadd.f32 0.0, %v793
      %v795 = vpop.f32.mrf.mxu0
      %796 = vmatprep.mubr.f32.mxu0 0.0
      %797 = vmatmul.mubr.f32.gmra.mxu0 %v525
      %v798 = vpop.f32.mrf.mxu0
      %v799 = vadd.f32 0.0, %v798
      %v800 = vpop.f32.mrf.mxu0
      %801 = vmatprep.mubr.f32.mxu0 0.0
      %802 = vmatmul.mubr.f32.gmra.mxu0 %v528
      %v803 = vpop.f32.mrf.mxu0
      %v804 = vadd.f32 0.0, %v803
      %v805 = vpop.f32.mrf.mxu0
      %806 = vmatprep.mubr.f32.mxu0 0.0
      %807 = vmatmul.mubr.f32.gmra.mxu0 %v531
      %v808 = vpop.f32.mrf.mxu0
      %v809 = vadd.f32 0.0, %v808
      %v810 = vpop.f32.mrf.mxu0
      %811 = vmatprep.mubr.f32.mxu0 0.0
      %812 = vmatmul.mubr.f32.gmra.mxu0 %v534
      %v813 = vpop.f32.mrf.mxu0
      %v814 = vadd.f32 0.0, %v813
      %v815 = vpop.f32.mrf.mxu0
      %816 = vmatprep.mubr.f32.mxu0 0.0
      %817 = vmatmul.mubr.f32.gmra.mxu0 %v537
      %v818 = vpop.f32.mrf.mxu0
      %v819 = vadd.f32 0.0, %v818
      %v820 = vpop.f32.mrf.mxu0
      %821 = vmatprep.mubr.f32.mxu0 0.0
      %822 = vmatmul.mubr.f32.gmra.mxu0 %v540
      %v823 = vpop.f32.mrf.mxu0
      %v824 = vadd.f32 0.0, %v823
      %v825 = vpop.f32.mrf.mxu0
      %826 = vmatprep.mubr.f32.mxu0 0.0
      %827 = vmatmul.mubr.f32.gmra.mxu0 %v543
      %v828 = vpop.f32.mrf.mxu0
      %v829 = vadd.f32 0.0, %v828
      %v830 = vpop.f32.mrf.mxu0
      %831 = vmatprep.mubr.f32.mxu0 0.0
      %832 = vmatmul.mubr.f32.gmra.mxu0 %v546
      %v833 = vpop.f32.mrf.mxu0
      %v834 = vadd.f32 0.0, %v833
      %v835 = vpop.f32.mrf.mxu0
      %836 = vmatprep.mubr.f32.mxu0 0.0
      %837 = vmatmul.mubr.f32.gmra.mxu0 %v549
      %v838 = vpop.f32.mrf.mxu0
      %v839 = vadd.f32 0.0, %v838
      %v840 = vpop.f32.mrf.mxu0
      %841 = vmatprep.mubr.f32.mxu0 0.0
      %842 = vmatmul.mubr.f32.gmra.mxu0 %v552
      %v843 = vpop.f32.mrf.mxu0
      %v844 = vadd.f32 0.0, %v843
      %v845 = vpop.f32.mrf.mxu0
      %846 = vmatprep.mubr.f32.mxu0 0.0
      %847 = vmatmul.mubr.f32.gmra.mxu0 %v555
      %v848 = vpop.f32.mrf.mxu0
      %v849 = vadd.f32 0.0, %v848
      %v850 = vpop.f32.mrf.mxu0
      %851 = vmatprep.mubr.f32.mxu0 0.0
      %852 = vmatmul.mubr.f32.gmra.mxu0 %v558
      %v853 = vpop.f32.mrf.mxu0
      %v854 = vadd.f32 0.0, %v853
      %v855 = vpop.f32.mrf.mxu0
      %856 = vmatprep.mubr.f32.mxu0 0.0
      %857 = vmatmul.mubr.f32.gmra.mxu0 %v561
      %v858 = vpop.f32.mrf.mxu0
      %v859 = vadd.f32 0.0, %v858
      %v860 = vpop.f32.mrf.mxu0
      %861 = vmatprep.mubr.f32.mxu0 0.0
      %862 = vmatmul.mubr.f32.gmra.mxu0 %v564
      %v863 = vpop.f32.mrf.mxu0
      %v864 = vadd.f32 0.0, %v863
      %v865 = vpop.f32.mrf.mxu0
      %866 = vmatprep.mubr.f32.mxu0 0.0
      %867 = vmatmul.mubr.f32.gmra.mxu0 %v567
      %v868 = vpop.f32.mrf.mxu0
      %v869 = vadd.f32 0.0, %v868
      %v870 = vpop.f32.mrf.mxu0
      %871 = vmatprep.mubr.f32.mxu0 0.0
      %872 = vmatmul.mubr.f32.gmra.mxu0 %v570
      %v873 = vpop.f32.mrf.mxu0
      %v874 = vadd.f32 0.0, %v873
      %v875 = vpop.f32.mrf.mxu0
      %876 = vmatprep.mubr.f32.mxu0 0.0
      %877 = vmatmul.mubr.f32.gmra.mxu0 %v573
      %v878 = vpop.f32.mrf.mxu0
      %v879 = vadd.f32 0.0, %v878
      %v880 = vpop.f32.mrf.mxu0
      %881 = vmatprep.mubr.f32.mxu0 0.0
      %882 = vmatmul.mubr.f32.gmra.mxu0 %v576
      %v883 = vpop.f32.mrf.mxu0
      %v884 = vadd.f32 0.0, %v883
      %v885 = vpop.f32.mrf.mxu0
      %886 = vdwg.mxu0
      %888 = vset.pattern.permute.xlu0 0
      %889 = vperm.xlu0 %888, %v337
      %v890 = vpop.permute.xlu0 %889
      %893 = vset.pattern.permute.xlu0 0
      %894 = vperm.xlu0 %893, %v338
      %v895 = vpop.permute.xlu0 %894
      %898 = vset.pattern.permute.xlu0 0
      %899 = vperm.xlu0 %898, %v339
      %v900 = vpop.permute.xlu0 %899
      %903 = vset.pattern.permute.xlu0 0
      %904 = vperm.xlu0 %903, %v340
      %v905 = vpop.permute.xlu0 %904
      %908 = vset.pattern.permute.xlu0 0
      %909 = vperm.xlu0 %908, %v341
      %v910 = vpop.permute.xlu0 %909
      %913 = vset.pattern.permute.xlu0 0
      %914 = vperm.xlu0 %913, %v342
      %v915 = vpop.permute.xlu0 %914
      %918 = vset.pattern.permute.xlu0 0
      %919 = vperm.xlu0 %918, %v343
      %v920 = vpop.permute.xlu0 %919
      %923 = vset.pattern.permute.xlu0 0
      %924 = vperm.xlu0 %923, %v344
      %v925 = vpop.permute.xlu0 %924
      %928 = vset.pattern.permute.xlu0 0
      %929 = vperm.xlu0 %928, %v345
      %v930 = vpop.permute.xlu0 %929
      %933 = vset.pattern.permute.xlu0 0
      %934 = vperm.xlu0 %933, %v346
      %v935 = vpop.permute.xlu0 %934
      %938 = vset.pattern.permute.xlu0 0
      %939 = vperm.xlu0 %938, %v347
      %v940 = vpop.permute.xlu0 %939
      %943 = vset.pattern.permute.xlu0 0
      %944 = vperm.xlu0 %943, %v348
      %v945 = vpop.permute.xlu0 %944
      %948 = vset.pattern.permute.xlu0 0
      %949 = vperm.xlu0 %948, %v349
      %v950 = vpop.permute.xlu0 %949
      %953 = vset.pattern.permute.xlu0 0
      %954 = vperm.xlu0 %953, %v350
      %v955 = vpop.permute.xlu0 %954
      %958 = vset.pattern.permute.xlu0 0
      %959 = vperm.xlu0 %958, %v351
      %v960 = vpop.permute.xlu0 %959
      %963 = vset.pattern.permute.xlu0 0
      %964 = vperm.xlu0 %963, %v352
      %v965 = vpop.permute.xlu0 %964
      %968 = vset.pattern.permute.xlu0 0
      %969 = vperm.xlu0 %968, %v353
      %v970 = vpop.permute.xlu0 %969
      %973 = vset.pattern.permute.xlu0 0
      %974 = vperm.xlu0 %973, %v354
      %v975 = vpop.permute.xlu0 %974
      %978 = vset.pattern.permute.xlu0 0
      %979 = vperm.xlu0 %978, %v355
      %v980 = vpop.permute.xlu0 %979
      %983 = vset.pattern.permute.xlu0 0
      %984 = vperm.xlu0 %983, %v356
      %v985 = vpop.permute.xlu0 %984
      %988 = vset.pattern.permute.xlu0 0
      %989 = vperm.xlu0 %988, %v357
      %v990 = vpop.permute.xlu0 %989
      %993 = vset.pattern.permute.xlu0 0
      %994 = vperm.xlu0 %993, %v358
      %v995 = vpop.permute.xlu0 %994
      %998 = vset.pattern.permute.xlu0 0
      %999 = vperm.xlu0 %998, %v359
      %v1000 = vpop.permute.xlu0 %999
      %1003 = vset.pattern.permute.xlu0 0
      %1004 = vperm.xlu0 %1003, %v360
      %v1005 = vpop.permute.xlu0 %1004
      %1008 = vset.pattern.permute.xlu0 0
      %1009 = vperm.xlu0 %1008, %v361
      %v1010 = vpop.permute.xlu0 %1009
      %1013 = vset.pattern.permute.xlu0 0
      %1014 = vperm.xlu0 %1013, %v362
      %v1015 = vpop.permute.xlu0 %1014
      %1018 = vset.pattern.permute.xlu0 0
      %1019 = vperm.xlu0 %1018, %v363
      %v1020 = vpop.permute.xlu0 %1019
      %1023 = vset.pattern.permute.xlu0 0
      %1024 = vperm.xlu0 %1023, %v364
      %v1025 = vpop.permute.xlu0 %1024
      %1028 = vset.pattern.permute.xlu0 0
      %1029 = vperm.xlu0 %1028, %v365
      %v1030 = vpop.permute.xlu0 %1029
      %1033 = vset.pattern.permute.xlu0 0
      %1034 = vperm.xlu0 %1033, %v366
      %v1035 = vpop.permute.xlu0 %1034
      %1038 = vset.pattern.permute.xlu0 0
      %1039 = vperm.xlu0 %1038, %v367
      %v1040 = vpop.permute.xlu0 %1039
      %1043 = vset.pattern.permute.xlu0 0
      %1044 = vperm.xlu0 %1043, %v368
      %v1045 = vpop.permute.xlu0 %1044
      %1048 = vset.pattern.permute.xlu0 0
      %1049 = vperm.xlu0 %1048, %v369
      %v1050 = vpop.permute.xlu0 %1049
      %1053 = vset.pattern.permute.xlu0 0
      %1054 = vperm.xlu0 %1053, %v370
      %v1055 = vpop.permute.xlu0 %1054
      %1058 = vset.pattern.permute.xlu0 0
      %1059 = vperm.xlu0 %1058, %v371
      %v1060 = vpop.permute.xlu0 %1059
      %1063 = vset.pattern.permute.xlu0 0
      %1064 = vperm.xlu0 %1063, %v372
      %v1065 = vpop.permute.xlu0 %1064
      %1068 = vset.pattern.permute.xlu0 0
      %1069 = vperm.xlu0 %1068, %v373
      %v1070 = vpop.permute.xlu0 %1069
      %1073 = vset.pattern.permute.xlu0 0
      %1074 = vperm.xlu0 %1073, %v374
      %v1075 = vpop.permute.xlu0 %1074
      %1078 = vset.pattern.permute.xlu0 0
      %1079 = vperm.xlu0 %1078, %v375
      %v1080 = vpop.permute.xlu0 %1079
      %1083 = vset.pattern.permute.xlu0 0
      %1084 = vperm.xlu0 %1083, %v376
      %v1085 = vpop.permute.xlu0 %1084
      %1088 = vset.pattern.permute.xlu0 0
      %1089 = vperm.xlu0 %1088, %v377
      %v1090 = vpop.permute.xlu0 %1089
      %1093 = vset.pattern.permute.xlu0 0
      %1094 = vperm.xlu0 %1093, %v378
      %v1095 = vpop.permute.xlu0 %1094
      %1098 = vset.pattern.permute.xlu0 0
      %1099 = vperm.xlu0 %1098, %v379
      %v1100 = vpop.permute.xlu0 %1099
      %1103 = vset.pattern.permute.xlu0 0
      %1104 = vperm.xlu0 %1103, %v380
      %v1105 = vpop.permute.xlu0 %1104
      %1108 = vset.pattern.permute.xlu0 0
      %1109 = vperm.xlu0 %1108, %v381
      %v1110 = vpop.permute.xlu0 %1109
      %1113 = vset.pattern.permute.xlu0 0
      %1114 = vperm.xlu0 %1113, %v382
      %v1115 = vpop.permute.xlu0 %1114
      %1118 = vset.pattern.permute.xlu0 0
      %1119 = vperm.xlu0 %1118, %v383
      %v1120 = vpop.permute.xlu0 %1119
      %1123 = vset.pattern.permute.xlu0 0
      %1124 = vperm.xlu0 %1123, %v384
      %v1125 = vpop.permute.xlu0 %1124
      %v1127 = vadd.f32 %v890, %v649
      %v1128 = vadd.f32 %v895, %v654
      %v1129 = vadd.f32 %v900, %v659
      %v1130 = vadd.f32 %v905, %v664
      %v1131 = vadd.f32 %v910, %v669
      %v1132 = vadd.f32 %v915, %v674
      %v1133 = vadd.f32 %v920, %v679
      %v1134 = vadd.f32 %v925, %v684
      %v1135 = vadd.f32 %v930, %v689
      %v1136 = vadd.f32 %v935, %v694
      %v1137 = vadd.f32 %v940, %v699
      %v1138 = vadd.f32 %v945, %v704
      %v1139 = vadd.f32 %v950, %v709
      %v1140 = vadd.f32 %v955, %v714
      %v1141 = vadd.f32 %v960, %v719
      %v1142 = vadd.f32 %v965, %v724
      %v1143 = vadd.f32 %v970, %v729
      %v1144 = vadd.f32 %v975, %v734
      %v1145 = vadd.f32 %v980, %v739
      %v1146 = vadd.f32 %v985, %v744
      %v1147 = vadd.f32 %v990, %v749
      %v1148 = vadd.f32 %v995, %v754
      %v1149 = vadd.f32 %v1000, %v759
      %v1150 = vadd.f32 %v1005, %v764
      %v1151 = vadd.f32 %v1010, %v769
      %v1152 = vadd.f32 %v1015, %v774
      %v1153 = vadd.f32 %v1020, %v779
      %v1154 = vadd.f32 %v1025, %v784
      %v1155 = vadd.f32 %v1030, %v789
      %v1156 = vadd.f32 %v1035, %v794
      %v1157 = vadd.f32 %v1040, %v799
      %v1158 = vadd.f32 %v1045, %v804
      %v1159 = vadd.f32 %v1050, %v809
      %v1160 = vadd.f32 %v1055, %v814
      %v1161 = vadd.f32 %v1060, %v819
      %v1162 = vadd.f32 %v1065, %v824
      %v1163 = vadd.f32 %v1070, %v829
      %v1164 = vadd.f32 %v1075, %v834
      %v1165 = vadd.f32 %v1080, %v839
      %v1166 = vadd.f32 %v1085, %v844
      %v1167 = vadd.f32 %v1090, %v849
      %v1168 = vadd.f32 %v1095, %v854
      %v1169 = vadd.f32 %v1100, %v859
      %v1170 = vadd.f32 %v1105, %v864
      %v1171 = vadd.f32 %v1110, %v869
      %v1172 = vadd.f32 %v1115, %v874
      %v1173 = vadd.f32 %v1120, %v879
      %v1174 = vadd.f32 %v1125, %v884
      %s1175 = scalar_lea.vmem %s1, 384
      %v1176 = vld [vmem:[%s1175] sm:$0xff]
      %v1177 = vld [vmem:[%s1175 + $0x8] sm:$0xff]
      %v1178 = vld [vmem:[%s1175 + $0x10] sm:$0xff]
      %v1179 = vld [vmem:[%s1175 + $0x18] sm:$0xff]
      %v1180 = vld [vmem:[%s1175 + $0x20] sm:$0xff]
      %v1181 = vld [vmem:[%s1175 + $0x28] sm:$0xff]
      %v1182 = vld [vmem:[%s1175 + $0x30] sm:$0xff]
      %v1183 = vld [vmem:[%s1175 + $0x38] sm:$0xff]
      %v1184 = vld [vmem:[%s1175 + $0x40] sm:$0xff]
      %v1185 = vld [vmem:[%s1175 + $0x48] sm:$0xff]
      %v1186 = vld [vmem:[%s1175 + $0x50] sm:$0xff]
      %v1187 = vld [vmem:[%s1175 + $0x58] sm:$0xff]
      %v1188 = vld [vmem:[%s1175 + $0x60] sm:$0xff]
      %v1189 = vld [vmem:[%s1175 + $0x68] sm:$0xff]
      %v1190 = vld [vmem:[%s1175 + $0x70] sm:$0xff]
      %v1191 = vld [vmem:[%s1175 + $0x78] sm:$0xff]
      %v1192 = vld [vmem:[%s1175 + $0x80] sm:$0xff]
      %v1193 = vld [vmem:[%s1175 + $0x88] sm:$0xff]
      %v1194 = vld [vmem:[%s1175 + $0x90] sm:$0xff]
      %v1195 = vld [vmem:[%s1175 + $0x98] sm:$0xff]
      %v1196 = vld [vmem:[%s1175 + $0xa0] sm:$0xff]
      %v1197 = vld [vmem:[%s1175 + $0xa8] sm:$0xff]
      %v1198 = vld [vmem:[%s1175 + $0xb0] sm:$0xff]
      %v1199 = vld [vmem:[%s1175 + $0xb8] sm:$0xff]
      %v1200 = vld [vmem:[%s1175 + $0xc0] sm:$0xff]
      %v1201 = vld [vmem:[%s1175 + $0xc8] sm:$0xff]
      %v1202 = vld [vmem:[%s1175 + $0xd0] sm:$0xff]
      %v1203 = vld [vmem:[%s1175 + $0xd8] sm:$0xff]
      %v1204 = vld [vmem:[%s1175 + $0xe0] sm:$0xff]
      %v1205 = vld [vmem:[%s1175 + $0xe8] sm:$0xff]
      %v1206 = vld [vmem:[%s1175 + $0xf0] sm:$0xff]
      %v1207 = vld [vmem:[%s1175 + $0xf8] sm:$0xff]
      %v1208 = vld [vmem:[%s1175 + $0x100] sm:$0xff]
      %v1209 = vld [vmem:[%s1175 + $0x108] sm:$0xff]
      %v1210 = vld [vmem:[%s1175 + $0x110] sm:$0xff]
      %v1211 = vld [vmem:[%s1175 + $0x118] sm:$0xff]
      %v1212 = vld [vmem:[%s1175 + $0x120] sm:$0xff]
      %v1213 = vld [vmem:[%s1175 + $0x128] sm:$0xff]
      %v1214 = vld [vmem:[%s1175 + $0x130] sm:$0xff]
      %v1215 = vld [vmem:[%s1175 + $0x138] sm:$0xff]
      %v1216 = vld [vmem:[%s1175 + $0x140] sm:$0xff]
      %v1217 = vld [vmem:[%s1175 + $0x148] sm:$0xff]
      %v1218 = vld [vmem:[%s1175 + $0x150] sm:$0xff]
      %v1219 = vld [vmem:[%s1175 + $0x158] sm:$0xff]
      %v1220 = vld [vmem:[%s1175 + $0x160] sm:$0xff]
      %v1221 = vld [vmem:[%s1175 + $0x168] sm:$0xff]
      %v1222 = vld [vmem:[%s1175 + $0x170] sm:$0xff]
      %v1223 = vld [vmem:[%s1175 + $0x178] sm:$0xff]
      %1227 = vrot.lane.b32.xlu0 %v333, 127
      %v1228 = vpop.permute.xlu0 %1227
      %1229 = vrot.lane.b32.xlu0 %v334, 127
      %v1230 = vpop.permute.xlu0 %1229
      %1231 = vrot.lane.b32.xlu0 %v335, 127
      %v1232 = vpop.permute.xlu0 %1231
      %1233 = vrot.lane.b32.xlu0 %v336, 127
      %v1234 = vpop.permute.xlu0 %1233
      %v1239 = vsel %vm433, %v1176, 0
      %v1242 = vsel %vm433, %v1177, 0
      %v1245 = vsel %vm433, %v1178, 0
      %v1248 = vsel %vm433, %v1179, 0
      %v1251 = vsel %vm433, %v1180, 0
      %v1254 = vsel %vm433, %v1181, 0
      %v1257 = vsel %vm433, %v1182, 0
      %v1260 = vsel %vm433, %v1183, 0
      %v1263 = vsel %vm433, %v1184, 0
      %v1266 = vsel %vm433, %v1185, 0
      %v1269 = vsel %vm433, %v1186, 0
      %v1272 = vsel %vm433, %v1187, 0
      %v1275 = vsel %vm433, %v1188, 0
      %v1278 = vsel %vm433, %v1189, 0
      %v1281 = vsel %vm433, %v1190, 0
      %v1284 = vsel %vm433, %v1191, 0
      %v1287 = vsel %vm433, %v1192, 0
      %v1290 = vsel %vm433, %v1193, 0
      %v1293 = vsel %vm433, %v1194, 0
      %v1296 = vsel %vm433, %v1195, 0
      %v1299 = vsel %vm433, %v1196, 0
      %v1302 = vsel %vm433, %v1197, 0
      %v1305 = vsel %vm433, %v1198, 0
      %v1308 = vsel %vm433, %v1199, 0
      %v1311 = vsel %vm433, %v1200, 0
      %v1314 = vsel %vm433, %v1201, 0
      %v1317 = vsel %vm433, %v1202, 0
      %v1320 = vsel %vm433, %v1203, 0
      %v1323 = vsel %vm433, %v1204, 0
      %v1326 = vsel %vm433, %v1205, 0
      %v1329 = vsel %vm433, %v1206, 0
      %v1332 = vsel %vm433, %v1207, 0
      %v1335 = vsel %vm433, %v1208, 0
      %v1338 = vsel %vm433, %v1209, 0
      %v1341 = vsel %vm433, %v1210, 0
      %v1344 = vsel %vm433, %v1211, 0
      %v1347 = vsel %vm433, %v1212, 0
      %v1350 = vsel %vm433, %v1213, 0
      %v1353 = vsel %vm433, %v1214, 0
      %v1356 = vsel %vm433, %v1215, 0
      %v1359 = vsel %vm433, %v1216, 0
      %v1362 = vsel %vm433, %v1217, 0
      %v1365 = vsel %vm433, %v1218, 0
      %v1368 = vsel %vm433, %v1219, 0
      %v1371 = vsel %vm433, %v1220, 0
      %v1374 = vsel %vm433, %v1221, 0
      %v1377 = vsel %vm433, %v1222, 0
      %v1380 = vsel %vm433, %v1223, 0
      %v1382 = vsel %vm578, %v1234, 0
      %1384 = vmatprep.subr.mxu0 0.0
      %1385 = vmatpush1.msra.mxu0 0.0
      %1386 = vmatprep.subr.mxu0 0.0
      %1387 = vmatpush1.msra.mxu0 0.0
      %1388 = vmatprep.subr.mxu0 0.0
      %1389 = vmatpush1.msra.mxu0 0.0
      %1390 = vmatprep.subr.mxu0 0.0
      %1391 = vmatpush1.msra.mxu0 0.0
      %1392 = vmatprep.subr.mxu0 0.0
      %1393 = vmatpush1.msra.mxu0 0.0
      %1394 = vmatprep.subr.mxu0 0.0
      %1395 = vmatpush1.msra.mxu0 0.0
      %1396 = vmatprep.subr.mxu0 0.0
      %1397 = vmatpush1.msra.mxu0 0.0
      %1398 = vmatprep.subr.mxu0 0.0
      %1399 = vmatpush1.msra.mxu0 0.0
      %1400 = vmatprep.subr.mxu0 0.0
      %1401 = vmatpush1.msra.mxu0 0.0
      %1402 = vmatprep.subr.mxu0 0.0
      %1403 = vmatpush1.msra.mxu0 0.0
      %1404 = vmatprep.subr.mxu0 0.0
      %1405 = vmatpush1.msra.mxu0 0.0
      %1406 = vmatprep.subr.mxu0 0.0
      %1407 = vmatpush1.msra.mxu0 0.0
      %1408 = vmatprep.subr.mxu0 0.0
      %1409 = vmatpush1.msra.mxu0 %v1382
      %1410 = vmatprep.subr.mxu0 0.0
      %1411 = vmatpush1.msra.mxu0 %v1232
      %1412 = vmatprep.subr.mxu0 0.0
      %1413 = vmatpush1.msra.mxu0 %v1230
      %1414 = vmatprep.subr.mxu0 0.0
      %1415 = vmatpush1.msra.mxu0 %v1228
      %1416 = vmatprep.subr.mxu0 0.0
      %1417 = vmatpush2.msra.mxu0 0.0
      %1418 = vmatprep.subr.mxu0 0.0
      %1419 = vmatpush2.msra.mxu0 0.0
      %1420 = vmatprep.subr.mxu0 0.0
      %1421 = vmatpush2.msra.mxu0 0.0
      %1422 = vmatprep.subr.mxu0 0.0
      %1423 = vmatpush2.msra.mxu0 0.0
      %1424 = vmatprep.subr.mxu0 0.0
      %1425 = vmatpush2.msra.mxu0 0.0
      %1426 = vmatprep.subr.mxu0 0.0
      %1427 = vmatpush2.msra.mxu0 0.0
      %1428 = vmatprep.subr.mxu0 0.0
      %1429 = vmatpush2.msra.mxu0 0.0
      %1430 = vmatprep.subr.mxu0 0.0
      %1431 = vmatpush2.msra.mxu0 0.0
      %1432 = vmatprep.subr.mxu0 0.0
      %1433 = vmatpush2.msra.mxu0 0.0
      %1434 = vmatprep.subr.mxu0 0.0
      %1435 = vmatpush2.msra.mxu0 0.0
      %1436 = vmatprep.subr.mxu0 0.0
      %1437 = vmatpush2.msra.mxu0 0.0
      %1438 = vmatprep.subr.mxu0 0.0
      %1439 = vmatpush2.msra.mxu0 0.0
      %1440 = vmatprep.subr.mxu0 0.0
      %1441 = vmatpush2.msra.mxu0 0.0
      %1442 = vmatprep.subr.mxu0 0.0
      %1443 = vmatpush2.msra.mxu0 0.0
      %1444 = vmatprep.subr.mxu0 0.0
      %1445 = vmatpush2.msra.mxu0 0.0
      %1446 = vmatprep.subr.mxu0 0.0
      %1447 = vmatpush2.msra.mxu0 0.0
      %1448 = vmatprep.mubr.f32.mxu0 0.0
      %1449 = vmatmul.mubr.f32.gmra.mxu0 %v1239
      %v1450 = vpop.f32.mrf.mxu0
      %v1451 = vadd.f32 0.0, %v1450
      %v1452 = vpop.f32.mrf.mxu0
      %1453 = vmatprep.mubr.f32.mxu0 0.0
      %1454 = vmatmul.mubr.f32.gmra.mxu0 %v1242
      %v1455 = vpop.f32.mrf.mxu0
      %v1456 = vadd.f32 0.0, %v1455
      %v1457 = vpop.f32.mrf.mxu0
      %1458 = vmatprep.mubr.f32.mxu0 0.0
      %1459 = vmatmul.mubr.f32.gmra.mxu0 %v1245
      %v1460 = vpop.f32.mrf.mxu0
      %v1461 = vadd.f32 0.0, %v1460
      %v1462 = vpop.f32.mrf.mxu0
      %1463 = vmatprep.mubr.f32.mxu0 0.0
      %1464 = vmatmul.mubr.f32.gmra.mxu0 %v1248
      %v1465 = vpop.f32.mrf.mxu0
      %v1466 = vadd.f32 0.0, %v1465
      %v1467 = vpop.f32.mrf.mxu0
      %1468 = vmatprep.mubr.f32.mxu0 0.0
      %1469 = vmatmul.mubr.f32.gmra.mxu0 %v1251
      %v1470 = vpop.f32.mrf.mxu0
      %v1471 = vadd.f32 0.0, %v1470
      %v1472 = vpop.f32.mrf.mxu0
      %1473 = vmatprep.mubr.f32.mxu0 0.0
      %1474 = vmatmul.mubr.f32.gmra.mxu0 %v1254
      %v1475 = vpop.f32.mrf.mxu0
      %v1476 = vadd.f32 0.0, %v1475
      %v1477 = vpop.f32.mrf.mxu0
      %1478 = vmatprep.mubr.f32.mxu0 0.0
      %1479 = vmatmul.mubr.f32.gmra.mxu0 %v1257
      %v1480 = vpop.f32.mrf.mxu0
      %v1481 = vadd.f32 0.0, %v1480
      %v1482 = vpop.f32.mrf.mxu0
      %1483 = vmatprep.mubr.f32.mxu0 0.0
      %1484 = vmatmul.mubr.f32.gmra.mxu0 %v1260
      %v1485 = vpop.f32.mrf.mxu0
      %v1486 = vadd.f32 0.0, %v1485
      %v1487 = vpop.f32.mrf.mxu0
      %1488 = vmatprep.mubr.f32.mxu0 0.0
      %1489 = vmatmul.mubr.f32.gmra.mxu0 %v1263
      %v1490 = vpop.f32.mrf.mxu0
      %v1491 = vadd.f32 0.0, %v1490
      %v1492 = vpop.f32.mrf.mxu0
      %1493 = vmatprep.mubr.f32.mxu0 0.0
      %1494 = vmatmul.mubr.f32.gmra.mxu0 %v1266
      %v1495 = vpop.f32.mrf.mxu0
      %v1496 = vadd.f32 0.0, %v1495
      %v1497 = vpop.f32.mrf.mxu0
      %1498 = vmatprep.mubr.f32.mxu0 0.0
      %1499 = vmatmul.mubr.f32.gmra.mxu0 %v1269
      %v1500 = vpop.f32.mrf.mxu0
      %v1501 = vadd.f32 0.0, %v1500
      %v1502 = vpop.f32.mrf.mxu0
      %1503 = vmatprep.mubr.f32.mxu0 0.0
      %1504 = vmatmul.mubr.f32.gmra.mxu0 %v1272
      %v1505 = vpop.f32.mrf.mxu0
      %v1506 = vadd.f32 0.0, %v1505
      %v1507 = vpop.f32.mrf.mxu0
      %1508 = vmatprep.mubr.f32.mxu0 0.0
      %1509 = vmatmul.mubr.f32.gmra.mxu0 %v1275
      %v1510 = vpop.f32.mrf.mxu0
      %v1511 = vadd.f32 0.0, %v1510
      %v1512 = vpop.f32.mrf.mxu0
      %1513 = vmatprep.mubr.f32.mxu0 0.0
      %1514 = vmatmul.mubr.f32.gmra.mxu0 %v1278
      %v1515 = vpop.f32.mrf.mxu0
      %v1516 = vadd.f32 0.0, %v1515
      %v1517 = vpop.f32.mrf.mxu0
      %1518 = vmatprep.mubr.f32.mxu0 0.0
      %1519 = vmatmul.mubr.f32.gmra.mxu0 %v1281
      %v1520 = vpop.f32.mrf.mxu0
      %v1521 = vadd.f32 0.0, %v1520
      %v1522 = vpop.f32.mrf.mxu0
      %1523 = vmatprep.mubr.f32.mxu0 0.0
      %1524 = vmatmul.mubr.f32.gmra.mxu0 %v1284
      %v1525 = vpop.f32.mrf.mxu0
      %v1526 = vadd.f32 0.0, %v1525
      %v1527 = vpop.f32.mrf.mxu0
      %1528 = vmatprep.mubr.f32.mxu0 0.0
      %1529 = vmatmul.mubr.f32.gmra.mxu0 %v1287
      %v1530 = vpop.f32.mrf.mxu0
      %v1531 = vadd.f32 0.0, %v1530
      %v1532 = vpop.f32.mrf.mxu0
      %1533 = vmatprep.mubr.f32.mxu0 0.0
      %1534 = vmatmul.mubr.f32.gmra.mxu0 %v1290
      %v1535 = vpop.f32.mrf.mxu0
      %v1536 = vadd.f32 0.0, %v1535
      %v1537 = vpop.f32.mrf.mxu0
      %1538 = vmatprep.mubr.f32.mxu0 0.0
      %1539 = vmatmul.mubr.f32.gmra.mxu0 %v1293
      %v1540 = vpop.f32.mrf.mxu0
      %v1541 = vadd.f32 0.0, %v1540
      %v1542 = vpop.f32.mrf.mxu0
      %1543 = vmatprep.mubr.f32.mxu0 0.0
      %1544 = vmatmul.mubr.f32.gmra.mxu0 %v1296
      %v1545 = vpop.f32.mrf.mxu0
      %v1546 = vadd.f32 0.0, %v1545
      %v1547 = vpop.f32.mrf.mxu0
      %1548 = vmatprep.mubr.f32.mxu0 0.0
      %1549 = vmatmul.mubr.f32.gmra.mxu0 %v1299
      %v1550 = vpop.f32.mrf.mxu0
      %v1551 = vadd.f32 0.0, %v1550
      %v1552 = vpop.f32.mrf.mxu0
      %1553 = vmatprep.mubr.f32.mxu0 0.0
      %1554 = vmatmul.mubr.f32.gmra.mxu0 %v1302
      %v1555 = vpop.f32.mrf.mxu0
      %v1556 = vadd.f32 0.0, %v1555
      %v1557 = vpop.f32.mrf.mxu0
      %1558 = vmatprep.mubr.f32.mxu0 0.0
      %1559 = vmatmul.mubr.f32.gmra.mxu0 %v1305
      %v1560 = vpop.f32.mrf.mxu0
      %v1561 = vadd.f32 0.0, %v1560
      %v1562 = vpop.f32.mrf.mxu0
      %1563 = vmatprep.mubr.f32.mxu0 0.0
      %1564 = vmatmul.mubr.f32.gmra.mxu0 %v1308
      %v1565 = vpop.f32.mrf.mxu0
      %v1566 = vadd.f32 0.0, %v1565
      %v1567 = vpop.f32.mrf.mxu0
      %1568 = vmatprep.mubr.f32.mxu0 0.0
      %1569 = vmatmul.mubr.f32.gmra.mxu0 %v1311
      %v1570 = vpop.f32.mrf.mxu0
      %v1571 = vadd.f32 0.0, %v1570
      %v1572 = vpop.f32.mrf.mxu0
      %1573 = vmatprep.mubr.f32.mxu0 0.0
      %1574 = vmatmul.mubr.f32.gmra.mxu0 %v1314
      %v1575 = vpop.f32.mrf.mxu0
      %v1576 = vadd.f32 0.0, %v1575
      %v1577 = vpop.f32.mrf.mxu0
      %1578 = vmatprep.mubr.f32.mxu0 0.0
      %1579 = vmatmul.mubr.f32.gmra.mxu0 %v1317
      %v1580 = vpop.f32.mrf.mxu0
      %v1581 = vadd.f32 0.0, %v1580
      %v1582 = vpop.f32.mrf.mxu0
      %1583 = vmatprep.mubr.f32.mxu0 0.0
      %1584 = vmatmul.mubr.f32.gmra.mxu0 %v1320
      %v1585 = vpop.f32.mrf.mxu0
      %v1586 = vadd.f32 0.0, %v1585
      %v1587 = vpop.f32.mrf.mxu0
      %1588 = vmatprep.mubr.f32.mxu0 0.0
      %1589 = vmatmul.mubr.f32.gmra.mxu0 %v1323
      %v1590 = vpop.f32.mrf.mxu0
      %v1591 = vadd.f32 0.0, %v1590
      %v1592 = vpop.f32.mrf.mxu0
      %1593 = vmatprep.mubr.f32.mxu0 0.0
      %1594 = vmatmul.mubr.f32.gmra.mxu0 %v1326
      %v1595 = vpop.f32.mrf.mxu0
      %v1596 = vadd.f32 0.0, %v1595
      %v1597 = vpop.f32.mrf.mxu0
      %1598 = vmatprep.mubr.f32.mxu0 0.0
      %1599 = vmatmul.mubr.f32.gmra.mxu0 %v1329
      %v1600 = vpop.f32.mrf.mxu0
      %v1601 = vadd.f32 0.0, %v1600
      %v1602 = vpop.f32.mrf.mxu0
      %1603 = vmatprep.mubr.f32.mxu0 0.0
      %1604 = vmatmul.mubr.f32.gmra.mxu0 %v1332
      %v1605 = vpop.f32.mrf.mxu0
      %v1606 = vadd.f32 0.0, %v1605
      %v1607 = vpop.f32.mrf.mxu0
      %1608 = vmatprep.mubr.f32.mxu0 0.0
      %1609 = vmatmul.mubr.f32.gmra.mxu0 %v1335
      %v1610 = vpop.f32.mrf.mxu0
      %v1611 = vadd.f32 0.0, %v1610
      %v1612 = vpop.f32.mrf.mxu0
      %1613 = vmatprep.mubr.f32.mxu0 0.0
      %1614 = vmatmul.mubr.f32.gmra.mxu0 %v1338
      %v1615 = vpop.f32.mrf.mxu0
      %v1616 = vadd.f32 0.0, %v1615
      %v1617 = vpop.f32.mrf.mxu0
      %1618 = vmatprep.mubr.f32.mxu0 0.0
      %1619 = vmatmul.mubr.f32.gmra.mxu0 %v1341
      %v1620 = vpop.f32.mrf.mxu0
      %v1621 = vadd.f32 0.0, %v1620
      %v1622 = vpop.f32.mrf.mxu0
      %1623 = vmatprep.mubr.f32.mxu0 0.0
      %1624 = vmatmul.mubr.f32.gmra.mxu0 %v1344
      %v1625 = vpop.f32.mrf.mxu0
      %v1626 = vadd.f32 0.0, %v1625
      %v1627 = vpop.f32.mrf.mxu0
      %1628 = vmatprep.mubr.f32.mxu0 0.0
      %1629 = vmatmul.mubr.f32.gmra.mxu0 %v1347
      %v1630 = vpop.f32.mrf.mxu0
      %v1631 = vadd.f32 0.0, %v1630
      %v1632 = vpop.f32.mrf.mxu0
      %1633 = vmatprep.mubr.f32.mxu0 0.0
      %1634 = vmatmul.mubr.f32.gmra.mxu0 %v1350
      %v1635 = vpop.f32.mrf.mxu0
      %v1636 = vadd.f32 0.0, %v1635
      %v1637 = vpop.f32.mrf.mxu0
      %1638 = vmatprep.mubr.f32.mxu0 0.0
      %1639 = vmatmul.mubr.f32.gmra.mxu0 %v1353
      %v1640 = vpop.f32.mrf.mxu0
      %v1641 = vadd.f32 0.0, %v1640
      %v1642 = vpop.f32.mrf.mxu0
      %1643 = vmatprep.mubr.f32.mxu0 0.0
      %1644 = vmatmul.mubr.f32.gmra.mxu0 %v1356
      %v1645 = vpop.f32.mrf.mxu0
      %v1646 = vadd.f32 0.0, %v1645
      %v1647 = vpop.f32.mrf.mxu0
      %1648 = vmatprep.mubr.f32.mxu0 0.0
      %1649 = vmatmul.mubr.f32.gmra.mxu0 %v1359
      %v1650 = vpop.f32.mrf.mxu0
      %v1651 = vadd.f32 0.0, %v1650
      %v1652 = vpop.f32.mrf.mxu0
      %1653 = vmatprep.mubr.f32.mxu0 0.0
      %1654 = vmatmul.mubr.f32.gmra.mxu0 %v1362
      %v1655 = vpop.f32.mrf.mxu0
      %v1656 = vadd.f32 0.0, %v1655
      %v1657 = vpop.f32.mrf.mxu0
      %1658 = vmatprep.mubr.f32.mxu0 0.0
      %1659 = vmatmul.mubr.f32.gmra.mxu0 %v1365
      %v1660 = vpop.f32.mrf.mxu0
      %v1661 = vadd.f32 0.0, %v1660
      %v1662 = vpop.f32.mrf.mxu0
      %1663 = vmatprep.mubr.f32.mxu0 0.0
      %1664 = vmatmul.mubr.f32.gmra.mxu0 %v1368
      %v1665 = vpop.f32.mrf.mxu0
      %v1666 = vadd.f32 0.0, %v1665
      %v1667 = vpop.f32.mrf.mxu0
      %1668 = vmatprep.mubr.f32.mxu0 0.0
      %1669 = vmatmul.mubr.f32.gmra.mxu0 %v1371
      %v1670 = vpop.f32.mrf.mxu0
      %v1671 = vadd.f32 0.0, %v1670
      %v1672 = vpop.f32.mrf.mxu0
      %1673 = vmatprep.mubr.f32.mxu0 0.0
      %1674 = vmatmul.mubr.f32.gmra.mxu0 %v1374
      %v1675 = vpop.f32.mrf.mxu0
      %v1676 = vadd.f32 0.0, %v1675
      %v1677 = vpop.f32.mrf.mxu0
      %1678 = vmatprep.mubr.f32.mxu0 0.0
      %1679 = vmatmul.mubr.f32.gmra.mxu0 %v1377
      %v1680 = vpop.f32.mrf.mxu0
      %v1681 = vadd.f32 0.0, %v1680
      %v1682 = vpop.f32.mrf.mxu0
      %1683 = vmatprep.mubr.f32.mxu0 0.0
      %1684 = vmatmul.mubr.f32.gmra.mxu0 %v1380
      %v1685 = vpop.f32.mrf.mxu0
      %v1686 = vadd.f32 0.0, %v1685
      %v1687 = vpop.f32.mrf.mxu0
      %1688 = vdwg.mxu0
      %v1689 = vadd.f32 %v1127, %v1451
      %v1690 = vadd.f32 %v1128, %v1456
      %v1691 = vadd.f32 %v1129, %v1461
      %v1692 = vadd.f32 %v1130, %v1466
      %v1693 = vadd.f32 %v1131, %v1471
      %v1694 = vadd.f32 %v1132, %v1476
      %v1695 = vadd.f32 %v1133, %v1481
      %v1696 = vadd.f32 %v1134, %v1486
      %v1697 = vadd.f32 %v1135, %v1491
      %v1698 = vadd.f32 %v1136, %v1496
      %v1699 = vadd.f32 %v1137, %v1501
      %v1700 = vadd.f32 %v1138, %v1506
      %v1701 = vadd.f32 %v1139, %v1511
      %v1702 = vadd.f32 %v1140, %v1516
      %v1703 = vadd.f32 %v1141, %v1521
      %v1704 = vadd.f32 %v1142, %v1526
      %v1705 = vadd.f32 %v1143, %v1531
      %v1706 = vadd.f32 %v1144, %v1536
      %v1707 = vadd.f32 %v1145, %v1541
      %v1708 = vadd.f32 %v1146, %v1546
      %v1709 = vadd.f32 %v1147, %v1551
      %v1710 = vadd.f32 %v1148, %v1556
      %v1711 = vadd.f32 %v1149, %v1561
      %v1712 = vadd.f32 %v1150, %v1566
      %v1713 = vadd.f32 %v1151, %v1571
      %v1714 = vadd.f32 %v1152, %v1576
      %v1715 = vadd.f32 %v1153, %v1581
      %v1716 = vadd.f32 %v1154, %v1586
      %v1717 = vadd.f32 %v1155, %v1591
      %v1718 = vadd.f32 %v1156, %v1596
      %v1719 = vadd.f32 %v1157, %v1601
      %v1720 = vadd.f32 %v1158, %v1606
      %v1721 = vadd.f32 %v1159, %v1611
      %v1722 = vadd.f32 %v1160, %v1616
      %v1723 = vadd.f32 %v1161, %v1621
      %v1724 = vadd.f32 %v1162, %v1626
      %v1725 = vadd.f32 %v1163, %v1631
      %v1726 = vadd.f32 %v1164, %v1636
      %v1727 = vadd.f32 %v1165, %v1641
      %v1728 = vadd.f32 %v1166, %v1646
      %v1729 = vadd.f32 %v1167, %v1651
      %v1730 = vadd.f32 %v1168, %v1656
      %v1731 = vadd.f32 %v1169, %v1661
      %v1732 = vadd.f32 %v1170, %v1666
      %v1733 = vadd.f32 %v1171, %v1671
      %v1734 = vadd.f32 %v1172, %v1676
      %v1735 = vadd.f32 %v1173, %v1681
      %v1736 = vadd.f32 %v1174, %v1686
      %s1737 = scalar_lea.vmem %s1, 768
      %v1738 = vld [vmem:[%s1737] sm:$0xff]
      %v1739 = vld [vmem:[%s1737 + $0x8] sm:$0xff]
      %v1740 = vld [vmem:[%s1737 + $0x10] sm:$0xff]
      %v1741 = vld [vmem:[%s1737 + $0x18] sm:$0xff]
      %v1742 = vld [vmem:[%s1737 + $0x20] sm:$0xff]
      %v1743 = vld [vmem:[%s1737 + $0x28] sm:$0xff]
      %v1744 = vld [vmem:[%s1737 + $0x30] sm:$0xff]
      %v1745 = vld [vmem:[%s1737 + $0x38] sm:$0xff]
      %v1746 = vld [vmem:[%s1737 + $0x40] sm:$0xff]
      %v1747 = vld [vmem:[%s1737 + $0x48] sm:$0xff]
      %v1748 = vld [vmem:[%s1737 + $0x50] sm:$0xff]
      %v1749 = vld [vmem:[%s1737 + $0x58] sm:$0xff]
      %v1750 = vld [vmem:[%s1737 + $0x60] sm:$0xff]
      %v1751 = vld [vmem:[%s1737 + $0x68] sm:$0xff]
      %v1752 = vld [vmem:[%s1737 + $0x70] sm:$0xff]
      %v1753 = vld [vmem:[%s1737 + $0x78] sm:$0xff]
      %v1754 = vld [vmem:[%s1737 + $0x80] sm:$0xff]
      %v1755 = vld [vmem:[%s1737 + $0x88] sm:$0xff]
      %v1756 = vld [vmem:[%s1737 + $0x90] sm:$0xff]
      %v1757 = vld [vmem:[%s1737 + $0x98] sm:$0xff]
      %v1758 = vld [vmem:[%s1737 + $0xa0] sm:$0xff]
      %v1759 = vld [vmem:[%s1737 + $0xa8] sm:$0xff]
      %v1760 = vld [vmem:[%s1737 + $0xb0] sm:$0xff]
      %v1761 = vld [vmem:[%s1737 + $0xb8] sm:$0xff]
      %v1762 = vld [vmem:[%s1737 + $0xc0] sm:$0xff]
      %v1763 = vld [vmem:[%s1737 + $0xc8] sm:$0xff]
      %v1764 = vld [vmem:[%s1737 + $0xd0] sm:$0xff]
      %v1765 = vld [vmem:[%s1737 + $0xd8] sm:$0xff]
      %v1766 = vld [vmem:[%s1737 + $0xe0] sm:$0xff]
      %v1767 = vld [vmem:[%s1737 + $0xe8] sm:$0xff]
      %v1768 = vld [vmem:[%s1737 + $0xf0] sm:$0xff]
      %v1769 = vld [vmem:[%s1737 + $0xf8] sm:$0xff]
      %v1770 = vld [vmem:[%s1737 + $0x100] sm:$0xff]
      %v1771 = vld [vmem:[%s1737 + $0x108] sm:$0xff]
      %v1772 = vld [vmem:[%s1737 + $0x110] sm:$0xff]
      %v1773 = vld [vmem:[%s1737 + $0x118] sm:$0xff]
      %v1774 = vld [vmem:[%s1737 + $0x120] sm:$0xff]
      %v1775 = vld [vmem:[%s1737 + $0x128] sm:$0xff]
      %v1776 = vld [vmem:[%s1737 + $0x130] sm:$0xff]
      %v1777 = vld [vmem:[%s1737 + $0x138] sm:$0xff]
      %v1778 = vld [vmem:[%s1737 + $0x140] sm:$0xff]
      %v1779 = vld [vmem:[%s1737 + $0x148] sm:$0xff]
      %v1780 = vld [vmem:[%s1737 + $0x150] sm:$0xff]
      %v1781 = vld [vmem:[%s1737 + $0x158] sm:$0xff]
      %v1782 = vld [vmem:[%s1737 + $0x160] sm:$0xff]
      %v1783 = vld [vmem:[%s1737 + $0x168] sm:$0xff]
      %v1784 = vld [vmem:[%s1737 + $0x170] sm:$0xff]
      %v1785 = vld [vmem:[%s1737 + $0x178] sm:$0xff]
      %1786 = vrot.lane.b32.xlu0 %v333, 126
      %v1787 = vpop.permute.xlu0 %1786
      %1788 = vrot.lane.b32.xlu0 %v334, 126
      %v1789 = vpop.permute.xlu0 %1788
      %1790 = vrot.lane.b32.xlu0 %v335, 126
      %v1791 = vpop.permute.xlu0 %1790
      %1792 = vrot.lane.b32.xlu0 %v336, 126
      %v1793 = vpop.permute.xlu0 %1792
      %v1798 = vsel %vm433, %v1738, 0
      %v1801 = vsel %vm433, %v1739, 0
      %v1804 = vsel %vm433, %v1740, 0
      %v1807 = vsel %vm433, %v1741, 0
      %v1810 = vsel %vm433, %v1742, 0
      %v1813 = vsel %vm433, %v1743, 0
      %v1816 = vsel %vm433, %v1744, 0
      %v1819 = vsel %vm433, %v1745, 0
      %v1822 = vsel %vm433, %v1746, 0
      %v1825 = vsel %vm433, %v1747, 0
      %v1828 = vsel %vm433, %v1748, 0
      %v1831 = vsel %vm433, %v1749, 0
      %v1834 = vsel %vm433, %v1750, 0
      %v1837 = vsel %vm433, %v1751, 0
      %v1840 = vsel %vm433, %v1752, 0
      %v1843 = vsel %vm433, %v1753, 0
      %v1846 = vsel %vm433, %v1754, 0
      %v1849 = vsel %vm433, %v1755, 0
      %v1852 = vsel %vm433, %v1756, 0
      %v1855 = vsel %vm433, %v1757, 0
      %v1858 = vsel %vm433, %v1758, 0
      %v1861 = vsel %vm433, %v1759, 0
      %v1864 = vsel %vm433, %v1760, 0
      %v1867 = vsel %vm433, %v1761, 0
      %v1870 = vsel %vm433, %v1762, 0
      %v1873 = vsel %vm433, %v1763, 0
      %v1876 = vsel %vm433, %v1764, 0
      %v1879 = vsel %vm433, %v1765, 0
      %v1882 = vsel %vm433, %v1766, 0
      %v1885 = vsel %vm433, %v1767, 0
      %v1888 = vsel %vm433, %v1768, 0
      %v1891 = vsel %vm433, %v1769, 0
      %v1894 = vsel %vm433, %v1770, 0
      %v1897 = vsel %vm433, %v1771, 0
      %v1900 = vsel %vm433, %v1772, 0
      %v1903 = vsel %vm433, %v1773, 0
      %v1906 = vsel %vm433, %v1774, 0
      %v1909 = vsel %vm433, %v1775, 0
      %v1912 = vsel %vm433, %v1776, 0
      %v1915 = vsel %vm433, %v1777, 0
      %v1918 = vsel %vm433, %v1778, 0
      %v1921 = vsel %vm433, %v1779, 0
      %v1924 = vsel %vm433, %v1780, 0
      %v1927 = vsel %vm433, %v1781, 0
      %v1930 = vsel %vm433, %v1782, 0
      %v1933 = vsel %vm433, %v1783, 0
      %v1936 = vsel %vm433, %v1784, 0
      %v1939 = vsel %vm433, %v1785, 0
      %v1941 = vsel %vm578, %v1793, 0
      %1943 = vmatprep.subr.mxu0 0.0
      %1944 = vmatpush1.msra.mxu0 0.0
      %1945 = vmatprep.subr.mxu0 0.0
      %1946 = vmatpush1.msra.mxu0 0.0
      %1947 = vmatprep.subr.mxu0 0.0
      %1948 = vmatpush1.msra.mxu0 0.0
      %1949 = vmatprep.subr.mxu0 0.0
      %1950 = vmatpush1.msra.mxu0 0.0
      %1951 = vmatprep.subr.mxu0 0.0
      %1952 = vmatpush1.msra.mxu0 0.0
      %1953 = vmatprep.subr.mxu0 0.0
      %1954 = vmatpush1.msra.mxu0 0.0
      %1955 = vmatprep.subr.mxu0 0.0
      %1956 = vmatpush1.msra.mxu0 0.0
      %1957 = vmatprep.subr.mxu0 0.0
      %1958 = vmatpush1.msra.mxu0 0.0
      %1959 = vmatprep.subr.mxu0 0.0
      %1960 = vmatpush1.msra.mxu0 0.0
      %1961 = vmatprep.subr.mxu0 0.0
      %1962 = vmatpush1.msra.mxu0 0.0
      %1963 = vmatprep.subr.mxu0 0.0
      %1964 = vmatpush1.msra.mxu0 0.0
      %1965 = vmatprep.subr.mxu0 0.0
      %1966 = vmatpush1.msra.mxu0 0.0
      %1967 = vmatprep.subr.mxu0 0.0
      %1968 = vmatpush1.msra.mxu0 %v1941
      %1969 = vmatprep.subr.mxu0 0.0
      %1970 = vmatpush1.msra.mxu0 %v1791
      %1971 = vmatprep.subr.mxu0 0.0
      %1972 = vmatpush1.msra.mxu0 %v1789
      %1973 = vmatprep.subr.mxu0 0.0
      %1974 = vmatpush1.msra.mxu0 %v1787
      %1975 = vmatprep.subr.mxu0 0.0
      %1976 = vmatpush2.msra.mxu0 0.0
      %1977 = vmatprep.subr.mxu0 0.0
      %1978 = vmatpush2.msra.mxu0 0.0
      %1979 = vmatprep.subr.mxu0 0.0
      %1980 = vmatpush2.msra.mxu0 0.0
      %1981 = vmatprep.subr.mxu0 0.0
      %1982 = vmatpush2.msra.mxu0 0.0
      %1983 = vmatprep.subr.mxu0 0.0
      %1984 = vmatpush2.msra.mxu0 0.0
      %1985 = vmatprep.subr.mxu0 0.0
      %1986 = vmatpush2.msra.mxu0 0.0
      %1987 = vmatprep.subr.mxu0 0.0
      %1988 = vmatpush2.msra.mxu0 0.0
      %1989 = vmatprep.subr.mxu0 0.0
      %1990 = vmatpush2.msra.mxu0 0.0
      %1991 = vmatprep.subr.mxu0 0.0
      %1992 = vmatpush2.msra.mxu0 0.0
      %1993 = vmatprep.subr.mxu0 0.0
      %1994 = vmatpush2.msra.mxu0 0.0
      %1995 = vmatprep.subr.mxu0 0.0
      %1996 = vmatpush2.msra.mxu0 0.0
      %1997 = vmatprep.subr.mxu0 0.0
      %1998 = vmatpush2.msra.mxu0 0.0
      %1999 = vmatprep.subr.mxu0 0.0
      %2000 = vmatpush2.msra.mxu0 0.0
      %2001 = vmatprep.subr.mxu0 0.0
      %2002 = vmatpush2.msra.mxu0 0.0
      %2003 = vmatprep.subr.mxu0 0.0
      %2004 = vmatpush2.msra.mxu0 0.0
      %2005 = vmatprep.subr.mxu0 0.0
      %2006 = vmatpush2.msra.mxu0 0.0
      %2007 = vmatprep.mubr.f32.mxu0 0.0
      %2008 = vmatmul.mubr.f32.gmra.mxu0 %v1798
      %v2009 = vpop.f32.mrf.mxu0
      %v2010 = vadd.f32 0.0, %v2009
      %v2011 = vpop.f32.mrf.mxu0
      %2012 = vmatprep.mubr.f32.mxu0 0.0
      %2013 = vmatmul.mubr.f32.gmra.mxu0 %v1801
      %v2014 = vpop.f32.mrf.mxu0
      %v2015 = vadd.f32 0.0, %v2014
      %v2016 = vpop.f32.mrf.mxu0
      %2017 = vmatprep.mubr.f32.mxu0 0.0
      %2018 = vmatmul.mubr.f32.gmra.mxu0 %v1804
      %v2019 = vpop.f32.mrf.mxu0
      %v2020 = vadd.f32 0.0, %v2019
      %v2021 = vpop.f32.mrf.mxu0
      %2022 = vmatprep.mubr.f32.mxu0 0.0
      %2023 = vmatmul.mubr.f32.gmra.mxu0 %v1807
      %v2024 = vpop.f32.mrf.mxu0
      %v2025 = vadd.f32 0.0, %v2024
      %v2026 = vpop.f32.mrf.mxu0
      %2027 = vmatprep.mubr.f32.mxu0 0.0
      %2028 = vmatmul.mubr.f32.gmra.mxu0 %v1810
      %v2029 = vpop.f32.mrf.mxu0
      %v2030 = vadd.f32 0.0, %v2029
      %v2031 = vpop.f32.mrf.mxu0
      %2032 = vmatprep.mubr.f32.mxu0 0.0
      %2033 = vmatmul.mubr.f32.gmra.mxu0 %v1813
      %v2034 = vpop.f32.mrf.mxu0
      %v2035 = vadd.f32 0.0, %v2034
      %v2036 = vpop.f32.mrf.mxu0
      %2037 = vmatprep.mubr.f32.mxu0 0.0
      %2038 = vmatmul.mubr.f32.gmra.mxu0 %v1816
      %v2039 = vpop.f32.mrf.mxu0
      %v2040 = vadd.f32 0.0, %v2039
      %v2041 = vpop.f32.mrf.mxu0
      %2042 = vmatprep.mubr.f32.mxu0 0.0
      %2043 = vmatmul.mubr.f32.gmra.mxu0 %v1819
      %v2044 = vpop.f32.mrf.mxu0
      %v2045 = vadd.f32 0.0, %v2044
      %v2046 = vpop.f32.mrf.mxu0
      %2047 = vmatprep.mubr.f32.mxu0 0.0
      %2048 = vmatmul.mubr.f32.gmra.mxu0 %v1822
      %v2049 = vpop.f32.mrf.mxu0
      %v2050 = vadd.f32 0.0, %v2049
      %v2051 = vpop.f32.mrf.mxu0
      %2052 = vmatprep.mubr.f32.mxu0 0.0
      %2053 = vmatmul.mubr.f32.gmra.mxu0 %v1825
      %v2054 = vpop.f32.mrf.mxu0
      %v2055 = vadd.f32 0.0, %v2054
      %v2056 = vpop.f32.mrf.mxu0
      %2057 = vmatprep.mubr.f32.mxu0 0.0
      %2058 = vmatmul.mubr.f32.gmra.mxu0 %v1828
      %v2059 = vpop.f32.mrf.mxu0
      %v2060 = vadd.f32 0.0, %v2059
      %v2061 = vpop.f32.mrf.mxu0
      %2062 = vmatprep.mubr.f32.mxu0 0.0
      %2063 = vmatmul.mubr.f32.gmra.mxu0 %v1831
      %v2064 = vpop.f32.mrf.mxu0
      %v2065 = vadd.f32 0.0, %v2064
      %v2066 = vpop.f32.mrf.mxu0
      %2067 = vmatprep.mubr.f32.mxu0 0.0
      %2068 = vmatmul.mubr.f32.gmra.mxu0 %v1834
      %v2069 = vpop.f32.mrf.mxu0
      %v2070 = vadd.f32 0.0, %v2069
      %v2071 = vpop.f32.mrf.mxu0
      %2072 = vmatprep.mubr.f32.mxu0 0.0
      %2073 = vmatmul.mubr.f32.gmra.mxu0 %v1837
      %v2074 = vpop.f32.mrf.mxu0
      %v2075 = vadd.f32 0.0, %v2074
      %v2076 = vpop.f32.mrf.mxu0
      %2077 = vmatprep.mubr.f32.mxu0 0.0
      %2078 = vmatmul.mubr.f32.gmra.mxu0 %v1840
      %v2079 = vpop.f32.mrf.mxu0
      %v2080 = vadd.f32 0.0, %v2079
      %v2081 = vpop.f32.mrf.mxu0
      %2082 = vmatprep.mubr.f32.mxu0 0.0
      %2083 = vmatmul.mubr.f32.gmra.mxu0 %v1843
      %v2084 = vpop.f32.mrf.mxu0
      %v2085 = vadd.f32 0.0, %v2084
      %v2086 = vpop.f32.mrf.mxu0
      %2087 = vmatprep.mubr.f32.mxu0 0.0
      %2088 = vmatmul.mubr.f32.gmra.mxu0 %v1846
      %v2089 = vpop.f32.mrf.mxu0
      %v2090 = vadd.f32 0.0, %v2089
      %v2091 = vpop.f32.mrf.mxu0
      %2092 = vmatprep.mubr.f32.mxu0 0.0
      %2093 = vmatmul.mubr.f32.gmra.mxu0 %v1849
      %v2094 = vpop.f32.mrf.mxu0
      %v2095 = vadd.f32 0.0, %v2094
      %v2096 = vpop.f32.mrf.mxu0
      %2097 = vmatprep.mubr.f32.mxu0 0.0
      %2098 = vmatmul.mubr.f32.gmra.mxu0 %v1852
      %v2099 = vpop.f32.mrf.mxu0
      %v2100 = vadd.f32 0.0, %v2099
      %v2101 = vpop.f32.mrf.mxu0
      %2102 = vmatprep.mubr.f32.mxu0 0.0
      %2103 = vmatmul.mubr.f32.gmra.mxu0 %v1855
      %v2104 = vpop.f32.mrf.mxu0
      %v2105 = vadd.f32 0.0, %v2104
      %v2106 = vpop.f32.mrf.mxu0
      %2107 = vmatprep.mubr.f32.mxu0 0.0
      %2108 = vmatmul.mubr.f32.gmra.mxu0 %v1858
      %v2109 = vpop.f32.mrf.mxu0
      %v2110 = vadd.f32 0.0, %v2109
      %v2111 = vpop.f32.mrf.mxu0
      %2112 = vmatprep.mubr.f32.mxu0 0.0
      %2113 = vmatmul.mubr.f32.gmra.mxu0 %v1861
      %v2114 = vpop.f32.mrf.mxu0
      %v2115 = vadd.f32 0.0, %v2114
      %v2116 = vpop.f32.mrf.mxu0
      %2117 = vmatprep.mubr.f32.mxu0 0.0
      %2118 = vmatmul.mubr.f32.gmra.mxu0 %v1864
      %v2119 = vpop.f32.mrf.mxu0
      %v2120 = vadd.f32 0.0, %v2119
      %v2121 = vpop.f32.mrf.mxu0
      %2122 = vmatprep.mubr.f32.mxu0 0.0
      %2123 = vmatmul.mubr.f32.gmra.mxu0 %v1867
      %v2124 = vpop.f32.mrf.mxu0
      %v2125 = vadd.f32 0.0, %v2124
      %v2126 = vpop.f32.mrf.mxu0
      %2127 = vmatprep.mubr.f32.mxu0 0.0
      %2128 = vmatmul.mubr.f32.gmra.mxu0 %v1870
      %v2129 = vpop.f32.mrf.mxu0
      %v2130 = vadd.f32 0.0, %v2129
      %v2131 = vpop.f32.mrf.mxu0
      %2132 = vmatprep.mubr.f32.mxu0 0.0
      %2133 = vmatmul.mubr.f32.gmra.mxu0 %v1873
      %v2134 = vpop.f32.mrf.mxu0
      %v2135 = vadd.f32 0.0, %v2134
      %v2136 = vpop.f32.mrf.mxu0
      %2137 = vmatprep.mubr.f32.mxu0 0.0
      %2138 = vmatmul.mubr.f32.gmra.mxu0 %v1876
      %v2139 = vpop.f32.mrf.mxu0
      %v2140 = vadd.f32 0.0, %v2139
      %v2141 = vpop.f32.mrf.mxu0
      %2142 = vmatprep.mubr.f32.mxu0 0.0
      %2143 = vmatmul.mubr.f32.gmra.mxu0 %v1879
      %v2144 = vpop.f32.mrf.mxu0
      %v2145 = vadd.f32 0.0, %v2144
      %v2146 = vpop.f32.mrf.mxu0
      %2147 = vmatprep.mubr.f32.mxu0 0.0
      %2148 = vmatmul.mubr.f32.gmra.mxu0 %v1882
      %v2149 = vpop.f32.mrf.mxu0
      %v2150 = vadd.f32 0.0, %v2149
      %v2151 = vpop.f32.mrf.mxu0
      %2152 = vmatprep.mubr.f32.mxu0 0.0
      %2153 = vmatmul.mubr.f32.gmra.mxu0 %v1885
      %v2154 = vpop.f32.mrf.mxu0
      %v2155 = vadd.f32 0.0, %v2154
      %v2156 = vpop.f32.mrf.mxu0
      %2157 = vmatprep.mubr.f32.mxu0 0.0
      %2158 = vmatmul.mubr.f32.gmra.mxu0 %v1888
      %v2159 = vpop.f32.mrf.mxu0
      %v2160 = vadd.f32 0.0, %v2159
      %v2161 = vpop.f32.mrf.mxu0
      %2162 = vmatprep.mubr.f32.mxu0 0.0
      %2163 = vmatmul.mubr.f32.gmra.mxu0 %v1891
      %v2164 = vpop.f32.mrf.mxu0
      %v2165 = vadd.f32 0.0, %v2164
      %v2166 = vpop.f32.mrf.mxu0
      %2167 = vmatprep.mubr.f32.mxu0 0.0
      %2168 = vmatmul.mubr.f32.gmra.mxu0 %v1894
      %v2169 = vpop.f32.mrf.mxu0
      %v2170 = vadd.f32 0.0, %v2169
      %v2171 = vpop.f32.mrf.mxu0
      %2172 = vmatprep.mubr.f32.mxu0 0.0
      %2173 = vmatmul.mubr.f32.gmra.mxu0 %v1897
      %v2174 = vpop.f32.mrf.mxu0
      %v2175 = vadd.f32 0.0, %v2174
      %v2176 = vpop.f32.mrf.mxu0
      %2177 = vmatprep.mubr.f32.mxu0 0.0
      %2178 = vmatmul.mubr.f32.gmra.mxu0 %v1900
      %v2179 = vpop.f32.mrf.mxu0
      %v2180 = vadd.f32 0.0, %v2179
      %v2181 = vpop.f32.mrf.mxu0
      %2182 = vmatprep.mubr.f32.mxu0 0.0
      %2183 = vmatmul.mubr.f32.gmra.mxu0 %v1903
      %v2184 = vpop.f32.mrf.mxu0
      %v2185 = vadd.f32 0.0, %v2184
      %v2186 = vpop.f32.mrf.mxu0
      %2187 = vmatprep.mubr.f32.mxu0 0.0
      %2188 = vmatmul.mubr.f32.gmra.mxu0 %v1906
      %v2189 = vpop.f32.mrf.mxu0
      %v2190 = vadd.f32 0.0, %v2189
      %v2191 = vpop.f32.mrf.mxu0
      %2192 = vmatprep.mubr.f32.mxu0 0.0
      %2193 = vmatmul.mubr.f32.gmra.mxu0 %v1909
      %v2194 = vpop.f32.mrf.mxu0
      %v2195 = vadd.f32 0.0, %v2194
      %v2196 = vpop.f32.mrf.mxu0
      %2197 = vmatprep.mubr.f32.mxu0 0.0
      %2198 = vmatmul.mubr.f32.gmra.mxu0 %v1912
      %v2199 = vpop.f32.mrf.mxu0
      %v2200 = vadd.f32 0.0, %v2199
      %v2201 = vpop.f32.mrf.mxu0
      %2202 = vmatprep.mubr.f32.mxu0 0.0
      %2203 = vmatmul.mubr.f32.gmra.mxu0 %v1915
      %v2204 = vpop.f32.mrf.mxu0
      %v2205 = vadd.f32 0.0, %v2204
      %v2206 = vpop.f32.mrf.mxu0
      %2207 = vmatprep.mubr.f32.mxu0 0.0
      %2208 = vmatmul.mubr.f32.gmra.mxu0 %v1918
      %v2209 = vpop.f32.mrf.mxu0
      %v2210 = vadd.f32 0.0, %v2209
      %v2211 = vpop.f32.mrf.mxu0
      %2212 = vmatprep.mubr.f32.mxu0 0.0
      %2213 = vmatmul.mubr.f32.gmra.mxu0 %v1921
      %v2214 = vpop.f32.mrf.mxu0
      %v2215 = vadd.f32 0.0, %v2214
      %v2216 = vpop.f32.mrf.mxu0
      %2217 = vmatprep.mubr.f32.mxu0 0.0
      %2218 = vmatmul.mubr.f32.gmra.mxu0 %v1924
      %v2219 = vpop.f32.mrf.mxu0
      %v2220 = vadd.f32 0.0, %v2219
      %v2221 = vpop.f32.mrf.mxu0
      %2222 = vmatprep.mubr.f32.mxu0 0.0
      %2223 = vmatmul.mubr.f32.gmra.mxu0 %v1927
      %v2224 = vpop.f32.mrf.mxu0
      %v2225 = vadd.f32 0.0, %v2224
      %v2226 = vpop.f32.mrf.mxu0
      %2227 = vmatprep.mubr.f32.mxu0 0.0
      %2228 = vmatmul.mubr.f32.gmra.mxu0 %v1930
      %v2229 = vpop.f32.mrf.mxu0
      %v2230 = vadd.f32 0.0, %v2229
      %v2231 = vpop.f32.mrf.mxu0
      %2232 = vmatprep.mubr.f32.mxu0 0.0
      %2233 = vmatmul.mubr.f32.gmra.mxu0 %v1933
      %v2234 = vpop.f32.mrf.mxu0
      %v2235 = vadd.f32 0.0, %v2234
      %v2236 = vpop.f32.mrf.mxu0
      %2237 = vmatprep.mubr.f32.mxu0 0.0
      %2238 = vmatmul.mubr.f32.gmra.mxu0 %v1936
      %v2239 = vpop.f32.mrf.mxu0
      %v2240 = vadd.f32 0.0, %v2239
      %v2241 = vpop.f32.mrf.mxu0
      %2242 = vmatprep.mubr.f32.mxu0 0.0
      %2243 = vmatmul.mubr.f32.gmra.mxu0 %v1939
      %v2244 = vpop.f32.mrf.mxu0
      %v2245 = vadd.f32 0.0, %v2244
      %v2246 = vpop.f32.mrf.mxu0
      %2247 = vdwg.mxu0
      %v2248 = vadd.f32 %v1689, %v2010
      %v2249 = vadd.f32 %v1690, %v2015
      %v2250 = vadd.f32 %v1691, %v2020
      %v2251 = vadd.f32 %v1692, %v2025
      %v2252 = vadd.f32 %v1693, %v2030
      %v2253 = vadd.f32 %v1694, %v2035
      %v2254 = vadd.f32 %v1695, %v2040
      %v2255 = vadd.f32 %v1696, %v2045
      %v2256 = vadd.f32 %v1697, %v2050
      %v2257 = vadd.f32 %v1698, %v2055
      %v2258 = vadd.f32 %v1699, %v2060
      %v2259 = vadd.f32 %v1700, %v2065
      %v2260 = vadd.f32 %v1701, %v2070
      %v2261 = vadd.f32 %v1702, %v2075
      %v2262 = vadd.f32 %v1703, %v2080
      %v2263 = vadd.f32 %v1704, %v2085
      %v2264 = vadd.f32 %v1705, %v2090
      %v2265 = vadd.f32 %v1706, %v2095
      %v2266 = vadd.f32 %v1707, %v2100
      %v2267 = vadd.f32 %v1708, %v2105
      %v2268 = vadd.f32 %v1709, %v2110
      %v2269 = vadd.f32 %v1710, %v2115
      %v2270 = vadd.f32 %v1711, %v2120
      %v2271 = vadd.f32 %v1712, %v2125
      %v2272 = vadd.f32 %v1713, %v2130
      %v2273 = vadd.f32 %v1714, %v2135
      %v2274 = vadd.f32 %v1715, %v2140
      %v2275 = vadd.f32 %v1716, %v2145
      %v2276 = vadd.f32 %v1717, %v2150
      %v2277 = vadd.f32 %v1718, %v2155
      %v2278 = vadd.f32 %v1719, %v2160
      %v2279 = vadd.f32 %v1720, %v2165
      %v2280 = vadd.f32 %v1721, %v2170
      %v2281 = vadd.f32 %v1722, %v2175
      %v2282 = vadd.f32 %v1723, %v2180
      %v2283 = vadd.f32 %v1724, %v2185
      %v2284 = vadd.f32 %v1725, %v2190
      %v2285 = vadd.f32 %v1726, %v2195
      %v2286 = vadd.f32 %v1727, %v2200
      %v2287 = vadd.f32 %v1728, %v2205
      %v2288 = vadd.f32 %v1729, %v2210
      %v2289 = vadd.f32 %v1730, %v2215
      %v2290 = vadd.f32 %v1731, %v2220
      %v2291 = vadd.f32 %v1732, %v2225
      %v2292 = vadd.f32 %v1733, %v2230
      %v2293 = vadd.f32 %v1734, %v2235
      %v2294 = vadd.f32 %v1735, %v2240
      %v2295 = vadd.f32 %v1736, %v2245
      %s2296 = scalar_lea.vmem %s1, 1152
      %v2297 = vld [vmem:[%s2296] sm:$0xff]
      %v2298 = vld [vmem:[%s2296 + $0x8] sm:$0xff]
      %v2299 = vld [vmem:[%s2296 + $0x10] sm:$0xff]
      %v2300 = vld [vmem:[%s2296 + $0x18] sm:$0xff]
      %v2301 = vld [vmem:[%s2296 + $0x20] sm:$0xff]
      %v2302 = vld [vmem:[%s2296 + $0x28] sm:$0xff]
      %v2303 = vld [vmem:[%s2296 + $0x30] sm:$0xff]
      %v2304 = vld [vmem:[%s2296 + $0x38] sm:$0xff]
      %v2305 = vld [vmem:[%s2296 + $0x40] sm:$0xff]
      %v2306 = vld [vmem:[%s2296 + $0x48] sm:$0xff]
      %v2307 = vld [vmem:[%s2296 + $0x50] sm:$0xff]
      %v2308 = vld [vmem:[%s2296 + $0x58] sm:$0xff]
      %v2309 = vld [vmem:[%s2296 + $0x60] sm:$0xff]
      %v2310 = vld [vmem:[%s2296 + $0x68] sm:$0xff]
      %v2311 = vld [vmem:[%s2296 + $0x70] sm:$0xff]
      %v2312 = vld [vmem:[%s2296 + $0x78] sm:$0xff]
      %v2313 = vld [vmem:[%s2296 + $0x80] sm:$0xff]
      %v2314 = vld [vmem:[%s2296 + $0x88] sm:$0xff]
      %v2315 = vld [vmem:[%s2296 + $0x90] sm:$0xff]
      %v2316 = vld [vmem:[%s2296 + $0x98] sm:$0xff]
      %v2317 = vld [vmem:[%s2296 + $0xa0] sm:$0xff]
      %v2318 = vld [vmem:[%s2296 + $0xa8] sm:$0xff]
      %v2319 = vld [vmem:[%s2296 + $0xb0] sm:$0xff]
      %v2320 = vld [vmem:[%s2296 + $0xb8] sm:$0xff]
      %v2321 = vld [vmem:[%s2296 + $0xc0] sm:$0xff]
      %v2322 = vld [vmem:[%s2296 + $0xc8] sm:$0xff]
      %v2323 = vld [vmem:[%s2296 + $0xd0] sm:$0xff]
      %v2324 = vld [vmem:[%s2296 + $0xd8] sm:$0xff]
      %v2325 = vld [vmem:[%s2296 + $0xe0] sm:$0xff]
      %v2326 = vld [vmem:[%s2296 + $0xe8] sm:$0xff]
      %v2327 = vld [vmem:[%s2296 + $0xf0] sm:$0xff]
      %v2328 = vld [vmem:[%s2296 + $0xf8] sm:$0xff]
      %v2329 = vld [vmem:[%s2296 + $0x100] sm:$0xff]
      %v2330 = vld [vmem:[%s2296 + $0x108] sm:$0xff]
      %v2331 = vld [vmem:[%s2296 + $0x110] sm:$0xff]
      %v2332 = vld [vmem:[%s2296 + $0x118] sm:$0xff]
      %v2333 = vld [vmem:[%s2296 + $0x120] sm:$0xff]
      %v2334 = vld [vmem:[%s2296 + $0x128] sm:$0xff]
      %v2335 = vld [vmem:[%s2296 + $0x130] sm:$0xff]
      %v2336 = vld [vmem:[%s2296 + $0x138] sm:$0xff]
      %v2337 = vld [vmem:[%s2296 + $0x140] sm:$0xff]
      %v2338 = vld [vmem:[%s2296 + $0x148] sm:$0xff]
      %v2339 = vld [vmem:[%s2296 + $0x150] sm:$0xff]
      %v2340 = vld [vmem:[%s2296 + $0x158] sm:$0xff]
      %v2341 = vld [vmem:[%s2296 + $0x160] sm:$0xff]
      %v2342 = vld [vmem:[%s2296 + $0x168] sm:$0xff]
      %v2343 = vld [vmem:[%s2296 + $0x170] sm:$0xff]
      %v2344 = vld [vmem:[%s2296 + $0x178] sm:$0xff]
      %2345 = vrot.lane.b32.xlu0 %v333, 125
      %v2346 = vpop.permute.xlu0 %2345
      %2347 = vrot.lane.b32.xlu0 %v334, 125
      %v2348 = vpop.permute.xlu0 %2347
      %2349 = vrot.lane.b32.xlu0 %v335, 125
      %v2350 = vpop.permute.xlu0 %2349
      %2351 = vrot.lane.b32.xlu0 %v336, 125
      %v2352 = vpop.permute.xlu0 %2351
      %v2357 = vsel %vm433, %v2297, 0
      %v2360 = vsel %vm433, %v2298, 0
      %v2363 = vsel %vm433, %v2299, 0
      %v2366 = vsel %vm433, %v2300, 0
      %v2369 = vsel %vm433, %v2301, 0
      %v2372 = vsel %vm433, %v2302, 0
      %v2375 = vsel %vm433, %v2303, 0
      %v2378 = vsel %vm433, %v2304, 0
      %v2381 = vsel %vm433, %v2305, 0
      %v2384 = vsel %vm433, %v2306, 0
      %v2387 = vsel %vm433, %v2307, 0
      %v2390 = vsel %vm433, %v2308, 0
      %v2393 = vsel %vm433, %v2309, 0
      %v2396 = vsel %vm433, %v2310, 0
      %v2399 = vsel %vm433, %v2311, 0
      %v2402 = vsel %vm433, %v2312, 0
      %v2405 = vsel %vm433, %v2313, 0
      %v2408 = vsel %vm433, %v2314, 0
      %v2411 = vsel %vm433, %v2315, 0
      %v2414 = vsel %vm433, %v2316, 0
      %v2417 = vsel %vm433, %v2317, 0
      %v2420 = vsel %vm433, %v2318, 0
      %v2423 = vsel %vm433, %v2319, 0
      %v2426 = vsel %vm433, %v2320, 0
      %v2429 = vsel %vm433, %v2321, 0
      %v2432 = vsel %vm433, %v2322, 0
      %v2435 = vsel %vm433, %v2323, 0
      %v2438 = vsel %vm433, %v2324, 0
      %v2441 = vsel %vm433, %v2325, 0
      %v2444 = vsel %vm433, %v2326, 0
      %v2447 = vsel %vm433, %v2327, 0
      %v2450 = vsel %vm433, %v2328, 0
      %v2453 = vsel %vm433, %v2329, 0
      %v2456 = vsel %vm433, %v2330, 0
      %v2459 = vsel %vm433, %v2331, 0
      %v2462 = vsel %vm433, %v2332, 0
      %v2465 = vsel %vm433, %v2333, 0
      %v2468 = vsel %vm433, %v2334, 0
      %v2471 = vsel %vm433, %v2335, 0
      %v2474 = vsel %vm433, %v2336, 0
      %v2477 = vsel %vm433, %v2337, 0
      %v2480 = vsel %vm433, %v2338, 0
      %v2483 = vsel %vm433, %v2339, 0
      %v2486 = vsel %vm433, %v2340, 0
      %v2489 = vsel %vm433, %v2341, 0
      %v2492 = vsel %vm433, %v2342, 0
      %v2495 = vsel %vm433, %v2343, 0
      %v2498 = vsel %vm433, %v2344, 0
      %v2500 = vsel %vm578, %v2352, 0
      %2502 = vmatprep.subr.mxu0 0.0
      %2503 = vmatpush1.msra.mxu0 0.0
      %2504 = vmatprep.subr.mxu0 0.0
      %2505 = vmatpush1.msra.mxu0 0.0
      %2506 = vmatprep.subr.mxu0 0.0
      %2507 = vmatpush1.msra.mxu0 0.0
      %2508 = vmatprep.subr.mxu0 0.0
      %2509 = vmatpush1.msra.mxu0 0.0
      %2510 = vmatprep.subr.mxu0 0.0
      %2511 = vmatpush1.msra.mxu0 0.0
      %2512 = vmatprep.subr.mxu0 0.0
      %2513 = vmatpush1.msra.mxu0 0.0
      %2514 = vmatprep.subr.mxu0 0.0
      %2515 = vmatpush1.msra.mxu0 0.0
      %2516 = vmatprep.subr.mxu0 0.0
      %2517 = vmatpush1.msra.mxu0 0.0
      %2518 = vmatprep.subr.mxu0 0.0
      %2519 = vmatpush1.msra.mxu0 0.0
      %2520 = vmatprep.subr.mxu0 0.0
      %2521 = vmatpush1.msra.mxu0 0.0
      %2522 = vmatprep.subr.mxu0 0.0
      %2523 = vmatpush1.msra.mxu0 0.0
      %2524 = vmatprep.subr.mxu0 0.0
      %2525 = vmatpush1.msra.mxu0 0.0
      %2526 = vmatprep.subr.mxu0 0.0
      %2527 = vmatpush1.msra.mxu0 %v2500
      %2528 = vmatprep.subr.mxu0 0.0
      %2529 = vmatpush1.msra.mxu0 %v2350
      %2530 = vmatprep.subr.mxu0 0.0
      %2531 = vmatpush1.msra.mxu0 %v2348
      %2532 = vmatprep.subr.mxu0 0.0
      %2533 = vmatpush1.msra.mxu0 %v2346
      %2534 = vmatprep.subr.mxu0 0.0
      %2535 = vmatpush2.msra.mxu0 0.0
      %2536 = vmatprep.subr.mxu0 0.0
      %2537 = vmatpush2.msra.mxu0 0.0
      %2538 = vmatprep.subr.mxu0 0.0
      %2539 = vmatpush2.msra.mxu0 0.0
      %2540 = vmatprep.subr.mxu0 0.0
      %2541 = vmatpush2.msra.mxu0 0.0
      %2542 = vmatprep.subr.mxu0 0.0
      %2543 = vmatpush2.msra.mxu0 0.0
      %2544 = vmatprep.subr.mxu0 0.0
      %2545 = vmatpush2.msra.mxu0 0.0
      %2546 = vmatprep.subr.mxu0 0.0
      %2547 = vmatpush2.msra.mxu0 0.0
      %2548 = vmatprep.subr.mxu0 0.0
      %2549 = vmatpush2.msra.mxu0 0.0
      %2550 = vmatprep.subr.mxu0 0.0
      %2551 = vmatpush2.msra.mxu0 0.0
      %2552 = vmatprep.subr.mxu0 0.0
      %2553 = vmatpush2.msra.mxu0 0.0
      %2554 = vmatprep.subr.mxu0 0.0
      %2555 = vmatpush2.msra.mxu0 0.0
      %2556 = vmatprep.subr.mxu0 0.0
      %2557 = vmatpush2.msra.mxu0 0.0
      %2558 = vmatprep.subr.mxu0 0.0
      %2559 = vmatpush2.msra.mxu0 0.0
      %2560 = vmatprep.subr.mxu0 0.0
      %2561 = vmatpush2.msra.mxu0 0.0
      %2562 = vmatprep.subr.mxu0 0.0
      %2563 = vmatpush2.msra.mxu0 0.0
      %2564 = vmatprep.subr.mxu0 0.0
      %2565 = vmatpush2.msra.mxu0 0.0
      %2566 = vmatprep.mubr.f32.mxu0 0.0
      %2567 = vmatmul.mubr.f32.gmra.mxu0 %v2357
      %v2568 = vpop.f32.mrf.mxu0
      %v2569 = vadd.f32 0.0, %v2568
      %v2570 = vpop.f32.mrf.mxu0
      %2571 = vmatprep.mubr.f32.mxu0 0.0
      %2572 = vmatmul.mubr.f32.gmra.mxu0 %v2360
      %v2573 = vpop.f32.mrf.mxu0
      %v2574 = vadd.f32 0.0, %v2573
      %v2575 = vpop.f32.mrf.mxu0
      %2576 = vmatprep.mubr.f32.mxu0 0.0
      %2577 = vmatmul.mubr.f32.gmra.mxu0 %v2363
      %v2578 = vpop.f32.mrf.mxu0
      %v2579 = vadd.f32 0.0, %v2578
      %v2580 = vpop.f32.mrf.mxu0
      %2581 = vmatprep.mubr.f32.mxu0 0.0
      %2582 = vmatmul.mubr.f32.gmra.mxu0 %v2366
      %v2583 = vpop.f32.mrf.mxu0
      %v2584 = vadd.f32 0.0, %v2583
      %v2585 = vpop.f32.mrf.mxu0
      %2586 = vmatprep.mubr.f32.mxu0 0.0
      %2587 = vmatmul.mubr.f32.gmra.mxu0 %v2369
      %v2588 = vpop.f32.mrf.mxu0
      %v2589 = vadd.f32 0.0, %v2588
      %v2590 = vpop.f32.mrf.mxu0
      %2591 = vmatprep.mubr.f32.mxu0 0.0
      %2592 = vmatmul.mubr.f32.gmra.mxu0 %v2372
      %v2593 = vpop.f32.mrf.mxu0
      %v2594 = vadd.f32 0.0, %v2593
      %v2595 = vpop.f32.mrf.mxu0
      %2596 = vmatprep.mubr.f32.mxu0 0.0
      %2597 = vmatmul.mubr.f32.gmra.mxu0 %v2375
      %v2598 = vpop.f32.mrf.mxu0
      %v2599 = vadd.f32 0.0, %v2598
      %v2600 = vpop.f32.mrf.mxu0
      %2601 = vmatprep.mubr.f32.mxu0 0.0
      %2602 = vmatmul.mubr.f32.gmra.mxu0 %v2378
      %v2603 = vpop.f32.mrf.mxu0
      %v2604 = vadd.f32 0.0, %v2603
      %v2605 = vpop.f32.mrf.mxu0
      %2606 = vmatprep.mubr.f32.mxu0 0.0
      %2607 = vmatmul.mubr.f32.gmra.mxu0 %v2381
      %v2608 = vpop.f32.mrf.mxu0
      %v2609 = vadd.f32 0.0, %v2608
      %v2610 = vpop.f32.mrf.mxu0
      %2611 = vmatprep.mubr.f32.mxu0 0.0
      %2612 = vmatmul.mubr.f32.gmra.mxu0 %v2384
      %v2613 = vpop.f32.mrf.mxu0
      %v2614 = vadd.f32 0.0, %v2613
      %v2615 = vpop.f32.mrf.mxu0
      %2616 = vmatprep.mubr.f32.mxu0 0.0
      %2617 = vmatmul.mubr.f32.gmra.mxu0 %v2387
      %v2618 = vpop.f32.mrf.mxu0
      %v2619 = vadd.f32 0.0, %v2618
      %v2620 = vpop.f32.mrf.mxu0
      %2621 = vmatprep.mubr.f32.mxu0 0.0
      %2622 = vmatmul.mubr.f32.gmra.mxu0 %v2390
      %v2623 = vpop.f32.mrf.mxu0
      %v2624 = vadd.f32 0.0, %v2623
      %v2625 = vpop.f32.mrf.mxu0
      %2626 = vmatprep.mubr.f32.mxu0 0.0
      %2627 = vmatmul.mubr.f32.gmra.mxu0 %v2393
      %v2628 = vpop.f32.mrf.mxu0
      %v2629 = vadd.f32 0.0, %v2628
      %v2630 = vpop.f32.mrf.mxu0
      %2631 = vmatprep.mubr.f32.mxu0 0.0
      %2632 = vmatmul.mubr.f32.gmra.mxu0 %v2396
      %v2633 = vpop.f32.mrf.mxu0
      %v2634 = vadd.f32 0.0, %v2633
      %v2635 = vpop.f32.mrf.mxu0
      %2636 = vmatprep.mubr.f32.mxu0 0.0
      %2637 = vmatmul.mubr.f32.gmra.mxu0 %v2399
      %v2638 = vpop.f32.mrf.mxu0
      %v2639 = vadd.f32 0.0, %v2638
      %v2640 = vpop.f32.mrf.mxu0
      %2641 = vmatprep.mubr.f32.mxu0 0.0
      %2642 = vmatmul.mubr.f32.gmra.mxu0 %v2402
      %v2643 = vpop.f32.mrf.mxu0
      %v2644 = vadd.f32 0.0, %v2643
      %v2645 = vpop.f32.mrf.mxu0
      %2646 = vmatprep.mubr.f32.mxu0 0.0
      %2647 = vmatmul.mubr.f32.gmra.mxu0 %v2405
      %v2648 = vpop.f32.mrf.mxu0
      %v2649 = vadd.f32 0.0, %v2648
      %v2650 = vpop.f32.mrf.mxu0
      %2651 = vmatprep.mubr.f32.mxu0 0.0
      %2652 = vmatmul.mubr.f32.gmra.mxu0 %v2408
      %v2653 = vpop.f32.mrf.mxu0
      %v2654 = vadd.f32 0.0, %v2653
      %v2655 = vpop.f32.mrf.mxu0
      %2656 = vmatprep.mubr.f32.mxu0 0.0
      %2657 = vmatmul.mubr.f32.gmra.mxu0 %v2411
      %v2658 = vpop.f32.mrf.mxu0
      %v2659 = vadd.f32 0.0, %v2658
      %v2660 = vpop.f32.mrf.mxu0
      %2661 = vmatprep.mubr.f32.mxu0 0.0
      %2662 = vmatmul.mubr.f32.gmra.mxu0 %v2414
      %v2663 = vpop.f32.mrf.mxu0
      %v2664 = vadd.f32 0.0, %v2663
      %v2665 = vpop.f32.mrf.mxu0
      %2666 = vmatprep.mubr.f32.mxu0 0.0
      %2667 = vmatmul.mubr.f32.gmra.mxu0 %v2417
      %v2668 = vpop.f32.mrf.mxu0
      %v2669 = vadd.f32 0.0, %v2668
      %v2670 = vpop.f32.mrf.mxu0
      %2671 = vmatprep.mubr.f32.mxu0 0.0
      %2672 = vmatmul.mubr.f32.gmra.mxu0 %v2420
      %v2673 = vpop.f32.mrf.mxu0
      %v2674 = vadd.f32 0.0, %v2673
      %v2675 = vpop.f32.mrf.mxu0
      %2676 = vmatprep.mubr.f32.mxu0 0.0
      %2677 = vmatmul.mubr.f32.gmra.mxu0 %v2423
      %v2678 = vpop.f32.mrf.mxu0
      %v2679 = vadd.f32 0.0, %v2678
      %v2680 = vpop.f32.mrf.mxu0
      %2681 = vmatprep.mubr.f32.mxu0 0.0
      %2682 = vmatmul.mubr.f32.gmra.mxu0 %v2426
      %v2683 = vpop.f32.mrf.mxu0
      %v2684 = vadd.f32 0.0, %v2683
      %v2685 = vpop.f32.mrf.mxu0
      %2686 = vmatprep.mubr.f32.mxu0 0.0
      %2687 = vmatmul.mubr.f32.gmra.mxu0 %v2429
      %v2688 = vpop.f32.mrf.mxu0
      %v2689 = vadd.f32 0.0, %v2688
      %v2690 = vpop.f32.mrf.mxu0
      %2691 = vmatprep.mubr.f32.mxu0 0.0
      %2692 = vmatmul.mubr.f32.gmra.mxu0 %v2432
      %v2693 = vpop.f32.mrf.mxu0
      %v2694 = vadd.f32 0.0, %v2693
      %v2695 = vpop.f32.mrf.mxu0
      %2696 = vmatprep.mubr.f32.mxu0 0.0
      %2697 = vmatmul.mubr.f32.gmra.mxu0 %v2435
      %v2698 = vpop.f32.mrf.mxu0
      %v2699 = vadd.f32 0.0, %v2698
      %v2700 = vpop.f32.mrf.mxu0
      %2701 = vmatprep.mubr.f32.mxu0 0.0
      %2702 = vmatmul.mubr.f32.gmra.mxu0 %v2438
      %v2703 = vpop.f32.mrf.mxu0
      %v2704 = vadd.f32 0.0, %v2703
      %v2705 = vpop.f32.mrf.mxu0
      %2706 = vmatprep.mubr.f32.mxu0 0.0
      %2707 = vmatmul.mubr.f32.gmra.mxu0 %v2441
      %v2708 = vpop.f32.mrf.mxu0
      %v2709 = vadd.f32 0.0, %v2708
      %v2710 = vpop.f32.mrf.mxu0
      %2711 = vmatprep.mubr.f32.mxu0 0.0
      %2712 = vmatmul.mubr.f32.gmra.mxu0 %v2444
      %v2713 = vpop.f32.mrf.mxu0
      %v2714 = vadd.f32 0.0, %v2713
      %v2715 = vpop.f32.mrf.mxu0
      %2716 = vmatprep.mubr.f32.mxu0 0.0
      %2717 = vmatmul.mubr.f32.gmra.mxu0 %v2447
      %v2718 = vpop.f32.mrf.mxu0
      %v2719 = vadd.f32 0.0, %v2718
      %v2720 = vpop.f32.mrf.mxu0
      %2721 = vmatprep.mubr.f32.mxu0 0.0
      %2722 = vmatmul.mubr.f32.gmra.mxu0 %v2450
      %v2723 = vpop.f32.mrf.mxu0
      %v2724 = vadd.f32 0.0, %v2723
      %v2725 = vpop.f32.mrf.mxu0
      %2726 = vmatprep.mubr.f32.mxu0 0.0
      %2727 = vmatmul.mubr.f32.gmra.mxu0 %v2453
      %v2728 = vpop.f32.mrf.mxu0
      %v2729 = vadd.f32 0.0, %v2728
      %v2730 = vpop.f32.mrf.mxu0
      %2731 = vmatprep.mubr.f32.mxu0 0.0
      %2732 = vmatmul.mubr.f32.gmra.mxu0 %v2456
      %v2733 = vpop.f32.mrf.mxu0
      %v2734 = vadd.f32 0.0, %v2733
      %v2735 = vpop.f32.mrf.mxu0
      %2736 = vmatprep.mubr.f32.mxu0 0.0
      %2737 = vmatmul.mubr.f32.gmra.mxu0 %v2459
      %v2738 = vpop.f32.mrf.mxu0
      %v2739 = vadd.f32 0.0, %v2738
      %v2740 = vpop.f32.mrf.mxu0
      %2741 = vmatprep.mubr.f32.mxu0 0.0
      %2742 = vmatmul.mubr.f32.gmra.mxu0 %v2462
      %v2743 = vpop.f32.mrf.mxu0
      %v2744 = vadd.f32 0.0, %v2743
      %v2745 = vpop.f32.mrf.mxu0
      %2746 = vmatprep.mubr.f32.mxu0 0.0
      %2747 = vmatmul.mubr.f32.gmra.mxu0 %v2465
      %v2748 = vpop.f32.mrf.mxu0
      %v2749 = vadd.f32 0.0, %v2748
      %v2750 = vpop.f32.mrf.mxu0
      %2751 = vmatprep.mubr.f32.mxu0 0.0
      %2752 = vmatmul.mubr.f32.gmra.mxu0 %v2468
      %v2753 = vpop.f32.mrf.mxu0
      %v2754 = vadd.f32 0.0, %v2753
      %v2755 = vpop.f32.mrf.mxu0
      %2756 = vmatprep.mubr.f32.mxu0 0.0
      %2757 = vmatmul.mubr.f32.gmra.mxu0 %v2471
      %v2758 = vpop.f32.mrf.mxu0
      %v2759 = vadd.f32 0.0, %v2758
      %v2760 = vpop.f32.mrf.mxu0
      %2761 = vmatprep.mubr.f32.mxu0 0.0
      %2762 = vmatmul.mubr.f32.gmra.mxu0 %v2474
      %v2763 = vpop.f32.mrf.mxu0
      %v2764 = vadd.f32 0.0, %v2763
      %v2765 = vpop.f32.mrf.mxu0
      %2766 = vmatprep.mubr.f32.mxu0 0.0
      %2767 = vmatmul.mubr.f32.gmra.mxu0 %v2477
      %v2768 = vpop.f32.mrf.mxu0
      %v2769 = vadd.f32 0.0, %v2768
      %v2770 = vpop.f32.mrf.mxu0
      %2771 = vmatprep.mubr.f32.mxu0 0.0
      %2772 = vmatmul.mubr.f32.gmra.mxu0 %v2480
      %v2773 = vpop.f32.mrf.mxu0
      %v2774 = vadd.f32 0.0, %v2773
      %v2775 = vpop.f32.mrf.mxu0
      %2776 = vmatprep.mubr.f32.mxu0 0.0
      %2777 = vmatmul.mubr.f32.gmra.mxu0 %v2483
      %v2778 = vpop.f32.mrf.mxu0
      %v2779 = vadd.f32 0.0, %v2778
      %v2780 = vpop.f32.mrf.mxu0
      %2781 = vmatprep.mubr.f32.mxu0 0.0
      %2782 = vmatmul.mubr.f32.gmra.mxu0 %v2486
      %v2783 = vpop.f32.mrf.mxu0
      %v2784 = vadd.f32 0.0, %v2783
      %v2785 = vpop.f32.mrf.mxu0
      %2786 = vmatprep.mubr.f32.mxu0 0.0
      %2787 = vmatmul.mubr.f32.gmra.mxu0 %v2489
      %v2788 = vpop.f32.mrf.mxu0
      %v2789 = vadd.f32 0.0, %v2788
      %v2790 = vpop.f32.mrf.mxu0
      %2791 = vmatprep.mubr.f32.mxu0 0.0
      %2792 = vmatmul.mubr.f32.gmra.mxu0 %v2492
      %v2793 = vpop.f32.mrf.mxu0
      %v2794 = vadd.f32 0.0, %v2793
      %v2795 = vpop.f32.mrf.mxu0
      %2796 = vmatprep.mubr.f32.mxu0 0.0
      %2797 = vmatmul.mubr.f32.gmra.mxu0 %v2495
      %v2798 = vpop.f32.mrf.mxu0
      %v2799 = vadd.f32 0.0, %v2798
      %v2800 = vpop.f32.mrf.mxu0
      %2801 = vmatprep.mubr.f32.mxu0 0.0
      %2802 = vmatmul.mubr.f32.gmra.mxu0 %v2498
      %v2803 = vpop.f32.mrf.mxu0
      %v2804 = vadd.f32 0.0, %v2803
      %v2805 = vpop.f32.mrf.mxu0
      %2806 = vdwg.mxu0
      %v2807 = vadd.f32 %v2248, %v2569
      %v2808 = vadd.f32 %v2249, %v2574
      %v2809 = vadd.f32 %v2250, %v2579
      %v2810 = vadd.f32 %v2251, %v2584
      %v2811 = vadd.f32 %v2252, %v2589
      %v2812 = vadd.f32 %v2253, %v2594
      %v2813 = vadd.f32 %v2254, %v2599
      %v2814 = vadd.f32 %v2255, %v2604
      %v2815 = vadd.f32 %v2256, %v2609
      %v2816 = vadd.f32 %v2257, %v2614
      %v2817 = vadd.f32 %v2258, %v2619
      %v2818 = vadd.f32 %v2259, %v2624
      %v2819 = vadd.f32 %v2260, %v2629
      %v2820 = vadd.f32 %v2261, %v2634
      %v2821 = vadd.f32 %v2262, %v2639
      %v2822 = vadd.f32 %v2263, %v2644
      %v2823 = vadd.f32 %v2264, %v2649
      %v2824 = vadd.f32 %v2265, %v2654
      %v2825 = vadd.f32 %v2266, %v2659
      %v2826 = vadd.f32 %v2267, %v2664
      %v2827 = vadd.f32 %v2268, %v2669
      %v2828 = vadd.f32 %v2269, %v2674
      %v2829 = vadd.f32 %v2270, %v2679
      %v2830 = vadd.f32 %v2271, %v2684
      %v2831 = vadd.f32 %v2272, %v2689
      %v2832 = vadd.f32 %v2273, %v2694
      %v2833 = vadd.f32 %v2274, %v2699
      %v2834 = vadd.f32 %v2275, %v2704
      %v2835 = vadd.f32 %v2276, %v2709
      %v2836 = vadd.f32 %v2277, %v2714
      %v2837 = vadd.f32 %v2278, %v2719
      %v2838 = vadd.f32 %v2279, %v2724
      %v2839 = vadd.f32 %v2280, %v2729
      %v2840 = vadd.f32 %v2281, %v2734
      %v2841 = vadd.f32 %v2282, %v2739
      %v2842 = vadd.f32 %v2283, %v2744
      %v2843 = vadd.f32 %v2284, %v2749
      %v2844 = vadd.f32 %v2285, %v2754
      %v2845 = vadd.f32 %v2286, %v2759
      %v2846 = vadd.f32 %v2287, %v2764
      %v2847 = vadd.f32 %v2288, %v2769
      %v2848 = vadd.f32 %v2289, %v2774
      %v2849 = vadd.f32 %v2290, %v2779
      %v2850 = vadd.f32 %v2291, %v2784
      %v2851 = vadd.f32 %v2292, %v2789
      %v2852 = vadd.f32 %v2293, %v2794
      %v2853 = vadd.f32 %v2294, %v2799
      %v2854 = vadd.f32 %v2295, %v2804
      %s2855 = scalar_lea.vmem %s1, 1536
      %v2856 = vld [vmem:[%s2855] sm:$0xff]
      %v2857 = vld [vmem:[%s2855 + $0x8] sm:$0xff]
      %v2858 = vld [vmem:[%s2855 + $0x10] sm:$0xff]
      %v2859 = vld [vmem:[%s2855 + $0x18] sm:$0xff]
      %v2860 = vld [vmem:[%s2855 + $0x20] sm:$0xff]
      %v2861 = vld [vmem:[%s2855 + $0x28] sm:$0xff]
      %v2862 = vld [vmem:[%s2855 + $0x30] sm:$0xff]
      %v2863 = vld [vmem:[%s2855 + $0x38] sm:$0xff]
      %v2864 = vld [vmem:[%s2855 + $0x40] sm:$0xff]
      %v2865 = vld [vmem:[%s2855 + $0x48] sm:$0xff]
      %v2866 = vld [vmem:[%s2855 + $0x50] sm:$0xff]
      %v2867 = vld [vmem:[%s2855 + $0x58] sm:$0xff]
      %v2868 = vld [vmem:[%s2855 + $0x60] sm:$0xff]
      %v2869 = vld [vmem:[%s2855 + $0x68] sm:$0xff]
      %v2870 = vld [vmem:[%s2855 + $0x70] sm:$0xff]
      %v2871 = vld [vmem:[%s2855 + $0x78] sm:$0xff]
      %v2872 = vld [vmem:[%s2855 + $0x80] sm:$0xff]
      %v2873 = vld [vmem:[%s2855 + $0x88] sm:$0xff]
      %v2874 = vld [vmem:[%s2855 + $0x90] sm:$0xff]
      %v2875 = vld [vmem:[%s2855 + $0x98] sm:$0xff]
      %v2876 = vld [vmem:[%s2855 + $0xa0] sm:$0xff]
      %v2877 = vld [vmem:[%s2855 + $0xa8] sm:$0xff]
      %v2878 = vld [vmem:[%s2855 + $0xb0] sm:$0xff]
      %v2879 = vld [vmem:[%s2855 + $0xb8] sm:$0xff]
      %v2880 = vld [vmem:[%s2855 + $0xc0] sm:$0xff]
      %v2881 = vld [vmem:[%s2855 + $0xc8] sm:$0xff]
      %v2882 = vld [vmem:[%s2855 + $0xd0] sm:$0xff]
      %v2883 = vld [vmem:[%s2855 + $0xd8] sm:$0xff]
      %v2884 = vld [vmem:[%s2855 + $0xe0] sm:$0xff]
      %v2885 = vld [vmem:[%s2855 + $0xe8] sm:$0xff]
      %v2886 = vld [vmem:[%s2855 + $0xf0] sm:$0xff]
      %v2887 = vld [vmem:[%s2855 + $0xf8] sm:$0xff]
      %v2888 = vld [vmem:[%s2855 + $0x100] sm:$0xff]
      %v2889 = vld [vmem:[%s2855 + $0x108] sm:$0xff]
      %v2890 = vld [vmem:[%s2855 + $0x110] sm:$0xff]
      %v2891 = vld [vmem:[%s2855 + $0x118] sm:$0xff]
      %v2892 = vld [vmem:[%s2855 + $0x120] sm:$0xff]
      %v2893 = vld [vmem:[%s2855 + $0x128] sm:$0xff]
      %v2894 = vld [vmem:[%s2855 + $0x130] sm:$0xff]
      %v2895 = vld [vmem:[%s2855 + $0x138] sm:$0xff]
      %v2896 = vld [vmem:[%s2855 + $0x140] sm:$0xff]
      %v2897 = vld [vmem:[%s2855 + $0x148] sm:$0xff]
      %v2898 = vld [vmem:[%s2855 + $0x150] sm:$0xff]
      %v2899 = vld [vmem:[%s2855 + $0x158] sm:$0xff]
      %v2900 = vld [vmem:[%s2855 + $0x160] sm:$0xff]
      %v2901 = vld [vmem:[%s2855 + $0x168] sm:$0xff]
      %v2902 = vld [vmem:[%s2855 + $0x170] sm:$0xff]
      %v2903 = vld [vmem:[%s2855 + $0x178] sm:$0xff]
      %2904 = vrot.lane.b32.xlu0 %v333, 124
      %v2905 = vpop.permute.xlu0 %2904
      %2906 = vrot.lane.b32.xlu0 %v334, 124
      %v2907 = vpop.permute.xlu0 %2906
      %2908 = vrot.lane.b32.xlu0 %v335, 124
      %v2909 = vpop.permute.xlu0 %2908
      %2910 = vrot.lane.b32.xlu0 %v336, 124
      %v2911 = vpop.permute.xlu0 %2910
      %v2916 = vsel %vm433, %v2856, 0
      %v2919 = vsel %vm433, %v2857, 0
      %v2922 = vsel %vm433, %v2858, 0
      %v2925 = vsel %vm433, %v2859, 0
      %v2928 = vsel %vm433, %v2860, 0
      %v2931 = vsel %vm433, %v2861, 0
      %v2934 = vsel %vm433, %v2862, 0
      %v2937 = vsel %vm433, %v2863, 0
      %v2940 = vsel %vm433, %v2864, 0
      %v2943 = vsel %vm433, %v2865, 0
      %v2946 = vsel %vm433, %v2866, 0
      %v2949 = vsel %vm433, %v2867, 0
      %v2952 = vsel %vm433, %v2868, 0
      %v2955 = vsel %vm433, %v2869, 0
      %v2958 = vsel %vm433, %v2870, 0
      %v2961 = vsel %vm433, %v2871, 0
      %v2964 = vsel %vm433, %v2872, 0
      %v2967 = vsel %vm433, %v2873, 0
      %v2970 = vsel %vm433, %v2874, 0
      %v2973 = vsel %vm433, %v2875, 0
      %v2976 = vsel %vm433, %v2876, 0
      %v2979 = vsel %vm433, %v2877, 0
      %v2982 = vsel %vm433, %v2878, 0
      %v2985 = vsel %vm433, %v2879, 0
      %v2988 = vsel %vm433, %v2880, 0
      %v2991 = vsel %vm433, %v2881, 0
      %v2994 = vsel %vm433, %v2882, 0
      %v2997 = vsel %vm433, %v2883, 0
      %v3000 = vsel %vm433, %v2884, 0
      %v3003 = vsel %vm433, %v2885, 0
      %v3006 = vsel %vm433, %v2886, 0
      %v3009 = vsel %vm433, %v2887, 0
      %v3012 = vsel %vm433, %v2888, 0
      %v3015 = vsel %vm433, %v2889, 0
      %v3018 = vsel %vm433, %v2890, 0
      %v3021 = vsel %vm433, %v2891, 0
      %v3024 = vsel %vm433, %v2892, 0
      %v3027 = vsel %vm433, %v2893, 0
      %v3030 = vsel %vm433, %v2894, 0
      %v3033 = vsel %vm433, %v2895, 0
      %v3036 = vsel %vm433, %v2896, 0
      %v3039 = vsel %vm433, %v2897, 0
      %v3042 = vsel %vm433, %v2898, 0
      %v3045 = vsel %vm433, %v2899, 0
      %v3048 = vsel %vm433, %v2900, 0
      %v3051 = vsel %vm433, %v2901, 0
      %v3054 = vsel %vm433, %v2902, 0
      %v3057 = vsel %vm433, %v2903, 0
      %v3059 = vsel %vm578, %v2911, 0
      %3061 = vmatprep.subr.mxu0 0.0
      %3062 = vmatpush1.msra.mxu0 0.0
      %3063 = vmatprep.subr.mxu0 0.0
      %3064 = vmatpush1.msra.mxu0 0.0
      %3065 = vmatprep.subr.mxu0 0.0
      %3066 = vmatpush1.msra.mxu0 0.0
      %3067 = vmatprep.subr.mxu0 0.0
      %3068 = vmatpush1.msra.mxu0 0.0
      %3069 = vmatprep.subr.mxu0 0.0
      %3070 = vmatpush1.msra.mxu0 0.0
      %3071 = vmatprep.subr.mxu0 0.0
      %3072 = vmatpush1.msra.mxu0 0.0
      %3073 = vmatprep.subr.mxu0 0.0
      %3074 = vmatpush1.msra.mxu0 0.0
      %3075 = vmatprep.subr.mxu0 0.0
      %3076 = vmatpush1.msra.mxu0 0.0
      %3077 = vmatprep.subr.mxu0 0.0
      %3078 = vmatpush1.msra.mxu0 0.0
      %3079 = vmatprep.subr.mxu0 0.0
      %3080 = vmatpush1.msra.mxu0 0.0
      %3081 = vmatprep.subr.mxu0 0.0
      %3082 = vmatpush1.msra.mxu0 0.0
      %3083 = vmatprep.subr.mxu0 0.0
      %3084 = vmatpush1.msra.mxu0 0.0
      %3085 = vmatprep.subr.mxu0 0.0
      %3086 = vmatpush1.msra.mxu0 %v3059
      %3087 = vmatprep.subr.mxu0 0.0
      %3088 = vmatpush1.msra.mxu0 %v2909
      %3089 = vmatprep.subr.mxu0 0.0
      %3090 = vmatpush1.msra.mxu0 %v2907
      %3091 = vmatprep.subr.mxu0 0.0
      %3092 = vmatpush1.msra.mxu0 %v2905
      %3093 = vmatprep.subr.mxu0 0.0
      %3094 = vmatpush2.msra.mxu0 0.0
      %3095 = vmatprep.subr.mxu0 0.0
      %3096 = vmatpush2.msra.mxu0 0.0
      %3097 = vmatprep.subr.mxu0 0.0
      %3098 = vmatpush2.msra.mxu0 0.0
      %3099 = vmatprep.subr.mxu0 0.0
      %3100 = vmatpush2.msra.mxu0 0.0
      %3101 = vmatprep.subr.mxu0 0.0
      %3102 = vmatpush2.msra.mxu0 0.0
      %3103 = vmatprep.subr.mxu0 0.0
      %3104 = vmatpush2.msra.mxu0 0.0
      %3105 = vmatprep.subr.mxu0 0.0
      %3106 = vmatpush2.msra.mxu0 0.0
      %3107 = vmatprep.subr.mxu0 0.0
      %3108 = vmatpush2.msra.mxu0 0.0
      %3109 = vmatprep.subr.mxu0 0.0
      %3110 = vmatpush2.msra.mxu0 0.0
      %3111 = vmatprep.subr.mxu0 0.0
      %3112 = vmatpush2.msra.mxu0 0.0
      %3113 = vmatprep.subr.mxu0 0.0
      %3114 = vmatpush2.msra.mxu0 0.0
      %3115 = vmatprep.subr.mxu0 0.0
      %3116 = vmatpush2.msra.mxu0 0.0
      %3117 = vmatprep.subr.mxu0 0.0
      %3118 = vmatpush2.msra.mxu0 0.0
      %3119 = vmatprep.subr.mxu0 0.0
      %3120 = vmatpush2.msra.mxu0 0.0
      %3121 = vmatprep.subr.mxu0 0.0
      %3122 = vmatpush2.msra.mxu0 0.0
      %3123 = vmatprep.subr.mxu0 0.0
      %3124 = vmatpush2.msra.mxu0 0.0
      %3125 = vmatprep.mubr.f32.mxu0 0.0
      %3126 = vmatmul.mubr.f32.gmra.mxu0 %v2916
      %v3127 = vpop.f32.mrf.mxu0
      %v3128 = vadd.f32 0.0, %v3127
      %v3129 = vpop.f32.mrf.mxu0
      %3130 = vmatprep.mubr.f32.mxu0 0.0
      %3131 = vmatmul.mubr.f32.gmra.mxu0 %v2919
      %v3132 = vpop.f32.mrf.mxu0
      %v3133 = vadd.f32 0.0, %v3132
      %v3134 = vpop.f32.mrf.mxu0
      %3135 = vmatprep.mubr.f32.mxu0 0.0
      %3136 = vmatmul.mubr.f32.gmra.mxu0 %v2922
      %v3137 = vpop.f32.mrf.mxu0
      %v3138 = vadd.f32 0.0, %v3137
      %v3139 = vpop.f32.mrf.mxu0
      %3140 = vmatprep.mubr.f32.mxu0 0.0
      %3141 = vmatmul.mubr.f32.gmra.mxu0 %v2925
      %v3142 = vpop.f32.mrf.mxu0
      %v3143 = vadd.f32 0.0, %v3142
      %v3144 = vpop.f32.mrf.mxu0
      %3145 = vmatprep.mubr.f32.mxu0 0.0
      %3146 = vmatmul.mubr.f32.gmra.mxu0 %v2928
      %v3147 = vpop.f32.mrf.mxu0
      %v3148 = vadd.f32 0.0, %v3147
      %v3149 = vpop.f32.mrf.mxu0
      %3150 = vmatprep.mubr.f32.mxu0 0.0
      %3151 = vmatmul.mubr.f32.gmra.mxu0 %v2931
      %v3152 = vpop.f32.mrf.mxu0
      %v3153 = vadd.f32 0.0, %v3152
      %v3154 = vpop.f32.mrf.mxu0
      %3155 = vmatprep.mubr.f32.mxu0 0.0
      %3156 = vmatmul.mubr.f32.gmra.mxu0 %v2934
      %v3157 = vpop.f32.mrf.mxu0
      %v3158 = vadd.f32 0.0, %v3157
      %v3159 = vpop.f32.mrf.mxu0
      %3160 = vmatprep.mubr.f32.mxu0 0.0
      %3161 = vmatmul.mubr.f32.gmra.mxu0 %v2937
      %v3162 = vpop.f32.mrf.mxu0
      %v3163 = vadd.f32 0.0, %v3162
      %v3164 = vpop.f32.mrf.mxu0
      %3165 = vmatprep.mubr.f32.mxu0 0.0
      %3166 = vmatmul.mubr.f32.gmra.mxu0 %v2940
      %v3167 = vpop.f32.mrf.mxu0
      %v3168 = vadd.f32 0.0, %v3167
      %v3169 = vpop.f32.mrf.mxu0
      %3170 = vmatprep.mubr.f32.mxu0 0.0
      %3171 = vmatmul.mubr.f32.gmra.mxu0 %v2943
      %v3172 = vpop.f32.mrf.mxu0
      %v3173 = vadd.f32 0.0, %v3172
      %v3174 = vpop.f32.mrf.mxu0
      %3175 = vmatprep.mubr.f32.mxu0 0.0
      %3176 = vmatmul.mubr.f32.gmra.mxu0 %v2946
      %v3177 = vpop.f32.mrf.mxu0
      %v3178 = vadd.f32 0.0, %v3177
      %v3179 = vpop.f32.mrf.mxu0
      %3180 = vmatprep.mubr.f32.mxu0 0.0
      %3181 = vmatmul.mubr.f32.gmra.mxu0 %v2949
      %v3182 = vpop.f32.mrf.mxu0
      %v3183 = vadd.f32 0.0, %v3182
      %v3184 = vpop.f32.mrf.mxu0
      %3185 = vmatprep.mubr.f32.mxu0 0.0
      %3186 = vmatmul.mubr.f32.gmra.mxu0 %v2952
      %v3187 = vpop.f32.mrf.mxu0
      %v3188 = vadd.f32 0.0, %v3187
      %v3189 = vpop.f32.mrf.mxu0
      %3190 = vmatprep.mubr.f32.mxu0 0.0
      %3191 = vmatmul.mubr.f32.gmra.mxu0 %v2955
      %v3192 = vpop.f32.mrf.mxu0
      %v3193 = vadd.f32 0.0, %v3192
      %v3194 = vpop.f32.mrf.mxu0
      %3195 = vmatprep.mubr.f32.mxu0 0.0
      %3196 = vmatmul.mubr.f32.gmra.mxu0 %v2958
      %v3197 = vpop.f32.mrf.mxu0
      %v3198 = vadd.f32 0.0, %v3197
      %v3199 = vpop.f32.mrf.mxu0
      %3200 = vmatprep.mubr.f32.mxu0 0.0
      %3201 = vmatmul.mubr.f32.gmra.mxu0 %v2961
      %v3202 = vpop.f32.mrf.mxu0
      %v3203 = vadd.f32 0.0, %v3202
      %v3204 = vpop.f32.mrf.mxu0
      %3205 = vmatprep.mubr.f32.mxu0 0.0
      %3206 = vmatmul.mubr.f32.gmra.mxu0 %v2964
      %v3207 = vpop.f32.mrf.mxu0
      %v3208 = vadd.f32 0.0, %v3207
      %v3209 = vpop.f32.mrf.mxu0
      %3210 = vmatprep.mubr.f32.mxu0 0.0
      %3211 = vmatmul.mubr.f32.gmra.mxu0 %v2967
      %v3212 = vpop.f32.mrf.mxu0
      %v3213 = vadd.f32 0.0, %v3212
      %v3214 = vpop.f32.mrf.mxu0
      %3215 = vmatprep.mubr.f32.mxu0 0.0
      %3216 = vmatmul.mubr.f32.gmra.mxu0 %v2970
      %v3217 = vpop.f32.mrf.mxu0
      %v3218 = vadd.f32 0.0, %v3217
      %v3219 = vpop.f32.mrf.mxu0
      %3220 = vmatprep.mubr.f32.mxu0 0.0
      %3221 = vmatmul.mubr.f32.gmra.mxu0 %v2973
      %v3222 = vpop.f32.mrf.mxu0
      %v3223 = vadd.f32 0.0, %v3222
      %v3224 = vpop.f32.mrf.mxu0
      %3225 = vmatprep.mubr.f32.mxu0 0.0
      %3226 = vmatmul.mubr.f32.gmra.mxu0 %v2976
      %v3227 = vpop.f32.mrf.mxu0
      %v3228 = vadd.f32 0.0, %v3227
      %v3229 = vpop.f32.mrf.mxu0
      %3230 = vmatprep.mubr.f32.mxu0 0.0
      %3231 = vmatmul.mubr.f32.gmra.mxu0 %v2979
      %v3232 = vpop.f32.mrf.mxu0
      %v3233 = vadd.f32 0.0, %v3232
      %v3234 = vpop.f32.mrf.mxu0
      %3235 = vmatprep.mubr.f32.mxu0 0.0
      %3236 = vmatmul.mubr.f32.gmra.mxu0 %v2982
      %v3237 = vpop.f32.mrf.mxu0
      %v3238 = vadd.f32 0.0, %v3237
      %v3239 = vpop.f32.mrf.mxu0
      %3240 = vmatprep.mubr.f32.mxu0 0.0
      %3241 = vmatmul.mubr.f32.gmra.mxu0 %v2985
      %v3242 = vpop.f32.mrf.mxu0
      %v3243 = vadd.f32 0.0, %v3242
      %v3244 = vpop.f32.mrf.mxu0
      %3245 = vmatprep.mubr.f32.mxu0 0.0
      %3246 = vmatmul.mubr.f32.gmra.mxu0 %v2988
      %v3247 = vpop.f32.mrf.mxu0
      %v3248 = vadd.f32 0.0, %v3247
      %v3249 = vpop.f32.mrf.mxu0
      %3250 = vmatprep.mubr.f32.mxu0 0.0
      %3251 = vmatmul.mubr.f32.gmra.mxu0 %v2991
      %v3252 = vpop.f32.mrf.mxu0
      %v3253 = vadd.f32 0.0, %v3252
      %v3254 = vpop.f32.mrf.mxu0
      %3255 = vmatprep.mubr.f32.mxu0 0.0
      %3256 = vmatmul.mubr.f32.gmra.mxu0 %v2994
      %v3257 = vpop.f32.mrf.mxu0
      %v3258 = vadd.f32 0.0, %v3257
      %v3259 = vpop.f32.mrf.mxu0
      %3260 = vmatprep.mubr.f32.mxu0 0.0
      %3261 = vmatmul.mubr.f32.gmra.mxu0 %v2997
      %v3262 = vpop.f32.mrf.mxu0
      %v3263 = vadd.f32 0.0, %v3262
      %v3264 = vpop.f32.mrf.mxu0
      %3265 = vmatprep.mubr.f32.mxu0 0.0
      %3266 = vmatmul.mubr.f32.gmra.mxu0 %v3000
      %v3267 = vpop.f32.mrf.mxu0
      %v3268 = vadd.f32 0.0, %v3267
      %v3269 = vpop.f32.mrf.mxu0
      %3270 = vmatprep.mubr.f32.mxu0 0.0
      %3271 = vmatmul.mubr.f32.gmra.mxu0 %v3003
      %v3272 = vpop.f32.mrf.mxu0
      %v3273 = vadd.f32 0.0, %v3272
      %v3274 = vpop.f32.mrf.mxu0
      %3275 = vmatprep.mubr.f32.mxu0 0.0
      %3276 = vmatmul.mubr.f32.gmra.mxu0 %v3006
      %v3277 = vpop.f32.mrf.mxu0
      %v3278 = vadd.f32 0.0, %v3277
      %v3279 = vpop.f32.mrf.mxu0
      %3280 = vmatprep.mubr.f32.mxu0 0.0
      %3281 = vmatmul.mubr.f32.gmra.mxu0 %v3009
      %v3282 = vpop.f32.mrf.mxu0
      %v3283 = vadd.f32 0.0, %v3282
      %v3284 = vpop.f32.mrf.mxu0
      %3285 = vmatprep.mubr.f32.mxu0 0.0
      %3286 = vmatmul.mubr.f32.gmra.mxu0 %v3012
      %v3287 = vpop.f32.mrf.mxu0
      %v3288 = vadd.f32 0.0, %v3287
      %v3289 = vpop.f32.mrf.mxu0
      %3290 = vmatprep.mubr.f32.mxu0 0.0
      %3291 = vmatmul.mubr.f32.gmra.mxu0 %v3015
      %v3292 = vpop.f32.mrf.mxu0
      %v3293 = vadd.f32 0.0, %v3292
      %v3294 = vpop.f32.mrf.mxu0
      %3295 = vmatprep.mubr.f32.mxu0 0.0
      %3296 = vmatmul.mubr.f32.gmra.mxu0 %v3018
      %v3297 = vpop.f32.mrf.mxu0
      %v3298 = vadd.f32 0.0, %v3297
      %v3299 = vpop.f32.mrf.mxu0
      %3300 = vmatprep.mubr.f32.mxu0 0.0
      %3301 = vmatmul.mubr.f32.gmra.mxu0 %v3021
      %v3302 = vpop.f32.mrf.mxu0
      %v3303 = vadd.f32 0.0, %v3302
      %v3304 = vpop.f32.mrf.mxu0
      %3305 = vmatprep.mubr.f32.mxu0 0.0
      %3306 = vmatmul.mubr.f32.gmra.mxu0 %v3024
      %v3307 = vpop.f32.mrf.mxu0
      %v3308 = vadd.f32 0.0, %v3307
      %v3309 = vpop.f32.mrf.mxu0
      %3310 = vmatprep.mubr.f32.mxu0 0.0
      %3311 = vmatmul.mubr.f32.gmra.mxu0 %v3027
      %v3312 = vpop.f32.mrf.mxu0
      %v3313 = vadd.f32 0.0, %v3312
      %v3314 = vpop.f32.mrf.mxu0
      %3315 = vmatprep.mubr.f32.mxu0 0.0
      %3316 = vmatmul.mubr.f32.gmra.mxu0 %v3030
      %v3317 = vpop.f32.mrf.mxu0
      %v3318 = vadd.f32 0.0, %v3317
      %v3319 = vpop.f32.mrf.mxu0
      %3320 = vmatprep.mubr.f32.mxu0 0.0
      %3321 = vmatmul.mubr.f32.gmra.mxu0 %v3033
      %v3322 = vpop.f32.mrf.mxu0
      %v3323 = vadd.f32 0.0, %v3322
      %v3324 = vpop.f32.mrf.mxu0
      %3325 = vmatprep.mubr.f32.mxu0 0.0
      %3326 = vmatmul.mubr.f32.gmra.mxu0 %v3036
      %v3327 = vpop.f32.mrf.mxu0
      %v3328 = vadd.f32 0.0, %v3327
      %v3329 = vpop.f32.mrf.mxu0
      %3330 = vmatprep.mubr.f32.mxu0 0.0
      %3331 = vmatmul.mubr.f32.gmra.mxu0 %v3039
      %v3332 = vpop.f32.mrf.mxu0
      %v3333 = vadd.f32 0.0, %v3332
      %v3334 = vpop.f32.mrf.mxu0
      %3335 = vmatprep.mubr.f32.mxu0 0.0
      %3336 = vmatmul.mubr.f32.gmra.mxu0 %v3042
      %v3337 = vpop.f32.mrf.mxu0
      %v3338 = vadd.f32 0.0, %v3337
      %v3339 = vpop.f32.mrf.mxu0
      %3340 = vmatprep.mubr.f32.mxu0 0.0
      %3341 = vmatmul.mubr.f32.gmra.mxu0 %v3045
      %v3342 = vpop.f32.mrf.mxu0
      %v3343 = vadd.f32 0.0, %v3342
      %v3344 = vpop.f32.mrf.mxu0
      %3345 = vmatprep.mubr.f32.mxu0 0.0
      %3346 = vmatmul.mubr.f32.gmra.mxu0 %v3048
      %v3347 = vpop.f32.mrf.mxu0
      %v3348 = vadd.f32 0.0, %v3347
      %v3349 = vpop.f32.mrf.mxu0
      %3350 = vmatprep.mubr.f32.mxu0 0.0
      %3351 = vmatmul.mubr.f32.gmra.mxu0 %v3051
      %v3352 = vpop.f32.mrf.mxu0
      %v3353 = vadd.f32 0.0, %v3352
      %v3354 = vpop.f32.mrf.mxu0
      %3355 = vmatprep.mubr.f32.mxu0 0.0
      %3356 = vmatmul.mubr.f32.gmra.mxu0 %v3054
      %v3357 = vpop.f32.mrf.mxu0
      %v3358 = vadd.f32 0.0, %v3357
      %v3359 = vpop.f32.mrf.mxu0
      %3360 = vmatprep.mubr.f32.mxu0 0.0
      %3361 = vmatmul.mubr.f32.gmra.mxu0 %v3057
      %v3362 = vpop.f32.mrf.mxu0
      %v3363 = vadd.f32 0.0, %v3362
      %v3364 = vpop.f32.mrf.mxu0
      %3365 = vdwg.mxu0
      %v3366 = vadd.f32 %v2807, %v3128
      %v3367 = vadd.f32 %v2808, %v3133
      %v3368 = vadd.f32 %v2809, %v3138
      %v3369 = vadd.f32 %v2810, %v3143
      %v3370 = vadd.f32 %v2811, %v3148
      %v3371 = vadd.f32 %v2812, %v3153
      %v3372 = vadd.f32 %v2813, %v3158
      %v3373 = vadd.f32 %v2814, %v3163
      %v3374 = vadd.f32 %v2815, %v3168
      %v3375 = vadd.f32 %v2816, %v3173
      %v3376 = vadd.f32 %v2817, %v3178
      %v3377 = vadd.f32 %v2818, %v3183
      %v3378 = vadd.f32 %v2819, %v3188
      %v3379 = vadd.f32 %v2820, %v3193
      %v3380 = vadd.f32 %v2821, %v3198
      %v3381 = vadd.f32 %v2822, %v3203
      %v3382 = vadd.f32 %v2823, %v3208
      %v3383 = vadd.f32 %v2824, %v3213
      %v3384 = vadd.f32 %v2825, %v3218
      %v3385 = vadd.f32 %v2826, %v3223
      %v3386 = vadd.f32 %v2827, %v3228
      %v3387 = vadd.f32 %v2828, %v3233
      %v3388 = vadd.f32 %v2829, %v3238
      %v3389 = vadd.f32 %v2830, %v3243
      %v3390 = vadd.f32 %v2831, %v3248
      %v3391 = vadd.f32 %v2832, %v3253
      %v3392 = vadd.f32 %v2833, %v3258
      %v3393 = vadd.f32 %v2834, %v3263
      %v3394 = vadd.f32 %v2835, %v3268
      %v3395 = vadd.f32 %v2836, %v3273
      %v3396 = vadd.f32 %v2837, %v3278
      %v3397 = vadd.f32 %v2838, %v3283
      %v3398 = vadd.f32 %v2839, %v3288
      %v3399 = vadd.f32 %v2840, %v3293
      %v3400 = vadd.f32 %v2841, %v3298
      %v3401 = vadd.f32 %v2842, %v3303
      %v3402 = vadd.f32 %v2843, %v3308
      %v3403 = vadd.f32 %v2844, %v3313
      %v3404 = vadd.f32 %v2845, %v3318
      %v3405 = vadd.f32 %v2846, %v3323
      %v3406 = vadd.f32 %v2847, %v3328
      %v3407 = vadd.f32 %v2848, %v3333
      %v3408 = vadd.f32 %v2849, %v3338
      %v3409 = vadd.f32 %v2850, %v3343
      %v3410 = vadd.f32 %v2851, %v3348
      %v3411 = vadd.f32 %v2852, %v3353
      %v3412 = vadd.f32 %v2853, %v3358
      %v3413 = vadd.f32 %v2854, %v3363
      %v3414 = vlaneseq
      %v3415 = vshrl.u32 %v3414, 7
      %v3416 = vadd.s32 %v3415, 8
      %v3417 = vadd.s32 %v3415, 16
      %v3418 = vlaneseq
      %v3419 = vand.u32 %v3418, 127
      %v3420 = vmul.u32 %v3419, 2
      %vm3421 = vcmp.eq.s32.totalorder %v3415, %v3420
      %vm3422 = vcmp.eq.s32.totalorder %v3416, %v3420
      %vm3423 = vcmp.eq.s32.totalorder %v3417, %v3420
      %v3424 = vsel %vm3421, 1, 0
      %v3425 = vsel %vm3422, 1, 0
      %v3426 = vsel %vm3423, 1, 0
      %v3427 = vcvt.s32.f32 %v3424
      %v3428 = vcvt.s32.f32 %v3425
      %v3429 = vcvt.s32.f32 %v3426
      %vm3430 = vcmask 195584
      %v3432 = vsel %vm3430, %v3366, 0
      %v3435 = vsel %vm3430, %v3367, 0
      %v3438 = vsel %vm3430, %v3368, 0
      %v3441 = vsel %vm3430, %v3369, 0
      %v3444 = vsel %vm3430, %v3370, 0
      %v3447 = vsel %vm3430, %v3371, 0
      %v3450 = vsel %vm3430, %v3372, 0
      %v3453 = vsel %vm3430, %v3373, 0
      %v3456 = vsel %vm3430, %v3374, 0
      %v3459 = vsel %vm3430, %v3375, 0
      %v3462 = vsel %vm3430, %v3376, 0
      %v3465 = vsel %vm3430, %v3377, 0
      %v3468 = vsel %vm3430, %v3378, 0
      %v3471 = vsel %vm3430, %v3379, 0
      %v3474 = vsel %vm3430, %v3380, 0
      %v3477 = vsel %vm3430, %v3381, 0
      %v3480 = vsel %vm3430, %v3382, 0
      %v3483 = vsel %vm3430, %v3383, 0
      %v3486 = vsel %vm3430, %v3384, 0
      %v3489 = vsel %vm3430, %v3385, 0
      %v3492 = vsel %vm3430, %v3386, 0
      %v3495 = vsel %vm3430, %v3387, 0
      %v3498 = vsel %vm3430, %v3388, 0
      %v3501 = vsel %vm3430, %v3389, 0
      %v3504 = vsel %vm3430, %v3390, 0
      %v3507 = vsel %vm3430, %v3391, 0
      %v3510 = vsel %vm3430, %v3392, 0
      %v3513 = vsel %vm3430, %v3393, 0
      %v3516 = vsel %vm3430, %v3394, 0
      %v3519 = vsel %vm3430, %v3395, 0
      %v3522 = vsel %vm3430, %v3396, 0
      %v3525 = vsel %vm3430, %v3397, 0
      %v3528 = vsel %vm3430, %v3398, 0
      %v3531 = vsel %vm3430, %v3399, 0
      %v3534 = vsel %vm3430, %v3400, 0
      %v3537 = vsel %vm3430, %v3401, 0
      %v3540 = vsel %vm3430, %v3402, 0
      %v3543 = vsel %vm3430, %v3403, 0
      %v3546 = vsel %vm3430, %v3404, 0
      %v3549 = vsel %vm3430, %v3405, 0
      %v3552 = vsel %vm3430, %v3406, 0
      %v3555 = vsel %vm3430, %v3407, 0
      %v3558 = vsel %vm3430, %v3408, 0
      %v3561 = vsel %vm3430, %v3409, 0
      %v3564 = vsel %vm3430, %v3410, 0
      %v3567 = vsel %vm3430, %v3411, 0
      %v3570 = vsel %vm3430, %v3412, 0
      %v3573 = vsel %vm3430, %v3413, 0
      %3575 = vmatprep.subr.mxu0 0.0
      %3576 = vmatpush1.msra.mxu0 0.0
      %3577 = vmatprep.subr.mxu0 0.0
      %3578 = vmatpush1.msra.mxu0 0.0
      %3579 = vmatprep.subr.mxu0 0.0
      %3580 = vmatpush1.msra.mxu0 0.0
      %3581 = vmatprep.subr.mxu0 0.0
      %3582 = vmatpush1.msra.mxu0 0.0
      %3583 = vmatprep.subr.mxu0 0.0
      %3584 = vmatpush1.msra.mxu0 0.0
      %3585 = vmatprep.subr.mxu0 0.0
      %3586 = vmatpush1.msra.mxu0 0.0
      %3587 = vmatprep.subr.mxu0 0.0
      %3588 = vmatpush1.msra.mxu0 0.0
      %3589 = vmatprep.subr.mxu0 0.0
      %3590 = vmatpush1.msra.mxu0 0.0
      %3591 = vmatprep.subr.mxu0 0.0
      %3592 = vmatpush1.msra.mxu0 0.0
      %3593 = vmatprep.subr.mxu0 0.0
      %3594 = vmatpush1.msra.mxu0 0.0
      %3595 = vmatprep.subr.mxu0 0.0
      %3596 = vmatpush1.msra.mxu0 0.0
      %3597 = vmatprep.subr.mxu0 0.0
      %3598 = vmatpush1.msra.mxu0 0.0
      %3599 = vmatprep.subr.mxu0 0.0
      %3600 = vmatpush1.msra.mxu0 0.0
      %3601 = vmatprep.subr.mxu0 0.0
      %3602 = vmatpush1.msra.mxu0 %v3429
      %3603 = vmatprep.subr.mxu0 0.0
      %3604 = vmatpush1.msra.mxu0 %v3428
      %3605 = vmatprep.subr.mxu0 0.0
      %3606 = vmatpush1.msra.mxu0 %v3427
      %3607 = vmatprep.subr.mxu0 0.0
      %3608 = vmatpush2.msra.mxu0 0.0
      %3609 = vmatprep.subr.mxu0 0.0
      %3610 = vmatpush2.msra.mxu0 0.0
      %3611 = vmatprep.subr.mxu0 0.0
      %3612 = vmatpush2.msra.mxu0 0.0
      %3613 = vmatprep.subr.mxu0 0.0
      %3614 = vmatpush2.msra.mxu0 0.0
      %3615 = vmatprep.subr.mxu0 0.0
      %3616 = vmatpush2.msra.mxu0 0.0
      %3617 = vmatprep.subr.mxu0 0.0
      %3618 = vmatpush2.msra.mxu0 0.0
      %3619 = vmatprep.subr.mxu0 0.0
      %3620 = vmatpush2.msra.mxu0 0.0
      %3621 = vmatprep.subr.mxu0 0.0
      %3622 = vmatpush2.msra.mxu0 0.0
      %3623 = vmatprep.subr.mxu0 0.0
      %3624 = vmatpush2.msra.mxu0 0.0
      %3625 = vmatprep.subr.mxu0 0.0
      %3626 = vmatpush2.msra.mxu0 0.0
      %3627 = vmatprep.subr.mxu0 0.0
      %3628 = vmatpush2.msra.mxu0 0.0
      %3629 = vmatprep.subr.mxu0 0.0
      %3630 = vmatpush2.msra.mxu0 0.0
      %3631 = vmatprep.subr.mxu0 0.0
      %3632 = vmatpush2.msra.mxu0 0.0
      %3633 = vmatprep.subr.mxu0 0.0
      %3634 = vmatpush2.msra.mxu0 0.0
      %3635 = vmatprep.subr.mxu0 0.0
      %3636 = vmatpush2.msra.mxu0 0.0
      %3637 = vmatprep.subr.mxu0 0.0
      %3638 = vmatpush2.msra.mxu0 0.0
      %3639 = vmatprep.mubr.f32.mxu0 0.0
      %3640 = vmatmul.mubr.f32.gmra.mxu0 %v3432
      %v3641 = vpop.f32.mrf.mxu0
      %v3642 = vadd.f32 0.0, %v3641
      %v3643 = vpop.f32.mrf.mxu0
      %3644 = vmatprep.mubr.f32.mxu0 0.0
      %3645 = vmatmul.mubr.f32.gmra.mxu0 %v3435
      %v3646 = vpop.f32.mrf.mxu0
      %v3647 = vadd.f32 0.0, %v3646
      %v3648 = vpop.f32.mrf.mxu0
      %3649 = vmatprep.mubr.f32.mxu0 0.0
      %3650 = vmatmul.mubr.f32.gmra.mxu0 %v3438
      %v3651 = vpop.f32.mrf.mxu0
      %v3652 = vadd.f32 0.0, %v3651
      %v3653 = vpop.f32.mrf.mxu0
      %3654 = vmatprep.mubr.f32.mxu0 0.0
      %3655 = vmatmul.mubr.f32.gmra.mxu0 %v3441
      %v3656 = vpop.f32.mrf.mxu0
      %v3657 = vadd.f32 0.0, %v3656
      %v3658 = vpop.f32.mrf.mxu0
      %3659 = vmatprep.mubr.f32.mxu0 0.0
      %3660 = vmatmul.mubr.f32.gmra.mxu0 %v3444
      %v3661 = vpop.f32.mrf.mxu0
      %v3662 = vadd.f32 0.0, %v3661
      %v3663 = vpop.f32.mrf.mxu0
      %3664 = vmatprep.mubr.f32.mxu0 0.0
      %3665 = vmatmul.mubr.f32.gmra.mxu0 %v3447
      %v3666 = vpop.f32.mrf.mxu0
      %v3667 = vadd.f32 0.0, %v3666
      %v3668 = vpop.f32.mrf.mxu0
      %3669 = vmatprep.mubr.f32.mxu0 0.0
      %3670 = vmatmul.mubr.f32.gmra.mxu0 %v3450
      %v3671 = vpop.f32.mrf.mxu0
      %v3672 = vadd.f32 0.0, %v3671
      %v3673 = vpop.f32.mrf.mxu0
      %3674 = vmatprep.mubr.f32.mxu0 0.0
      %3675 = vmatmul.mubr.f32.gmra.mxu0 %v3453
      %v3676 = vpop.f32.mrf.mxu0
      %v3677 = vadd.f32 0.0, %v3676
      %v3678 = vpop.f32.mrf.mxu0
      %3679 = vmatprep.mubr.f32.mxu0 0.0
      %3680 = vmatmul.mubr.f32.gmra.mxu0 %v3456
      %v3681 = vpop.f32.mrf.mxu0
      %v3682 = vadd.f32 0.0, %v3681
      %v3683 = vpop.f32.mrf.mxu0
      %3684 = vmatprep.mubr.f32.mxu0 0.0
      %3685 = vmatmul.mubr.f32.gmra.mxu0 %v3459
      %v3686 = vpop.f32.mrf.mxu0
      %v3687 = vadd.f32 0.0, %v3686
      %v3688 = vpop.f32.mrf.mxu0
      %3689 = vmatprep.mubr.f32.mxu0 0.0
      %3690 = vmatmul.mubr.f32.gmra.mxu0 %v3462
      %v3691 = vpop.f32.mrf.mxu0
      %v3692 = vadd.f32 0.0, %v3691
      %v3693 = vpop.f32.mrf.mxu0
      %3694 = vmatprep.mubr.f32.mxu0 0.0
      %3695 = vmatmul.mubr.f32.gmra.mxu0 %v3465
      %v3696 = vpop.f32.mrf.mxu0
      %v3697 = vadd.f32 0.0, %v3696
      %v3698 = vpop.f32.mrf.mxu0
      %3699 = vmatprep.mubr.f32.mxu0 0.0
      %3700 = vmatmul.mubr.f32.gmra.mxu0 %v3468
      %v3701 = vpop.f32.mrf.mxu0
      %v3702 = vadd.f32 0.0, %v3701
      %v3703 = vpop.f32.mrf.mxu0
      %3704 = vmatprep.mubr.f32.mxu0 0.0
      %3705 = vmatmul.mubr.f32.gmra.mxu0 %v3471
      %v3706 = vpop.f32.mrf.mxu0
      %v3707 = vadd.f32 0.0, %v3706
      %v3708 = vpop.f32.mrf.mxu0
      %3709 = vmatprep.mubr.f32.mxu0 0.0
      %3710 = vmatmul.mubr.f32.gmra.mxu0 %v3474
      %v3711 = vpop.f32.mrf.mxu0
      %v3712 = vadd.f32 0.0, %v3711
      %v3713 = vpop.f32.mrf.mxu0
      %3714 = vmatprep.mubr.f32.mxu0 0.0
      %3715 = vmatmul.mubr.f32.gmra.mxu0 %v3477
      %v3716 = vpop.f32.mrf.mxu0
      %v3717 = vadd.f32 0.0, %v3716
      %v3718 = vpop.f32.mrf.mxu0
      %3719 = vmatprep.mubr.f32.mxu0 0.0
      %3720 = vmatmul.mubr.f32.gmra.mxu0 %v3480
      %v3721 = vpop.f32.mrf.mxu0
      %v3722 = vadd.f32 0.0, %v3721
      %v3723 = vpop.f32.mrf.mxu0
      %3724 = vmatprep.mubr.f32.mxu0 0.0
      %3725 = vmatmul.mubr.f32.gmra.mxu0 %v3483
      %v3726 = vpop.f32.mrf.mxu0
      %v3727 = vadd.f32 0.0, %v3726
      %v3728 = vpop.f32.mrf.mxu0
      %3729 = vmatprep.mubr.f32.mxu0 0.0
      %3730 = vmatmul.mubr.f32.gmra.mxu0 %v3486
      %v3731 = vpop.f32.mrf.mxu0
      %v3732 = vadd.f32 0.0, %v3731
      %v3733 = vpop.f32.mrf.mxu0
      %3734 = vmatprep.mubr.f32.mxu0 0.0
      %3735 = vmatmul.mubr.f32.gmra.mxu0 %v3489
      %v3736 = vpop.f32.mrf.mxu0
      %v3737 = vadd.f32 0.0, %v3736
      %v3738 = vpop.f32.mrf.mxu0
      %3739 = vmatprep.mubr.f32.mxu0 0.0
      %3740 = vmatmul.mubr.f32.gmra.mxu0 %v3492
      %v3741 = vpop.f32.mrf.mxu0
      %v3742 = vadd.f32 0.0, %v3741
      %v3743 = vpop.f32.mrf.mxu0
      %3744 = vmatprep.mubr.f32.mxu0 0.0
      %3745 = vmatmul.mubr.f32.gmra.mxu0 %v3495
      %v3746 = vpop.f32.mrf.mxu0
      %v3747 = vadd.f32 0.0, %v3746
      %v3748 = vpop.f32.mrf.mxu0
      %3749 = vmatprep.mubr.f32.mxu0 0.0
      %3750 = vmatmul.mubr.f32.gmra.mxu0 %v3498
      %v3751 = vpop.f32.mrf.mxu0
      %v3752 = vadd.f32 0.0, %v3751
      %v3753 = vpop.f32.mrf.mxu0
      %3754 = vmatprep.mubr.f32.mxu0 0.0
      %3755 = vmatmul.mubr.f32.gmra.mxu0 %v3501
      %v3756 = vpop.f32.mrf.mxu0
      %v3757 = vadd.f32 0.0, %v3756
      %v3758 = vpop.f32.mrf.mxu0
      %3759 = vmatprep.mubr.f32.mxu0 0.0
      %3760 = vmatmul.mubr.f32.gmra.mxu0 %v3504
      %v3761 = vpop.f32.mrf.mxu0
      %v3762 = vadd.f32 0.0, %v3761
      %v3763 = vpop.f32.mrf.mxu0
      %3764 = vmatprep.mubr.f32.mxu0 0.0
      %3765 = vmatmul.mubr.f32.gmra.mxu0 %v3507
      %v3766 = vpop.f32.mrf.mxu0
      %v3767 = vadd.f32 0.0, %v3766
      %v3768 = vpop.f32.mrf.mxu0
      %3769 = vmatprep.mubr.f32.mxu0 0.0
      %3770 = vmatmul.mubr.f32.gmra.mxu0 %v3510
      %v3771 = vpop.f32.mrf.mxu0
      %v3772 = vadd.f32 0.0, %v3771
      %v3773 = vpop.f32.mrf.mxu0
      %3774 = vmatprep.mubr.f32.mxu0 0.0
      %3775 = vmatmul.mubr.f32.gmra.mxu0 %v3513
      %v3776 = vpop.f32.mrf.mxu0
      %v3777 = vadd.f32 0.0, %v3776
      %v3778 = vpop.f32.mrf.mxu0
      %3779 = vmatprep.mubr.f32.mxu0 0.0
      %3780 = vmatmul.mubr.f32.gmra.mxu0 %v3516
      %v3781 = vpop.f32.mrf.mxu0
      %v3782 = vadd.f32 0.0, %v3781
      %v3783 = vpop.f32.mrf.mxu0
      %3784 = vmatprep.mubr.f32.mxu0 0.0
      %3785 = vmatmul.mubr.f32.gmra.mxu0 %v3519
      %v3786 = vpop.f32.mrf.mxu0
      %v3787 = vadd.f32 0.0, %v3786
      %v3788 = vpop.f32.mrf.mxu0
      %3789 = vmatprep.mubr.f32.mxu0 0.0
      %3790 = vmatmul.mubr.f32.gmra.mxu0 %v3522
      %v3791 = vpop.f32.mrf.mxu0
      %v3792 = vadd.f32 0.0, %v3791
      %v3793 = vpop.f32.mrf.mxu0
      %3794 = vmatprep.mubr.f32.mxu0 0.0
      %3795 = vmatmul.mubr.f32.gmra.mxu0 %v3525
      %v3796 = vpop.f32.mrf.mxu0
      %v3797 = vadd.f32 0.0, %v3796
      %v3798 = vpop.f32.mrf.mxu0
      %3799 = vmatprep.mubr.f32.mxu0 0.0
      %3800 = vmatmul.mubr.f32.gmra.mxu0 %v3528
      %v3801 = vpop.f32.mrf.mxu0
      %v3802 = vadd.f32 0.0, %v3801
      %v3803 = vpop.f32.mrf.mxu0
      %3804 = vmatprep.mubr.f32.mxu0 0.0
      %3805 = vmatmul.mubr.f32.gmra.mxu0 %v3531
      %v3806 = vpop.f32.mrf.mxu0
      %v3807 = vadd.f32 0.0, %v3806
      %v3808 = vpop.f32.mrf.mxu0
      %3809 = vmatprep.mubr.f32.mxu0 0.0
      %3810 = vmatmul.mubr.f32.gmra.mxu0 %v3534
      %v3811 = vpop.f32.mrf.mxu0
      %v3812 = vadd.f32 0.0, %v3811
      %v3813 = vpop.f32.mrf.mxu0
      %3814 = vmatprep.mubr.f32.mxu0 0.0
      %3815 = vmatmul.mubr.f32.gmra.mxu0 %v3537
      %v3816 = vpop.f32.mrf.mxu0
      %v3817 = vadd.f32 0.0, %v3816
      %v3818 = vpop.f32.mrf.mxu0
      %3819 = vmatprep.mubr.f32.mxu0 0.0
      %3820 = vmatmul.mubr.f32.gmra.mxu0 %v3540
      %v3821 = vpop.f32.mrf.mxu0
      %v3822 = vadd.f32 0.0, %v3821
      %v3823 = vpop.f32.mrf.mxu0
      %3824 = vmatprep.mubr.f32.mxu0 0.0
      %3825 = vmatmul.mubr.f32.gmra.mxu0 %v3543
      %v3826 = vpop.f32.mrf.mxu0
      %v3827 = vadd.f32 0.0, %v3826
      %v3828 = vpop.f32.mrf.mxu0
      %3829 = vmatprep.mubr.f32.mxu0 0.0
      %3830 = vmatmul.mubr.f32.gmra.mxu0 %v3546
      %v3831 = vpop.f32.mrf.mxu0
      %v3832 = vadd.f32 0.0, %v3831
      %v3833 = vpop.f32.mrf.mxu0
      %3834 = vmatprep.mubr.f32.mxu0 0.0
      %3835 = vmatmul.mubr.f32.gmra.mxu0 %v3549
      %v3836 = vpop.f32.mrf.mxu0
      %v3837 = vadd.f32 0.0, %v3836
      %v3838 = vpop.f32.mrf.mxu0
      %3839 = vmatprep.mubr.f32.mxu0 0.0
      %3840 = vmatmul.mubr.f32.gmra.mxu0 %v3552
      %v3841 = vpop.f32.mrf.mxu0
      %v3842 = vadd.f32 0.0, %v3841
      %v3843 = vpop.f32.mrf.mxu0
      %3844 = vmatprep.mubr.f32.mxu0 0.0
      %3845 = vmatmul.mubr.f32.gmra.mxu0 %v3555
      %v3846 = vpop.f32.mrf.mxu0
      %v3847 = vadd.f32 0.0, %v3846
      %v3848 = vpop.f32.mrf.mxu0
      %3849 = vmatprep.mubr.f32.mxu0 0.0
      %3850 = vmatmul.mubr.f32.gmra.mxu0 %v3558
      %v3851 = vpop.f32.mrf.mxu0
      %v3852 = vadd.f32 0.0, %v3851
      %v3853 = vpop.f32.mrf.mxu0
      %3854 = vmatprep.mubr.f32.mxu0 0.0
      %3855 = vmatmul.mubr.f32.gmra.mxu0 %v3561
      %v3856 = vpop.f32.mrf.mxu0
      %v3857 = vadd.f32 0.0, %v3856
      %v3858 = vpop.f32.mrf.mxu0
      %3859 = vmatprep.mubr.f32.mxu0 0.0
      %3860 = vmatmul.mubr.f32.gmra.mxu0 %v3564
      %v3861 = vpop.f32.mrf.mxu0
      %v3862 = vadd.f32 0.0, %v3861
      %v3863 = vpop.f32.mrf.mxu0
      %3864 = vmatprep.mubr.f32.mxu0 0.0
      %3865 = vmatmul.mubr.f32.gmra.mxu0 %v3567
      %v3866 = vpop.f32.mrf.mxu0
      %v3867 = vadd.f32 0.0, %v3866
      %v3868 = vpop.f32.mrf.mxu0
      %3869 = vmatprep.mubr.f32.mxu0 0.0
      %3870 = vmatmul.mubr.f32.gmra.mxu0 %v3570
      %v3871 = vpop.f32.mrf.mxu0
      %v3872 = vadd.f32 0.0, %v3871
      %v3873 = vpop.f32.mrf.mxu0
      %3874 = vmatprep.mubr.f32.mxu0 0.0
      %3875 = vmatmul.mubr.f32.gmra.mxu0 %v3573
      %v3876 = vpop.f32.mrf.mxu0
      %v3877 = vadd.f32 0.0, %v3876
      %v3878 = vpop.f32.mrf.mxu0
      %3879 = vdwg.mxu0
      %v3880 = vadd.s32 %v3420, 1
      %vm3881 = vcmp.eq.s32.totalorder %v3415, %v3880
      %vm3882 = vcmp.eq.s32.totalorder %v3416, %v3880
      %vm3883 = vcmp.eq.s32.totalorder %v3417, %v3880
      %v3884 = vsel %vm3881, 1, 0
      %v3885 = vsel %vm3882, 1, 0
      %v3886 = vsel %vm3883, 1, 0
      %v3887 = vcvt.s32.f32 %v3884
      %v3888 = vcvt.s32.f32 %v3885
      %v3889 = vcvt.s32.f32 %v3886
      %3890 = vmatprep.subr.mxu0 0.0
      %3891 = vmatpush1.msra.mxu0 0.0
      %3892 = vmatprep.subr.mxu0 0.0
      %3893 = vmatpush1.msra.mxu0 0.0
      %3894 = vmatprep.subr.mxu0 0.0
      %3895 = vmatpush1.msra.mxu0 0.0
      %3896 = vmatprep.subr.mxu0 0.0
      %3897 = vmatpush1.msra.mxu0 0.0
      %3898 = vmatprep.subr.mxu0 0.0
      %3899 = vmatpush1.msra.mxu0 0.0
      %3900 = vmatprep.subr.mxu0 0.0
      %3901 = vmatpush1.msra.mxu0 0.0
      %3902 = vmatprep.subr.mxu0 0.0
      %3903 = vmatpush1.msra.mxu0 0.0
      %3904 = vmatprep.subr.mxu0 0.0
      %3905 = vmatpush1.msra.mxu0 0.0
      %3906 = vmatprep.subr.mxu0 0.0
      %3907 = vmatpush1.msra.mxu0 0.0
      %3908 = vmatprep.subr.mxu0 0.0
      %3909 = vmatpush1.msra.mxu0 0.0
      %3910 = vmatprep.subr.mxu0 0.0
      %3911 = vmatpush1.msra.mxu0 0.0
      %3912 = vmatprep.subr.mxu0 0.0
      %3913 = vmatpush1.msra.mxu0 0.0
      %3914 = vmatprep.subr.mxu0 0.0
      %3915 = vmatpush1.msra.mxu0 0.0
      %3916 = vmatprep.subr.mxu0 0.0
      %3917 = vmatpush1.msra.mxu0 %v3889
      %3918 = vmatprep.subr.mxu0 0.0
      %3919 = vmatpush1.msra.mxu0 %v3888
      %3920 = vmatprep.subr.mxu0 0.0
      %3921 = vmatpush1.msra.mxu0 %v3887
      %3922 = vmatprep.subr.mxu0 0.0
      %3923 = vmatpush2.msra.mxu0 0.0
      %3924 = vmatprep.subr.mxu0 0.0
      %3925 = vmatpush2.msra.mxu0 0.0
      %3926 = vmatprep.subr.mxu0 0.0
      %3927 = vmatpush2.msra.mxu0 0.0
      %3928 = vmatprep.subr.mxu0 0.0
      %3929 = vmatpush2.msra.mxu0 0.0
      %3930 = vmatprep.subr.mxu0 0.0
      %3931 = vmatpush2.msra.mxu0 0.0
      %3932 = vmatprep.subr.mxu0 0.0
      %3933 = vmatpush2.msra.mxu0 0.0
      %3934 = vmatprep.subr.mxu0 0.0
      %3935 = vmatpush2.msra.mxu0 0.0
      %3936 = vmatprep.subr.mxu0 0.0
      %3937 = vmatpush2.msra.mxu0 0.0
      %3938 = vmatprep.subr.mxu0 0.0
      %3939 = vmatpush2.msra.mxu0 0.0
      %3940 = vmatprep.subr.mxu0 0.0
      %3941 = vmatpush2.msra.mxu0 0.0
      %3942 = vmatprep.subr.mxu0 0.0
      %3943 = vmatpush2.msra.mxu0 0.0
      %3944 = vmatprep.subr.mxu0 0.0
      %3945 = vmatpush2.msra.mxu0 0.0
      %3946 = vmatprep.subr.mxu0 0.0
      %3947 = vmatpush2.msra.mxu0 0.0
      %3948 = vmatprep.subr.mxu0 0.0
      %3949 = vmatpush2.msra.mxu0 0.0
      %3950 = vmatprep.subr.mxu0 0.0
      %3951 = vmatpush2.msra.mxu0 0.0
      %3952 = vmatprep.subr.mxu0 0.0
      %3953 = vmatpush2.msra.mxu0 0.0
      %3954 = vmatprep.mubr.f32.mxu0 0.0
      %3955 = vmatmul.mubr.f32.gmra.mxu0 %v3432
      %v3956 = vpop.f32.mrf.mxu0
      %v3957 = vadd.f32 0.0, %v3956
      %v3958 = vpop.f32.mrf.mxu0
      %3959 = vmatprep.mubr.f32.mxu0 0.0
      %3960 = vmatmul.mubr.f32.gmra.mxu0 %v3435
      %v3961 = vpop.f32.mrf.mxu0
      %v3962 = vadd.f32 0.0, %v3961
      %v3963 = vpop.f32.mrf.mxu0
      %3964 = vmatprep.mubr.f32.mxu0 0.0
      %3965 = vmatmul.mubr.f32.gmra.mxu0 %v3438
      %v3966 = vpop.f32.mrf.mxu0
      %v3967 = vadd.f32 0.0, %v3966
      %v3968 = vpop.f32.mrf.mxu0
      %3969 = vmatprep.mubr.f32.mxu0 0.0
      %3970 = vmatmul.mubr.f32.gmra.mxu0 %v3441
      %v3971 = vpop.f32.mrf.mxu0
      %v3972 = vadd.f32 0.0, %v3971
      %v3973 = vpop.f32.mrf.mxu0
      %3974 = vmatprep.mubr.f32.mxu0 0.0
      %3975 = vmatmul.mubr.f32.gmra.mxu0 %v3444
      %v3976 = vpop.f32.mrf.mxu0
      %v3977 = vadd.f32 0.0, %v3976
      %v3978 = vpop.f32.mrf.mxu0
      %3979 = vmatprep.mubr.f32.mxu0 0.0
      %3980 = vmatmul.mubr.f32.gmra.mxu0 %v3447
      %v3981 = vpop.f32.mrf.mxu0
      %v3982 = vadd.f32 0.0, %v3981
      %v3983 = vpop.f32.mrf.mxu0
      %3984 = vmatprep.mubr.f32.mxu0 0.0
      %3985 = vmatmul.mubr.f32.gmra.mxu0 %v3450
      %v3986 = vpop.f32.mrf.mxu0
      %v3987 = vadd.f32 0.0, %v3986
      %v3988 = vpop.f32.mrf.mxu0
      %3989 = vmatprep.mubr.f32.mxu0 0.0
      %3990 = vmatmul.mubr.f32.gmra.mxu0 %v3453
      %v3991 = vpop.f32.mrf.mxu0
      %v3992 = vadd.f32 0.0, %v3991
      %v3993 = vpop.f32.mrf.mxu0
      %3994 = vmatprep.mubr.f32.mxu0 0.0
      %3995 = vmatmul.mubr.f32.gmra.mxu0 %v3456
      %v3996 = vpop.f32.mrf.mxu0
      %v3997 = vadd.f32 0.0, %v3996
      %v3998 = vpop.f32.mrf.mxu0
      %3999 = vmatprep.mubr.f32.mxu0 0.0
      %4000 = vmatmul.mubr.f32.gmra.mxu0 %v3459
      %v4001 = vpop.f32.mrf.mxu0
      %v4002 = vadd.f32 0.0, %v4001
      %v4003 = vpop.f32.mrf.mxu0
      %4004 = vmatprep.mubr.f32.mxu0 0.0
      %4005 = vmatmul.mubr.f32.gmra.mxu0 %v3462
      %v4006 = vpop.f32.mrf.mxu0
      %v4007 = vadd.f32 0.0, %v4006
      %v4008 = vpop.f32.mrf.mxu0
      %4009 = vmatprep.mubr.f32.mxu0 0.0
      %4010 = vmatmul.mubr.f32.gmra.mxu0 %v3465
      %v4011 = vpop.f32.mrf.mxu0
      %v4012 = vadd.f32 0.0, %v4011
      %v4013 = vpop.f32.mrf.mxu0
      %4014 = vmatprep.mubr.f32.mxu0 0.0
      %4015 = vmatmul.mubr.f32.gmra.mxu0 %v3468
      %v4016 = vpop.f32.mrf.mxu0
      %v4017 = vadd.f32 0.0, %v4016
      %v4018 = vpop.f32.mrf.mxu0
      %4019 = vmatprep.mubr.f32.mxu0 0.0
      %4020 = vmatmul.mubr.f32.gmra.mxu0 %v3471
      %v4021 = vpop.f32.mrf.mxu0
      %v4022 = vadd.f32 0.0, %v4021
      %v4023 = vpop.f32.mrf.mxu0
      %4024 = vmatprep.mubr.f32.mxu0 0.0
      %4025 = vmatmul.mubr.f32.gmra.mxu0 %v3474
      %v4026 = vpop.f32.mrf.mxu0
      %v4027 = vadd.f32 0.0, %v4026
      %v4028 = vpop.f32.mrf.mxu0
      %4029 = vmatprep.mubr.f32.mxu0 0.0
      %4030 = vmatmul.mubr.f32.gmra.mxu0 %v3477
      %v4031 = vpop.f32.mrf.mxu0
      %v4032 = vadd.f32 0.0, %v4031
      %v4033 = vpop.f32.mrf.mxu0
      %4034 = vmatprep.mubr.f32.mxu0 0.0
      %4035 = vmatmul.mubr.f32.gmra.mxu0 %v3480
      %v4036 = vpop.f32.mrf.mxu0
      %v4037 = vadd.f32 0.0, %v4036
      %v4038 = vpop.f32.mrf.mxu0
      %4039 = vmatprep.mubr.f32.mxu0 0.0
      %4040 = vmatmul.mubr.f32.gmra.mxu0 %v3483
      %v4041 = vpop.f32.mrf.mxu0
      %v4042 = vadd.f32 0.0, %v4041
      %v4043 = vpop.f32.mrf.mxu0
      %4044 = vmatprep.mubr.f32.mxu0 0.0
      %4045 = vmatmul.mubr.f32.gmra.mxu0 %v3486
      %v4046 = vpop.f32.mrf.mxu0
      %v4047 = vadd.f32 0.0, %v4046
      %v4048 = vpop.f32.mrf.mxu0
      %4049 = vmatprep.mubr.f32.mxu0 0.0
      %4050 = vmatmul.mubr.f32.gmra.mxu0 %v3489
      %v4051 = vpop.f32.mrf.mxu0
      %v4052 = vadd.f32 0.0, %v4051
      %v4053 = vpop.f32.mrf.mxu0
      %4054 = vmatprep.mubr.f32.mxu0 0.0
      %4055 = vmatmul.mubr.f32.gmra.mxu0 %v3492
      %v4056 = vpop.f32.mrf.mxu0
      %v4057 = vadd.f32 0.0, %v4056
      %v4058 = vpop.f32.mrf.mxu0
      %4059 = vmatprep.mubr.f32.mxu0 0.0
      %4060 = vmatmul.mubr.f32.gmra.mxu0 %v3495
      %v4061 = vpop.f32.mrf.mxu0
      %v4062 = vadd.f32 0.0, %v4061
      %v4063 = vpop.f32.mrf.mxu0
      %4064 = vmatprep.mubr.f32.mxu0 0.0
      %4065 = vmatmul.mubr.f32.gmra.mxu0 %v3498
      %v4066 = vpop.f32.mrf.mxu0
      %v4067 = vadd.f32 0.0, %v4066
      %v4068 = vpop.f32.mrf.mxu0
      %4069 = vmatprep.mubr.f32.mxu0 0.0
      %4070 = vmatmul.mubr.f32.gmra.mxu0 %v3501
      %v4071 = vpop.f32.mrf.mxu0
      %v4072 = vadd.f32 0.0, %v4071
      %v4073 = vpop.f32.mrf.mxu0
      %4074 = vmatprep.mubr.f32.mxu0 0.0
      %4075 = vmatmul.mubr.f32.gmra.mxu0 %v3504
      %v4076 = vpop.f32.mrf.mxu0
      %v4077 = vadd.f32 0.0, %v4076
      %v4078 = vpop.f32.mrf.mxu0
      %4079 = vmatprep.mubr.f32.mxu0 0.0
      %4080 = vmatmul.mubr.f32.gmra.mxu0 %v3507
      %v4081 = vpop.f32.mrf.mxu0
      %v4082 = vadd.f32 0.0, %v4081
      %v4083 = vpop.f32.mrf.mxu0
      %4084 = vmatprep.mubr.f32.mxu0 0.0
      %4085 = vmatmul.mubr.f32.gmra.mxu0 %v3510
      %v4086 = vpop.f32.mrf.mxu0
      %v4087 = vadd.f32 0.0, %v4086
      %v4088 = vpop.f32.mrf.mxu0
      %4089 = vmatprep.mubr.f32.mxu0 0.0
      %4090 = vmatmul.mubr.f32.gmra.mxu0 %v3513
      %v4091 = vpop.f32.mrf.mxu0
      %v4092 = vadd.f32 0.0, %v4091
      %v4093 = vpop.f32.mrf.mxu0
      %4094 = vmatprep.mubr.f32.mxu0 0.0
      %4095 = vmatmul.mubr.f32.gmra.mxu0 %v3516
      %v4096 = vpop.f32.mrf.mxu0
      %v4097 = vadd.f32 0.0, %v4096
      %v4098 = vpop.f32.mrf.mxu0
      %4099 = vmatprep.mubr.f32.mxu0 0.0
      %4100 = vmatmul.mubr.f32.gmra.mxu0 %v3519
      %v4101 = vpop.f32.mrf.mxu0
      %v4102 = vadd.f32 0.0, %v4101
      %v4103 = vpop.f32.mrf.mxu0
      %4104 = vmatprep.mubr.f32.mxu0 0.0
      %4105 = vmatmul.mubr.f32.gmra.mxu0 %v3522
      %v4106 = vpop.f32.mrf.mxu0
      %v4107 = vadd.f32 0.0, %v4106
      %v4108 = vpop.f32.mrf.mxu0
      %4109 = vmatprep.mubr.f32.mxu0 0.0
      %4110 = vmatmul.mubr.f32.gmra.mxu0 %v3525
      %v4111 = vpop.f32.mrf.mxu0
      %v4112 = vadd.f32 0.0, %v4111
      %v4113 = vpop.f32.mrf.mxu0
      %4114 = vmatprep.mubr.f32.mxu0 0.0
      %4115 = vmatmul.mubr.f32.gmra.mxu0 %v3528
      %v4116 = vpop.f32.mrf.mxu0
      %v4117 = vadd.f32 0.0, %v4116
      %v4118 = vpop.f32.mrf.mxu0
      %4119 = vmatprep.mubr.f32.mxu0 0.0
      %4120 = vmatmul.mubr.f32.gmra.mxu0 %v3531
      %v4121 = vpop.f32.mrf.mxu0
      %v4122 = vadd.f32 0.0, %v4121
      %v4123 = vpop.f32.mrf.mxu0
      %4124 = vmatprep.mubr.f32.mxu0 0.0
      %4125 = vmatmul.mubr.f32.gmra.mxu0 %v3534
      %v4126 = vpop.f32.mrf.mxu0
      %v4127 = vadd.f32 0.0, %v4126
      %v4128 = vpop.f32.mrf.mxu0
      %4129 = vmatprep.mubr.f32.mxu0 0.0
      %4130 = vmatmul.mubr.f32.gmra.mxu0 %v3537
      %v4131 = vpop.f32.mrf.mxu0
      %v4132 = vadd.f32 0.0, %v4131
      %v4133 = vpop.f32.mrf.mxu0
      %4134 = vmatprep.mubr.f32.mxu0 0.0
      %4135 = vmatmul.mubr.f32.gmra.mxu0 %v3540
      %v4136 = vpop.f32.mrf.mxu0
      %v4137 = vadd.f32 0.0, %v4136
      %v4138 = vpop.f32.mrf.mxu0
      %4139 = vmatprep.mubr.f32.mxu0 0.0
      %4140 = vmatmul.mubr.f32.gmra.mxu0 %v3543
      %v4141 = vpop.f32.mrf.mxu0
      %v4142 = vadd.f32 0.0, %v4141
      %v4143 = vpop.f32.mrf.mxu0
      %4144 = vmatprep.mubr.f32.mxu0 0.0
      %4145 = vmatmul.mubr.f32.gmra.mxu0 %v3546
      %v4146 = vpop.f32.mrf.mxu0
      %v4147 = vadd.f32 0.0, %v4146
      %v4148 = vpop.f32.mrf.mxu0
      %4149 = vmatprep.mubr.f32.mxu0 0.0
      %4150 = vmatmul.mubr.f32.gmra.mxu0 %v3549
      %v4151 = vpop.f32.mrf.mxu0
      %v4152 = vadd.f32 0.0, %v4151
      %v4153 = vpop.f32.mrf.mxu0
      %4154 = vmatprep.mubr.f32.mxu0 0.0
      %4155 = vmatmul.mubr.f32.gmra.mxu0 %v3552
      %v4156 = vpop.f32.mrf.mxu0
      %v4157 = vadd.f32 0.0, %v4156
      %v4158 = vpop.f32.mrf.mxu0
      %4159 = vmatprep.mubr.f32.mxu0 0.0
      %4160 = vmatmul.mubr.f32.gmra.mxu0 %v3555
      %v4161 = vpop.f32.mrf.mxu0
      %v4162 = vadd.f32 0.0, %v4161
      %v4163 = vpop.f32.mrf.mxu0
      %4164 = vmatprep.mubr.f32.mxu0 0.0
      %4165 = vmatmul.mubr.f32.gmra.mxu0 %v3558
      %v4166 = vpop.f32.mrf.mxu0
      %v4167 = vadd.f32 0.0, %v4166
      %v4168 = vpop.f32.mrf.mxu0
      %4169 = vmatprep.mubr.f32.mxu0 0.0
      %4170 = vmatmul.mubr.f32.gmra.mxu0 %v3561
      %v4171 = vpop.f32.mrf.mxu0
      %v4172 = vadd.f32 0.0, %v4171
      %v4173 = vpop.f32.mrf.mxu0
      %4174 = vmatprep.mubr.f32.mxu0 0.0
      %4175 = vmatmul.mubr.f32.gmra.mxu0 %v3564
      %v4176 = vpop.f32.mrf.mxu0
      %v4177 = vadd.f32 0.0, %v4176
      %v4178 = vpop.f32.mrf.mxu0
      %4179 = vmatprep.mubr.f32.mxu0 0.0
      %4180 = vmatmul.mubr.f32.gmra.mxu0 %v3567
      %v4181 = vpop.f32.mrf.mxu0
      %v4182 = vadd.f32 0.0, %v4181
      %v4183 = vpop.f32.mrf.mxu0
      %4184 = vmatprep.mubr.f32.mxu0 0.0
      %4185 = vmatmul.mubr.f32.gmra.mxu0 %v3570
      %v4186 = vpop.f32.mrf.mxu0
      %v4187 = vadd.f32 0.0, %v4186
      %v4188 = vpop.f32.mrf.mxu0
      %4189 = vmatprep.mubr.f32.mxu0 0.0
      %4190 = vmatmul.mubr.f32.gmra.mxu0 %v3573
      %v4191 = vpop.f32.mrf.mxu0
      %v4192 = vadd.f32 0.0, %v4191
      %v4193 = vpop.f32.mrf.mxu0
      %4194 = vdwg.mxu0
      %v4195 = vmax.f32 %v3642, %v3957
      %v4196 = vmax.f32 %v3647, %v3962
      %v4197 = vmax.f32 %v3652, %v3967
      %v4198 = vmax.f32 %v3657, %v3972
      %v4199 = vmax.f32 %v3662, %v3977
      %v4200 = vmax.f32 %v3667, %v3982
      %v4201 = vmax.f32 %v3672, %v3987
      %v4202 = vmax.f32 %v3677, %v3992
      %v4203 = vmax.f32 %v3682, %v3997
      %v4204 = vmax.f32 %v3687, %v4002
      %v4205 = vmax.f32 %v3692, %v4007
      %v4206 = vmax.f32 %v3697, %v4012
      %v4207 = vmax.f32 %v3702, %v4017
      %v4208 = vmax.f32 %v3707, %v4022
      %v4209 = vmax.f32 %v3712, %v4027
      %v4210 = vmax.f32 %v3717, %v4032
      %v4211 = vmax.f32 %v3722, %v4037
      %v4212 = vmax.f32 %v3727, %v4042
      %v4213 = vmax.f32 %v3732, %v4047
      %v4214 = vmax.f32 %v3737, %v4052
      %v4215 = vmax.f32 %v3742, %v4057
      %v4216 = vmax.f32 %v3747, %v4062
      %v4217 = vmax.f32 %v3752, %v4067
      %v4218 = vmax.f32 %v3757, %v4072
      %v4219 = vmax.f32 %v3762, %v4077
      %v4220 = vmax.f32 %v3767, %v4082
      %v4221 = vmax.f32 %v3772, %v4087
      %v4222 = vmax.f32 %v3777, %v4092
      %v4223 = vmax.f32 %v3782, %v4097
      %v4224 = vmax.f32 %v3787, %v4102
      %v4225 = vmax.f32 %v3792, %v4107
      %v4226 = vmax.f32 %v3797, %v4112
      %v4227 = vmax.f32 %v3802, %v4117
      %v4228 = vmax.f32 %v3807, %v4122
      %v4229 = vmax.f32 %v3812, %v4127
      %v4230 = vmax.f32 %v3817, %v4132
      %v4231 = vmax.f32 %v3822, %v4137
      %v4232 = vmax.f32 %v3827, %v4142
      %v4233 = vmax.f32 %v3832, %v4147
      %v4234 = vmax.f32 %v3837, %v4152
      %v4235 = vmax.f32 %v3842, %v4157
      %v4236 = vmax.f32 %v3847, %v4162
      %v4237 = vmax.f32 %v3852, %v4167
      %v4238 = vmax.f32 %v3857, %v4172
      %v4239 = vmax.f32 %v3862, %v4177
      %v4240 = vmax.f32 %v3867, %v4182
      %v4241 = vmax.f32 %v3872, %v4187
      %v4242 = vmax.f32 %v3877, %v4192
      %v4243 = vmax.f32 %v4195, %v4197
      %v4244 = vmax.f32 %v4196, %v4198
      %v4245 = vmax.f32 %v4197, %v4199
      %v4246 = vmax.f32 %v4198, %v4200
      %v4247 = vmax.f32 %v4199, %v4201
      %v4248 = vmax.f32 %v4200, %v4202
      %v4249 = vmax.f32 %v4201, %v4203
      %v4250 = vmax.f32 %v4202, %v4204
      %v4251 = vmax.f32 %v4203, %v4205
      %v4252 = vmax.f32 %v4204, %v4206
      %v4253 = vmax.f32 %v4205, %v4207
      %v4254 = vmax.f32 %v4206, %v4208
      %v4255 = vmax.f32 %v4207, %v4209
      %v4256 = vmax.f32 %v4208, %v4210
      %v4257 = vmax.f32 %v4209, %v4211
      %v4258 = vmax.f32 %v4210, %v4212
      %v4259 = vmax.f32 %v4211, %v4213
      %v4260 = vmax.f32 %v4212, %v4214
      %v4261 = vmax.f32 %v4213, %v4215
      %v4262 = vmax.f32 %v4214, %v4216
      %v4263 = vmax.f32 %v4215, %v4217
      %v4264 = vmax.f32 %v4216, %v4218
      %v4265 = vmax.f32 %v4217, %v4219
      %v4266 = vmax.f32 %v4218, %v4220
      %v4267 = vmax.f32 %v4219, %v4221
      %v4268 = vmax.f32 %v4220, %v4222
      %v4269 = vmax.f32 %v4221, %v4223
      %v4270 = vmax.f32 %v4222, %v4224
      %v4271 = vmax.f32 %v4223, %v4225
      %v4272 = vmax.f32 %v4224, %v4226
      %v4273 = vmax.f32 %v4225, %v4227
      %v4274 = vmax.f32 %v4226, %v4228
      %v4275 = vmax.f32 %v4227, %v4229
      %v4276 = vmax.f32 %v4228, %v4230
      %v4277 = vmax.f32 %v4229, %v4231
      %v4278 = vmax.f32 %v4230, %v4232
      %v4279 = vmax.f32 %v4231, %v4233
      %v4280 = vmax.f32 %v4232, %v4234
      %v4281 = vmax.f32 %v4233, %v4235
      %v4282 = vmax.f32 %v4234, %v4236
      %v4283 = vmax.f32 %v4235, %v4237
      %v4284 = vmax.f32 %v4236, %v4238
      %v4285 = vmax.f32 %v4237, %v4239
      %v4286 = vmax.f32 %v4238, %v4240
      %v4287 = vmax.f32 %v4239, %v4241
      %v4288 = vmax.f32 %v4240, %v4242
      %v4289 = vmax.f32 %v4243, 0.0
      %v4290 = vmax.f32 %v4244, 0.0
      %v4291 = vmax.f32 %v4245, 0.0
      %v4292 = vmax.f32 %v4246, 0.0
      %v4293 = vmax.f32 %v4247, 0.0
      %v4294 = vmax.f32 %v4248, 0.0
      %v4295 = vmax.f32 %v4249, 0.0
      %v4296 = vmax.f32 %v4250, 0.0
      %v4297 = vmax.f32 %v4251, 0.0
      %v4298 = vmax.f32 %v4252, 0.0
      %v4299 = vmax.f32 %v4253, 0.0
      %v4300 = vmax.f32 %v4254, 0.0
      %v4301 = vmax.f32 %v4255, 0.0
      %v4302 = vmax.f32 %v4256, 0.0
      %v4303 = vmax.f32 %v4257, 0.0
      %v4304 = vmax.f32 %v4258, 0.0
      %v4305 = vmax.f32 %v4259, 0.0
      %v4306 = vmax.f32 %v4260, 0.0
      %v4307 = vmax.f32 %v4261, 0.0
      %v4308 = vmax.f32 %v4262, 0.0
      %v4309 = vmax.f32 %v4263, 0.0
      %v4310 = vmax.f32 %v4264, 0.0
      %v4311 = vmax.f32 %v4265, 0.0
      %v4312 = vmax.f32 %v4266, 0.0
      %v4313 = vmax.f32 %v4267, 0.0
      %v4314 = vmax.f32 %v4268, 0.0
      %v4315 = vmax.f32 %v4269, 0.0
      %v4316 = vmax.f32 %v4270, 0.0
      %v4317 = vmax.f32 %v4271, 0.0
      %v4318 = vmax.f32 %v4272, 0.0
      %v4319 = vmax.f32 %v4273, 0.0
      %v4320 = vmax.f32 %v4274, 0.0
      %v4321 = vmax.f32 %v4275, 0.0
      %v4322 = vmax.f32 %v4276, 0.0
      %v4323 = vmax.f32 %v4277, 0.0
      %v4324 = vmax.f32 %v4278, 0.0
      %v4325 = vmax.f32 %v4279, 0.0
      %v4326 = vmax.f32 %v4280, 0.0
      %v4327 = vmax.f32 %v4281, 0.0
      %v4328 = vmax.f32 %v4282, 0.0
      %v4329 = vmax.f32 %v4283, 0.0
      %v4330 = vmax.f32 %v4284, 0.0
      %v4331 = vmax.f32 %v4285, 0.0
      %v4332 = vmax.f32 %v4286, 0.0
      %v4333 = vmax.f32 %v4287, 0.0
      %v4334 = vmax.f32 %v4288, 0.0
      %v4335 = vld [vmem:[%s4] sm:$0xff]
      %v4336 = vld [vmem:[%s4 + $0x8] sm:$0xff]
      %v4337 = vld [vmem:[%s4 + $0x10] sm:$0xff]
      %v4338 = vld [vmem:[%s4 + $0x18] sm:$0xff]
      %v4339 = vld [vmem:[%s4 + $0x20] sm:$0xff]
      %v4340 = vld [vmem:[%s4 + $0x28] sm:$0xff]
      %v4341 = vld [vmem:[%s4 + $0x30] sm:$0xff]
      %v4342 = vld [vmem:[%s4 + $0x38] sm:$0xff]
      %v4343 = vld [vmem:[%s4 + $0x40] sm:$0xff]
      %v4344 = vld [vmem:[%s4 + $0x48] sm:$0xff]
      %v4345 = vld [vmem:[%s4 + $0x50] sm:$0xff]
      %v4346 = vld [vmem:[%s4 + $0x58] sm:$0xff]
      %v4347 = vld [vmem:[%s4 + $0x60] sm:$0xff]
      %v4348 = vld [vmem:[%s4 + $0x68] sm:$0xff]
      %v4349 = vld [vmem:[%s4 + $0x70] sm:$0xff]
      %v4350 = vld [vmem:[%s4 + $0x78] sm:$0xff]
      %v4351 = vld [vmem:[%s4 + $0x80] sm:$0xff]
      %v4352 = vld [vmem:[%s4 + $0x88] sm:$0xff]
      %v4353 = vld [vmem:[%s4 + $0x90] sm:$0xff]
      %v4354 = vld [vmem:[%s4 + $0x98] sm:$0xff]
      %v4355 = vld [vmem:[%s4 + $0xa0] sm:$0xff]
      %v4356 = vld [vmem:[%s4 + $0xa8] sm:$0xff]
      %v4357 = vld [vmem:[%s4 + $0xb0] sm:$0xff]
      %v4358 = vld [vmem:[%s4 + $0xb8] sm:$0xff]
      %v4359 = vld [vmem:[%s4 + $0xc0] sm:$0xff]
      %v4360 = vld [vmem:[%s4 + $0xc8] sm:$0xff]
      %v4361 = vld [vmem:[%s4 + $0xd0] sm:$0xff]
      %v4362 = vld [vmem:[%s4 + $0xd8] sm:$0xff]
      %v4363 = vld [vmem:[%s4 + $0xe0] sm:$0xff]
      %v4364 = vld [vmem:[%s4 + $0xe8] sm:$0xff]
      %v4365 = vld [vmem:[%s4 + $0xf0] sm:$0xff]
      %v4366 = vld [vmem:[%s4 + $0xf8] sm:$0xff]
      %v4367 = vld [vmem:[%s4 + $0x100] sm:$0xff]
      %v4368 = vld [vmem:[%s4 + $0x108] sm:$0xff]
      %v4369 = vld [vmem:[%s4 + $0x110] sm:$0xff]
      %v4370 = vld [vmem:[%s4 + $0x118] sm:$0xff]
      %v4371 = vld [vmem:[%s4 + $0x120] sm:$0xff]
      %v4372 = vld [vmem:[%s4 + $0x128] sm:$0xff]
      %v4373 = vld [vmem:[%s4 + $0x130] sm:$0xff]
      %v4374 = vld [vmem:[%s4 + $0x138] sm:$0xff]
      %v4375 = vld [vmem:[%s3] sm:$0xff]
      %v4376 = vld [vmem:[%s3 + $0x8] sm:$0xff]
      %v4377 = vld [vmem:[%s3 + $0x10] sm:$0xff]
      %v4378 = vld [vmem:[%s3 + $0x18] sm:$0xff]
      %v4379 = vld [vmem:[%s3 + $0x20] sm:$0xff]
      %v4380 = vld [vmem:[%s3 + $0x28] sm:$0xff]
      %v4381 = vld [vmem:[%s3 + $0x30] sm:$0xff]
      %v4382 = vld [vmem:[%s3 + $0x38] sm:$0xff]
      %v4383 = vld [vmem:[%s3 + $0x40] sm:$0xff]
      %v4384 = vld [vmem:[%s3 + $0x48] sm:$0xff]
      %v4385 = vld [vmem:[%s3 + $0x50] sm:$0xff]
      %v4386 = vld [vmem:[%s3 + $0x58] sm:$0xff]
      %v4387 = vld [vmem:[%s3 + $0x60] sm:$0xff]
      %v4388 = vld [vmem:[%s3 + $0x68] sm:$0xff]
      %v4389 = vld [vmem:[%s3 + $0x70] sm:$0xff]
      %v4390 = vld [vmem:[%s3 + $0x78] sm:$0xff]
      %v4391 = vld [vmem:[%s3 + $0x80] sm:$0xff]
      %v4392 = vld [vmem:[%s3 + $0x88] sm:$0xff]
      %v4393 = vld [vmem:[%s3 + $0x90] sm:$0xff]
      %v4394 = vld [vmem:[%s3 + $0x98] sm:$0xff]
      %v4395 = vld [vmem:[%s3 + $0xa0] sm:$0xff]
      %v4396 = vld [vmem:[%s3 + $0xa8] sm:$0xff]
      %v4397 = vld [vmem:[%s3 + $0xb0] sm:$0xff]
      %v4398 = vld [vmem:[%s3 + $0xb8] sm:$0xff]
      %v4399 = vld [vmem:[%s3 + $0xc0] sm:$0xff]
      %v4400 = vld [vmem:[%s3 + $0xc8] sm:$0xff]
      %v4401 = vld [vmem:[%s3 + $0xd0] sm:$0xff]
      %v4402 = vld [vmem:[%s3 + $0xd8] sm:$0xff]
      %v4403 = vld [vmem:[%s3 + $0xe0] sm:$0xff]
      %v4404 = vld [vmem:[%s3 + $0xe8] sm:$0xff]
      %v4405 = vld [vmem:[%s3 + $0xf0] sm:$0xff]
      %v4406 = vld [vmem:[%s3 + $0xf8] sm:$0xff]
      %v4407 = vld [vmem:[%s3 + $0x100] sm:$0xff]
      %v4408 = vld [vmem:[%s3 + $0x108] sm:$0xff]
      %v4409 = vld [vmem:[%s3 + $0x110] sm:$0xff]
      %v4410 = vld [vmem:[%s3 + $0x118] sm:$0xff]
      %v4411 = vld [vmem:[%s3 + $0x120] sm:$0xff]
      %v4412 = vld [vmem:[%s3 + $0x128] sm:$0xff]
      %v4413 = vld [vmem:[%s3 + $0x130] sm:$0xff]
      %v4414 = vld [vmem:[%s3 + $0x138] sm:$0xff]
      %v4415 = vld [vmem:[%s3 + $0x140] sm:$0xff]
      %v4416 = vld [vmem:[%s3 + $0x148] sm:$0xff]
      %v4417 = vld [vmem:[%s3 + $0x150] sm:$0xff]
      %v4418 = vld [vmem:[%s3 + $0x158] sm:$0xff]
      %v4419 = vld [vmem:[%s3 + $0x160] sm:$0xff]
      %v4420 = vld [vmem:[%s3 + $0x168] sm:$0xff]
      %v4421 = vld [vmem:[%s3 + $0x170] sm:$0xff]
      %v4422 = vld [vmem:[%s3 + $0x178] sm:$0xff]
      %v4423 = vld [vmem:[%s3 + $0x180] sm:$0xff]
      %v4424 = vld [vmem:[%s3 + $0x188] sm:$0xff]
      %v4425 = vld [vmem:[%s3 + $0x190] sm:$0xff]
      %v4426 = vld [vmem:[%s3 + $0x198] sm:$0xff]
      %v4427 = vld [vmem:[%s3 + $0x1a0] sm:$0xff]
      %v4428 = vld [vmem:[%s3 + $0x1a8] sm:$0xff]
      %v4429 = vld [vmem:[%s3 + $0x1b0] sm:$0xff]
      %v4430 = vld [vmem:[%s3 + $0x1b8] sm:$0xff]
      %v4431 = vld [vmem:[%s3 + $0x1c0] sm:$0xff]
      %v4432 = vld [vmem:[%s3 + $0x1c8] sm:$0xff]
      %v4433 = vld [vmem:[%s3 + $0x1d0] sm:$0xff]
      %v4434 = vld [vmem:[%s3 + $0x1d8] sm:$0xff]
      %v4435 = vld [vmem:[%s3 + $0x1e0] sm:$0xff]
      %v4436 = vld [vmem:[%s3 + $0x1e8] sm:$0xff]
      %v4437 = vld [vmem:[%s3 + $0x1f0] sm:$0xff]
      %v4438 = vld [vmem:[%s3 + $0x1f8] sm:$0xff]
      %v4439 = vld [vmem:[%s3 + $0x200] sm:$0xff]
      %v4440 = vld [vmem:[%s3 + $0x208] sm:$0xff]
      %v4441 = vld [vmem:[%s3 + $0x210] sm:$0xff]
      %v4442 = vld [vmem:[%s3 + $0x218] sm:$0xff]
      %v4443 = vld [vmem:[%s3 + $0x220] sm:$0xff]
      %v4444 = vld [vmem:[%s3 + $0x228] sm:$0xff]
      %v4445 = vld [vmem:[%s3 + $0x230] sm:$0xff]
      %v4446 = vld [vmem:[%s3 + $0x238] sm:$0xff]
      %v4447 = vld [vmem:[%s3 + $0x240] sm:$0xff]
      %v4448 = vld [vmem:[%s3 + $0x248] sm:$0xff]
      %v4449 = vld [vmem:[%s3 + $0x250] sm:$0xff]
      %v4450 = vld [vmem:[%s3 + $0x258] sm:$0xff]
      %v4451 = vld [vmem:[%s3 + $0x260] sm:$0xff]
      %v4452 = vld [vmem:[%s3 + $0x268] sm:$0xff]
      %v4453 = vld [vmem:[%s3 + $0x270] sm:$0xff]
      %v4454 = vld [vmem:[%s3 + $0x278] sm:$0xff]
      %v4455 = vld [vmem:[%s3 + $0x280] sm:$0xff]
      %v4456 = vld [vmem:[%s3 + $0x288] sm:$0xff]
      %v4457 = vld [vmem:[%s3 + $0x290] sm:$0xff]
      %v4458 = vld [vmem:[%s3 + $0x298] sm:$0xff]
      %v4459 = vld [vmem:[%s3 + $0x2a0] sm:$0xff]
      %v4460 = vld [vmem:[%s3 + $0x2a8] sm:$0xff]
      %v4461 = vld [vmem:[%s3 + $0x2b0] sm:$0xff]
      %v4462 = vld [vmem:[%s3 + $0x2b8] sm:$0xff]
      %v4463 = vld [vmem:[%s3 + $0x2c0] sm:$0xff]
      %v4464 = vld [vmem:[%s3 + $0x2c8] sm:$0xff]
      %v4465 = vld [vmem:[%s3 + $0x2d0] sm:$0xff]
      %v4466 = vld [vmem:[%s3 + $0x2d8] sm:$0xff]
      %v4467 = vld [vmem:[%s3 + $0x2e0] sm:$0xff]
      %v4468 = vld [vmem:[%s3 + $0x2e8] sm:$0xff]
      %v4469 = vld [vmem:[%s3 + $0x2f0] sm:$0xff]
      %v4470 = vld [vmem:[%s3 + $0x2f8] sm:$0xff]
      %v4471 = vld [vmem:[%s3 + $0x300] sm:$0xff]
      %v4472 = vld [vmem:[%s3 + $0x308] sm:$0xff]
      %v4473 = vld [vmem:[%s3 + $0x310] sm:$0xff]
      %v4474 = vld [vmem:[%s3 + $0x318] sm:$0xff]
      %v4475 = vld [vmem:[%s3 + $0x320] sm:$0xff]
      %v4476 = vld [vmem:[%s3 + $0x328] sm:$0xff]
      %v4477 = vld [vmem:[%s3 + $0x330] sm:$0xff]
      %v4478 = vld [vmem:[%s3 + $0x338] sm:$0xff]
      %v4479 = vld [vmem:[%s3 + $0x340] sm:$0xff]
      %v4480 = vld [vmem:[%s3 + $0x348] sm:$0xff]
      %v4481 = vld [vmem:[%s3 + $0x350] sm:$0xff]
      %v4482 = vld [vmem:[%s3 + $0x358] sm:$0xff]
      %v4483 = vld [vmem:[%s3 + $0x360] sm:$0xff]
      %v4484 = vld [vmem:[%s3 + $0x368] sm:$0xff]
      %v4485 = vld [vmem:[%s3 + $0x370] sm:$0xff]
      %v4486 = vld [vmem:[%s3 + $0x378] sm:$0xff]
      %v4487 = vld [vmem:[%s3 + $0x380] sm:$0xff]
      %v4488 = vld [vmem:[%s3 + $0x388] sm:$0xff]
      %v4489 = vld [vmem:[%s3 + $0x390] sm:$0xff]
      %v4490 = vld [vmem:[%s3 + $0x398] sm:$0xff]
      %v4491 = vld [vmem:[%s3 + $0x3a0] sm:$0xff]
      %v4492 = vld [vmem:[%s3 + $0x3a8] sm:$0xff]
      %v4493 = vld [vmem:[%s3 + $0x3b0] sm:$0xff]
      %v4494 = vld [vmem:[%s3 + $0x3b8] sm:$0xff]
      %vm4495 = vcmask 916480
      %v4497 = vsel %vm4495, %v4377, 0
      %v4500 = vsel %vm4495, %v4380, 0
      %v4503 = vsel %vm4495, %v4383, 0
      %v4506 = vsel %vm4495, %v4386, 0
      %v4509 = vsel %vm4495, %v4389, 0
      %v4512 = vsel %vm4495, %v4392, 0
      %v4515 = vsel %vm4495, %v4395, 0
      %v4518 = vsel %vm4495, %v4398, 0
      %v4521 = vsel %vm4495, %v4401, 0
      %v4524 = vsel %vm4495, %v4404, 0
      %v4527 = vsel %vm4495, %v4407, 0
      %v4530 = vsel %vm4495, %v4410, 0
      %v4533 = vsel %vm4495, %v4413, 0
      %v4536 = vsel %vm4495, %v4416, 0
      %v4539 = vsel %vm4495, %v4419, 0
      %v4542 = vsel %vm4495, %v4422, 0
      %v4545 = vsel %vm4495, %v4425, 0
      %v4548 = vsel %vm4495, %v4428, 0
      %v4551 = vsel %vm4495, %v4431, 0
      %v4554 = vsel %vm4495, %v4434, 0
      %v4557 = vsel %vm4495, %v4437, 0
      %v4560 = vsel %vm4495, %v4440, 0
      %v4563 = vsel %vm4495, %v4443, 0
      %v4566 = vsel %vm4495, %v4446, 0
      %v4569 = vsel %vm4495, %v4449, 0
      %v4572 = vsel %vm4495, %v4452, 0
      %v4575 = vsel %vm4495, %v4455, 0
      %v4578 = vsel %vm4495, %v4458, 0
      %v4581 = vsel %vm4495, %v4461, 0
      %v4584 = vsel %vm4495, %v4464, 0
      %v4587 = vsel %vm4495, %v4467, 0
      %v4590 = vsel %vm4495, %v4470, 0
      %v4593 = vsel %vm4495, %v4473, 0
      %v4596 = vsel %vm4495, %v4476, 0
      %v4599 = vsel %vm4495, %v4479, 0
      %v4602 = vsel %vm4495, %v4482, 0
      %v4605 = vsel %vm4495, %v4485, 0
      %v4608 = vsel %vm4495, %v4488, 0
      %v4611 = vsel %vm4495, %v4491, 0
      %v4614 = vsel %vm4495, %v4494, 0
      %4616 = vmatprep.subr.mxu0 0.0
      %4617 = vmatpush1.msra.mxu0 %v4304
      %4618 = vmatprep.subr.mxu0 0.0
      %4619 = vmatpush1.msra.mxu0 %v4303
      %4620 = vmatprep.subr.mxu0 0.0
      %4621 = vmatpush1.msra.mxu0 %v4302
      %4622 = vmatprep.subr.mxu0 0.0
      %4623 = vmatpush1.msra.mxu0 %v4301
      %4624 = vmatprep.subr.mxu0 0.0
      %4625 = vmatpush1.msra.mxu0 %v4300
      %4626 = vmatprep.subr.mxu0 0.0
      %4627 = vmatpush1.msra.mxu0 %v4299
      %4628 = vmatprep.subr.mxu0 0.0
      %4629 = vmatpush1.msra.mxu0 %v4298
      %4630 = vmatprep.subr.mxu0 0.0
      %4631 = vmatpush1.msra.mxu0 %v4297
      %4632 = vmatprep.subr.mxu0 0.0
      %4633 = vmatpush1.msra.mxu0 %v4296
      %4634 = vmatprep.subr.mxu0 0.0
      %4635 = vmatpush1.msra.mxu0 %v4295
      %4636 = vmatprep.subr.mxu0 0.0
      %4637 = vmatpush1.msra.mxu0 %v4294
      %4638 = vmatprep.subr.mxu0 0.0
      %4639 = vmatpush1.msra.mxu0 %v4293
      %4640 = vmatprep.subr.mxu0 0.0
      %4641 = vmatpush1.msra.mxu0 %v4292
      %4642 = vmatprep.subr.mxu0 0.0
      %4643 = vmatpush1.msra.mxu0 %v4291
      %4644 = vmatprep.subr.mxu0 0.0
      %4645 = vmatpush1.msra.mxu0 %v4290
      %4646 = vmatprep.subr.mxu0 0.0
      %4647 = vmatpush1.msra.mxu0 %v4289
      %4648 = vmatprep.subr.mxu0 0.0
      %4649 = vmatpush2.msra.mxu0 %v4320
      %4650 = vmatprep.subr.mxu0 0.0
      %4651 = vmatpush2.msra.mxu0 %v4319
      %4652 = vmatprep.subr.mxu0 0.0
      %4653 = vmatpush2.msra.mxu0 %v4318
      %4654 = vmatprep.subr.mxu0 0.0
      %4655 = vmatpush2.msra.mxu0 %v4317
      %4656 = vmatprep.subr.mxu0 0.0
      %4657 = vmatpush2.msra.mxu0 %v4316
      %4658 = vmatprep.subr.mxu0 0.0
      %4659 = vmatpush2.msra.mxu0 %v4315
      %4660 = vmatprep.subr.mxu0 0.0
      %4661 = vmatpush2.msra.mxu0 %v4314
      %4662 = vmatprep.subr.mxu0 0.0
      %4663 = vmatpush2.msra.mxu0 %v4313
      %4664 = vmatprep.subr.mxu0 0.0
      %4665 = vmatpush2.msra.mxu0 %v4312
      %4666 = vmatprep.subr.mxu0 0.0
      %4667 = vmatpush2.msra.mxu0 %v4311
      %4668 = vmatprep.subr.mxu0 0.0
      %4669 = vmatpush2.msra.mxu0 %v4310
      %4670 = vmatprep.subr.mxu0 0.0
      %4671 = vmatpush2.msra.mxu0 %v4309
      %4672 = vmatprep.subr.mxu0 0.0
      %4673 = vmatpush2.msra.mxu0 %v4308
      %4674 = vmatprep.subr.mxu0 0.0
      %4675 = vmatpush2.msra.mxu0 %v4307
      %4676 = vmatprep.subr.mxu0 0.0
      %4677 = vmatpush2.msra.mxu0 %v4306
      %4678 = vmatprep.subr.mxu0 0.0
      %4679 = vmatpush2.msra.mxu0 %v4305
      %4680 = vmatprep.mubr.f32.mxu0 %v4376
      %4681 = vmatmul.mubr.f32.gmra.mxu0 %v4375
      %v4682 = vpop.f32.mrf.mxu0
      %v4683 = vadd.f32 0.0, %v4682
      %v4684 = vpop.f32.mrf.mxu0
      %4685 = vmatprep.mubr.f32.mxu0 %v4379
      %4686 = vmatmul.mubr.f32.gmra.mxu0 %v4378
      %v4687 = vpop.f32.mrf.mxu0
      %v4688 = vadd.f32 0.0, %v4687
      %v4689 = vpop.f32.mrf.mxu0
      %4690 = vmatprep.mubr.f32.mxu0 %v4382
      %4691 = vmatmul.mubr.f32.gmra.mxu0 %v4381
      %v4692 = vpop.f32.mrf.mxu0
      %v4693 = vadd.f32 0.0, %v4692
      %v4694 = vpop.f32.mrf.mxu0
      %4695 = vmatprep.mubr.f32.mxu0 %v4385
      %4696 = vmatmul.mubr.f32.gmra.mxu0 %v4384
      %v4697 = vpop.f32.mrf.mxu0
      %v4698 = vadd.f32 0.0, %v4697
      %v4699 = vpop.f32.mrf.mxu0
      %4700 = vmatprep.mubr.f32.mxu0 %v4388
      %4701 = vmatmul.mubr.f32.gmra.mxu0 %v4387
      %v4702 = vpop.f32.mrf.mxu0
      %v4703 = vadd.f32 0.0, %v4702
      %v4704 = vpop.f32.mrf.mxu0
      %4705 = vmatprep.mubr.f32.mxu0 %v4391
      %4706 = vmatmul.mubr.f32.gmra.mxu0 %v4390
      %v4707 = vpop.f32.mrf.mxu0
      %v4708 = vadd.f32 0.0, %v4707
      %v4709 = vpop.f32.mrf.mxu0
      %4710 = vmatprep.mubr.f32.mxu0 %v4394
      %4711 = vmatmul.mubr.f32.gmra.mxu0 %v4393
      %v4712 = vpop.f32.mrf.mxu0
      %v4713 = vadd.f32 0.0, %v4712
      %v4714 = vpop.f32.mrf.mxu0
      %4715 = vmatprep.mubr.f32.mxu0 %v4397
      %4716 = vmatmul.mubr.f32.gmra.mxu0 %v4396
      %v4717 = vpop.f32.mrf.mxu0
      %v4718 = vadd.f32 0.0, %v4717
      %v4719 = vpop.f32.mrf.mxu0
      %4720 = vmatprep.mubr.f32.mxu0 %v4400
      %4721 = vmatmul.mubr.f32.gmra.mxu0 %v4399
      %v4722 = vpop.f32.mrf.mxu0
      %v4723 = vadd.f32 0.0, %v4722
      %v4724 = vpop.f32.mrf.mxu0
      %4725 = vmatprep.mubr.f32.mxu0 %v4403
      %4726 = vmatmul.mubr.f32.gmra.mxu0 %v4402
      %v4727 = vpop.f32.mrf.mxu0
      %v4728 = vadd.f32 0.0, %v4727
      %v4729 = vpop.f32.mrf.mxu0
      %4730 = vmatprep.mubr.f32.mxu0 %v4406
      %4731 = vmatmul.mubr.f32.gmra.mxu0 %v4405
      %v4732 = vpop.f32.mrf.mxu0
      %v4733 = vadd.f32 0.0, %v4732
      %v4734 = vpop.f32.mrf.mxu0
      %4735 = vmatprep.mubr.f32.mxu0 %v4409
      %4736 = vmatmul.mubr.f32.gmra.mxu0 %v4408
      %v4737 = vpop.f32.mrf.mxu0
      %v4738 = vadd.f32 0.0, %v4737
      %v4739 = vpop.f32.mrf.mxu0
      %4740 = vmatprep.mubr.f32.mxu0 %v4412
      %4741 = vmatmul.mubr.f32.gmra.mxu0 %v4411
      %v4742 = vpop.f32.mrf.mxu0
      %v4743 = vadd.f32 0.0, %v4742
      %v4744 = vpop.f32.mrf.mxu0
      %4745 = vmatprep.mubr.f32.mxu0 %v4415
      %4746 = vmatmul.mubr.f32.gmra.mxu0 %v4414
      %v4747 = vpop.f32.mrf.mxu0
      %v4748 = vadd.f32 0.0, %v4747
      %v4749 = vpop.f32.mrf.mxu0
      %4750 = vmatprep.mubr.f32.mxu0 %v4418
      %4751 = vmatmul.mubr.f32.gmra.mxu0 %v4417
      %v4752 = vpop.f32.mrf.mxu0
      %v4753 = vadd.f32 0.0, %v4752
      %v4754 = vpop.f32.mrf.mxu0
      %4755 = vmatprep.mubr.f32.mxu0 %v4421
      %4756 = vmatmul.mubr.f32.gmra.mxu0 %v4420
      %v4757 = vpop.f32.mrf.mxu0
      %v4758 = vadd.f32 0.0, %v4757
      %v4759 = vpop.f32.mrf.mxu0
      %4760 = vmatprep.mubr.f32.mxu0 %v4424
      %4761 = vmatmul.mubr.f32.gmra.mxu0 %v4423
      %v4762 = vpop.f32.mrf.mxu0
      %v4763 = vadd.f32 0.0, %v4762
      %v4764 = vpop.f32.mrf.mxu0
      %4765 = vmatprep.mubr.f32.mxu0 %v4427
      %4766 = vmatmul.mubr.f32.gmra.mxu0 %v4426
      %v4767 = vpop.f32.mrf.mxu0
      %v4768 = vadd.f32 0.0, %v4767
      %v4769 = vpop.f32.mrf.mxu0
      %4770 = vmatprep.mubr.f32.mxu0 %v4430
      %4771 = vmatmul.mubr.f32.gmra.mxu0 %v4429
      %v4772 = vpop.f32.mrf.mxu0
      %v4773 = vadd.f32 0.0, %v4772
      %v4774 = vpop.f32.mrf.mxu0
      %4775 = vmatprep.mubr.f32.mxu0 %v4433
      %4776 = vmatmul.mubr.f32.gmra.mxu0 %v4432
      %v4777 = vpop.f32.mrf.mxu0
      %v4778 = vadd.f32 0.0, %v4777
      %v4779 = vpop.f32.mrf.mxu0
      %4780 = vmatprep.mubr.f32.mxu0 %v4436
      %4781 = vmatmul.mubr.f32.gmra.mxu0 %v4435
      %v4782 = vpop.f32.mrf.mxu0
      %v4783 = vadd.f32 0.0, %v4782
      %v4784 = vpop.f32.mrf.mxu0
      %4785 = vmatprep.mubr.f32.mxu0 %v4439
      %4786 = vmatmul.mubr.f32.gmra.mxu0 %v4438
      %v4787 = vpop.f32.mrf.mxu0
      %v4788 = vadd.f32 0.0, %v4787
      %v4789 = vpop.f32.mrf.mxu0
      %4790 = vmatprep.mubr.f32.mxu0 %v4442
      %4791 = vmatmul.mubr.f32.gmra.mxu0 %v4441
      %v4792 = vpop.f32.mrf.mxu0
      %v4793 = vadd.f32 0.0, %v4792
      %v4794 = vpop.f32.mrf.mxu0
      %4795 = vmatprep.mubr.f32.mxu0 %v4445
      %4796 = vmatmul.mubr.f32.gmra.mxu0 %v4444
      %v4797 = vpop.f32.mrf.mxu0
      %v4798 = vadd.f32 0.0, %v4797
      %v4799 = vpop.f32.mrf.mxu0
      %4800 = vmatprep.mubr.f32.mxu0 %v4448
      %4801 = vmatmul.mubr.f32.gmra.mxu0 %v4447
      %v4802 = vpop.f32.mrf.mxu0
      %v4803 = vadd.f32 0.0, %v4802
      %v4804 = vpop.f32.mrf.mxu0
      %4805 = vmatprep.mubr.f32.mxu0 %v4451
      %4806 = vmatmul.mubr.f32.gmra.mxu0 %v4450
      %v4807 = vpop.f32.mrf.mxu0
      %v4808 = vadd.f32 0.0, %v4807
      %v4809 = vpop.f32.mrf.mxu0
      %4810 = vmatprep.mubr.f32.mxu0 %v4454
      %4811 = vmatmul.mubr.f32.gmra.mxu0 %v4453
      %v4812 = vpop.f32.mrf.mxu0
      %v4813 = vadd.f32 0.0, %v4812
      %v4814 = vpop.f32.mrf.mxu0
      %4815 = vmatprep.mubr.f32.mxu0 %v4457
      %4816 = vmatmul.mubr.f32.gmra.mxu0 %v4456
      %v4817 = vpop.f32.mrf.mxu0
      %v4818 = vadd.f32 0.0, %v4817
      %v4819 = vpop.f32.mrf.mxu0
      %4820 = vmatprep.mubr.f32.mxu0 %v4460
      %4821 = vmatmul.mubr.f32.gmra.mxu0 %v4459
      %v4822 = vpop.f32.mrf.mxu0
      %v4823 = vadd.f32 0.0, %v4822
      %v4824 = vpop.f32.mrf.mxu0
      %4825 = vmatprep.mubr.f32.mxu0 %v4463
      %4826 = vmatmul.mubr.f32.gmra.mxu0 %v4462
      %v4827 = vpop.f32.mrf.mxu0
      %v4828 = vadd.f32 0.0, %v4827
      %v4829 = vpop.f32.mrf.mxu0
      %4830 = vmatprep.mubr.f32.mxu0 %v4466
      %4831 = vmatmul.mubr.f32.gmra.mxu0 %v4465
      %v4832 = vpop.f32.mrf.mxu0
      %v4833 = vadd.f32 0.0, %v4832
      %v4834 = vpop.f32.mrf.mxu0
      %4835 = vmatprep.mubr.f32.mxu0 %v4469
      %4836 = vmatmul.mubr.f32.gmra.mxu0 %v4468
      %v4837 = vpop.f32.mrf.mxu0
      %v4838 = vadd.f32 0.0, %v4837
      %v4839 = vpop.f32.mrf.mxu0
      %4840 = vmatprep.mubr.f32.mxu0 %v4472
      %4841 = vmatmul.mubr.f32.gmra.mxu0 %v4471
      %v4842 = vpop.f32.mrf.mxu0
      %v4843 = vadd.f32 0.0, %v4842
      %v4844 = vpop.f32.mrf.mxu0
      %4845 = vmatprep.mubr.f32.mxu0 %v4475
      %4846 = vmatmul.mubr.f32.gmra.mxu0 %v4474
      %v4847 = vpop.f32.mrf.mxu0
      %v4848 = vadd.f32 0.0, %v4847
      %v4849 = vpop.f32.mrf.mxu0
      %4850 = vmatprep.mubr.f32.mxu0 %v4478
      %4851 = vmatmul.mubr.f32.gmra.mxu0 %v4477
      %v4852 = vpop.f32.mrf.mxu0
      %v4853 = vadd.f32 0.0, %v4852
      %v4854 = vpop.f32.mrf.mxu0
      %4855 = vmatprep.mubr.f32.mxu0 %v4481
      %4856 = vmatmul.mubr.f32.gmra.mxu0 %v4480
      %v4857 = vpop.f32.mrf.mxu0
      %v4858 = vadd.f32 0.0, %v4857
      %v4859 = vpop.f32.mrf.mxu0
      %4860 = vmatprep.mubr.f32.mxu0 %v4484
      %4861 = vmatmul.mubr.f32.gmra.mxu0 %v4483
      %v4862 = vpop.f32.mrf.mxu0
      %v4863 = vadd.f32 0.0, %v4862
      %v4864 = vpop.f32.mrf.mxu0
      %4865 = vmatprep.mubr.f32.mxu0 %v4487
      %4866 = vmatmul.mubr.f32.gmra.mxu0 %v4486
      %v4867 = vpop.f32.mrf.mxu0
      %v4868 = vadd.f32 0.0, %v4867
      %v4869 = vpop.f32.mrf.mxu0
      %4870 = vmatprep.mubr.f32.mxu0 %v4490
      %4871 = vmatmul.mubr.f32.gmra.mxu0 %v4489
      %v4872 = vpop.f32.mrf.mxu0
      %v4873 = vadd.f32 0.0, %v4872
      %v4874 = vpop.f32.mrf.mxu0
      %4875 = vmatprep.mubr.f32.mxu0 %v4493
      %4876 = vmatmul.mubr.f32.gmra.mxu0 %v4492
      %v4877 = vpop.f32.mrf.mxu0
      %v4878 = vadd.f32 0.0, %v4877
      %v4879 = vpop.f32.mrf.mxu0
      %4880 = vdwg.mxu0
      %4881 = vmatprep.subr.mxu0 0.0
      %4882 = vmatpush1.msra.mxu0 0.0
      %4883 = vmatprep.subr.mxu0 0.0
      %4884 = vmatpush1.msra.mxu0 0.0
      %4885 = vmatprep.subr.mxu0 0.0
      %4886 = vmatpush1.msra.mxu0 %v4334
      %4887 = vmatprep.subr.mxu0 0.0
      %4888 = vmatpush1.msra.mxu0 %v4333
      %4889 = vmatprep.subr.mxu0 0.0
      %4890 = vmatpush1.msra.mxu0 %v4332
      %4891 = vmatprep.subr.mxu0 0.0
      %4892 = vmatpush1.msra.mxu0 %v4331
      %4893 = vmatprep.subr.mxu0 0.0
      %4894 = vmatpush1.msra.mxu0 %v4330
      %4895 = vmatprep.subr.mxu0 0.0
      %4896 = vmatpush1.msra.mxu0 %v4329
      %4897 = vmatprep.subr.mxu0 0.0
      %4898 = vmatpush1.msra.mxu0 %v4328
      %4899 = vmatprep.subr.mxu0 0.0
      %4900 = vmatpush1.msra.mxu0 %v4327
      %4901 = vmatprep.subr.mxu0 0.0
      %4902 = vmatpush1.msra.mxu0 %v4326
      %4903 = vmatprep.subr.mxu0 0.0
      %4904 = vmatpush1.msra.mxu0 %v4325
      %4905 = vmatprep.subr.mxu0 0.0
      %4906 = vmatpush1.msra.mxu0 %v4324
      %4907 = vmatprep.subr.mxu0 0.0
      %4908 = vmatpush1.msra.mxu0 %v4323
      %4909 = vmatprep.subr.mxu0 0.0
      %4910 = vmatpush1.msra.mxu0 %v4322
      %4911 = vmatprep.subr.mxu0 0.0
      %4912 = vmatpush1.msra.mxu0 %v4321
      %4913 = vmatprep.subr.mxu0 0.0
      %4914 = vmatpush2.msra.mxu0 0.0
      %4915 = vmatprep.subr.mxu0 0.0
      %4916 = vmatpush2.msra.mxu0 0.0
      %4917 = vmatprep.subr.mxu0 0.0
      %4918 = vmatpush2.msra.mxu0 0.0
      %4919 = vmatprep.subr.mxu0 0.0
      %4920 = vmatpush2.msra.mxu0 0.0
      %4921 = vmatprep.subr.mxu0 0.0
      %4922 = vmatpush2.msra.mxu0 0.0
      %4923 = vmatprep.subr.mxu0 0.0
      %4924 = vmatpush2.msra.mxu0 0.0
      %4925 = vmatprep.subr.mxu0 0.0
      %4926 = vmatpush2.msra.mxu0 0.0
      %4927 = vmatprep.subr.mxu0 0.0
      %4928 = vmatpush2.msra.mxu0 0.0
      %4929 = vmatprep.subr.mxu0 0.0
      %4930 = vmatpush2.msra.mxu0 0.0
      %4931 = vmatprep.subr.mxu0 0.0
      %4932 = vmatpush2.msra.mxu0 0.0
      %4933 = vmatprep.subr.mxu0 0.0
      %4934 = vmatpush2.msra.mxu0 0.0
      %4935 = vmatprep.subr.mxu0 0.0
      %4936 = vmatpush2.msra.mxu0 0.0
      %4937 = vmatprep.subr.mxu0 0.0
      %4938 = vmatpush2.msra.mxu0 0.0
      %4939 = vmatprep.subr.mxu0 0.0
      %4940 = vmatpush2.msra.mxu0 0.0
      %4941 = vmatprep.subr.mxu0 0.0
      %4942 = vmatpush2.msra.mxu0 0.0
      %4943 = vmatprep.subr.mxu0 0.0
      %4944 = vmatpush2.msra.mxu0 0.0
      %4945 = vmatprep.mubr.f32.mxu0 0.0
      %4946 = vmatmul.mubr.f32.gmra.mxu0 %v4497
      %v4947 = vpop.f32.mrf.mxu0
      %v4948 = vadd.f32 %v4683, %v4947
      %v4949 = vpop.f32.mrf.mxu0
      %4950 = vmatprep.mubr.f32.mxu0 0.0
      %4951 = vmatmul.mubr.f32.gmra.mxu0 %v4500
      %v4952 = vpop.f32.mrf.mxu0
      %v4953 = vadd.f32 %v4688, %v4952
      %v4954 = vpop.f32.mrf.mxu0
      %4955 = vmatprep.mubr.f32.mxu0 0.0
      %4956 = vmatmul.mubr.f32.gmra.mxu0 %v4503
      %v4957 = vpop.f32.mrf.mxu0
      %v4958 = vadd.f32 %v4693, %v4957
      %v4959 = vpop.f32.mrf.mxu0
      %4960 = vmatprep.mubr.f32.mxu0 0.0
      %4961 = vmatmul.mubr.f32.gmra.mxu0 %v4506
      %v4962 = vpop.f32.mrf.mxu0
      %v4963 = vadd.f32 %v4698, %v4962
      %v4964 = vpop.f32.mrf.mxu0
      %4965 = vmatprep.mubr.f32.mxu0 0.0
      %4966 = vmatmul.mubr.f32.gmra.mxu0 %v4509
      %v4967 = vpop.f32.mrf.mxu0
      %v4968 = vadd.f32 %v4703, %v4967
      %v4969 = vpop.f32.mrf.mxu0
      %4970 = vmatprep.mubr.f32.mxu0 0.0
      %4971 = vmatmul.mubr.f32.gmra.mxu0 %v4512
      %v4972 = vpop.f32.mrf.mxu0
      %v4973 = vadd.f32 %v4708, %v4972
      %v4974 = vpop.f32.mrf.mxu0
      %4975 = vmatprep.mubr.f32.mxu0 0.0
      %4976 = vmatmul.mubr.f32.gmra.mxu0 %v4515
      %v4977 = vpop.f32.mrf.mxu0
      %v4978 = vadd.f32 %v4713, %v4977
      %v4979 = vpop.f32.mrf.mxu0
      %4980 = vmatprep.mubr.f32.mxu0 0.0
      %4981 = vmatmul.mubr.f32.gmra.mxu0 %v4518
      %v4982 = vpop.f32.mrf.mxu0
      %v4983 = vadd.f32 %v4718, %v4982
      %v4984 = vpop.f32.mrf.mxu0
      %4985 = vmatprep.mubr.f32.mxu0 0.0
      %4986 = vmatmul.mubr.f32.gmra.mxu0 %v4521
      %v4987 = vpop.f32.mrf.mxu0
      %v4988 = vadd.f32 %v4723, %v4987
      %v4989 = vpop.f32.mrf.mxu0
      %4990 = vmatprep.mubr.f32.mxu0 0.0
      %4991 = vmatmul.mubr.f32.gmra.mxu0 %v4524
      %v4992 = vpop.f32.mrf.mxu0
      %v4993 = vadd.f32 %v4728, %v4992
      %v4994 = vpop.f32.mrf.mxu0
      %4995 = vmatprep.mubr.f32.mxu0 0.0
      %4996 = vmatmul.mubr.f32.gmra.mxu0 %v4527
      %v4997 = vpop.f32.mrf.mxu0
      %v4998 = vadd.f32 %v4733, %v4997
      %v4999 = vpop.f32.mrf.mxu0
      %5000 = vmatprep.mubr.f32.mxu0 0.0
      %5001 = vmatmul.mubr.f32.gmra.mxu0 %v4530
      %v5002 = vpop.f32.mrf.mxu0
      %v5003 = vadd.f32 %v4738, %v5002
      %v5004 = vpop.f32.mrf.mxu0
      %5005 = vmatprep.mubr.f32.mxu0 0.0
      %5006 = vmatmul.mubr.f32.gmra.mxu0 %v4533
      %v5007 = vpop.f32.mrf.mxu0
      %v5008 = vadd.f32 %v4743, %v5007
      %v5009 = vpop.f32.mrf.mxu0
      %5010 = vmatprep.mubr.f32.mxu0 0.0
      %5011 = vmatmul.mubr.f32.gmra.mxu0 %v4536
      %v5012 = vpop.f32.mrf.mxu0
      %v5013 = vadd.f32 %v4748, %v5012
      %v5014 = vpop.f32.mrf.mxu0
      %5015 = vmatprep.mubr.f32.mxu0 0.0
      %5016 = vmatmul.mubr.f32.gmra.mxu0 %v4539
      %v5017 = vpop.f32.mrf.mxu0
      %v5018 = vadd.f32 %v4753, %v5017
      %v5019 = vpop.f32.mrf.mxu0
      %5020 = vmatprep.mubr.f32.mxu0 0.0
      %5021 = vmatmul.mubr.f32.gmra.mxu0 %v4542
      %v5022 = vpop.f32.mrf.mxu0
      %v5023 = vadd.f32 %v4758, %v5022
      %v5024 = vpop.f32.mrf.mxu0
      %5025 = vmatprep.mubr.f32.mxu0 0.0
      %5026 = vmatmul.mubr.f32.gmra.mxu0 %v4545
      %v5027 = vpop.f32.mrf.mxu0
      %v5028 = vadd.f32 %v4763, %v5027
      %v5029 = vpop.f32.mrf.mxu0
      %5030 = vmatprep.mubr.f32.mxu0 0.0
      %5031 = vmatmul.mubr.f32.gmra.mxu0 %v4548
      %v5032 = vpop.f32.mrf.mxu0
      %v5033 = vadd.f32 %v4768, %v5032
      %v5034 = vpop.f32.mrf.mxu0
      %5035 = vmatprep.mubr.f32.mxu0 0.0
      %5036 = vmatmul.mubr.f32.gmra.mxu0 %v4551
      %v5037 = vpop.f32.mrf.mxu0
      %v5038 = vadd.f32 %v4773, %v5037
      %v5039 = vpop.f32.mrf.mxu0
      %5040 = vmatprep.mubr.f32.mxu0 0.0
      %5041 = vmatmul.mubr.f32.gmra.mxu0 %v4554
      %v5042 = vpop.f32.mrf.mxu0
      %v5043 = vadd.f32 %v4778, %v5042
      %v5044 = vpop.f32.mrf.mxu0
      %5045 = vmatprep.mubr.f32.mxu0 0.0
      %5046 = vmatmul.mubr.f32.gmra.mxu0 %v4557
      %v5047 = vpop.f32.mrf.mxu0
      %v5048 = vadd.f32 %v4783, %v5047
      %v5049 = vpop.f32.mrf.mxu0
      %5050 = vmatprep.mubr.f32.mxu0 0.0
      %5051 = vmatmul.mubr.f32.gmra.mxu0 %v4560
      %v5052 = vpop.f32.mrf.mxu0
      %v5053 = vadd.f32 %v4788, %v5052
      %v5054 = vpop.f32.mrf.mxu0
      %5055 = vmatprep.mubr.f32.mxu0 0.0
      %5056 = vmatmul.mubr.f32.gmra.mxu0 %v4563
      %v5057 = vpop.f32.mrf.mxu0
      %v5058 = vadd.f32 %v4793, %v5057
      %v5059 = vpop.f32.mrf.mxu0
      %5060 = vmatprep.mubr.f32.mxu0 0.0
      %5061 = vmatmul.mubr.f32.gmra.mxu0 %v4566
      %v5062 = vpop.f32.mrf.mxu0
      %v5063 = vadd.f32 %v4798, %v5062
      %v5064 = vpop.f32.mrf.mxu0
      %5065 = vmatprep.mubr.f32.mxu0 0.0
      %5066 = vmatmul.mubr.f32.gmra.mxu0 %v4569
      %v5067 = vpop.f32.mrf.mxu0
      %v5068 = vadd.f32 %v4803, %v5067
      %v5069 = vpop.f32.mrf.mxu0
      %5070 = vmatprep.mubr.f32.mxu0 0.0
      %5071 = vmatmul.mubr.f32.gmra.mxu0 %v4572
      %v5072 = vpop.f32.mrf.mxu0
      %v5073 = vadd.f32 %v4808, %v5072
      %v5074 = vpop.f32.mrf.mxu0
      %5075 = vmatprep.mubr.f32.mxu0 0.0
      %5076 = vmatmul.mubr.f32.gmra.mxu0 %v4575
      %v5077 = vpop.f32.mrf.mxu0
      %v5078 = vadd.f32 %v4813, %v5077
      %v5079 = vpop.f32.mrf.mxu0
      %5080 = vmatprep.mubr.f32.mxu0 0.0
      %5081 = vmatmul.mubr.f32.gmra.mxu0 %v4578
      %v5082 = vpop.f32.mrf.mxu0
      %v5083 = vadd.f32 %v4818, %v5082
      %v5084 = vpop.f32.mrf.mxu0
      %5085 = vmatprep.mubr.f32.mxu0 0.0
      %5086 = vmatmul.mubr.f32.gmra.mxu0 %v4581
      %v5087 = vpop.f32.mrf.mxu0
      %v5088 = vadd.f32 %v4823, %v5087
      %v5089 = vpop.f32.mrf.mxu0
      %5090 = vmatprep.mubr.f32.mxu0 0.0
      %5091 = vmatmul.mubr.f32.gmra.mxu0 %v4584
      %v5092 = vpop.f32.mrf.mxu0
      %v5093 = vadd.f32 %v4828, %v5092
      %v5094 = vpop.f32.mrf.mxu0
      %5095 = vmatprep.mubr.f32.mxu0 0.0
      %5096 = vmatmul.mubr.f32.gmra.mxu0 %v4587
      %v5097 = vpop.f32.mrf.mxu0
      %v5098 = vadd.f32 %v4833, %v5097
      %v5099 = vpop.f32.mrf.mxu0
      %5100 = vmatprep.mubr.f32.mxu0 0.0
      %5101 = vmatmul.mubr.f32.gmra.mxu0 %v4590
      %v5102 = vpop.f32.mrf.mxu0
      %v5103 = vadd.f32 %v4838, %v5102
      %v5104 = vpop.f32.mrf.mxu0
      %5105 = vmatprep.mubr.f32.mxu0 0.0
      %5106 = vmatmul.mubr.f32.gmra.mxu0 %v4593
      %v5107 = vpop.f32.mrf.mxu0
      %v5108 = vadd.f32 %v4843, %v5107
      %v5109 = vpop.f32.mrf.mxu0
      %5110 = vmatprep.mubr.f32.mxu0 0.0
      %5111 = vmatmul.mubr.f32.gmra.mxu0 %v4596
      %v5112 = vpop.f32.mrf.mxu0
      %v5113 = vadd.f32 %v4848, %v5112
      %v5114 = vpop.f32.mrf.mxu0
      %5115 = vmatprep.mubr.f32.mxu0 0.0
      %5116 = vmatmul.mubr.f32.gmra.mxu0 %v4599
      %v5117 = vpop.f32.mrf.mxu0
      %v5118 = vadd.f32 %v4853, %v5117
      %v5119 = vpop.f32.mrf.mxu0
      %5120 = vmatprep.mubr.f32.mxu0 0.0
      %5121 = vmatmul.mubr.f32.gmra.mxu0 %v4602
      %v5122 = vpop.f32.mrf.mxu0
      %v5123 = vadd.f32 %v4858, %v5122
      %v5124 = vpop.f32.mrf.mxu0
      %5125 = vmatprep.mubr.f32.mxu0 0.0
      %5126 = vmatmul.mubr.f32.gmra.mxu0 %v4605
      %v5127 = vpop.f32.mrf.mxu0
      %v5128 = vadd.f32 %v4863, %v5127
      %v5129 = vpop.f32.mrf.mxu0
      %5130 = vmatprep.mubr.f32.mxu0 0.0
      %5131 = vmatmul.mubr.f32.gmra.mxu0 %v4608
      %v5132 = vpop.f32.mrf.mxu0
      %v5133 = vadd.f32 %v4868, %v5132
      %v5134 = vpop.f32.mrf.mxu0
      %5135 = vmatprep.mubr.f32.mxu0 0.0
      %5136 = vmatmul.mubr.f32.gmra.mxu0 %v4611
      %v5137 = vpop.f32.mrf.mxu0
      %v5138 = vadd.f32 %v4873, %v5137
      %v5139 = vpop.f32.mrf.mxu0
      %5140 = vmatprep.mubr.f32.mxu0 0.0
      %5141 = vmatmul.mubr.f32.gmra.mxu0 %v4614
      %v5142 = vpop.f32.mrf.mxu0
      %v5143 = vadd.f32 %v4878, %v5142
      %v5144 = vpop.f32.mrf.mxu0
      %5145 = vdwg.mxu0
      %5147 = vset.pattern.permute.xlu0 0
      %5148 = vperm.xlu0 %5147, %v4335
      %v5149 = vpop.permute.xlu0 %5148
      %5152 = vset.pattern.permute.xlu0 0
      %5153 = vperm.xlu0 %5152, %v4336
      %v5154 = vpop.permute.xlu0 %5153
      %5157 = vset.pattern.permute.xlu0 0
      %5158 = vperm.xlu0 %5157, %v4337
      %v5159 = vpop.permute.xlu0 %5158
      %5162 = vset.pattern.permute.xlu0 0
      %5163 = vperm.xlu0 %5162, %v4338
      %v5164 = vpop.permute.xlu0 %5163
      %5167 = vset.pattern.permute.xlu0 0
      %5168 = vperm.xlu0 %5167, %v4339
      %v5169 = vpop.permute.xlu0 %5168
      %5172 = vset.pattern.permute.xlu0 0
      %5173 = vperm.xlu0 %5172, %v4340
      %v5174 = vpop.permute.xlu0 %5173
      %5177 = vset.pattern.permute.xlu0 0
      %5178 = vperm.xlu0 %5177, %v4341
      %v5179 = vpop.permute.xlu0 %5178
      %5182 = vset.pattern.permute.xlu0 0
      %5183 = vperm.xlu0 %5182, %v4342
      %v5184 = vpop.permute.xlu0 %5183
      %5187 = vset.pattern.permute.xlu0 0
      %5188 = vperm.xlu0 %5187, %v4343
      %v5189 = vpop.permute.xlu0 %5188
      %5192 = vset.pattern.permute.xlu0 0
      %5193 = vperm.xlu0 %5192, %v4344
      %v5194 = vpop.permute.xlu0 %5193
      %5197 = vset.pattern.permute.xlu0 0
      %5198 = vperm.xlu0 %5197, %v4345
      %v5199 = vpop.permute.xlu0 %5198
      %5202 = vset.pattern.permute.xlu0 0
      %5203 = vperm.xlu0 %5202, %v4346
      %v5204 = vpop.permute.xlu0 %5203
      %5207 = vset.pattern.permute.xlu0 0
      %5208 = vperm.xlu0 %5207, %v4347
      %v5209 = vpop.permute.xlu0 %5208
      %5212 = vset.pattern.permute.xlu0 0
      %5213 = vperm.xlu0 %5212, %v4348
      %v5214 = vpop.permute.xlu0 %5213
      %5217 = vset.pattern.permute.xlu0 0
      %5218 = vperm.xlu0 %5217, %v4349
      %v5219 = vpop.permute.xlu0 %5218
      %5222 = vset.pattern.permute.xlu0 0
      %5223 = vperm.xlu0 %5222, %v4350
      %v5224 = vpop.permute.xlu0 %5223
      %5227 = vset.pattern.permute.xlu0 0
      %5228 = vperm.xlu0 %5227, %v4351
      %v5229 = vpop.permute.xlu0 %5228
      %5232 = vset.pattern.permute.xlu0 0
      %5233 = vperm.xlu0 %5232, %v4352
      %v5234 = vpop.permute.xlu0 %5233
      %5237 = vset.pattern.permute.xlu0 0
      %5238 = vperm.xlu0 %5237, %v4353
      %v5239 = vpop.permute.xlu0 %5238
      %5242 = vset.pattern.permute.xlu0 0
      %5243 = vperm.xlu0 %5242, %v4354
      %v5244 = vpop.permute.xlu0 %5243
      %5247 = vset.pattern.permute.xlu0 0
      %5248 = vperm.xlu0 %5247, %v4355
      %v5249 = vpop.permute.xlu0 %5248
      %5252 = vset.pattern.permute.xlu0 0
      %5253 = vperm.xlu0 %5252, %v4356
      %v5254 = vpop.permute.xlu0 %5253
      %5257 = vset.pattern.permute.xlu0 0
      %5258 = vperm.xlu0 %5257, %v4357
      %v5259 = vpop.permute.xlu0 %5258
      %5262 = vset.pattern.permute.xlu0 0
      %5263 = vperm.xlu0 %5262, %v4358
      %v5264 = vpop.permute.xlu0 %5263
      %5267 = vset.pattern.permute.xlu0 0
      %5268 = vperm.xlu0 %5267, %v4359
      %v5269 = vpop.permute.xlu0 %5268
      %5272 = vset.pattern.permute.xlu0 0
      %5273 = vperm.xlu0 %5272, %v4360
      %v5274 = vpop.permute.xlu0 %5273
      %5277 = vset.pattern.permute.xlu0 0
      %5278 = vperm.xlu0 %5277, %v4361
      %v5279 = vpop.permute.xlu0 %5278
      %5282 = vset.pattern.permute.xlu0 0
      %5283 = vperm.xlu0 %5282, %v4362
      %v5284 = vpop.permute.xlu0 %5283
      %5287 = vset.pattern.permute.xlu0 0
      %5288 = vperm.xlu0 %5287, %v4363
      %v5289 = vpop.permute.xlu0 %5288
      %5292 = vset.pattern.permute.xlu0 0
      %5293 = vperm.xlu0 %5292, %v4364
      %v5294 = vpop.permute.xlu0 %5293
      %5297 = vset.pattern.permute.xlu0 0
      %5298 = vperm.xlu0 %5297, %v4365
      %v5299 = vpop.permute.xlu0 %5298
      %5302 = vset.pattern.permute.xlu0 0
      %5303 = vperm.xlu0 %5302, %v4366
      %v5304 = vpop.permute.xlu0 %5303
      %5307 = vset.pattern.permute.xlu0 0
      %5308 = vperm.xlu0 %5307, %v4367
      %v5309 = vpop.permute.xlu0 %5308
      %5312 = vset.pattern.permute.xlu0 0
      %5313 = vperm.xlu0 %5312, %v4368
      %v5314 = vpop.permute.xlu0 %5313
      %5317 = vset.pattern.permute.xlu0 0
      %5318 = vperm.xlu0 %5317, %v4369
      %v5319 = vpop.permute.xlu0 %5318
      %5322 = vset.pattern.permute.xlu0 0
      %5323 = vperm.xlu0 %5322, %v4370
      %v5324 = vpop.permute.xlu0 %5323
      %5327 = vset.pattern.permute.xlu0 0
      %5328 = vperm.xlu0 %5327, %v4371
      %v5329 = vpop.permute.xlu0 %5328
      %5332 = vset.pattern.permute.xlu0 0
      %5333 = vperm.xlu0 %5332, %v4372
      %v5334 = vpop.permute.xlu0 %5333
      %5337 = vset.pattern.permute.xlu0 0
      %5338 = vperm.xlu0 %5337, %v4373
      %v5339 = vpop.permute.xlu0 %5338
      %5342 = vset.pattern.permute.xlu0 0
      %5343 = vperm.xlu0 %5342, %v4374
      %v5344 = vpop.permute.xlu0 %5343
      %v5346 = vadd.f32 %v5149, %v4948
      %v5347 = vadd.f32 %v5154, %v4953
      %v5348 = vadd.f32 %v5159, %v4958
      %v5349 = vadd.f32 %v5164, %v4963
      %v5350 = vadd.f32 %v5169, %v4968
      %v5351 = vadd.f32 %v5174, %v4973
      %v5352 = vadd.f32 %v5179, %v4978
      %v5353 = vadd.f32 %v5184, %v4983
      %v5354 = vadd.f32 %v5189, %v4988
      %v5355 = vadd.f32 %v5194, %v4993
      %v5356 = vadd.f32 %v5199, %v4998
      %v5357 = vadd.f32 %v5204, %v5003
      %v5358 = vadd.f32 %v5209, %v5008
      %v5359 = vadd.f32 %v5214, %v5013
      %v5360 = vadd.f32 %v5219, %v5018
      %v5361 = vadd.f32 %v5224, %v5023
      %v5362 = vadd.f32 %v5229, %v5028
      %v5363 = vadd.f32 %v5234, %v5033
      %v5364 = vadd.f32 %v5239, %v5038
      %v5365 = vadd.f32 %v5244, %v5043
      %v5366 = vadd.f32 %v5249, %v5048
      %v5367 = vadd.f32 %v5254, %v5053
      %v5368 = vadd.f32 %v5259, %v5058
      %v5369 = vadd.f32 %v5264, %v5063
      %v5370 = vadd.f32 %v5269, %v5068
      %v5371 = vadd.f32 %v5274, %v5073
      %v5372 = vadd.f32 %v5279, %v5078
      %v5373 = vadd.f32 %v5284, %v5083
      %v5374 = vadd.f32 %v5289, %v5088
      %v5375 = vadd.f32 %v5294, %v5093
      %v5376 = vadd.f32 %v5299, %v5098
      %v5377 = vadd.f32 %v5304, %v5103
      %v5378 = vadd.f32 %v5309, %v5108
      %v5379 = vadd.f32 %v5314, %v5113
      %v5380 = vadd.f32 %v5319, %v5118
      %v5381 = vadd.f32 %v5324, %v5123
      %v5382 = vadd.f32 %v5329, %v5128
      %v5383 = vadd.f32 %v5334, %v5133
      %v5384 = vadd.f32 %v5339, %v5138
      %v5385 = vadd.f32 %v5344, %v5143
      %s5386 = scalar_lea.vmem %s3, 960
      %v5387 = vld [vmem:[%s5386] sm:$0xff]
      %v5388 = vld [vmem:[%s5386 + $0x8] sm:$0xff]
      %v5389 = vld [vmem:[%s5386 + $0x10] sm:$0xff]
      %v5390 = vld [vmem:[%s5386 + $0x18] sm:$0xff]
      %v5391 = vld [vmem:[%s5386 + $0x20] sm:$0xff]
      %v5392 = vld [vmem:[%s5386 + $0x28] sm:$0xff]
      %v5393 = vld [vmem:[%s5386 + $0x30] sm:$0xff]
      %v5394 = vld [vmem:[%s5386 + $0x38] sm:$0xff]
      %v5395 = vld [vmem:[%s5386 + $0x40] sm:$0xff]
      %v5396 = vld [vmem:[%s5386 + $0x48] sm:$0xff]
      %v5397 = vld [vmem:[%s5386 + $0x50] sm:$0xff]
      %v5398 = vld [vmem:[%s5386 + $0x58] sm:$0xff]
      %v5399 = vld [vmem:[%s5386 + $0x60] sm:$0xff]
      %v5400 = vld [vmem:[%s5386 + $0x68] sm:$0xff]
      %v5401 = vld [vmem:[%s5386 + $0x70] sm:$0xff]
      %v5402 = vld [vmem:[%s5386 + $0x78] sm:$0xff]
      %v5403 = vld [vmem:[%s5386 + $0x80] sm:$0xff]
      %v5404 = vld [vmem:[%s5386 + $0x88] sm:$0xff]
      %v5405 = vld [vmem:[%s5386 + $0x90] sm:$0xff]
      %v5406 = vld [vmem:[%s5386 + $0x98] sm:$0xff]
      %v5407 = vld [vmem:[%s5386 + $0xa0] sm:$0xff]
      %v5408 = vld [vmem:[%s5386 + $0xa8] sm:$0xff]
      %v5409 = vld [vmem:[%s5386 + $0xb0] sm:$0xff]
      %v5410 = vld [vmem:[%s5386 + $0xb8] sm:$0xff]
      %v5411 = vld [vmem:[%s5386 + $0xc0] sm:$0xff]
      %v5412 = vld [vmem:[%s5386 + $0xc8] sm:$0xff]
      %v5413 = vld [vmem:[%s5386 + $0xd0] sm:$0xff]
      %v5414 = vld [vmem:[%s5386 + $0xd8] sm:$0xff]
      %v5415 = vld [vmem:[%s5386 + $0xe0] sm:$0xff]
      %v5416 = vld [vmem:[%s5386 + $0xe8] sm:$0xff]
      %v5417 = vld [vmem:[%s5386 + $0xf0] sm:$0xff]
      %v5418 = vld [vmem:[%s5386 + $0xf8] sm:$0xff]
      %v5419 = vld [vmem:[%s5386 + $0x100] sm:$0xff]
      %v5420 = vld [vmem:[%s5386 + $0x108] sm:$0xff]
      %v5421 = vld [vmem:[%s5386 + $0x110] sm:$0xff]
      %v5422 = vld [vmem:[%s5386 + $0x118] sm:$0xff]
      %v5423 = vld [vmem:[%s5386 + $0x120] sm:$0xff]
      %v5424 = vld [vmem:[%s5386 + $0x128] sm:$0xff]
      %v5425 = vld [vmem:[%s5386 + $0x130] sm:$0xff]
      %v5426 = vld [vmem:[%s5386 + $0x138] sm:$0xff]
      %v5427 = vld [vmem:[%s5386 + $0x140] sm:$0xff]
      %v5428 = vld [vmem:[%s5386 + $0x148] sm:$0xff]
      %v5429 = vld [vmem:[%s5386 + $0x150] sm:$0xff]
      %v5430 = vld [vmem:[%s5386 + $0x158] sm:$0xff]
      %v5431 = vld [vmem:[%s5386 + $0x160] sm:$0xff]
      %v5432 = vld [vmem:[%s5386 + $0x168] sm:$0xff]
      %v5433 = vld [vmem:[%s5386 + $0x170] sm:$0xff]
      %v5434 = vld [vmem:[%s5386 + $0x178] sm:$0xff]
      %v5435 = vld [vmem:[%s5386 + $0x180] sm:$0xff]
      %v5436 = vld [vmem:[%s5386 + $0x188] sm:$0xff]
      %v5437 = vld [vmem:[%s5386 + $0x190] sm:$0xff]
      %v5438 = vld [vmem:[%s5386 + $0x198] sm:$0xff]
      %v5439 = vld [vmem:[%s5386 + $0x1a0] sm:$0xff]
      %v5440 = vld [vmem:[%s5386 + $0x1a8] sm:$0xff]
      %v5441 = vld [vmem:[%s5386 + $0x1b0] sm:$0xff]
      %v5442 = vld [vmem:[%s5386 + $0x1b8] sm:$0xff]
      %v5443 = vld [vmem:[%s5386 + $0x1c0] sm:$0xff]
      %v5444 = vld [vmem:[%s5386 + $0x1c8] sm:$0xff]
      %v5445 = vld [vmem:[%s5386 + $0x1d0] sm:$0xff]
      %v5446 = vld [vmem:[%s5386 + $0x1d8] sm:$0xff]
      %v5447 = vld [vmem:[%s5386 + $0x1e0] sm:$0xff]
      %v5448 = vld [vmem:[%s5386 + $0x1e8] sm:$0xff]
      %v5449 = vld [vmem:[%s5386 + $0x1f0] sm:$0xff]
      %v5450 = vld [vmem:[%s5386 + $0x1f8] sm:$0xff]
      %v5451 = vld [vmem:[%s5386 + $0x200] sm:$0xff]
      %v5452 = vld [vmem:[%s5386 + $0x208] sm:$0xff]
      %v5453 = vld [vmem:[%s5386 + $0x210] sm:$0xff]
      %v5454 = vld [vmem:[%s5386 + $0x218] sm:$0xff]
      %v5455 = vld [vmem:[%s5386 + $0x220] sm:$0xff]
      %v5456 = vld [vmem:[%s5386 + $0x228] sm:$0xff]
      %v5457 = vld [vmem:[%s5386 + $0x230] sm:$0xff]
      %v5458 = vld [vmem:[%s5386 + $0x238] sm:$0xff]
      %v5459 = vld [vmem:[%s5386 + $0x240] sm:$0xff]
      %v5460 = vld [vmem:[%s5386 + $0x248] sm:$0xff]
      %v5461 = vld [vmem:[%s5386 + $0x250] sm:$0xff]
      %v5462 = vld [vmem:[%s5386 + $0x258] sm:$0xff]
      %v5463 = vld [vmem:[%s5386 + $0x260] sm:$0xff]
      %v5464 = vld [vmem:[%s5386 + $0x268] sm:$0xff]
      %v5465 = vld [vmem:[%s5386 + $0x270] sm:$0xff]
      %v5466 = vld [vmem:[%s5386 + $0x278] sm:$0xff]
      %v5467 = vld [vmem:[%s5386 + $0x280] sm:$0xff]
      %v5468 = vld [vmem:[%s5386 + $0x288] sm:$0xff]
      %v5469 = vld [vmem:[%s5386 + $0x290] sm:$0xff]
      %v5470 = vld [vmem:[%s5386 + $0x298] sm:$0xff]
      %v5471 = vld [vmem:[%s5386 + $0x2a0] sm:$0xff]
      %v5472 = vld [vmem:[%s5386 + $0x2a8] sm:$0xff]
      %v5473 = vld [vmem:[%s5386 + $0x2b0] sm:$0xff]
      %v5474 = vld [vmem:[%s5386 + $0x2b8] sm:$0xff]
      %v5475 = vld [vmem:[%s5386 + $0x2c0] sm:$0xff]
      %v5476 = vld [vmem:[%s5386 + $0x2c8] sm:$0xff]
      %v5477 = vld [vmem:[%s5386 + $0x2d0] sm:$0xff]
      %v5478 = vld [vmem:[%s5386 + $0x2d8] sm:$0xff]
      %v5479 = vld [vmem:[%s5386 + $0x2e0] sm:$0xff]
      %v5480 = vld [vmem:[%s5386 + $0x2e8] sm:$0xff]
      %v5481 = vld [vmem:[%s5386 + $0x2f0] sm:$0xff]
      %v5482 = vld [vmem:[%s5386 + $0x2f8] sm:$0xff]
      %v5483 = vld [vmem:[%s5386 + $0x300] sm:$0xff]
      %v5484 = vld [vmem:[%s5386 + $0x308] sm:$0xff]
      %v5485 = vld [vmem:[%s5386 + $0x310] sm:$0xff]
      %v5486 = vld [vmem:[%s5386 + $0x318] sm:$0xff]
      %v5487 = vld [vmem:[%s5386 + $0x320] sm:$0xff]
      %v5488 = vld [vmem:[%s5386 + $0x328] sm:$0xff]
      %v5489 = vld [vmem:[%s5386 + $0x330] sm:$0xff]
      %v5490 = vld [vmem:[%s5386 + $0x338] sm:$0xff]
      %v5491 = vld [vmem:[%s5386 + $0x340] sm:$0xff]
      %v5492 = vld [vmem:[%s5386 + $0x348] sm:$0xff]
      %v5493 = vld [vmem:[%s5386 + $0x350] sm:$0xff]
      %v5494 = vld [vmem:[%s5386 + $0x358] sm:$0xff]
      %v5495 = vld [vmem:[%s5386 + $0x360] sm:$0xff]
      %v5496 = vld [vmem:[%s5386 + $0x368] sm:$0xff]
      %v5497 = vld [vmem:[%s5386 + $0x370] sm:$0xff]
      %v5498 = vld [vmem:[%s5386 + $0x378] sm:$0xff]
      %v5499 = vld [vmem:[%s5386 + $0x380] sm:$0xff]
      %v5500 = vld [vmem:[%s5386 + $0x388] sm:$0xff]
      %v5501 = vld [vmem:[%s5386 + $0x390] sm:$0xff]
      %v5502 = vld [vmem:[%s5386 + $0x398] sm:$0xff]
      %v5503 = vld [vmem:[%s5386 + $0x3a0] sm:$0xff]
      %v5504 = vld [vmem:[%s5386 + $0x3a8] sm:$0xff]
      %v5505 = vld [vmem:[%s5386 + $0x3b0] sm:$0xff]
      %v5506 = vld [vmem:[%s5386 + $0x3b8] sm:$0xff]
      %5553 = vrot.lane.b32.xlu0 %v4289, 127
      %v5554 = vpop.permute.xlu0 %5553
      %5555 = vrot.lane.b32.xlu0 %v4290, 127
      %v5556 = vpop.permute.xlu0 %5555
      %5557 = vrot.lane.b32.xlu0 %v4291, 127
      %v5558 = vpop.permute.xlu0 %5557
      %5559 = vrot.lane.b32.xlu0 %v4292, 127
      %v5560 = vpop.permute.xlu0 %5559
      %5561 = vrot.lane.b32.xlu0 %v4293, 127
      %v5562 = vpop.permute.xlu0 %5561
      %5563 = vrot.lane.b32.xlu0 %v4294, 127
      %v5564 = vpop.permute.xlu0 %5563
      %5565 = vrot.lane.b32.xlu0 %v4295, 127
      %v5566 = vpop.permute.xlu0 %5565
      %5567 = vrot.lane.b32.xlu0 %v4296, 127
      %v5568 = vpop.permute.xlu0 %5567
      %5569 = vrot.lane.b32.xlu0 %v4297, 127
      %v5570 = vpop.permute.xlu0 %5569
      %5571 = vrot.lane.b32.xlu0 %v4298, 127
      %v5572 = vpop.permute.xlu0 %5571
      %5573 = vrot.lane.b32.xlu0 %v4299, 127
      %v5574 = vpop.permute.xlu0 %5573
      %5575 = vrot.lane.b32.xlu0 %v4300, 127
      %v5576 = vpop.permute.xlu0 %5575
      %5577 = vrot.lane.b32.xlu0 %v4301, 127
      %v5578 = vpop.permute.xlu0 %5577
      %5579 = vrot.lane.b32.xlu0 %v4302, 127
      %v5580 = vpop.permute.xlu0 %5579
      %5581 = vrot.lane.b32.xlu0 %v4303, 127
      %v5582 = vpop.permute.xlu0 %5581
      %5583 = vrot.lane.b32.xlu0 %v4304, 127
      %v5584 = vpop.permute.xlu0 %5583
      %5585 = vrot.lane.b32.xlu0 %v4305, 127
      %v5586 = vpop.permute.xlu0 %5585
      %5587 = vrot.lane.b32.xlu0 %v4306, 127
      %v5588 = vpop.permute.xlu0 %5587
      %5589 = vrot.lane.b32.xlu0 %v4307, 127
      %v5590 = vpop.permute.xlu0 %5589
      %5591 = vrot.lane.b32.xlu0 %v4308, 127
      %v5592 = vpop.permute.xlu0 %5591
      %5593 = vrot.lane.b32.xlu0 %v4309, 127
      %v5594 = vpop.permute.xlu0 %5593
      %5595 = vrot.lane.b32.xlu0 %v4310, 127
      %v5596 = vpop.permute.xlu0 %5595
      %5597 = vrot.lane.b32.xlu0 %v4311, 127
      %v5598 = vpop.permute.xlu0 %5597
      %5599 = vrot.lane.b32.xlu0 %v4312, 127
      %v5600 = vpop.permute.xlu0 %5599
      %5601 = vrot.lane.b32.xlu0 %v4313, 127
      %v5602 = vpop.permute.xlu0 %5601
      %5603 = vrot.lane.b32.xlu0 %v4314, 127
      %v5604 = vpop.permute.xlu0 %5603
      %5605 = vrot.lane.b32.xlu0 %v4315, 127
      %v5606 = vpop.permute.xlu0 %5605
      %5607 = vrot.lane.b32.xlu0 %v4316, 127
      %v5608 = vpop.permute.xlu0 %5607
      %5609 = vrot.lane.b32.xlu0 %v4317, 127
      %v5610 = vpop.permute.xlu0 %5609
      %5611 = vrot.lane.b32.xlu0 %v4318, 127
      %v5612 = vpop.permute.xlu0 %5611
      %5613 = vrot.lane.b32.xlu0 %v4319, 127
      %v5614 = vpop.permute.xlu0 %5613
      %5615 = vrot.lane.b32.xlu0 %v4320, 127
      %v5616 = vpop.permute.xlu0 %5615
      %5617 = vrot.lane.b32.xlu0 %v4321, 127
      %v5618 = vpop.permute.xlu0 %5617
      %5619 = vrot.lane.b32.xlu0 %v4322, 127
      %v5620 = vpop.permute.xlu0 %5619
      %5621 = vrot.lane.b32.xlu0 %v4323, 127
      %v5622 = vpop.permute.xlu0 %5621
      %5623 = vrot.lane.b32.xlu0 %v4324, 127
      %v5624 = vpop.permute.xlu0 %5623
      %5625 = vrot.lane.b32.xlu0 %v4325, 127
      %v5626 = vpop.permute.xlu0 %5625
      %5627 = vrot.lane.b32.xlu0 %v4326, 127
      %v5628 = vpop.permute.xlu0 %5627
      %5629 = vrot.lane.b32.xlu0 %v4327, 127
      %v5630 = vpop.permute.xlu0 %5629
      %5631 = vrot.lane.b32.xlu0 %v4328, 127
      %v5632 = vpop.permute.xlu0 %5631
      %5633 = vrot.lane.b32.xlu0 %v4329, 127
      %v5634 = vpop.permute.xlu0 %5633
      %5635 = vrot.lane.b32.xlu0 %v4330, 127
      %v5636 = vpop.permute.xlu0 %5635
      %5637 = vrot.lane.b32.xlu0 %v4331, 127
      %v5638 = vpop.permute.xlu0 %5637
      %5639 = vrot.lane.b32.xlu0 %v4332, 127
      %v5640 = vpop.permute.xlu0 %5639
      %5641 = vrot.lane.b32.xlu0 %v4333, 127
      %v5642 = vpop.permute.xlu0 %5641
      %5643 = vrot.lane.b32.xlu0 %v4334, 127
      %v5644 = vpop.permute.xlu0 %5643
      %v5692 = vsel %vm4495, %v5389, 0
      %v5695 = vsel %vm4495, %v5392, 0
      %v5698 = vsel %vm4495, %v5395, 0
      %v5701 = vsel %vm4495, %v5398, 0
      %v5704 = vsel %vm4495, %v5401, 0
      %v5707 = vsel %vm4495, %v5404, 0
      %v5710 = vsel %vm4495, %v5407, 0
      %v5713 = vsel %vm4495, %v5410, 0
      %v5716 = vsel %vm4495, %v5413, 0
      %v5719 = vsel %vm4495, %v5416, 0
      %v5722 = vsel %vm4495, %v5419, 0
      %v5725 = vsel %vm4495, %v5422, 0
      %v5728 = vsel %vm4495, %v5425, 0
      %v5731 = vsel %vm4495, %v5428, 0
      %v5734 = vsel %vm4495, %v5431, 0
      %v5737 = vsel %vm4495, %v5434, 0
      %v5740 = vsel %vm4495, %v5437, 0
      %v5743 = vsel %vm4495, %v5440, 0
      %v5746 = vsel %vm4495, %v5443, 0
      %v5749 = vsel %vm4495, %v5446, 0
      %v5752 = vsel %vm4495, %v5449, 0
      %v5755 = vsel %vm4495, %v5452, 0
      %v5758 = vsel %vm4495, %v5455, 0
      %v5761 = vsel %vm4495, %v5458, 0
      %v5764 = vsel %vm4495, %v5461, 0
      %v5767 = vsel %vm4495, %v5464, 0
      %v5770 = vsel %vm4495, %v5467, 0
      %v5773 = vsel %vm4495, %v5470, 0
      %v5776 = vsel %vm4495, %v5473, 0
      %v5779 = vsel %vm4495, %v5476, 0
      %v5782 = vsel %vm4495, %v5479, 0
      %v5785 = vsel %vm4495, %v5482, 0
      %v5788 = vsel %vm4495, %v5485, 0
      %v5791 = vsel %vm4495, %v5488, 0
      %v5794 = vsel %vm4495, %v5491, 0
      %v5797 = vsel %vm4495, %v5494, 0
      %v5800 = vsel %vm4495, %v5497, 0
      %v5803 = vsel %vm4495, %v5500, 0
      %v5806 = vsel %vm4495, %v5503, 0
      %v5809 = vsel %vm4495, %v5506, 0
      %5811 = vmatprep.subr.mxu0 0.0
      %5812 = vmatpush1.msra.mxu0 %v5584
      %5813 = vmatprep.subr.mxu0 0.0
      %5814 = vmatpush1.msra.mxu0 %v5582
      %5815 = vmatprep.subr.mxu0 0.0
      %5816 = vmatpush1.msra.mxu0 %v5580
      %5817 = vmatprep.subr.mxu0 0.0
      %5818 = vmatpush1.msra.mxu0 %v5578
      %5819 = vmatprep.subr.mxu0 0.0
      %5820 = vmatpush1.msra.mxu0 %v5576
      %5821 = vmatprep.subr.mxu0 0.0
      %5822 = vmatpush1.msra.mxu0 %v5574
      %5823 = vmatprep.subr.mxu0 0.0
      %5824 = vmatpush1.msra.mxu0 %v5572
      %5825 = vmatprep.subr.mxu0 0.0
      %5826 = vmatpush1.msra.mxu0 %v5570
      %5827 = vmatprep.subr.mxu0 0.0
      %5828 = vmatpush1.msra.mxu0 %v5568
      %5829 = vmatprep.subr.mxu0 0.0
      %5830 = vmatpush1.msra.mxu0 %v5566
      %5831 = vmatprep.subr.mxu0 0.0
      %5832 = vmatpush1.msra.mxu0 %v5564
      %5833 = vmatprep.subr.mxu0 0.0
      %5834 = vmatpush1.msra.mxu0 %v5562
      %5835 = vmatprep.subr.mxu0 0.0
      %5836 = vmatpush1.msra.mxu0 %v5560
      %5837 = vmatprep.subr.mxu0 0.0
      %5838 = vmatpush1.msra.mxu0 %v5558
      %5839 = vmatprep.subr.mxu0 0.0
      %5840 = vmatpush1.msra.mxu0 %v5556
      %5841 = vmatprep.subr.mxu0 0.0
      %5842 = vmatpush1.msra.mxu0 %v5554
      %5843 = vmatprep.subr.mxu0 0.0
      %5844 = vmatpush2.msra.mxu0 %v5616
      %5845 = vmatprep.subr.mxu0 0.0
      %5846 = vmatpush2.msra.mxu0 %v5614
      %5847 = vmatprep.subr.mxu0 0.0
      %5848 = vmatpush2.msra.mxu0 %v5612
      %5849 = vmatprep.subr.mxu0 0.0
      %5850 = vmatpush2.msra.mxu0 %v5610
      %5851 = vmatprep.subr.mxu0 0.0
      %5852 = vmatpush2.msra.mxu0 %v5608
      %5853 = vmatprep.subr.mxu0 0.0
      %5854 = vmatpush2.msra.mxu0 %v5606
      %5855 = vmatprep.subr.mxu0 0.0
      %5856 = vmatpush2.msra.mxu0 %v5604
      %5857 = vmatprep.subr.mxu0 0.0
      %5858 = vmatpush2.msra.mxu0 %v5602
      %5859 = vmatprep.subr.mxu0 0.0
      %5860 = vmatpush2.msra.mxu0 %v5600
      %5861 = vmatprep.subr.mxu0 0.0
      %5862 = vmatpush2.msra.mxu0 %v5598
      %5863 = vmatprep.subr.mxu0 0.0
      %5864 = vmatpush2.msra.mxu0 %v5596
      %5865 = vmatprep.subr.mxu0 0.0
      %5866 = vmatpush2.msra.mxu0 %v5594
      %5867 = vmatprep.subr.mxu0 0.0
      %5868 = vmatpush2.msra.mxu0 %v5592
      %5869 = vmatprep.subr.mxu0 0.0
      %5870 = vmatpush2.msra.mxu0 %v5590
      %5871 = vmatprep.subr.mxu0 0.0
      %5872 = vmatpush2.msra.mxu0 %v5588
      %5873 = vmatprep.subr.mxu0 0.0
      %5874 = vmatpush2.msra.mxu0 %v5586
      %5875 = vmatprep.mubr.f32.mxu0 %v5388
      %5876 = vmatmul.mubr.f32.gmra.mxu0 %v5387
      %v5877 = vpop.f32.mrf.mxu0
      %v5878 = vadd.f32 0.0, %v5877
      %v5879 = vpop.f32.mrf.mxu0
      %5880 = vmatprep.mubr.f32.mxu0 %v5391
      %5881 = vmatmul.mubr.f32.gmra.mxu0 %v5390
      %v5882 = vpop.f32.mrf.mxu0
      %v5883 = vadd.f32 0.0, %v5882
      %v5884 = vpop.f32.mrf.mxu0
      %5885 = vmatprep.mubr.f32.mxu0 %v5394
      %5886 = vmatmul.mubr.f32.gmra.mxu0 %v5393
      %v5887 = vpop.f32.mrf.mxu0
      %v5888 = vadd.f32 0.0, %v5887
      %v5889 = vpop.f32.mrf.mxu0
      %5890 = vmatprep.mubr.f32.mxu0 %v5397
      %5891 = vmatmul.mubr.f32.gmra.mxu0 %v5396
      %v5892 = vpop.f32.mrf.mxu0
      %v5893 = vadd.f32 0.0, %v5892
      %v5894 = vpop.f32.mrf.mxu0
      %5895 = vmatprep.mubr.f32.mxu0 %v5400
      %5896 = vmatmul.mubr.f32.gmra.mxu0 %v5399
      %v5897 = vpop.f32.mrf.mxu0
      %v5898 = vadd.f32 0.0, %v5897
      %v5899 = vpop.f32.mrf.mxu0
      %5900 = vmatprep.mubr.f32.mxu0 %v5403
      %5901 = vmatmul.mubr.f32.gmra.mxu0 %v5402
      %v5902 = vpop.f32.mrf.mxu0
      %v5903 = vadd.f32 0.0, %v5902
      %v5904 = vpop.f32.mrf.mxu0
      %5905 = vmatprep.mubr.f32.mxu0 %v5406
      %5906 = vmatmul.mubr.f32.gmra.mxu0 %v5405
      %v5907 = vpop.f32.mrf.mxu0
      %v5908 = vadd.f32 0.0, %v5907
      %v5909 = vpop.f32.mrf.mxu0
      %5910 = vmatprep.mubr.f32.mxu0 %v5409
      %5911 = vmatmul.mubr.f32.gmra.mxu0 %v5408
      %v5912 = vpop.f32.mrf.mxu0
      %v5913 = vadd.f32 0.0, %v5912
      %v5914 = vpop.f32.mrf.mxu0
      %5915 = vmatprep.mubr.f32.mxu0 %v5412
      %5916 = vmatmul.mubr.f32.gmra.mxu0 %v5411
      %v5917 = vpop.f32.mrf.mxu0
      %v5918 = vadd.f32 0.0, %v5917
      %v5919 = vpop.f32.mrf.mxu0
      %5920 = vmatprep.mubr.f32.mxu0 %v5415
      %5921 = vmatmul.mubr.f32.gmra.mxu0 %v5414
      %v5922 = vpop.f32.mrf.mxu0
      %v5923 = vadd.f32 0.0, %v5922
      %v5924 = vpop.f32.mrf.mxu0
      %5925 = vmatprep.mubr.f32.mxu0 %v5418
      %5926 = vmatmul.mubr.f32.gmra.mxu0 %v5417
      %v5927 = vpop.f32.mrf.mxu0
      %v5928 = vadd.f32 0.0, %v5927
      %v5929 = vpop.f32.mrf.mxu0
      %5930 = vmatprep.mubr.f32.mxu0 %v5421
      %5931 = vmatmul.mubr.f32.gmra.mxu0 %v5420
      %v5932 = vpop.f32.mrf.mxu0
      %v5933 = vadd.f32 0.0, %v5932
      %v5934 = vpop.f32.mrf.mxu0
      %5935 = vmatprep.mubr.f32.mxu0 %v5424
      %5936 = vmatmul.mubr.f32.gmra.mxu0 %v5423
      %v5937 = vpop.f32.mrf.mxu0
      %v5938 = vadd.f32 0.0, %v5937
      %v5939 = vpop.f32.mrf.mxu0
      %5940 = vmatprep.mubr.f32.mxu0 %v5427
      %5941 = vmatmul.mubr.f32.gmra.mxu0 %v5426
      %v5942 = vpop.f32.mrf.mxu0
      %v5943 = vadd.f32 0.0, %v5942
      %v5944 = vpop.f32.mrf.mxu0
      %5945 = vmatprep.mubr.f32.mxu0 %v5430
      %5946 = vmatmul.mubr.f32.gmra.mxu0 %v5429
      %v5947 = vpop.f32.mrf.mxu0
      %v5948 = vadd.f32 0.0, %v5947
      %v5949 = vpop.f32.mrf.mxu0
      %5950 = vmatprep.mubr.f32.mxu0 %v5433
      %5951 = vmatmul.mubr.f32.gmra.mxu0 %v5432
      %v5952 = vpop.f32.mrf.mxu0
      %v5953 = vadd.f32 0.0, %v5952
      %v5954 = vpop.f32.mrf.mxu0
      %5955 = vmatprep.mubr.f32.mxu0 %v5436
      %5956 = vmatmul.mubr.f32.gmra.mxu0 %v5435
      %v5957 = vpop.f32.mrf.mxu0
      %v5958 = vadd.f32 0.0, %v5957
      %v5959 = vpop.f32.mrf.mxu0
      %5960 = vmatprep.mubr.f32.mxu0 %v5439
      %5961 = vmatmul.mubr.f32.gmra.mxu0 %v5438
      %v5962 = vpop.f32.mrf.mxu0
      %v5963 = vadd.f32 0.0, %v5962
      %v5964 = vpop.f32.mrf.mxu0
      %5965 = vmatprep.mubr.f32.mxu0 %v5442
      %5966 = vmatmul.mubr.f32.gmra.mxu0 %v5441
      %v5967 = vpop.f32.mrf.mxu0
      %v5968 = vadd.f32 0.0, %v5967
      %v5969 = vpop.f32.mrf.mxu0
      %5970 = vmatprep.mubr.f32.mxu0 %v5445
      %5971 = vmatmul.mubr.f32.gmra.mxu0 %v5444
      %v5972 = vpop.f32.mrf.mxu0
      %v5973 = vadd.f32 0.0, %v5972
      %v5974 = vpop.f32.mrf.mxu0
      %5975 = vmatprep.mubr.f32.mxu0 %v5448
      %5976 = vmatmul.mubr.f32.gmra.mxu0 %v5447
      %v5977 = vpop.f32.mrf.mxu0
      %v5978 = vadd.f32 0.0, %v5977
      %v5979 = vpop.f32.mrf.mxu0
      %5980 = vmatprep.mubr.f32.mxu0 %v5451
      %5981 = vmatmul.mubr.f32.gmra.mxu0 %v5450
      %v5982 = vpop.f32.mrf.mxu0
      %v5983 = vadd.f32 0.0, %v5982
      %v5984 = vpop.f32.mrf.mxu0
      %5985 = vmatprep.mubr.f32.mxu0 %v5454
      %5986 = vmatmul.mubr.f32.gmra.mxu0 %v5453
      %v5987 = vpop.f32.mrf.mxu0
      %v5988 = vadd.f32 0.0, %v5987
      %v5989 = vpop.f32.mrf.mxu0
      %5990 = vmatprep.mubr.f32.mxu0 %v5457
      %5991 = vmatmul.mubr.f32.gmra.mxu0 %v5456
      %v5992 = vpop.f32.mrf.mxu0
      %v5993 = vadd.f32 0.0, %v5992
      %v5994 = vpop.f32.mrf.mxu0
      %5995 = vmatprep.mubr.f32.mxu0 %v5460
      %5996 = vmatmul.mubr.f32.gmra.mxu0 %v5459
      %v5997 = vpop.f32.mrf.mxu0
      %v5998 = vadd.f32 0.0, %v5997
      %v5999 = vpop.f32.mrf.mxu0
      %6000 = vmatprep.mubr.f32.mxu0 %v5463
      %6001 = vmatmul.mubr.f32.gmra.mxu0 %v5462
      %v6002 = vpop.f32.mrf.mxu0
      %v6003 = vadd.f32 0.0, %v6002
      %v6004 = vpop.f32.mrf.mxu0
      %6005 = vmatprep.mubr.f32.mxu0 %v5466
      %6006 = vmatmul.mubr.f32.gmra.mxu0 %v5465
      %v6007 = vpop.f32.mrf.mxu0
      %v6008 = vadd.f32 0.0, %v6007
      %v6009 = vpop.f32.mrf.mxu0
      %6010 = vmatprep.mubr.f32.mxu0 %v5469
      %6011 = vmatmul.mubr.f32.gmra.mxu0 %v5468
      %v6012 = vpop.f32.mrf.mxu0
      %v6013 = vadd.f32 0.0, %v6012
      %v6014 = vpop.f32.mrf.mxu0
      %6015 = vmatprep.mubr.f32.mxu0 %v5472
      %6016 = vmatmul.mubr.f32.gmra.mxu0 %v5471
      %v6017 = vpop.f32.mrf.mxu0
      %v6018 = vadd.f32 0.0, %v6017
      %v6019 = vpop.f32.mrf.mxu0
      %6020 = vmatprep.mubr.f32.mxu0 %v5475
      %6021 = vmatmul.mubr.f32.gmra.mxu0 %v5474
      %v6022 = vpop.f32.mrf.mxu0
      %v6023 = vadd.f32 0.0, %v6022
      %v6024 = vpop.f32.mrf.mxu0
      %6025 = vmatprep.mubr.f32.mxu0 %v5478
      %6026 = vmatmul.mubr.f32.gmra.mxu0 %v5477
      %v6027 = vpop.f32.mrf.mxu0
      %v6028 = vadd.f32 0.0, %v6027
      %v6029 = vpop.f32.mrf.mxu0
      %6030 = vmatprep.mubr.f32.mxu0 %v5481
      %6031 = vmatmul.mubr.f32.gmra.mxu0 %v5480
      %v6032 = vpop.f32.mrf.mxu0
      %v6033 = vadd.f32 0.0, %v6032
      %v6034 = vpop.f32.mrf.mxu0
      %6035 = vmatprep.mubr.f32.mxu0 %v5484
      %6036 = vmatmul.mubr.f32.gmra.mxu0 %v5483
      %v6037 = vpop.f32.mrf.mxu0
      %v6038 = vadd.f32 0.0, %v6037
      %v6039 = vpop.f32.mrf.mxu0
      %6040 = vmatprep.mubr.f32.mxu0 %v5487
      %6041 = vmatmul.mubr.f32.gmra.mxu0 %v5486
      %v6042 = vpop.f32.mrf.mxu0
      %v6043 = vadd.f32 0.0, %v6042
      %v6044 = vpop.f32.mrf.mxu0
      %6045 = vmatprep.mubr.f32.mxu0 %v5490
      %6046 = vmatmul.mubr.f32.gmra.mxu0 %v5489
      %v6047 = vpop.f32.mrf.mxu0
      %v6048 = vadd.f32 0.0, %v6047
      %v6049 = vpop.f32.mrf.mxu0
      %6050 = vmatprep.mubr.f32.mxu0 %v5493
      %6051 = vmatmul.mubr.f32.gmra.mxu0 %v5492
      %v6052 = vpop.f32.mrf.mxu0
      %v6053 = vadd.f32 0.0, %v6052
      %v6054 = vpop.f32.mrf.mxu0
      %6055 = vmatprep.mubr.f32.mxu0 %v5496
      %6056 = vmatmul.mubr.f32.gmra.mxu0 %v5495
      %v6057 = vpop.f32.mrf.mxu0
      %v6058 = vadd.f32 0.0, %v6057
      %v6059 = vpop.f32.mrf.mxu0
      %6060 = vmatprep.mubr.f32.mxu0 %v5499
      %6061 = vmatmul.mubr.f32.gmra.mxu0 %v5498
      %v6062 = vpop.f32.mrf.mxu0
      %v6063 = vadd.f32 0.0, %v6062
      %v6064 = vpop.f32.mrf.mxu0
      %6065 = vmatprep.mubr.f32.mxu0 %v5502
      %6066 = vmatmul.mubr.f32.gmra.mxu0 %v5501
      %v6067 = vpop.f32.mrf.mxu0
      %v6068 = vadd.f32 0.0, %v6067
      %v6069 = vpop.f32.mrf.mxu0
      %6070 = vmatprep.mubr.f32.mxu0 %v5505
      %6071 = vmatmul.mubr.f32.gmra.mxu0 %v5504
      %v6072 = vpop.f32.mrf.mxu0
      %v6073 = vadd.f32 0.0, %v6072
      %v6074 = vpop.f32.mrf.mxu0
      %6075 = vdwg.mxu0
      %6076 = vmatprep.subr.mxu0 0.0
      %6077 = vmatpush1.msra.mxu0 0.0
      %6078 = vmatprep.subr.mxu0 0.0
      %6079 = vmatpush1.msra.mxu0 0.0
      %6080 = vmatprep.subr.mxu0 0.0
      %6081 = vmatpush1.msra.mxu0 %v5644
      %6082 = vmatprep.subr.mxu0 0.0
      %6083 = vmatpush1.msra.mxu0 %v5642
      %6084 = vmatprep.subr.mxu0 0.0
      %6085 = vmatpush1.msra.mxu0 %v5640
      %6086 = vmatprep.subr.mxu0 0.0
      %6087 = vmatpush1.msra.mxu0 %v5638
      %6088 = vmatprep.subr.mxu0 0.0
      %6089 = vmatpush1.msra.mxu0 %v5636
      %6090 = vmatprep.subr.mxu0 0.0
      %6091 = vmatpush1.msra.mxu0 %v5634
      %6092 = vmatprep.subr.mxu0 0.0
      %6093 = vmatpush1.msra.mxu0 %v5632
      %6094 = vmatprep.subr.mxu0 0.0
      %6095 = vmatpush1.msra.mxu0 %v5630
      %6096 = vmatprep.subr.mxu0 0.0
      %6097 = vmatpush1.msra.mxu0 %v5628
      %6098 = vmatprep.subr.mxu0 0.0
      %6099 = vmatpush1.msra.mxu0 %v5626
      %6100 = vmatprep.subr.mxu0 0.0
      %6101 = vmatpush1.msra.mxu0 %v5624
      %6102 = vmatprep.subr.mxu0 0.0
      %6103 = vmatpush1.msra.mxu0 %v5622
      %6104 = vmatprep.subr.mxu0 0.0
      %6105 = vmatpush1.msra.mxu0 %v5620
      %6106 = vmatprep.subr.mxu0 0.0
      %6107 = vmatpush1.msra.mxu0 %v5618
      %6108 = vmatprep.subr.mxu0 0.0
      %6109 = vmatpush2.msra.mxu0 0.0
      %6110 = vmatprep.subr.mxu0 0.0
      %6111 = vmatpush2.msra.mxu0 0.0
      %6112 = vmatprep.subr.mxu0 0.0
      %6113 = vmatpush2.msra.mxu0 0.0
      %6114 = vmatprep.subr.mxu0 0.0
      %6115 = vmatpush2.msra.mxu0 0.0
      %6116 = vmatprep.subr.mxu0 0.0
      %6117 = vmatpush2.msra.mxu0 0.0
      %6118 = vmatprep.subr.mxu0 0.0
      %6119 = vmatpush2.msra.mxu0 0.0
      %6120 = vmatprep.subr.mxu0 0.0
      %6121 = vmatpush2.msra.mxu0 0.0
      %6122 = vmatprep.subr.mxu0 0.0
      %6123 = vmatpush2.msra.mxu0 0.0
      %6124 = vmatprep.subr.mxu0 0.0
      %6125 = vmatpush2.msra.mxu0 0.0
      %6126 = vmatprep.subr.mxu0 0.0
      %6127 = vmatpush2.msra.mxu0 0.0
      %6128 = vmatprep.subr.mxu0 0.0
      %6129 = vmatpush2.msra.mxu0 0.0
      %6130 = vmatprep.subr.mxu0 0.0
      %6131 = vmatpush2.msra.mxu0 0.0
      %6132 = vmatprep.subr.mxu0 0.0
      %6133 = vmatpush2.msra.mxu0 0.0
      %6134 = vmatprep.subr.mxu0 0.0
      %6135 = vmatpush2.msra.mxu0 0.0
      %6136 = vmatprep.subr.mxu0 0.0
      %6137 = vmatpush2.msra.mxu0 0.0
      %6138 = vmatprep.subr.mxu0 0.0
      %6139 = vmatpush2.msra.mxu0 0.0
      %6140 = vmatprep.mubr.f32.mxu0 0.0
      %6141 = vmatmul.mubr.f32.gmra.mxu0 %v5692
      %v6142 = vpop.f32.mrf.mxu0
      %v6143 = vadd.f32 %v5878, %v6142
      %v6144 = vpop.f32.mrf.mxu0
      %6145 = vmatprep.mubr.f32.mxu0 0.0
      %6146 = vmatmul.mubr.f32.gmra.mxu0 %v5695
      %v6147 = vpop.f32.mrf.mxu0
      %v6148 = vadd.f32 %v5883, %v6147
      %v6149 = vpop.f32.mrf.mxu0
      %6150 = vmatprep.mubr.f32.mxu0 0.0
      %6151 = vmatmul.mubr.f32.gmra.mxu0 %v5698
      %v6152 = vpop.f32.mrf.mxu0
      %v6153 = vadd.f32 %v5888, %v6152
      %v6154 = vpop.f32.mrf.mxu0
      %6155 = vmatprep.mubr.f32.mxu0 0.0
      %6156 = vmatmul.mubr.f32.gmra.mxu0 %v5701
      %v6157 = vpop.f32.mrf.mxu0
      %v6158 = vadd.f32 %v5893, %v6157
      %v6159 = vpop.f32.mrf.mxu0
      %6160 = vmatprep.mubr.f32.mxu0 0.0
      %6161 = vmatmul.mubr.f32.gmra.mxu0 %v5704
      %v6162 = vpop.f32.mrf.mxu0
      %v6163 = vadd.f32 %v5898, %v6162
      %v6164 = vpop.f32.mrf.mxu0
      %6165 = vmatprep.mubr.f32.mxu0 0.0
      %6166 = vmatmul.mubr.f32.gmra.mxu0 %v5707
      %v6167 = vpop.f32.mrf.mxu0
      %v6168 = vadd.f32 %v5903, %v6167
      %v6169 = vpop.f32.mrf.mxu0
      %6170 = vmatprep.mubr.f32.mxu0 0.0
      %6171 = vmatmul.mubr.f32.gmra.mxu0 %v5710
      %v6172 = vpop.f32.mrf.mxu0
      %v6173 = vadd.f32 %v5908, %v6172
      %v6174 = vpop.f32.mrf.mxu0
      %6175 = vmatprep.mubr.f32.mxu0 0.0
      %6176 = vmatmul.mubr.f32.gmra.mxu0 %v5713
      %v6177 = vpop.f32.mrf.mxu0
      %v6178 = vadd.f32 %v5913, %v6177
      %v6179 = vpop.f32.mrf.mxu0
      %6180 = vmatprep.mubr.f32.mxu0 0.0
      %6181 = vmatmul.mubr.f32.gmra.mxu0 %v5716
      %v6182 = vpop.f32.mrf.mxu0
      %v6183 = vadd.f32 %v5918, %v6182
      %v6184 = vpop.f32.mrf.mxu0
      %6185 = vmatprep.mubr.f32.mxu0 0.0
      %6186 = vmatmul.mubr.f32.gmra.mxu0 %v5719
      %v6187 = vpop.f32.mrf.mxu0
      %v6188 = vadd.f32 %v5923, %v6187
      %v6189 = vpop.f32.mrf.mxu0
      %6190 = vmatprep.mubr.f32.mxu0 0.0
      %6191 = vmatmul.mubr.f32.gmra.mxu0 %v5722
      %v6192 = vpop.f32.mrf.mxu0
      %v6193 = vadd.f32 %v5928, %v6192
      %v6194 = vpop.f32.mrf.mxu0
      %6195 = vmatprep.mubr.f32.mxu0 0.0
      %6196 = vmatmul.mubr.f32.gmra.mxu0 %v5725
      %v6197 = vpop.f32.mrf.mxu0
      %v6198 = vadd.f32 %v5933, %v6197
      %v6199 = vpop.f32.mrf.mxu0
      %6200 = vmatprep.mubr.f32.mxu0 0.0
      %6201 = vmatmul.mubr.f32.gmra.mxu0 %v5728
      %v6202 = vpop.f32.mrf.mxu0
      %v6203 = vadd.f32 %v5938, %v6202
      %v6204 = vpop.f32.mrf.mxu0
      %6205 = vmatprep.mubr.f32.mxu0 0.0
      %6206 = vmatmul.mubr.f32.gmra.mxu0 %v5731
      %v6207 = vpop.f32.mrf.mxu0
      %v6208 = vadd.f32 %v5943, %v6207
      %v6209 = vpop.f32.mrf.mxu0
      %6210 = vmatprep.mubr.f32.mxu0 0.0
      %6211 = vmatmul.mubr.f32.gmra.mxu0 %v5734
      %v6212 = vpop.f32.mrf.mxu0
      %v6213 = vadd.f32 %v5948, %v6212
      %v6214 = vpop.f32.mrf.mxu0
      %6215 = vmatprep.mubr.f32.mxu0 0.0
      %6216 = vmatmul.mubr.f32.gmra.mxu0 %v5737
      %v6217 = vpop.f32.mrf.mxu0
      %v6218 = vadd.f32 %v5953, %v6217
      %v6219 = vpop.f32.mrf.mxu0
      %6220 = vmatprep.mubr.f32.mxu0 0.0
      %6221 = vmatmul.mubr.f32.gmra.mxu0 %v5740
      %v6222 = vpop.f32.mrf.mxu0
      %v6223 = vadd.f32 %v5958, %v6222
      %v6224 = vpop.f32.mrf.mxu0
      %6225 = vmatprep.mubr.f32.mxu0 0.0
      %6226 = vmatmul.mubr.f32.gmra.mxu0 %v5743
      %v6227 = vpop.f32.mrf.mxu0
      %v6228 = vadd.f32 %v5963, %v6227
      %v6229 = vpop.f32.mrf.mxu0
      %6230 = vmatprep.mubr.f32.mxu0 0.0
      %6231 = vmatmul.mubr.f32.gmra.mxu0 %v5746
      %v6232 = vpop.f32.mrf.mxu0
      %v6233 = vadd.f32 %v5968, %v6232
      %v6234 = vpop.f32.mrf.mxu0
      %6235 = vmatprep.mubr.f32.mxu0 0.0
      %6236 = vmatmul.mubr.f32.gmra.mxu0 %v5749
      %v6237 = vpop.f32.mrf.mxu0
      %v6238 = vadd.f32 %v5973, %v6237
      %v6239 = vpop.f32.mrf.mxu0
      %6240 = vmatprep.mubr.f32.mxu0 0.0
      %6241 = vmatmul.mubr.f32.gmra.mxu0 %v5752
      %v6242 = vpop.f32.mrf.mxu0
      %v6243 = vadd.f32 %v5978, %v6242
      %v6244 = vpop.f32.mrf.mxu0
      %6245 = vmatprep.mubr.f32.mxu0 0.0
      %6246 = vmatmul.mubr.f32.gmra.mxu0 %v5755
      %v6247 = vpop.f32.mrf.mxu0
      %v6248 = vadd.f32 %v5983, %v6247
      %v6249 = vpop.f32.mrf.mxu0
      %6250 = vmatprep.mubr.f32.mxu0 0.0
      %6251 = vmatmul.mubr.f32.gmra.mxu0 %v5758
      %v6252 = vpop.f32.mrf.mxu0
      %v6253 = vadd.f32 %v5988, %v6252
      %v6254 = vpop.f32.mrf.mxu0
      %6255 = vmatprep.mubr.f32.mxu0 0.0
      %6256 = vmatmul.mubr.f32.gmra.mxu0 %v5761
      %v6257 = vpop.f32.mrf.mxu0
      %v6258 = vadd.f32 %v5993, %v6257
      %v6259 = vpop.f32.mrf.mxu0
      %6260 = vmatprep.mubr.f32.mxu0 0.0
      %6261 = vmatmul.mubr.f32.gmra.mxu0 %v5764
      %v6262 = vpop.f32.mrf.mxu0
      %v6263 = vadd.f32 %v5998, %v6262
      %v6264 = vpop.f32.mrf.mxu0
      %6265 = vmatprep.mubr.f32.mxu0 0.0
      %6266 = vmatmul.mubr.f32.gmra.mxu0 %v5767
      %v6267 = vpop.f32.mrf.mxu0
      %v6268 = vadd.f32 %v6003, %v6267
      %v6269 = vpop.f32.mrf.mxu0
      %6270 = vmatprep.mubr.f32.mxu0 0.0
      %6271 = vmatmul.mubr.f32.gmra.mxu0 %v5770
      %v6272 = vpop.f32.mrf.mxu0
      %v6273 = vadd.f32 %v6008, %v6272
      %v6274 = vpop.f32.mrf.mxu0
      %6275 = vmatprep.mubr.f32.mxu0 0.0
      %6276 = vmatmul.mubr.f32.gmra.mxu0 %v5773
      %v6277 = vpop.f32.mrf.mxu0
      %v6278 = vadd.f32 %v6013, %v6277
      %v6279 = vpop.f32.mrf.mxu0
      %6280 = vmatprep.mubr.f32.mxu0 0.0
      %6281 = vmatmul.mubr.f32.gmra.mxu0 %v5776
      %v6282 = vpop.f32.mrf.mxu0
      %v6283 = vadd.f32 %v6018, %v6282
      %v6284 = vpop.f32.mrf.mxu0
      %6285 = vmatprep.mubr.f32.mxu0 0.0
      %6286 = vmatmul.mubr.f32.gmra.mxu0 %v5779
      %v6287 = vpop.f32.mrf.mxu0
      %v6288 = vadd.f32 %v6023, %v6287
      %v6289 = vpop.f32.mrf.mxu0
      %6290 = vmatprep.mubr.f32.mxu0 0.0
      %6291 = vmatmul.mubr.f32.gmra.mxu0 %v5782
      %v6292 = vpop.f32.mrf.mxu0
      %v6293 = vadd.f32 %v6028, %v6292
      %v6294 = vpop.f32.mrf.mxu0
      %6295 = vmatprep.mubr.f32.mxu0 0.0
      %6296 = vmatmul.mubr.f32.gmra.mxu0 %v5785
      %v6297 = vpop.f32.mrf.mxu0
      %v6298 = vadd.f32 %v6033, %v6297
      %v6299 = vpop.f32.mrf.mxu0
      %6300 = vmatprep.mubr.f32.mxu0 0.0
      %6301 = vmatmul.mubr.f32.gmra.mxu0 %v5788
      %v6302 = vpop.f32.mrf.mxu0
      %v6303 = vadd.f32 %v6038, %v6302
      %v6304 = vpop.f32.mrf.mxu0
      %6305 = vmatprep.mubr.f32.mxu0 0.0
      %6306 = vmatmul.mubr.f32.gmra.mxu0 %v5791
      %v6307 = vpop.f32.mrf.mxu0
      %v6308 = vadd.f32 %v6043, %v6307
      %v6309 = vpop.f32.mrf.mxu0
      %6310 = vmatprep.mubr.f32.mxu0 0.0
      %6311 = vmatmul.mubr.f32.gmra.mxu0 %v5794
      %v6312 = vpop.f32.mrf.mxu0
      %v6313 = vadd.f32 %v6048, %v6312
      %v6314 = vpop.f32.mrf.mxu0
      %6315 = vmatprep.mubr.f32.mxu0 0.0
      %6316 = vmatmul.mubr.f32.gmra.mxu0 %v5797
      %v6317 = vpop.f32.mrf.mxu0
      %v6318 = vadd.f32 %v6053, %v6317
      %v6319 = vpop.f32.mrf.mxu0
      %6320 = vmatprep.mubr.f32.mxu0 0.0
      %6321 = vmatmul.mubr.f32.gmra.mxu0 %v5800
      %v6322 = vpop.f32.mrf.mxu0
      %v6323 = vadd.f32 %v6058, %v6322
      %v6324 = vpop.f32.mrf.mxu0
      %6325 = vmatprep.mubr.f32.mxu0 0.0
      %6326 = vmatmul.mubr.f32.gmra.mxu0 %v5803
      %v6327 = vpop.f32.mrf.mxu0
      %v6328 = vadd.f32 %v6063, %v6327
      %v6329 = vpop.f32.mrf.mxu0
      %6330 = vmatprep.mubr.f32.mxu0 0.0
      %6331 = vmatmul.mubr.f32.gmra.mxu0 %v5806
      %v6332 = vpop.f32.mrf.mxu0
      %v6333 = vadd.f32 %v6068, %v6332
      %v6334 = vpop.f32.mrf.mxu0
      %6335 = vmatprep.mubr.f32.mxu0 0.0
      %6336 = vmatmul.mubr.f32.gmra.mxu0 %v5809
      %v6337 = vpop.f32.mrf.mxu0
      %v6338 = vadd.f32 %v6073, %v6337
      %v6339 = vpop.f32.mrf.mxu0
      %6340 = vdwg.mxu0
      %v6341 = vadd.f32 %v5346, %v6143
      %v6342 = vadd.f32 %v5347, %v6148
      %v6343 = vadd.f32 %v5348, %v6153
      %v6344 = vadd.f32 %v5349, %v6158
      %v6345 = vadd.f32 %v5350, %v6163
      %v6346 = vadd.f32 %v5351, %v6168
      %v6347 = vadd.f32 %v5352, %v6173
      %v6348 = vadd.f32 %v5353, %v6178
      %v6349 = vadd.f32 %v5354, %v6183
      %v6350 = vadd.f32 %v5355, %v6188
      %v6351 = vadd.f32 %v5356, %v6193
      %v6352 = vadd.f32 %v5357, %v6198
      %v6353 = vadd.f32 %v5358, %v6203
      %v6354 = vadd.f32 %v5359, %v6208
      %v6355 = vadd.f32 %v5360, %v6213
      %v6356 = vadd.f32 %v5361, %v6218
      %v6357 = vadd.f32 %v5362, %v6223
      %v6358 = vadd.f32 %v5363, %v6228
      %v6359 = vadd.f32 %v5364, %v6233
      %v6360 = vadd.f32 %v5365, %v6238
      %v6361 = vadd.f32 %v5366, %v6243
      %v6362 = vadd.f32 %v5367, %v6248
      %v6363 = vadd.f32 %v5368, %v6253
      %v6364 = vadd.f32 %v5369, %v6258
      %v6365 = vadd.f32 %v5370, %v6263
      %v6366 = vadd.f32 %v5371, %v6268
      %v6367 = vadd.f32 %v5372, %v6273
      %v6368 = vadd.f32 %v5373, %v6278
      %v6369 = vadd.f32 %v5374, %v6283
      %v6370 = vadd.f32 %v5375, %v6288
      %v6371 = vadd.f32 %v5376, %v6293
      %v6372 = vadd.f32 %v5377, %v6298
      %v6373 = vadd.f32 %v5378, %v6303
      %v6374 = vadd.f32 %v5379, %v6308
      %v6375 = vadd.f32 %v5380, %v6313
      %v6376 = vadd.f32 %v5381, %v6318
      %v6377 = vadd.f32 %v5382, %v6323
      %v6378 = vadd.f32 %v5383, %v6328
      %v6379 = vadd.f32 %v5384, %v6333
      %v6380 = vadd.f32 %v5385, %v6338
      %s6381 = scalar_lea.vmem %s3, 1920
      %v6382 = vld [vmem:[%s6381] sm:$0xff]
      %v6383 = vld [vmem:[%s6381 + $0x8] sm:$0xff]
      %v6384 = vld [vmem:[%s6381 + $0x10] sm:$0xff]
      %v6385 = vld [vmem:[%s6381 + $0x18] sm:$0xff]
      %v6386 = vld [vmem:[%s6381 + $0x20] sm:$0xff]
      %v6387 = vld [vmem:[%s6381 + $0x28] sm:$0xff]
      %v6388 = vld [vmem:[%s6381 + $0x30] sm:$0xff]
      %v6389 = vld [vmem:[%s6381 + $0x38] sm:$0xff]
      %v6390 = vld [vmem:[%s6381 + $0x40] sm:$0xff]
      %v6391 = vld [vmem:[%s6381 + $0x48] sm:$0xff]
      %v6392 = vld [vmem:[%s6381 + $0x50] sm:$0xff]
      %v6393 = vld [vmem:[%s6381 + $0x58] sm:$0xff]
      %v6394 = vld [vmem:[%s6381 + $0x60] sm:$0xff]
      %v6395 = vld [vmem:[%s6381 + $0x68] sm:$0xff]
      %v6396 = vld [vmem:[%s6381 + $0x70] sm:$0xff]
      %v6397 = vld [vmem:[%s6381 + $0x78] sm:$0xff]
      %v6398 = vld [vmem:[%s6381 + $0x80] sm:$0xff]
      %v6399 = vld [vmem:[%s6381 + $0x88] sm:$0xff]
      %v6400 = vld [vmem:[%s6381 + $0x90] sm:$0xff]
      %v6401 = vld [vmem:[%s6381 + $0x98] sm:$0xff]
      %v6402 = vld [vmem:[%s6381 + $0xa0] sm:$0xff]
      %v6403 = vld [vmem:[%s6381 + $0xa8] sm:$0xff]
      %v6404 = vld [vmem:[%s6381 + $0xb0] sm:$0xff]
      %v6405 = vld [vmem:[%s6381 + $0xb8] sm:$0xff]
      %v6406 = vld [vmem:[%s6381 + $0xc0] sm:$0xff]
      %v6407 = vld [vmem:[%s6381 + $0xc8] sm:$0xff]
      %v6408 = vld [vmem:[%s6381 + $0xd0] sm:$0xff]
      %v6409 = vld [vmem:[%s6381 + $0xd8] sm:$0xff]
      %v6410 = vld [vmem:[%s6381 + $0xe0] sm:$0xff]
      %v6411 = vld [vmem:[%s6381 + $0xe8] sm:$0xff]
      %v6412 = vld [vmem:[%s6381 + $0xf0] sm:$0xff]
      %v6413 = vld [vmem:[%s6381 + $0xf8] sm:$0xff]
      %v6414 = vld [vmem:[%s6381 + $0x100] sm:$0xff]
      %v6415 = vld [vmem:[%s6381 + $0x108] sm:$0xff]
      %v6416 = vld [vmem:[%s6381 + $0x110] sm:$0xff]
      %v6417 = vld [vmem:[%s6381 + $0x118] sm:$0xff]
      %v6418 = vld [vmem:[%s6381 + $0x120] sm:$0xff]
      %v6419 = vld [vmem:[%s6381 + $0x128] sm:$0xff]
      %v6420 = vld [vmem:[%s6381 + $0x130] sm:$0xff]
      %v6421 = vld [vmem:[%s6381 + $0x138] sm:$0xff]
      %v6422 = vld [vmem:[%s6381 + $0x140] sm:$0xff]
      %v6423 = vld [vmem:[%s6381 + $0x148] sm:$0xff]
      %v6424 = vld [vmem:[%s6381 + $0x150] sm:$0xff]
      %v6425 = vld [vmem:[%s6381 + $0x158] sm:$0xff]
      %v6426 = vld [vmem:[%s6381 + $0x160] sm:$0xff]
      %v6427 = vld [vmem:[%s6381 + $0x168] sm:$0xff]
      %v6428 = vld [vmem:[%s6381 + $0x170] sm:$0xff]
      %v6429 = vld [vmem:[%s6381 + $0x178] sm:$0xff]
      %v6430 = vld [vmem:[%s6381 + $0x180] sm:$0xff]
      %v6431 = vld [vmem:[%s6381 + $0x188] sm:$0xff]
      %v6432 = vld [vmem:[%s6381 + $0x190] sm:$0xff]
      %v6433 = vld [vmem:[%s6381 + $0x198] sm:$0xff]
      %v6434 = vld [vmem:[%s6381 + $0x1a0] sm:$0xff]
      %v6435 = vld [vmem:[%s6381 + $0x1a8] sm:$0xff]
      %v6436 = vld [vmem:[%s6381 + $0x1b0] sm:$0xff]
      %v6437 = vld [vmem:[%s6381 + $0x1b8] sm:$0xff]
      %v6438 = vld [vmem:[%s6381 + $0x1c0] sm:$0xff]
      %v6439 = vld [vmem:[%s6381 + $0x1c8] sm:$0xff]
      %v6440 = vld [vmem:[%s6381 + $0x1d0] sm:$0xff]
      %v6441 = vld [vmem:[%s6381 + $0x1d8] sm:$0xff]
      %v6442 = vld [vmem:[%s6381 + $0x1e0] sm:$0xff]
      %v6443 = vld [vmem:[%s6381 + $0x1e8] sm:$0xff]
      %v6444 = vld [vmem:[%s6381 + $0x1f0] sm:$0xff]
      %v6445 = vld [vmem:[%s6381 + $0x1f8] sm:$0xff]
      %v6446 = vld [vmem:[%s6381 + $0x200] sm:$0xff]
      %v6447 = vld [vmem:[%s6381 + $0x208] sm:$0xff]
      %v6448 = vld [vmem:[%s6381 + $0x210] sm:$0xff]
      %v6449 = vld [vmem:[%s6381 + $0x218] sm:$0xff]
      %v6450 = vld [vmem:[%s6381 + $0x220] sm:$0xff]
      %v6451 = vld [vmem:[%s6381 + $0x228] sm:$0xff]
      %v6452 = vld [vmem:[%s6381 + $0x230] sm:$0xff]
      %v6453 = vld [vmem:[%s6381 + $0x238] sm:$0xff]
      %v6454 = vld [vmem:[%s6381 + $0x240] sm:$0xff]
      %v6455 = vld [vmem:[%s6381 + $0x248] sm:$0xff]
      %v6456 = vld [vmem:[%s6381 + $0x250] sm:$0xff]
      %v6457 = vld [vmem:[%s6381 + $0x258] sm:$0xff]
      %v6458 = vld [vmem:[%s6381 + $0x260] sm:$0xff]
      %v6459 = vld [vmem:[%s6381 + $0x268] sm:$0xff]
      %v6460 = vld [vmem:[%s6381 + $0x270] sm:$0xff]
      %v6461 = vld [vmem:[%s6381 + $0x278] sm:$0xff]
      %v6462 = vld [vmem:[%s6381 + $0x280] sm:$0xff]
      %v6463 = vld [vmem:[%s6381 + $0x288] sm:$0xff]
      %v6464 = vld [vmem:[%s6381 + $0x290] sm:$0xff]
      %v6465 = vld [vmem:[%s6381 + $0x298] sm:$0xff]
      %v6466 = vld [vmem:[%s6381 + $0x2a0] sm:$0xff]
      %v6467 = vld [vmem:[%s6381 + $0x2a8] sm:$0xff]
      %v6468 = vld [vmem:[%s6381 + $0x2b0] sm:$0xff]
      %v6469 = vld [vmem:[%s6381 + $0x2b8] sm:$0xff]
      %v6470 = vld [vmem:[%s6381 + $0x2c0] sm:$0xff]
      %v6471 = vld [vmem:[%s6381 + $0x2c8] sm:$0xff]
      %v6472 = vld [vmem:[%s6381 + $0x2d0] sm:$0xff]
      %v6473 = vld [vmem:[%s6381 + $0x2d8] sm:$0xff]
      %v6474 = vld [vmem:[%s6381 + $0x2e0] sm:$0xff]
      %v6475 = vld [vmem:[%s6381 + $0x2e8] sm:$0xff]
      %v6476 = vld [vmem:[%s6381 + $0x2f0] sm:$0xff]
      %v6477 = vld [vmem:[%s6381 + $0x2f8] sm:$0xff]
      %v6478 = vld [vmem:[%s6381 + $0x300] sm:$0xff]
      %v6479 = vld [vmem:[%s6381 + $0x308] sm:$0xff]
      %v6480 = vld [vmem:[%s6381 + $0x310] sm:$0xff]
      %v6481 = vld [vmem:[%s6381 + $0x318] sm:$0xff]
      %v6482 = vld [vmem:[%s6381 + $0x320] sm:$0xff]
      %v6483 = vld [vmem:[%s6381 + $0x328] sm:$0xff]
      %v6484 = vld [vmem:[%s6381 + $0x330] sm:$0xff]
      %v6485 = vld [vmem:[%s6381 + $0x338] sm:$0xff]
      %v6486 = vld [vmem:[%s6381 + $0x340] sm:$0xff]
      %v6487 = vld [vmem:[%s6381 + $0x348] sm:$0xff]
      %v6488 = vld [vmem:[%s6381 + $0x350] sm:$0xff]
      %v6489 = vld [vmem:[%s6381 + $0x358] sm:$0xff]
      %v6490 = vld [vmem:[%s6381 + $0x360] sm:$0xff]
      %v6491 = vld [vmem:[%s6381 + $0x368] sm:$0xff]
      %v6492 = vld [vmem:[%s6381 + $0x370] sm:$0xff]
      %v6493 = vld [vmem:[%s6381 + $0x378] sm:$0xff]
      %v6494 = vld [vmem:[%s6381 + $0x380] sm:$0xff]
      %v6495 = vld [vmem:[%s6381 + $0x388] sm:$0xff]
      %v6496 = vld [vmem:[%s6381 + $0x390] sm:$0xff]
      %v6497 = vld [vmem:[%s6381 + $0x398] sm:$0xff]
      %v6498 = vld [vmem:[%s6381 + $0x3a0] sm:$0xff]
      %v6499 = vld [vmem:[%s6381 + $0x3a8] sm:$0xff]
      %v6500 = vld [vmem:[%s6381 + $0x3b0] sm:$0xff]
      %v6501 = vld [vmem:[%s6381 + $0x3b8] sm:$0xff]
      %6502 = vrot.lane.b32.xlu0 %v4289, 126
      %v6503 = vpop.permute.xlu0 %6502
      %6504 = vrot.lane.b32.xlu0 %v4290, 126
      %v6505 = vpop.permute.xlu0 %6504
      %6506 = vrot.lane.b32.xlu0 %v4291, 126
      %v6507 = vpop.permute.xlu0 %6506
      %6508 = vrot.lane.b32.xlu0 %v4292, 126
      %v6509 = vpop.permute.xlu0 %6508
      %6510 = vrot.lane.b32.xlu0 %v4293, 126
      %v6511 = vpop.permute.xlu0 %6510
      %6512 = vrot.lane.b32.xlu0 %v4294, 126
      %v6513 = vpop.permute.xlu0 %6512
      %6514 = vrot.lane.b32.xlu0 %v4295, 126
      %v6515 = vpop.permute.xlu0 %6514
      %6516 = vrot.lane.b32.xlu0 %v4296, 126
      %v6517 = vpop.permute.xlu0 %6516
      %6518 = vrot.lane.b32.xlu0 %v4297, 126
      %v6519 = vpop.permute.xlu0 %6518
      %6520 = vrot.lane.b32.xlu0 %v4298, 126
      %v6521 = vpop.permute.xlu0 %6520
      %6522 = vrot.lane.b32.xlu0 %v4299, 126
      %v6523 = vpop.permute.xlu0 %6522
      %6524 = vrot.lane.b32.xlu0 %v4300, 126
      %v6525 = vpop.permute.xlu0 %6524
      %6526 = vrot.lane.b32.xlu0 %v4301, 126
      %v6527 = vpop.permute.xlu0 %6526
      %6528 = vrot.lane.b32.xlu0 %v4302, 126
      %v6529 = vpop.permute.xlu0 %6528
      %6530 = vrot.lane.b32.xlu0 %v4303, 126
      %v6531 = vpop.permute.xlu0 %6530
      %6532 = vrot.lane.b32.xlu0 %v4304, 126
      %v6533 = vpop.permute.xlu0 %6532
      %6534 = vrot.lane.b32.xlu0 %v4305, 126
      %v6535 = vpop.permute.xlu0 %6534
      %6536 = vrot.lane.b32.xlu0 %v4306, 126
      %v6537 = vpop.permute.xlu0 %6536
      %6538 = vrot.lane.b32.xlu0 %v4307, 126
      %v6539 = vpop.permute.xlu0 %6538
      %6540 = vrot.lane.b32.xlu0 %v4308, 126
      %v6541 = vpop.permute.xlu0 %6540
      %6542 = vrot.lane.b32.xlu0 %v4309, 126
      %v6543 = vpop.permute.xlu0 %6542
      %6544 = vrot.lane.b32.xlu0 %v4310, 126
      %v6545 = vpop.permute.xlu0 %6544
      %6546 = vrot.lane.b32.xlu0 %v4311, 126
      %v6547 = vpop.permute.xlu0 %6546
      %6548 = vrot.lane.b32.xlu0 %v4312, 126
      %v6549 = vpop.permute.xlu0 %6548
      %6550 = vrot.lane.b32.xlu0 %v4313, 126
      %v6551 = vpop.permute.xlu0 %6550
      %6552 = vrot.lane.b32.xlu0 %v4314, 126
      %v6553 = vpop.permute.xlu0 %6552
      %6554 = vrot.lane.b32.xlu0 %v4315, 126
      %v6555 = vpop.permute.xlu0 %6554
      %6556 = vrot.lane.b32.xlu0 %v4316, 126
      %v6557 = vpop.permute.xlu0 %6556
      %6558 = vrot.lane.b32.xlu0 %v4317, 126
      %v6559 = vpop.permute.xlu0 %6558
      %6560 = vrot.lane.b32.xlu0 %v4318, 126
      %v6561 = vpop.permute.xlu0 %6560
      %6562 = vrot.lane.b32.xlu0 %v4319, 126
      %v6563 = vpop.permute.xlu0 %6562
      %6564 = vrot.lane.b32.xlu0 %v4320, 126
      %v6565 = vpop.permute.xlu0 %6564
      %6566 = vrot.lane.b32.xlu0 %v4321, 126
      %v6567 = vpop.permute.xlu0 %6566
      %6568 = vrot.lane.b32.xlu0 %v4322, 126
      %v6569 = vpop.permute.xlu0 %6568
      %6570 = vrot.lane.b32.xlu0 %v4323, 126
      %v6571 = vpop.permute.xlu0 %6570
      %6572 = vrot.lane.b32.xlu0 %v4324, 126
      %v6573 = vpop.permute.xlu0 %6572
      %6574 = vrot.lane.b32.xlu0 %v4325, 126
      %v6575 = vpop.permute.xlu0 %6574
      %6576 = vrot.lane.b32.xlu0 %v4326, 126
      %v6577 = vpop.permute.xlu0 %6576
      %6578 = vrot.lane.b32.xlu0 %v4327, 126
      %v6579 = vpop.permute.xlu0 %6578
      %6580 = vrot.lane.b32.xlu0 %v4328, 126
      %v6581 = vpop.permute.xlu0 %6580
      %6582 = vrot.lane.b32.xlu0 %v4329, 126
      %v6583 = vpop.permute.xlu0 %6582
      %6584 = vrot.lane.b32.xlu0 %v4330, 126
      %v6585 = vpop.permute.xlu0 %6584
      %6586 = vrot.lane.b32.xlu0 %v4331, 126
      %v6587 = vpop.permute.xlu0 %6586
      %6588 = vrot.lane.b32.xlu0 %v4332, 126
      %v6589 = vpop.permute.xlu0 %6588
      %6590 = vrot.lane.b32.xlu0 %v4333, 126
      %v6591 = vpop.permute.xlu0 %6590
      %6592 = vrot.lane.b32.xlu0 %v4334, 126
      %v6593 = vpop.permute.xlu0 %6592
      %v6641 = vsel %vm4495, %v6384, 0
      %v6644 = vsel %vm4495, %v6387, 0
      %v6647 = vsel %vm4495, %v6390, 0
      %v6650 = vsel %vm4495, %v6393, 0
      %v6653 = vsel %vm4495, %v6396, 0
      %v6656 = vsel %vm4495, %v6399, 0
      %v6659 = vsel %vm4495, %v6402, 0
      %v6662 = vsel %vm4495, %v6405, 0
      %v6665 = vsel %vm4495, %v6408, 0
      %v6668 = vsel %vm4495, %v6411, 0
      %v6671 = vsel %vm4495, %v6414, 0
      %v6674 = vsel %vm4495, %v6417, 0
      %v6677 = vsel %vm4495, %v6420, 0
      %v6680 = vsel %vm4495, %v6423, 0
      %v6683 = vsel %vm4495, %v6426, 0
      %v6686 = vsel %vm4495, %v6429, 0
      %v6689 = vsel %vm4495, %v6432, 0
      %v6692 = vsel %vm4495, %v6435, 0
      %v6695 = vsel %vm4495, %v6438, 0
      %v6698 = vsel %vm4495, %v6441, 0
      %v6701 = vsel %vm4495, %v6444, 0
      %v6704 = vsel %vm4495, %v6447, 0
      %v6707 = vsel %vm4495, %v6450, 0
      %v6710 = vsel %vm4495, %v6453, 0
      %v6713 = vsel %vm4495, %v6456, 0
      %v6716 = vsel %vm4495, %v6459, 0
      %v6719 = vsel %vm4495, %v6462, 0
      %v6722 = vsel %vm4495, %v6465, 0
      %v6725 = vsel %vm4495, %v6468, 0
      %v6728 = vsel %vm4495, %v6471, 0
      %v6731 = vsel %vm4495, %v6474, 0
      %v6734 = vsel %vm4495, %v6477, 0
      %v6737 = vsel %vm4495, %v6480, 0
      %v6740 = vsel %vm4495, %v6483, 0
      %v6743 = vsel %vm4495, %v6486, 0
      %v6746 = vsel %vm4495, %v6489, 0
      %v6749 = vsel %vm4495, %v6492, 0
      %v6752 = vsel %vm4495, %v6495, 0
      %v6755 = vsel %vm4495, %v6498, 0
      %v6758 = vsel %vm4495, %v6501, 0
      %6760 = vmatprep.subr.mxu0 0.0
      %6761 = vmatpush1.msra.mxu0 %v6533
      %6762 = vmatprep.subr.mxu0 0.0
      %6763 = vmatpush1.msra.mxu0 %v6531
      %6764 = vmatprep.subr.mxu0 0.0
      %6765 = vmatpush1.msra.mxu0 %v6529
      %6766 = vmatprep.subr.mxu0 0.0
      %6767 = vmatpush1.msra.mxu0 %v6527
      %6768 = vmatprep.subr.mxu0 0.0
      %6769 = vmatpush1.msra.mxu0 %v6525
      %6770 = vmatprep.subr.mxu0 0.0
      %6771 = vmatpush1.msra.mxu0 %v6523
      %6772 = vmatprep.subr.mxu0 0.0
      %6773 = vmatpush1.msra.mxu0 %v6521
      %6774 = vmatprep.subr.mxu0 0.0
      %6775 = vmatpush1.msra.mxu0 %v6519
      %6776 = vmatprep.subr.mxu0 0.0
      %6777 = vmatpush1.msra.mxu0 %v6517
      %6778 = vmatprep.subr.mxu0 0.0
      %6779 = vmatpush1.msra.mxu0 %v6515
      %6780 = vmatprep.subr.mxu0 0.0
      %6781 = vmatpush1.msra.mxu0 %v6513
      %6782 = vmatprep.subr.mxu0 0.0
      %6783 = vmatpush1.msra.mxu0 %v6511
      %6784 = vmatprep.subr.mxu0 0.0
      %6785 = vmatpush1.msra.mxu0 %v6509
      %6786 = vmatprep.subr.mxu0 0.0
      %6787 = vmatpush1.msra.mxu0 %v6507
      %6788 = vmatprep.subr.mxu0 0.0
      %6789 = vmatpush1.msra.mxu0 %v6505
      %6790 = vmatprep.subr.mxu0 0.0
      %6791 = vmatpush1.msra.mxu0 %v6503
      %6792 = vmatprep.subr.mxu0 0.0
      %6793 = vmatpush2.msra.mxu0 %v6565
      %6794 = vmatprep.subr.mxu0 0.0
      %6795 = vmatpush2.msra.mxu0 %v6563
      %6796 = vmatprep.subr.mxu0 0.0
      %6797 = vmatpush2.msra.mxu0 %v6561
      %6798 = vmatprep.subr.mxu0 0.0
      %6799 = vmatpush2.msra.mxu0 %v6559
      %6800 = vmatprep.subr.mxu0 0.0
      %6801 = vmatpush2.msra.mxu0 %v6557
      %6802 = vmatprep.subr.mxu0 0.0
      %6803 = vmatpush2.msra.mxu0 %v6555
      %6804 = vmatprep.subr.mxu0 0.0
      %6805 = vmatpush2.msra.mxu0 %v6553
      %6806 = vmatprep.subr.mxu0 0.0
      %6807 = vmatpush2.msra.mxu0 %v6551
      %6808 = vmatprep.subr.mxu0 0.0
      %6809 = vmatpush2.msra.mxu0 %v6549
      %6810 = vmatprep.subr.mxu0 0.0
      %6811 = vmatpush2.msra.mxu0 %v6547
      %6812 = vmatprep.subr.mxu0 0.0
      %6813 = vmatpush2.msra.mxu0 %v6545
      %6814 = vmatprep.subr.mxu0 0.0
      %6815 = vmatpush2.msra.mxu0 %v6543
      %6816 = vmatprep.subr.mxu0 0.0
      %6817 = vmatpush2.msra.mxu0 %v6541
      %6818 = vmatprep.subr.mxu0 0.0
      %6819 = vmatpush2.msra.mxu0 %v6539
      %6820 = vmatprep.subr.mxu0 0.0
      %6821 = vmatpush2.msra.mxu0 %v6537
      %6822 = vmatprep.subr.mxu0 0.0
      %6823 = vmatpush2.msra.mxu0 %v6535
      %6824 = vmatprep.mubr.f32.mxu0 %v6383
      %6825 = vmatmul.mubr.f32.gmra.mxu0 %v6382
      %v6826 = vpop.f32.mrf.mxu0
      %v6827 = vadd.f32 0.0, %v6826
      %v6828 = vpop.f32.mrf.mxu0
      %6829 = vmatprep.mubr.f32.mxu0 %v6386
      %6830 = vmatmul.mubr.f32.gmra.mxu0 %v6385
      %v6831 = vpop.f32.mrf.mxu0
      %v6832 = vadd.f32 0.0, %v6831
      %v6833 = vpop.f32.mrf.mxu0
      %6834 = vmatprep.mubr.f32.mxu0 %v6389
      %6835 = vmatmul.mubr.f32.gmra.mxu0 %v6388
      %v6836 = vpop.f32.mrf.mxu0
      %v6837 = vadd.f32 0.0, %v6836
      %v6838 = vpop.f32.mrf.mxu0
      %6839 = vmatprep.mubr.f32.mxu0 %v6392
      %6840 = vmatmul.mubr.f32.gmra.mxu0 %v6391
      %v6841 = vpop.f32.mrf.mxu0
      %v6842 = vadd.f32 0.0, %v6841
      %v6843 = vpop.f32.mrf.mxu0
      %6844 = vmatprep.mubr.f32.mxu0 %v6395
      %6845 = vmatmul.mubr.f32.gmra.mxu0 %v6394
      %v6846 = vpop.f32.mrf.mxu0
      %v6847 = vadd.f32 0.0, %v6846
      %v6848 = vpop.f32.mrf.mxu0
      %6849 = vmatprep.mubr.f32.mxu0 %v6398
      %6850 = vmatmul.mubr.f32.gmra.mxu0 %v6397
      %v6851 = vpop.f32.mrf.mxu0
      %v6852 = vadd.f32 0.0, %v6851
      %v6853 = vpop.f32.mrf.mxu0
      %6854 = vmatprep.mubr.f32.mxu0 %v6401
      %6855 = vmatmul.mubr.f32.gmra.mxu0 %v6400
      %v6856 = vpop.f32.mrf.mxu0
      %v6857 = vadd.f32 0.0, %v6856
      %v6858 = vpop.f32.mrf.mxu0
      %6859 = vmatprep.mubr.f32.mxu0 %v6404
      %6860 = vmatmul.mubr.f32.gmra.mxu0 %v6403
      %v6861 = vpop.f32.mrf.mxu0
      %v6862 = vadd.f32 0.0, %v6861
      %v6863 = vpop.f32.mrf.mxu0
      %6864 = vmatprep.mubr.f32.mxu0 %v6407
      %6865 = vmatmul.mubr.f32.gmra.mxu0 %v6406
      %v6866 = vpop.f32.mrf.mxu0
      %v6867 = vadd.f32 0.0, %v6866
      %v6868 = vpop.f32.mrf.mxu0
      %6869 = vmatprep.mubr.f32.mxu0 %v6410
      %6870 = vmatmul.mubr.f32.gmra.mxu0 %v6409
      %v6871 = vpop.f32.mrf.mxu0
      %v6872 = vadd.f32 0.0, %v6871
      %v6873 = vpop.f32.mrf.mxu0
      %6874 = vmatprep.mubr.f32.mxu0 %v6413
      %6875 = vmatmul.mubr.f32.gmra.mxu0 %v6412
      %v6876 = vpop.f32.mrf.mxu0
      %v6877 = vadd.f32 0.0, %v6876
      %v6878 = vpop.f32.mrf.mxu0
      %6879 = vmatprep.mubr.f32.mxu0 %v6416
      %6880 = vmatmul.mubr.f32.gmra.mxu0 %v6415
      %v6881 = vpop.f32.mrf.mxu0
      %v6882 = vadd.f32 0.0, %v6881
      %v6883 = vpop.f32.mrf.mxu0
      %6884 = vmatprep.mubr.f32.mxu0 %v6419
      %6885 = vmatmul.mubr.f32.gmra.mxu0 %v6418
      %v6886 = vpop.f32.mrf.mxu0
      %v6887 = vadd.f32 0.0, %v6886
      %v6888 = vpop.f32.mrf.mxu0
      %6889 = vmatprep.mubr.f32.mxu0 %v6422
      %6890 = vmatmul.mubr.f32.gmra.mxu0 %v6421
      %v6891 = vpop.f32.mrf.mxu0
      %v6892 = vadd.f32 0.0, %v6891
      %v6893 = vpop.f32.mrf.mxu0
      %6894 = vmatprep.mubr.f32.mxu0 %v6425
      %6895 = vmatmul.mubr.f32.gmra.mxu0 %v6424
      %v6896 = vpop.f32.mrf.mxu0
      %v6897 = vadd.f32 0.0, %v6896
      %v6898 = vpop.f32.mrf.mxu0
      %6899 = vmatprep.mubr.f32.mxu0 %v6428
      %6900 = vmatmul.mubr.f32.gmra.mxu0 %v6427
      %v6901 = vpop.f32.mrf.mxu0
      %v6902 = vadd.f32 0.0, %v6901
      %v6903 = vpop.f32.mrf.mxu0
      %6904 = vmatprep.mubr.f32.mxu0 %v6431
      %6905 = vmatmul.mubr.f32.gmra.mxu0 %v6430
      %v6906 = vpop.f32.mrf.mxu0
      %v6907 = vadd.f32 0.0, %v6906
      %v6908 = vpop.f32.mrf.mxu0
      %6909 = vmatprep.mubr.f32.mxu0 %v6434
      %6910 = vmatmul.mubr.f32.gmra.mxu0 %v6433
      %v6911 = vpop.f32.mrf.mxu0
      %v6912 = vadd.f32 0.0, %v6911
      %v6913 = vpop.f32.mrf.mxu0
      %6914 = vmatprep.mubr.f32.mxu0 %v6437
      %6915 = vmatmul.mubr.f32.gmra.mxu0 %v6436
      %v6916 = vpop.f32.mrf.mxu0
      %v6917 = vadd.f32 0.0, %v6916
      %v6918 = vpop.f32.mrf.mxu0
      %6919 = vmatprep.mubr.f32.mxu0 %v6440
      %6920 = vmatmul.mubr.f32.gmra.mxu0 %v6439
      %v6921 = vpop.f32.mrf.mxu0
      %v6922 = vadd.f32 0.0, %v6921
      %v6923 = vpop.f32.mrf.mxu0
      %6924 = vmatprep.mubr.f32.mxu0 %v6443
      %6925 = vmatmul.mubr.f32.gmra.mxu0 %v6442
      %v6926 = vpop.f32.mrf.mxu0
      %v6927 = vadd.f32 0.0, %v6926
      %v6928 = vpop.f32.mrf.mxu0
      %6929 = vmatprep.mubr.f32.mxu0 %v6446
      %6930 = vmatmul.mubr.f32.gmra.mxu0 %v6445
      %v6931 = vpop.f32.mrf.mxu0
      %v6932 = vadd.f32 0.0, %v6931
      %v6933 = vpop.f32.mrf.mxu0
      %6934 = vmatprep.mubr.f32.mxu0 %v6449
      %6935 = vmatmul.mubr.f32.gmra.mxu0 %v6448
      %v6936 = vpop.f32.mrf.mxu0
      %v6937 = vadd.f32 0.0, %v6936
      %v6938 = vpop.f32.mrf.mxu0
      %6939 = vmatprep.mubr.f32.mxu0 %v6452
      %6940 = vmatmul.mubr.f32.gmra.mxu0 %v6451
      %v6941 = vpop.f32.mrf.mxu0
      %v6942 = vadd.f32 0.0, %v6941
      %v6943 = vpop.f32.mrf.mxu0
      %6944 = vmatprep.mubr.f32.mxu0 %v6455
      %6945 = vmatmul.mubr.f32.gmra.mxu0 %v6454
      %v6946 = vpop.f32.mrf.mxu0
      %v6947 = vadd.f32 0.0, %v6946
      %v6948 = vpop.f32.mrf.mxu0
      %6949 = vmatprep.mubr.f32.mxu0 %v6458
      %6950 = vmatmul.mubr.f32.gmra.mxu0 %v6457
      %v6951 = vpop.f32.mrf.mxu0
      %v6952 = vadd.f32 0.0, %v6951
      %v6953 = vpop.f32.mrf.mxu0
      %6954 = vmatprep.mubr.f32.mxu0 %v6461
      %6955 = vmatmul.mubr.f32.gmra.mxu0 %v6460
      %v6956 = vpop.f32.mrf.mxu0
      %v6957 = vadd.f32 0.0, %v6956
      %v6958 = vpop.f32.mrf.mxu0
      %6959 = vmatprep.mubr.f32.mxu0 %v6464
      %6960 = vmatmul.mubr.f32.gmra.mxu0 %v6463
      %v6961 = vpop.f32.mrf.mxu0
      %v6962 = vadd.f32 0.0, %v6961
      %v6963 = vpop.f32.mrf.mxu0
      %6964 = vmatprep.mubr.f32.mxu0 %v6467
      %6965 = vmatmul.mubr.f32.gmra.mxu0 %v6466
      %v6966 = vpop.f32.mrf.mxu0
      %v6967 = vadd.f32 0.0, %v6966
      %v6968 = vpop.f32.mrf.mxu0
      %6969 = vmatprep.mubr.f32.mxu0 %v6470
      %6970 = vmatmul.mubr.f32.gmra.mxu0 %v6469
      %v6971 = vpop.f32.mrf.mxu0
      %v6972 = vadd.f32 0.0, %v6971
      %v6973 = vpop.f32.mrf.mxu0
      %6974 = vmatprep.mubr.f32.mxu0 %v6473
      %6975 = vmatmul.mubr.f32.gmra.mxu0 %v6472
      %v6976 = vpop.f32.mrf.mxu0
      %v6977 = vadd.f32 0.0, %v6976
      %v6978 = vpop.f32.mrf.mxu0
      %6979 = vmatprep.mubr.f32.mxu0 %v6476
      %6980 = vmatmul.mubr.f32.gmra.mxu0 %v6475
      %v6981 = vpop.f32.mrf.mxu0
      %v6982 = vadd.f32 0.0, %v6981
      %v6983 = vpop.f32.mrf.mxu0
      %6984 = vmatprep.mubr.f32.mxu0 %v6479
      %6985 = vmatmul.mubr.f32.gmra.mxu0 %v6478
      %v6986 = vpop.f32.mrf.mxu0
      %v6987 = vadd.f32 0.0, %v6986
      %v6988 = vpop.f32.mrf.mxu0
      %6989 = vmatprep.mubr.f32.mxu0 %v6482
      %6990 = vmatmul.mubr.f32.gmra.mxu0 %v6481
      %v6991 = vpop.f32.mrf.mxu0
      %v6992 = vadd.f32 0.0, %v6991
      %v6993 = vpop.f32.mrf.mxu0
      %6994 = vmatprep.mubr.f32.mxu0 %v6485
      %6995 = vmatmul.mubr.f32.gmra.mxu0 %v6484
      %v6996 = vpop.f32.mrf.mxu0
      %v6997 = vadd.f32 0.0, %v6996
      %v6998 = vpop.f32.mrf.mxu0
      %6999 = vmatprep.mubr.f32.mxu0 %v6488
      %7000 = vmatmul.mubr.f32.gmra.mxu0 %v6487
      %v7001 = vpop.f32.mrf.mxu0
      %v7002 = vadd.f32 0.0, %v7001
      %v7003 = vpop.f32.mrf.mxu0
      %7004 = vmatprep.mubr.f32.mxu0 %v6491
      %7005 = vmatmul.mubr.f32.gmra.mxu0 %v6490
      %v7006 = vpop.f32.mrf.mxu0
      %v7007 = vadd.f32 0.0, %v7006
      %v7008 = vpop.f32.mrf.mxu0
      %7009 = vmatprep.mubr.f32.mxu0 %v6494
      %7010 = vmatmul.mubr.f32.gmra.mxu0 %v6493
      %v7011 = vpop.f32.mrf.mxu0
      %v7012 = vadd.f32 0.0, %v7011
      %v7013 = vpop.f32.mrf.mxu0
      %7014 = vmatprep.mubr.f32.mxu0 %v6497
      %7015 = vmatmul.mubr.f32.gmra.mxu0 %v6496
      %v7016 = vpop.f32.mrf.mxu0
      %v7017 = vadd.f32 0.0, %v7016
      %v7018 = vpop.f32.mrf.mxu0
      %7019 = vmatprep.mubr.f32.mxu0 %v6500
      %7020 = vmatmul.mubr.f32.gmra.mxu0 %v6499
      %v7021 = vpop.f32.mrf.mxu0
      %v7022 = vadd.f32 0.0, %v7021
      %v7023 = vpop.f32.mrf.mxu0
      %7024 = vdwg.mxu0
      %7025 = vmatprep.subr.mxu0 0.0
      %7026 = vmatpush1.msra.mxu0 0.0
      %7027 = vmatprep.subr.mxu0 0.0
      %7028 = vmatpush1.msra.mxu0 0.0
      %7029 = vmatprep.subr.mxu0 0.0
      %7030 = vmatpush1.msra.mxu0 %v6593
      %7031 = vmatprep.subr.mxu0 0.0
      %7032 = vmatpush1.msra.mxu0 %v6591
      %7033 = vmatprep.subr.mxu0 0.0
      %7034 = vmatpush1.msra.mxu0 %v6589
      %7035 = vmatprep.subr.mxu0 0.0
      %7036 = vmatpush1.msra.mxu0 %v6587
      %7037 = vmatprep.subr.mxu0 0.0
      %7038 = vmatpush1.msra.mxu0 %v6585
      %7039 = vmatprep.subr.mxu0 0.0
      %7040 = vmatpush1.msra.mxu0 %v6583
      %7041 = vmatprep.subr.mxu0 0.0
      %7042 = vmatpush1.msra.mxu0 %v6581
      %7043 = vmatprep.subr.mxu0 0.0
      %7044 = vmatpush1.msra.mxu0 %v6579
      %7045 = vmatprep.subr.mxu0 0.0
      %7046 = vmatpush1.msra.mxu0 %v6577
      %7047 = vmatprep.subr.mxu0 0.0
      %7048 = vmatpush1.msra.mxu0 %v6575
      %7049 = vmatprep.subr.mxu0 0.0
      %7050 = vmatpush1.msra.mxu0 %v6573
      %7051 = vmatprep.subr.mxu0 0.0
      %7052 = vmatpush1.msra.mxu0 %v6571
      %7053 = vmatprep.subr.mxu0 0.0
      %7054 = vmatpush1.msra.mxu0 %v6569
      %7055 = vmatprep.subr.mxu0 0.0
      %7056 = vmatpush1.msra.mxu0 %v6567
      %7057 = vmatprep.subr.mxu0 0.0
      %7058 = vmatpush2.msra.mxu0 0.0
      %7059 = vmatprep.subr.mxu0 0.0
      %7060 = vmatpush2.msra.mxu0 0.0
      %7061 = vmatprep.subr.mxu0 0.0
      %7062 = vmatpush2.msra.mxu0 0.0
      %7063 = vmatprep.subr.mxu0 0.0
      %7064 = vmatpush2.msra.mxu0 0.0
      %7065 = vmatprep.subr.mxu0 0.0
      %7066 = vmatpush2.msra.mxu0 0.0
      %7067 = vmatprep.subr.mxu0 0.0
      %7068 = vmatpush2.msra.mxu0 0.0
      %7069 = vmatprep.subr.mxu0 0.0
      %7070 = vmatpush2.msra.mxu0 0.0
      %7071 = vmatprep.subr.mxu0 0.0
      %7072 = vmatpush2.msra.mxu0 0.0
      %7073 = vmatprep.subr.mxu0 0.0
      %7074 = vmatpush2.msra.mxu0 0.0
      %7075 = vmatprep.subr.mxu0 0.0
      %7076 = vmatpush2.msra.mxu0 0.0
      %7077 = vmatprep.subr.mxu0 0.0
      %7078 = vmatpush2.msra.mxu0 0.0
      %7079 = vmatprep.subr.mxu0 0.0
      %7080 = vmatpush2.msra.mxu0 0.0
      %7081 = vmatprep.subr.mxu0 0.0
      %7082 = vmatpush2.msra.mxu0 0.0
      %7083 = vmatprep.subr.mxu0 0.0
      %7084 = vmatpush2.msra.mxu0 0.0
      %7085 = vmatprep.subr.mxu0 0.0
      %7086 = vmatpush2.msra.mxu0 0.0
      %7087 = vmatprep.subr.mxu0 0.0
      %7088 = vmatpush2.msra.mxu0 0.0
      %7089 = vmatprep.mubr.f32.mxu0 0.0
      %7090 = vmatmul.mubr.f32.gmra.mxu0 %v6641
      %v7091 = vpop.f32.mrf.mxu0
      %v7092 = vadd.f32 %v6827, %v7091
      %v7093 = vpop.f32.mrf.mxu0
      %7094 = vmatprep.mubr.f32.mxu0 0.0
      %7095 = vmatmul.mubr.f32.gmra.mxu0 %v6644
      %v7096 = vpop.f32.mrf.mxu0
      %v7097 = vadd.f32 %v6832, %v7096
      %v7098 = vpop.f32.mrf.mxu0
      %7099 = vmatprep.mubr.f32.mxu0 0.0
      %7100 = vmatmul.mubr.f32.gmra.mxu0 %v6647
      %v7101 = vpop.f32.mrf.mxu0
      %v7102 = vadd.f32 %v6837, %v7101
      %v7103 = vpop.f32.mrf.mxu0
      %7104 = vmatprep.mubr.f32.mxu0 0.0
      %7105 = vmatmul.mubr.f32.gmra.mxu0 %v6650
      %v7106 = vpop.f32.mrf.mxu0
      %v7107 = vadd.f32 %v6842, %v7106
      %v7108 = vpop.f32.mrf.mxu0
      %7109 = vmatprep.mubr.f32.mxu0 0.0
      %7110 = vmatmul.mubr.f32.gmra.mxu0 %v6653
      %v7111 = vpop.f32.mrf.mxu0
      %v7112 = vadd.f32 %v6847, %v7111
      %v7113 = vpop.f32.mrf.mxu0
      %7114 = vmatprep.mubr.f32.mxu0 0.0
      %7115 = vmatmul.mubr.f32.gmra.mxu0 %v6656
      %v7116 = vpop.f32.mrf.mxu0
      %v7117 = vadd.f32 %v6852, %v7116
      %v7118 = vpop.f32.mrf.mxu0
      %7119 = vmatprep.mubr.f32.mxu0 0.0
      %7120 = vmatmul.mubr.f32.gmra.mxu0 %v6659
      %v7121 = vpop.f32.mrf.mxu0
      %v7122 = vadd.f32 %v6857, %v7121
      %v7123 = vpop.f32.mrf.mxu0
      %7124 = vmatprep.mubr.f32.mxu0 0.0
      %7125 = vmatmul.mubr.f32.gmra.mxu0 %v6662
      %v7126 = vpop.f32.mrf.mxu0
      %v7127 = vadd.f32 %v6862, %v7126
      %v7128 = vpop.f32.mrf.mxu0
      %7129 = vmatprep.mubr.f32.mxu0 0.0
      %7130 = vmatmul.mubr.f32.gmra.mxu0 %v6665
      %v7131 = vpop.f32.mrf.mxu0
      %v7132 = vadd.f32 %v6867, %v7131
      %v7133 = vpop.f32.mrf.mxu0
      %7134 = vmatprep.mubr.f32.mxu0 0.0
      %7135 = vmatmul.mubr.f32.gmra.mxu0 %v6668
      %v7136 = vpop.f32.mrf.mxu0
      %v7137 = vadd.f32 %v6872, %v7136
      %v7138 = vpop.f32.mrf.mxu0
      %7139 = vmatprep.mubr.f32.mxu0 0.0
      %7140 = vmatmul.mubr.f32.gmra.mxu0 %v6671
      %v7141 = vpop.f32.mrf.mxu0
      %v7142 = vadd.f32 %v6877, %v7141
      %v7143 = vpop.f32.mrf.mxu0
      %7144 = vmatprep.mubr.f32.mxu0 0.0
      %7145 = vmatmul.mubr.f32.gmra.mxu0 %v6674
      %v7146 = vpop.f32.mrf.mxu0
      %v7147 = vadd.f32 %v6882, %v7146
      %v7148 = vpop.f32.mrf.mxu0
      %7149 = vmatprep.mubr.f32.mxu0 0.0
      %7150 = vmatmul.mubr.f32.gmra.mxu0 %v6677
      %v7151 = vpop.f32.mrf.mxu0
      %v7152 = vadd.f32 %v6887, %v7151
      %v7153 = vpop.f32.mrf.mxu0
      %7154 = vmatprep.mubr.f32.mxu0 0.0
      %7155 = vmatmul.mubr.f32.gmra.mxu0 %v6680
      %v7156 = vpop.f32.mrf.mxu0
      %v7157 = vadd.f32 %v6892, %v7156
      %v7158 = vpop.f32.mrf.mxu0
      %7159 = vmatprep.mubr.f32.mxu0 0.0
      %7160 = vmatmul.mubr.f32.gmra.mxu0 %v6683
      %v7161 = vpop.f32.mrf.mxu0
      %v7162 = vadd.f32 %v6897, %v7161
      %v7163 = vpop.f32.mrf.mxu0
      %7164 = vmatprep.mubr.f32.mxu0 0.0
      %7165 = vmatmul.mubr.f32.gmra.mxu0 %v6686
      %v7166 = vpop.f32.mrf.mxu0
      %v7167 = vadd.f32 %v6902, %v7166
      %v7168 = vpop.f32.mrf.mxu0
      %7169 = vmatprep.mubr.f32.mxu0 0.0
      %7170 = vmatmul.mubr.f32.gmra.mxu0 %v6689
      %v7171 = vpop.f32.mrf.mxu0
      %v7172 = vadd.f32 %v6907, %v7171
      %v7173 = vpop.f32.mrf.mxu0
      %7174 = vmatprep.mubr.f32.mxu0 0.0
      %7175 = vmatmul.mubr.f32.gmra.mxu0 %v6692
      %v7176 = vpop.f32.mrf.mxu0
      %v7177 = vadd.f32 %v6912, %v7176
      %v7178 = vpop.f32.mrf.mxu0
      %7179 = vmatprep.mubr.f32.mxu0 0.0
      %7180 = vmatmul.mubr.f32.gmra.mxu0 %v6695
      %v7181 = vpop.f32.mrf.mxu0
      %v7182 = vadd.f32 %v6917, %v7181
      %v7183 = vpop.f32.mrf.mxu0
      %7184 = vmatprep.mubr.f32.mxu0 0.0
      %7185 = vmatmul.mubr.f32.gmra.mxu0 %v6698
      %v7186 = vpop.f32.mrf.mxu0
      %v7187 = vadd.f32 %v6922, %v7186
      %v7188 = vpop.f32.mrf.mxu0
      %7189 = vmatprep.mubr.f32.mxu0 0.0
      %7190 = vmatmul.mubr.f32.gmra.mxu0 %v6701
      %v7191 = vpop.f32.mrf.mxu0
      %v7192 = vadd.f32 %v6927, %v7191
      %v7193 = vpop.f32.mrf.mxu0
      %7194 = vmatprep.mubr.f32.mxu0 0.0
      %7195 = vmatmul.mubr.f32.gmra.mxu0 %v6704
      %v7196 = vpop.f32.mrf.mxu0
      %v7197 = vadd.f32 %v6932, %v7196
      %v7198 = vpop.f32.mrf.mxu0
      %7199 = vmatprep.mubr.f32.mxu0 0.0
      %7200 = vmatmul.mubr.f32.gmra.mxu0 %v6707
      %v7201 = vpop.f32.mrf.mxu0
      %v7202 = vadd.f32 %v6937, %v7201
      %v7203 = vpop.f32.mrf.mxu0
      %7204 = vmatprep.mubr.f32.mxu0 0.0
      %7205 = vmatmul.mubr.f32.gmra.mxu0 %v6710
      %v7206 = vpop.f32.mrf.mxu0
      %v7207 = vadd.f32 %v6942, %v7206
      %v7208 = vpop.f32.mrf.mxu0
      %7209 = vmatprep.mubr.f32.mxu0 0.0
      %7210 = vmatmul.mubr.f32.gmra.mxu0 %v6713
      %v7211 = vpop.f32.mrf.mxu0
      %v7212 = vadd.f32 %v6947, %v7211
      %v7213 = vpop.f32.mrf.mxu0
      %7214 = vmatprep.mubr.f32.mxu0 0.0
      %7215 = vmatmul.mubr.f32.gmra.mxu0 %v6716
      %v7216 = vpop.f32.mrf.mxu0
      %v7217 = vadd.f32 %v6952, %v7216
      %v7218 = vpop.f32.mrf.mxu0
      %7219 = vmatprep.mubr.f32.mxu0 0.0
      %7220 = vmatmul.mubr.f32.gmra.mxu0 %v6719
      %v7221 = vpop.f32.mrf.mxu0
      %v7222 = vadd.f32 %v6957, %v7221
      %v7223 = vpop.f32.mrf.mxu0
      %7224 = vmatprep.mubr.f32.mxu0 0.0
      %7225 = vmatmul.mubr.f32.gmra.mxu0 %v6722
      %v7226 = vpop.f32.mrf.mxu0
      %v7227 = vadd.f32 %v6962, %v7226
      %v7228 = vpop.f32.mrf.mxu0
      %7229 = vmatprep.mubr.f32.mxu0 0.0
      %7230 = vmatmul.mubr.f32.gmra.mxu0 %v6725
      %v7231 = vpop.f32.mrf.mxu0
      %v7232 = vadd.f32 %v6967, %v7231
      %v7233 = vpop.f32.mrf.mxu0
      %7234 = vmatprep.mubr.f32.mxu0 0.0
      %7235 = vmatmul.mubr.f32.gmra.mxu0 %v6728
      %v7236 = vpop.f32.mrf.mxu0
      %v7237 = vadd.f32 %v6972, %v7236
      %v7238 = vpop.f32.mrf.mxu0
      %7239 = vmatprep.mubr.f32.mxu0 0.0
      %7240 = vmatmul.mubr.f32.gmra.mxu0 %v6731
      %v7241 = vpop.f32.mrf.mxu0
      %v7242 = vadd.f32 %v6977, %v7241
      %v7243 = vpop.f32.mrf.mxu0
      %7244 = vmatprep.mubr.f32.mxu0 0.0
      %7245 = vmatmul.mubr.f32.gmra.mxu0 %v6734
      %v7246 = vpop.f32.mrf.mxu0
      %v7247 = vadd.f32 %v6982, %v7246
      %v7248 = vpop.f32.mrf.mxu0
      %7249 = vmatprep.mubr.f32.mxu0 0.0
      %7250 = vmatmul.mubr.f32.gmra.mxu0 %v6737
      %v7251 = vpop.f32.mrf.mxu0
      %v7252 = vadd.f32 %v6987, %v7251
      %v7253 = vpop.f32.mrf.mxu0
      %7254 = vmatprep.mubr.f32.mxu0 0.0
      %7255 = vmatmul.mubr.f32.gmra.mxu0 %v6740
      %v7256 = vpop.f32.mrf.mxu0
      %v7257 = vadd.f32 %v6992, %v7256
      %v7258 = vpop.f32.mrf.mxu0
      %7259 = vmatprep.mubr.f32.mxu0 0.0
      %7260 = vmatmul.mubr.f32.gmra.mxu0 %v6743
      %v7261 = vpop.f32.mrf.mxu0
      %v7262 = vadd.f32 %v6997, %v7261
      %v7263 = vpop.f32.mrf.mxu0
      %7264 = vmatprep.mubr.f32.mxu0 0.0
      %7265 = vmatmul.mubr.f32.gmra.mxu0 %v6746
      %v7266 = vpop.f32.mrf.mxu0
      %v7267 = vadd.f32 %v7002, %v7266
      %v7268 = vpop.f32.mrf.mxu0
      %7269 = vmatprep.mubr.f32.mxu0 0.0
      %7270 = vmatmul.mubr.f32.gmra.mxu0 %v6749
      %v7271 = vpop.f32.mrf.mxu0
      %v7272 = vadd.f32 %v7007, %v7271
      %v7273 = vpop.f32.mrf.mxu0
      %7274 = vmatprep.mubr.f32.mxu0 0.0
      %7275 = vmatmul.mubr.f32.gmra.mxu0 %v6752
      %v7276 = vpop.f32.mrf.mxu0
      %v7277 = vadd.f32 %v7012, %v7276
      %v7278 = vpop.f32.mrf.mxu0
      %7279 = vmatprep.mubr.f32.mxu0 0.0
      %7280 = vmatmul.mubr.f32.gmra.mxu0 %v6755
      %v7281 = vpop.f32.mrf.mxu0
      %v7282 = vadd.f32 %v7017, %v7281
      %v7283 = vpop.f32.mrf.mxu0
      %7284 = vmatprep.mubr.f32.mxu0 0.0
      %7285 = vmatmul.mubr.f32.gmra.mxu0 %v6758
      %v7286 = vpop.f32.mrf.mxu0
      %v7287 = vadd.f32 %v7022, %v7286
      %v7288 = vpop.f32.mrf.mxu0
      %7289 = vdwg.mxu0
      %v7290 = vadd.f32 %v6341, %v7092
      %v7291 = vadd.f32 %v6342, %v7097
      %v7292 = vadd.f32 %v6343, %v7102
      %v7293 = vadd.f32 %v6344, %v7107
      %v7294 = vadd.f32 %v6345, %v7112
      %v7295 = vadd.f32 %v6346, %v7117
      %v7296 = vadd.f32 %v6347, %v7122
      %v7297 = vadd.f32 %v6348, %v7127
      %v7298 = vadd.f32 %v6349, %v7132
      %v7299 = vadd.f32 %v6350, %v7137
      %v7300 = vadd.f32 %v6351, %v7142
      %v7301 = vadd.f32 %v6352, %v7147
      %v7302 = vadd.f32 %v6353, %v7152
      %v7303 = vadd.f32 %v6354, %v7157
      %v7304 = vadd.f32 %v6355, %v7162
      %v7305 = vadd.f32 %v6356, %v7167
      %v7306 = vadd.f32 %v6357, %v7172
      %v7307 = vadd.f32 %v6358, %v7177
      %v7308 = vadd.f32 %v6359, %v7182
      %v7309 = vadd.f32 %v6360, %v7187
      %v7310 = vadd.f32 %v6361, %v7192
      %v7311 = vadd.f32 %v6362, %v7197
      %v7312 = vadd.f32 %v6363, %v7202
      %v7313 = vadd.f32 %v6364, %v7207
      %v7314 = vadd.f32 %v6365, %v7212
      %v7315 = vadd.f32 %v6366, %v7217
      %v7316 = vadd.f32 %v6367, %v7222
      %v7317 = vadd.f32 %v6368, %v7227
      %v7318 = vadd.f32 %v6369, %v7232
      %v7319 = vadd.f32 %v6370, %v7237
      %v7320 = vadd.f32 %v6371, %v7242
      %v7321 = vadd.f32 %v6372, %v7247
      %v7322 = vadd.f32 %v6373, %v7252
      %v7323 = vadd.f32 %v6374, %v7257
      %v7324 = vadd.f32 %v6375, %v7262
      %v7325 = vadd.f32 %v6376, %v7267
      %v7326 = vadd.f32 %v6377, %v7272
      %v7327 = vadd.f32 %v6378, %v7277
      %v7328 = vadd.f32 %v6379, %v7282
      %v7329 = vadd.f32 %v6380, %v7287
      %vm7330 = vcmask 80896
      %v7332 = vsel %vm7330, %v7290, 0
      %v7335 = vsel %vm7330, %v7291, 0
      %v7338 = vsel %vm7330, %v7292, 0
      %v7341 = vsel %vm7330, %v7293, 0
      %v7344 = vsel %vm7330, %v7294, 0
      %v7347 = vsel %vm7330, %v7295, 0
      %v7350 = vsel %vm7330, %v7296, 0
      %v7353 = vsel %vm7330, %v7297, 0
      %v7356 = vsel %vm7330, %v7298, 0
      %v7359 = vsel %vm7330, %v7299, 0
      %v7362 = vsel %vm7330, %v7300, 0
      %v7365 = vsel %vm7330, %v7301, 0
      %v7368 = vsel %vm7330, %v7302, 0
      %v7371 = vsel %vm7330, %v7303, 0
      %v7374 = vsel %vm7330, %v7304, 0
      %v7377 = vsel %vm7330, %v7305, 0
      %v7380 = vsel %vm7330, %v7306, 0
      %v7383 = vsel %vm7330, %v7307, 0
      %v7386 = vsel %vm7330, %v7308, 0
      %v7389 = vsel %vm7330, %v7309, 0
      %v7392 = vsel %vm7330, %v7310, 0
      %v7395 = vsel %vm7330, %v7311, 0
      %v7398 = vsel %vm7330, %v7312, 0
      %v7401 = vsel %vm7330, %v7313, 0
      %v7404 = vsel %vm7330, %v7314, 0
      %v7407 = vsel %vm7330, %v7315, 0
      %v7410 = vsel %vm7330, %v7316, 0
      %v7413 = vsel %vm7330, %v7317, 0
      %v7416 = vsel %vm7330, %v7318, 0
      %v7419 = vsel %vm7330, %v7319, 0
      %v7422 = vsel %vm7330, %v7320, 0
      %v7425 = vsel %vm7330, %v7321, 0
      %v7428 = vsel %vm7330, %v7322, 0
      %v7431 = vsel %vm7330, %v7323, 0
      %v7434 = vsel %vm7330, %v7324, 0
      %v7437 = vsel %vm7330, %v7325, 0
      %v7440 = vsel %vm7330, %v7326, 0
      %v7443 = vsel %vm7330, %v7327, 0
      %v7446 = vsel %vm7330, %v7328, 0
      %v7449 = vsel %vm7330, %v7329, 0
      %vm7451 = vcmask 1041408
      %v7453 = vsel %vm7451, %v3428, 0
      %7455 = vmatprep.subr.mxu0 0.0
      %7456 = vmatpush1.msra.mxu0 0.0
      %7457 = vmatprep.subr.mxu0 0.0
      %7458 = vmatpush1.msra.mxu0 0.0
      %7459 = vmatprep.subr.mxu0 0.0
      %7460 = vmatpush1.msra.mxu0 0.0
      %7461 = vmatprep.subr.mxu0 0.0
      %7462 = vmatpush1.msra.mxu0 0.0
      %7463 = vmatprep.subr.mxu0 0.0
      %7464 = vmatpush1.msra.mxu0 0.0
      %7465 = vmatprep.subr.mxu0 0.0
      %7466 = vmatpush1.msra.mxu0 0.0
      %7467 = vmatprep.subr.mxu0 0.0
      %7468 = vmatpush1.msra.mxu0 0.0
      %7469 = vmatprep.subr.mxu0 0.0
      %7470 = vmatpush1.msra.mxu0 0.0
      %7471 = vmatprep.subr.mxu0 0.0
      %7472 = vmatpush1.msra.mxu0 0.0
      %7473 = vmatprep.subr.mxu0 0.0
      %7474 = vmatpush1.msra.mxu0 0.0
      %7475 = vmatprep.subr.mxu0 0.0
      %7476 = vmatpush1.msra.mxu0 0.0
      %7477 = vmatprep.subr.mxu0 0.0
      %7478 = vmatpush1.msra.mxu0 0.0
      %7479 = vmatprep.subr.mxu0 0.0
      %7480 = vmatpush1.msra.mxu0 0.0
      %7481 = vmatprep.subr.mxu0 0.0
      %7482 = vmatpush1.msra.mxu0 0.0
      %7483 = vmatprep.subr.mxu0 0.0
      %7484 = vmatpush1.msra.mxu0 %v7453
      %7485 = vmatprep.subr.mxu0 0.0
      %7486 = vmatpush1.msra.mxu0 %v3427
      %7487 = vmatprep.subr.mxu0 0.0
      %7488 = vmatpush2.msra.mxu0 0.0
      %7489 = vmatprep.subr.mxu0 0.0
      %7490 = vmatpush2.msra.mxu0 0.0
      %7491 = vmatprep.subr.mxu0 0.0
      %7492 = vmatpush2.msra.mxu0 0.0
      %7493 = vmatprep.subr.mxu0 0.0
      %7494 = vmatpush2.msra.mxu0 0.0
      %7495 = vmatprep.subr.mxu0 0.0
      %7496 = vmatpush2.msra.mxu0 0.0
      %7497 = vmatprep.subr.mxu0 0.0
      %7498 = vmatpush2.msra.mxu0 0.0
      %7499 = vmatprep.subr.mxu0 0.0
      %7500 = vmatpush2.msra.mxu0 0.0
      %7501 = vmatprep.subr.mxu0 0.0
      %7502 = vmatpush2.msra.mxu0 0.0
      %7503 = vmatprep.subr.mxu0 0.0
      %7504 = vmatpush2.msra.mxu0 0.0
      %7505 = vmatprep.subr.mxu0 0.0
      %7506 = vmatpush2.msra.mxu0 0.0
      %7507 = vmatprep.subr.mxu0 0.0
      %7508 = vmatpush2.msra.mxu0 0.0
      %7509 = vmatprep.subr.mxu0 0.0
      %7510 = vmatpush2.msra.mxu0 0.0
      %7511 = vmatprep.subr.mxu0 0.0
      %7512 = vmatpush2.msra.mxu0 0.0
      %7513 = vmatprep.subr.mxu0 0.0
      %7514 = vmatpush2.msra.mxu0 0.0
      %7515 = vmatprep.subr.mxu0 0.0
      %7516 = vmatpush2.msra.mxu0 0.0
      %7517 = vmatprep.subr.mxu0 0.0
      %7518 = vmatpush2.msra.mxu0 0.0
      %7519 = vmatprep.mubr.f32.mxu0 0.0
      %7520 = vmatmul.mubr.f32.gmra.mxu0 %v7332
      %v7521 = vpop.f32.mrf.mxu0
      %v7522 = vadd.f32 0.0, %v7521
      %v7523 = vpop.f32.mrf.mxu0
      %7524 = vmatprep.mubr.f32.mxu0 0.0
      %7525 = vmatmul.mubr.f32.gmra.mxu0 %v7335
      %v7526 = vpop.f32.mrf.mxu0
      %v7527 = vadd.f32 0.0, %v7526
      %v7528 = vpop.f32.mrf.mxu0
      %7529 = vmatprep.mubr.f32.mxu0 0.0
      %7530 = vmatmul.mubr.f32.gmra.mxu0 %v7338
      %v7531 = vpop.f32.mrf.mxu0
      %v7532 = vadd.f32 0.0, %v7531
      %v7533 = vpop.f32.mrf.mxu0
      %7534 = vmatprep.mubr.f32.mxu0 0.0
      %7535 = vmatmul.mubr.f32.gmra.mxu0 %v7341
      %v7536 = vpop.f32.mrf.mxu0
      %v7537 = vadd.f32 0.0, %v7536
      %v7538 = vpop.f32.mrf.mxu0
      %7539 = vmatprep.mubr.f32.mxu0 0.0
      %7540 = vmatmul.mubr.f32.gmra.mxu0 %v7344
      %v7541 = vpop.f32.mrf.mxu0
      %v7542 = vadd.f32 0.0, %v7541
      %v7543 = vpop.f32.mrf.mxu0
      %7544 = vmatprep.mubr.f32.mxu0 0.0
      %7545 = vmatmul.mubr.f32.gmra.mxu0 %v7347
      %v7546 = vpop.f32.mrf.mxu0
      %v7547 = vadd.f32 0.0, %v7546
      %v7548 = vpop.f32.mrf.mxu0
      %7549 = vmatprep.mubr.f32.mxu0 0.0
      %7550 = vmatmul.mubr.f32.gmra.mxu0 %v7350
      %v7551 = vpop.f32.mrf.mxu0
      %v7552 = vadd.f32 0.0, %v7551
      %v7553 = vpop.f32.mrf.mxu0
      %7554 = vmatprep.mubr.f32.mxu0 0.0
      %7555 = vmatmul.mubr.f32.gmra.mxu0 %v7353
      %v7556 = vpop.f32.mrf.mxu0
      %v7557 = vadd.f32 0.0, %v7556
      %v7558 = vpop.f32.mrf.mxu0
      %7559 = vmatprep.mubr.f32.mxu0 0.0
      %7560 = vmatmul.mubr.f32.gmra.mxu0 %v7356
      %v7561 = vpop.f32.mrf.mxu0
      %v7562 = vadd.f32 0.0, %v7561
      %v7563 = vpop.f32.mrf.mxu0
      %7564 = vmatprep.mubr.f32.mxu0 0.0
      %7565 = vmatmul.mubr.f32.gmra.mxu0 %v7359
      %v7566 = vpop.f32.mrf.mxu0
      %v7567 = vadd.f32 0.0, %v7566
      %v7568 = vpop.f32.mrf.mxu0
      %7569 = vmatprep.mubr.f32.mxu0 0.0
      %7570 = vmatmul.mubr.f32.gmra.mxu0 %v7362
      %v7571 = vpop.f32.mrf.mxu0
      %v7572 = vadd.f32 0.0, %v7571
      %v7573 = vpop.f32.mrf.mxu0
      %7574 = vmatprep.mubr.f32.mxu0 0.0
      %7575 = vmatmul.mubr.f32.gmra.mxu0 %v7365
      %v7576 = vpop.f32.mrf.mxu0
      %v7577 = vadd.f32 0.0, %v7576
      %v7578 = vpop.f32.mrf.mxu0
      %7579 = vmatprep.mubr.f32.mxu0 0.0
      %7580 = vmatmul.mubr.f32.gmra.mxu0 %v7368
      %v7581 = vpop.f32.mrf.mxu0
      %v7582 = vadd.f32 0.0, %v7581
      %v7583 = vpop.f32.mrf.mxu0
      %7584 = vmatprep.mubr.f32.mxu0 0.0
      %7585 = vmatmul.mubr.f32.gmra.mxu0 %v7371
      %v7586 = vpop.f32.mrf.mxu0
      %v7587 = vadd.f32 0.0, %v7586
      %v7588 = vpop.f32.mrf.mxu0
      %7589 = vmatprep.mubr.f32.mxu0 0.0
      %7590 = vmatmul.mubr.f32.gmra.mxu0 %v7374
      %v7591 = vpop.f32.mrf.mxu0
      %v7592 = vadd.f32 0.0, %v7591
      %v7593 = vpop.f32.mrf.mxu0
      %7594 = vmatprep.mubr.f32.mxu0 0.0
      %7595 = vmatmul.mubr.f32.gmra.mxu0 %v7377
      %v7596 = vpop.f32.mrf.mxu0
      %v7597 = vadd.f32 0.0, %v7596
      %v7598 = vpop.f32.mrf.mxu0
      %7599 = vmatprep.mubr.f32.mxu0 0.0
      %7600 = vmatmul.mubr.f32.gmra.mxu0 %v7380
      %v7601 = vpop.f32.mrf.mxu0
      %v7602 = vadd.f32 0.0, %v7601
      %v7603 = vpop.f32.mrf.mxu0
      %7604 = vmatprep.mubr.f32.mxu0 0.0
      %7605 = vmatmul.mubr.f32.gmra.mxu0 %v7383
      %v7606 = vpop.f32.mrf.mxu0
      %v7607 = vadd.f32 0.0, %v7606
      %v7608 = vpop.f32.mrf.mxu0
      %7609 = vmatprep.mubr.f32.mxu0 0.0
      %7610 = vmatmul.mubr.f32.gmra.mxu0 %v7386
      %v7611 = vpop.f32.mrf.mxu0
      %v7612 = vadd.f32 0.0, %v7611
      %v7613 = vpop.f32.mrf.mxu0
      %7614 = vmatprep.mubr.f32.mxu0 0.0
      %7615 = vmatmul.mubr.f32.gmra.mxu0 %v7389
      %v7616 = vpop.f32.mrf.mxu0
      %v7617 = vadd.f32 0.0, %v7616
      %v7618 = vpop.f32.mrf.mxu0
      %7619 = vmatprep.mubr.f32.mxu0 0.0
      %7620 = vmatmul.mubr.f32.gmra.mxu0 %v7392
      %v7621 = vpop.f32.mrf.mxu0
      %v7622 = vadd.f32 0.0, %v7621
      %v7623 = vpop.f32.mrf.mxu0
      %7624 = vmatprep.mubr.f32.mxu0 0.0
      %7625 = vmatmul.mubr.f32.gmra.mxu0 %v7395
      %v7626 = vpop.f32.mrf.mxu0
      %v7627 = vadd.f32 0.0, %v7626
      %v7628 = vpop.f32.mrf.mxu0
      %7629 = vmatprep.mubr.f32.mxu0 0.0
      %7630 = vmatmul.mubr.f32.gmra.mxu0 %v7398
      %v7631 = vpop.f32.mrf.mxu0
      %v7632 = vadd.f32 0.0, %v7631
      %v7633 = vpop.f32.mrf.mxu0
      %7634 = vmatprep.mubr.f32.mxu0 0.0
      %7635 = vmatmul.mubr.f32.gmra.mxu0 %v7401
      %v7636 = vpop.f32.mrf.mxu0
      %v7637 = vadd.f32 0.0, %v7636
      %v7638 = vpop.f32.mrf.mxu0
      %7639 = vmatprep.mubr.f32.mxu0 0.0
      %7640 = vmatmul.mubr.f32.gmra.mxu0 %v7404
      %v7641 = vpop.f32.mrf.mxu0
      %v7642 = vadd.f32 0.0, %v7641
      %v7643 = vpop.f32.mrf.mxu0
      %7644 = vmatprep.mubr.f32.mxu0 0.0
      %7645 = vmatmul.mubr.f32.gmra.mxu0 %v7407
      %v7646 = vpop.f32.mrf.mxu0
      %v7647 = vadd.f32 0.0, %v7646
      %v7648 = vpop.f32.mrf.mxu0
      %7649 = vmatprep.mubr.f32.mxu0 0.0
      %7650 = vmatmul.mubr.f32.gmra.mxu0 %v7410
      %v7651 = vpop.f32.mrf.mxu0
      %v7652 = vadd.f32 0.0, %v7651
      %v7653 = vpop.f32.mrf.mxu0
      %7654 = vmatprep.mubr.f32.mxu0 0.0
      %7655 = vmatmul.mubr.f32.gmra.mxu0 %v7413
      %v7656 = vpop.f32.mrf.mxu0
      %v7657 = vadd.f32 0.0, %v7656
      %v7658 = vpop.f32.mrf.mxu0
      %7659 = vmatprep.mubr.f32.mxu0 0.0
      %7660 = vmatmul.mubr.f32.gmra.mxu0 %v7416
      %v7661 = vpop.f32.mrf.mxu0
      %v7662 = vadd.f32 0.0, %v7661
      %v7663 = vpop.f32.mrf.mxu0
      %7664 = vmatprep.mubr.f32.mxu0 0.0
      %7665 = vmatmul.mubr.f32.gmra.mxu0 %v7419
      %v7666 = vpop.f32.mrf.mxu0
      %v7667 = vadd.f32 0.0, %v7666
      %v7668 = vpop.f32.mrf.mxu0
      %7669 = vmatprep.mubr.f32.mxu0 0.0
      %7670 = vmatmul.mubr.f32.gmra.mxu0 %v7422
      %v7671 = vpop.f32.mrf.mxu0
      %v7672 = vadd.f32 0.0, %v7671
      %v7673 = vpop.f32.mrf.mxu0
      %7674 = vmatprep.mubr.f32.mxu0 0.0
      %7675 = vmatmul.mubr.f32.gmra.mxu0 %v7425
      %v7676 = vpop.f32.mrf.mxu0
      %v7677 = vadd.f32 0.0, %v7676
      %v7678 = vpop.f32.mrf.mxu0
      %7679 = vmatprep.mubr.f32.mxu0 0.0
      %7680 = vmatmul.mubr.f32.gmra.mxu0 %v7428
      %v7681 = vpop.f32.mrf.mxu0
      %v7682 = vadd.f32 0.0, %v7681
      %v7683 = vpop.f32.mrf.mxu0
      %7684 = vmatprep.mubr.f32.mxu0 0.0
      %7685 = vmatmul.mubr.f32.gmra.mxu0 %v7431
      %v7686 = vpop.f32.mrf.mxu0
      %v7687 = vadd.f32 0.0, %v7686
      %v7688 = vpop.f32.mrf.mxu0
      %7689 = vmatprep.mubr.f32.mxu0 0.0
      %7690 = vmatmul.mubr.f32.gmra.mxu0 %v7434
      %v7691 = vpop.f32.mrf.mxu0
      %v7692 = vadd.f32 0.0, %v7691
      %v7693 = vpop.f32.mrf.mxu0
      %7694 = vmatprep.mubr.f32.mxu0 0.0
      %7695 = vmatmul.mubr.f32.gmra.mxu0 %v7437
      %v7696 = vpop.f32.mrf.mxu0
      %v7697 = vadd.f32 0.0, %v7696
      %v7698 = vpop.f32.mrf.mxu0
      %7699 = vmatprep.mubr.f32.mxu0 0.0
      %7700 = vmatmul.mubr.f32.gmra.mxu0 %v7440
      %v7701 = vpop.f32.mrf.mxu0
      %v7702 = vadd.f32 0.0, %v7701
      %v7703 = vpop.f32.mrf.mxu0
      %7704 = vmatprep.mubr.f32.mxu0 0.0
      %7705 = vmatmul.mubr.f32.gmra.mxu0 %v7443
      %v7706 = vpop.f32.mrf.mxu0
      %v7707 = vadd.f32 0.0, %v7706
      %v7708 = vpop.f32.mrf.mxu0
      %7709 = vmatprep.mubr.f32.mxu0 0.0
      %7710 = vmatmul.mubr.f32.gmra.mxu0 %v7446
      %v7711 = vpop.f32.mrf.mxu0
      %v7712 = vadd.f32 0.0, %v7711
      %v7713 = vpop.f32.mrf.mxu0
      %7714 = vmatprep.mubr.f32.mxu0 0.0
      %7715 = vmatmul.mubr.f32.gmra.mxu0 %v7449
      %v7716 = vpop.f32.mrf.mxu0
      %v7717 = vadd.f32 0.0, %v7716
      %v7718 = vpop.f32.mrf.mxu0
      %7719 = vdwg.mxu0
      %v7721 = vsel %vm7451, %v3888, 0
      %7723 = vmatprep.subr.mxu0 0.0
      %7724 = vmatpush1.msra.mxu0 0.0
      %7725 = vmatprep.subr.mxu0 0.0
      %7726 = vmatpush1.msra.mxu0 0.0
      %7727 = vmatprep.subr.mxu0 0.0
      %7728 = vmatpush1.msra.mxu0 0.0
      %7729 = vmatprep.subr.mxu0 0.0
      %7730 = vmatpush1.msra.mxu0 0.0
      %7731 = vmatprep.subr.mxu0 0.0
      %7732 = vmatpush1.msra.mxu0 0.0
      %7733 = vmatprep.subr.mxu0 0.0
      %7734 = vmatpush1.msra.mxu0 0.0
      %7735 = vmatprep.subr.mxu0 0.0
      %7736 = vmatpush1.msra.mxu0 0.0
      %7737 = vmatprep.subr.mxu0 0.0
      %7738 = vmatpush1.msra.mxu0 0.0
      %7739 = vmatprep.subr.mxu0 0.0
      %7740 = vmatpush1.msra.mxu0 0.0
      %7741 = vmatprep.subr.mxu0 0.0
      %7742 = vmatpush1.msra.mxu0 0.0
      %7743 = vmatprep.subr.mxu0 0.0
      %7744 = vmatpush1.msra.mxu0 0.0
      %7745 = vmatprep.subr.mxu0 0.0
      %7746 = vmatpush1.msra.mxu0 0.0
      %7747 = vmatprep.subr.mxu0 0.0
      %7748 = vmatpush1.msra.mxu0 0.0
      %7749 = vmatprep.subr.mxu0 0.0
      %7750 = vmatpush1.msra.mxu0 0.0
      %7751 = vmatprep.subr.mxu0 0.0
      %7752 = vmatpush1.msra.mxu0 %v7721
      %7753 = vmatprep.subr.mxu0 0.0
      %7754 = vmatpush1.msra.mxu0 %v3887
      %7755 = vmatprep.subr.mxu0 0.0
      %7756 = vmatpush2.msra.mxu0 0.0
      %7757 = vmatprep.subr.mxu0 0.0
      %7758 = vmatpush2.msra.mxu0 0.0
      %7759 = vmatprep.subr.mxu0 0.0
      %7760 = vmatpush2.msra.mxu0 0.0
      %7761 = vmatprep.subr.mxu0 0.0
      %7762 = vmatpush2.msra.mxu0 0.0
      %7763 = vmatprep.subr.mxu0 0.0
      %7764 = vmatpush2.msra.mxu0 0.0
      %7765 = vmatprep.subr.mxu0 0.0
      %7766 = vmatpush2.msra.mxu0 0.0
      %7767 = vmatprep.subr.mxu0 0.0
      %7768 = vmatpush2.msra.mxu0 0.0
      %7769 = vmatprep.subr.mxu0 0.0
      %7770 = vmatpush2.msra.mxu0 0.0
      %7771 = vmatprep.subr.mxu0 0.0
      %7772 = vmatpush2.msra.mxu0 0.0
      %7773 = vmatprep.subr.mxu0 0.0
      %7774 = vmatpush2.msra.mxu0 0.0
      %7775 = vmatprep.subr.mxu0 0.0
      %7776 = vmatpush2.msra.mxu0 0.0
      %7777 = vmatprep.subr.mxu0 0.0
      %7778 = vmatpush2.msra.mxu0 0.0
      %7779 = vmatprep.subr.mxu0 0.0
      %7780 = vmatpush2.msra.mxu0 0.0
      %7781 = vmatprep.subr.mxu0 0.0
      %7782 = vmatpush2.msra.mxu0 0.0
      %7783 = vmatprep.subr.mxu0 0.0
      %7784 = vmatpush2.msra.mxu0 0.0
      %7785 = vmatprep.subr.mxu0 0.0
      %7786 = vmatpush2.msra.mxu0 0.0
      %7787 = vmatprep.mubr.f32.mxu0 0.0
      %7788 = vmatmul.mubr.f32.gmra.mxu0 %v7332
      %v7789 = vpop.f32.mrf.mxu0
      %v7790 = vadd.f32 0.0, %v7789
      %v7791 = vpop.f32.mrf.mxu0
      %7792 = vmatprep.mubr.f32.mxu0 0.0
      %7793 = vmatmul.mubr.f32.gmra.mxu0 %v7335
      %v7794 = vpop.f32.mrf.mxu0
      %v7795 = vadd.f32 0.0, %v7794
      %v7796 = vpop.f32.mrf.mxu0
      %7797 = vmatprep.mubr.f32.mxu0 0.0
      %7798 = vmatmul.mubr.f32.gmra.mxu0 %v7338
      %v7799 = vpop.f32.mrf.mxu0
      %v7800 = vadd.f32 0.0, %v7799
      %v7801 = vpop.f32.mrf.mxu0
      %7802 = vmatprep.mubr.f32.mxu0 0.0
      %7803 = vmatmul.mubr.f32.gmra.mxu0 %v7341
      %v7804 = vpop.f32.mrf.mxu0
      %v7805 = vadd.f32 0.0, %v7804
      %v7806 = vpop.f32.mrf.mxu0
      %7807 = vmatprep.mubr.f32.mxu0 0.0
      %7808 = vmatmul.mubr.f32.gmra.mxu0 %v7344
      %v7809 = vpop.f32.mrf.mxu0
      %v7810 = vadd.f32 0.0, %v7809
      %v7811 = vpop.f32.mrf.mxu0
      %7812 = vmatprep.mubr.f32.mxu0 0.0
      %7813 = vmatmul.mubr.f32.gmra.mxu0 %v7347
      %v7814 = vpop.f32.mrf.mxu0
      %v7815 = vadd.f32 0.0, %v7814
      %v7816 = vpop.f32.mrf.mxu0
      %7817 = vmatprep.mubr.f32.mxu0 0.0
      %7818 = vmatmul.mubr.f32.gmra.mxu0 %v7350
      %v7819 = vpop.f32.mrf.mxu0
      %v7820 = vadd.f32 0.0, %v7819
      %v7821 = vpop.f32.mrf.mxu0
      %7822 = vmatprep.mubr.f32.mxu0 0.0
      %7823 = vmatmul.mubr.f32.gmra.mxu0 %v7353
      %v7824 = vpop.f32.mrf.mxu0
      %v7825 = vadd.f32 0.0, %v7824
      %v7826 = vpop.f32.mrf.mxu0
      %7827 = vmatprep.mubr.f32.mxu0 0.0
      %7828 = vmatmul.mubr.f32.gmra.mxu0 %v7356
      %v7829 = vpop.f32.mrf.mxu0
      %v7830 = vadd.f32 0.0, %v7829
      %v7831 = vpop.f32.mrf.mxu0
      %7832 = vmatprep.mubr.f32.mxu0 0.0
      %7833 = vmatmul.mubr.f32.gmra.mxu0 %v7359
      %v7834 = vpop.f32.mrf.mxu0
      %v7835 = vadd.f32 0.0, %v7834
      %v7836 = vpop.f32.mrf.mxu0
      %7837 = vmatprep.mubr.f32.mxu0 0.0
      %7838 = vmatmul.mubr.f32.gmra.mxu0 %v7362
      %v7839 = vpop.f32.mrf.mxu0
      %v7840 = vadd.f32 0.0, %v7839
      %v7841 = vpop.f32.mrf.mxu0
      %7842 = vmatprep.mubr.f32.mxu0 0.0
      %7843 = vmatmul.mubr.f32.gmra.mxu0 %v7365
      %v7844 = vpop.f32.mrf.mxu0
      %v7845 = vadd.f32 0.0, %v7844
      %v7846 = vpop.f32.mrf.mxu0
      %7847 = vmatprep.mubr.f32.mxu0 0.0
      %7848 = vmatmul.mubr.f32.gmra.mxu0 %v7368
      %v7849 = vpop.f32.mrf.mxu0
      %v7850 = vadd.f32 0.0, %v7849
      %v7851 = vpop.f32.mrf.mxu0
      %7852 = vmatprep.mubr.f32.mxu0 0.0
      %7853 = vmatmul.mubr.f32.gmra.mxu0 %v7371
      %v7854 = vpop.f32.mrf.mxu0
      %v7855 = vadd.f32 0.0, %v7854
      %v7856 = vpop.f32.mrf.mxu0
      %7857 = vmatprep.mubr.f32.mxu0 0.0
      %7858 = vmatmul.mubr.f32.gmra.mxu0 %v7374
      %v7859 = vpop.f32.mrf.mxu0
      %v7860 = vadd.f32 0.0, %v7859
      %v7861 = vpop.f32.mrf.mxu0
      %7862 = vmatprep.mubr.f32.mxu0 0.0
      %7863 = vmatmul.mubr.f32.gmra.mxu0 %v7377
      %v7864 = vpop.f32.mrf.mxu0
      %v7865 = vadd.f32 0.0, %v7864
      %v7866 = vpop.f32.mrf.mxu0
      %7867 = vmatprep.mubr.f32.mxu0 0.0
      %7868 = vmatmul.mubr.f32.gmra.mxu0 %v7380
      %v7869 = vpop.f32.mrf.mxu0
      %v7870 = vadd.f32 0.0, %v7869
      %v7871 = vpop.f32.mrf.mxu0
      %7872 = vmatprep.mubr.f32.mxu0 0.0
      %7873 = vmatmul.mubr.f32.gmra.mxu0 %v7383
      %v7874 = vpop.f32.mrf.mxu0
      %v7875 = vadd.f32 0.0, %v7874
      %v7876 = vpop.f32.mrf.mxu0
      %7877 = vmatprep.mubr.f32.mxu0 0.0
      %7878 = vmatmul.mubr.f32.gmra.mxu0 %v7386
      %v7879 = vpop.f32.mrf.mxu0
      %v7880 = vadd.f32 0.0, %v7879
      %v7881 = vpop.f32.mrf.mxu0
      %7882 = vmatprep.mubr.f32.mxu0 0.0
      %7883 = vmatmul.mubr.f32.gmra.mxu0 %v7389
      %v7884 = vpop.f32.mrf.mxu0
      %v7885 = vadd.f32 0.0, %v7884
      %v7886 = vpop.f32.mrf.mxu0
      %7887 = vmatprep.mubr.f32.mxu0 0.0
      %7888 = vmatmul.mubr.f32.gmra.mxu0 %v7392
      %v7889 = vpop.f32.mrf.mxu0
      %v7890 = vadd.f32 0.0, %v7889
      %v7891 = vpop.f32.mrf.mxu0
      %7892 = vmatprep.mubr.f32.mxu0 0.0
      %7893 = vmatmul.mubr.f32.gmra.mxu0 %v7395
      %v7894 = vpop.f32.mrf.mxu0
      %v7895 = vadd.f32 0.0, %v7894
      %v7896 = vpop.f32.mrf.mxu0
      %7897 = vmatprep.mubr.f32.mxu0 0.0
      %7898 = vmatmul.mubr.f32.gmra.mxu0 %v7398
      %v7899 = vpop.f32.mrf.mxu0
      %v7900 = vadd.f32 0.0, %v7899
      %v7901 = vpop.f32.mrf.mxu0
      %7902 = vmatprep.mubr.f32.mxu0 0.0
      %7903 = vmatmul.mubr.f32.gmra.mxu0 %v7401
      %v7904 = vpop.f32.mrf.mxu0
      %v7905 = vadd.f32 0.0, %v7904
      %v7906 = vpop.f32.mrf.mxu0
      %7907 = vmatprep.mubr.f32.mxu0 0.0
      %7908 = vmatmul.mubr.f32.gmra.mxu0 %v7404
      %v7909 = vpop.f32.mrf.mxu0
      %v7910 = vadd.f32 0.0, %v7909
      %v7911 = vpop.f32.mrf.mxu0
      %7912 = vmatprep.mubr.f32.mxu0 0.0
      %7913 = vmatmul.mubr.f32.gmra.mxu0 %v7407
      %v7914 = vpop.f32.mrf.mxu0
      %v7915 = vadd.f32 0.0, %v7914
      %v7916 = vpop.f32.mrf.mxu0
      %7917 = vmatprep.mubr.f32.mxu0 0.0
      %7918 = vmatmul.mubr.f32.gmra.mxu0 %v7410
      %v7919 = vpop.f32.mrf.mxu0
      %v7920 = vadd.f32 0.0, %v7919
      %v7921 = vpop.f32.mrf.mxu0
      %7922 = vmatprep.mubr.f32.mxu0 0.0
      %7923 = vmatmul.mubr.f32.gmra.mxu0 %v7413
      %v7924 = vpop.f32.mrf.mxu0
      %v7925 = vadd.f32 0.0, %v7924
      %v7926 = vpop.f32.mrf.mxu0
      %7927 = vmatprep.mubr.f32.mxu0 0.0
      %7928 = vmatmul.mubr.f32.gmra.mxu0 %v7416
      %v7929 = vpop.f32.mrf.mxu0
      %v7930 = vadd.f32 0.0, %v7929
      %v7931 = vpop.f32.mrf.mxu0
      %7932 = vmatprep.mubr.f32.mxu0 0.0
      %7933 = vmatmul.mubr.f32.gmra.mxu0 %v7419
      %v7934 = vpop.f32.mrf.mxu0
      %v7935 = vadd.f32 0.0, %v7934
      %v7936 = vpop.f32.mrf.mxu0
      %7937 = vmatprep.mubr.f32.mxu0 0.0
      %7938 = vmatmul.mubr.f32.gmra.mxu0 %v7422
      %v7939 = vpop.f32.mrf.mxu0
      %v7940 = vadd.f32 0.0, %v7939
      %v7941 = vpop.f32.mrf.mxu0
      %7942 = vmatprep.mubr.f32.mxu0 0.0
      %7943 = vmatmul.mubr.f32.gmra.mxu0 %v7425
      %v7944 = vpop.f32.mrf.mxu0
      %v7945 = vadd.f32 0.0, %v7944
      %v7946 = vpop.f32.mrf.mxu0
      %7947 = vmatprep.mubr.f32.mxu0 0.0
      %7948 = vmatmul.mubr.f32.gmra.mxu0 %v7428
      %v7949 = vpop.f32.mrf.mxu0
      %v7950 = vadd.f32 0.0, %v7949
      %v7951 = vpop.f32.mrf.mxu0
      %7952 = vmatprep.mubr.f32.mxu0 0.0
      %7953 = vmatmul.mubr.f32.gmra.mxu0 %v7431
      %v7954 = vpop.f32.mrf.mxu0
      %v7955 = vadd.f32 0.0, %v7954
      %v7956 = vpop.f32.mrf.mxu0
      %7957 = vmatprep.mubr.f32.mxu0 0.0
      %7958 = vmatmul.mubr.f32.gmra.mxu0 %v7434
      %v7959 = vpop.f32.mrf.mxu0
      %v7960 = vadd.f32 0.0, %v7959
      %v7961 = vpop.f32.mrf.mxu0
      %7962 = vmatprep.mubr.f32.mxu0 0.0
      %7963 = vmatmul.mubr.f32.gmra.mxu0 %v7437
      %v7964 = vpop.f32.mrf.mxu0
      %v7965 = vadd.f32 0.0, %v7964
      %v7966 = vpop.f32.mrf.mxu0
      %7967 = vmatprep.mubr.f32.mxu0 0.0
      %7968 = vmatmul.mubr.f32.gmra.mxu0 %v7440
      %v7969 = vpop.f32.mrf.mxu0
      %v7970 = vadd.f32 0.0, %v7969
      %v7971 = vpop.f32.mrf.mxu0
      %7972 = vmatprep.mubr.f32.mxu0 0.0
      %7973 = vmatmul.mubr.f32.gmra.mxu0 %v7443
      %v7974 = vpop.f32.mrf.mxu0
      %v7975 = vadd.f32 0.0, %v7974
      %v7976 = vpop.f32.mrf.mxu0
      %7977 = vmatprep.mubr.f32.mxu0 0.0
      %7978 = vmatmul.mubr.f32.gmra.mxu0 %v7446
      %v7979 = vpop.f32.mrf.mxu0
      %v7980 = vadd.f32 0.0, %v7979
      %v7981 = vpop.f32.mrf.mxu0
      %7982 = vmatprep.mubr.f32.mxu0 0.0
      %7983 = vmatmul.mubr.f32.gmra.mxu0 %v7449
      %v7984 = vpop.f32.mrf.mxu0
      %v7985 = vadd.f32 0.0, %v7984
      %v7986 = vpop.f32.mrf.mxu0
      %7987 = vdwg.mxu0
      %v7988 = vmax.f32 %v7522, %v7790
      %v7989 = vmax.f32 %v7527, %v7795
      %v7990 = vmax.f32 %v7532, %v7800
      %v7991 = vmax.f32 %v7537, %v7805
      %v7992 = vmax.f32 %v7542, %v7810
      %v7993 = vmax.f32 %v7547, %v7815
      %v7994 = vmax.f32 %v7552, %v7820
      %v7995 = vmax.f32 %v7557, %v7825
      %v7996 = vmax.f32 %v7562, %v7830
      %v7997 = vmax.f32 %v7567, %v7835
      %v7998 = vmax.f32 %v7572, %v7840
      %v7999 = vmax.f32 %v7577, %v7845
      %v8000 = vmax.f32 %v7582, %v7850
      %v8001 = vmax.f32 %v7587, %v7855
      %v8002 = vmax.f32 %v7592, %v7860
      %v8003 = vmax.f32 %v7597, %v7865
      %v8004 = vmax.f32 %v7602, %v7870
      %v8005 = vmax.f32 %v7607, %v7875
      %v8006 = vmax.f32 %v7612, %v7880
      %v8007 = vmax.f32 %v7617, %v7885
      %v8008 = vmax.f32 %v7622, %v7890
      %v8009 = vmax.f32 %v7627, %v7895
      %v8010 = vmax.f32 %v7632, %v7900
      %v8011 = vmax.f32 %v7637, %v7905
      %v8012 = vmax.f32 %v7642, %v7910
      %v8013 = vmax.f32 %v7647, %v7915
      %v8014 = vmax.f32 %v7652, %v7920
      %v8015 = vmax.f32 %v7657, %v7925
      %v8016 = vmax.f32 %v7662, %v7930
      %v8017 = vmax.f32 %v7667, %v7935
      %v8018 = vmax.f32 %v7672, %v7940
      %v8019 = vmax.f32 %v7677, %v7945
      %v8020 = vmax.f32 %v7682, %v7950
      %v8021 = vmax.f32 %v7687, %v7955
      %v8022 = vmax.f32 %v7692, %v7960
      %v8023 = vmax.f32 %v7697, %v7965
      %v8024 = vmax.f32 %v7702, %v7970
      %v8025 = vmax.f32 %v7707, %v7975
      %v8026 = vmax.f32 %v7712, %v7980
      %v8027 = vmax.f32 %v7717, %v7985
      %v8028 = vmax.f32 %v7988, %v7992
      %v8029 = vmax.f32 %v7989, %v7993
      %v8030 = vmax.f32 %v7990, %v7994
      %v8031 = vmax.f32 %v7991, %v7995
      %v8032 = vmax.f32 %v7992, %v7996
      %v8033 = vmax.f32 %v7993, %v7997
      %v8034 = vmax.f32 %v7994, %v7998
      %v8035 = vmax.f32 %v7995, %v7999
      %v8036 = vmax.f32 %v7996, %v8000
      %v8037 = vmax.f32 %v7997, %v8001
      %v8038 = vmax.f32 %v7998, %v8002
      %v8039 = vmax.f32 %v7999, %v8003
      %v8040 = vmax.f32 %v8000, %v8004
      %v8041 = vmax.f32 %v8001, %v8005
      %v8042 = vmax.f32 %v8002, %v8006
      %v8043 = vmax.f32 %v8003, %v8007
      %v8044 = vmax.f32 %v8004, %v8008
      %v8045 = vmax.f32 %v8005, %v8009
      %v8046 = vmax.f32 %v8006, %v8010
      %v8047 = vmax.f32 %v8007, %v8011
      %v8048 = vmax.f32 %v8008, %v8012
      %v8049 = vmax.f32 %v8009, %v8013
      %v8050 = vmax.f32 %v8010, %v8014
      %v8051 = vmax.f32 %v8011, %v8015
      %v8052 = vmax.f32 %v8012, %v8016
      %v8053 = vmax.f32 %v8013, %v8017
      %v8054 = vmax.f32 %v8014, %v8018
      %v8055 = vmax.f32 %v8015, %v8019
      %v8056 = vmax.f32 %v8016, %v8020
      %v8057 = vmax.f32 %v8017, %v8021
      %v8058 = vmax.f32 %v8018, %v8022
      %v8059 = vmax.f32 %v8019, %v8023
      %v8060 = vmax.f32 %v8020, %v8024
      %v8061 = vmax.f32 %v8021, %v8025
      %v8062 = vmax.f32 %v8022, %v8026
      %v8063 = vmax.f32 %v8023, %v8027
      %v8064 = vmax.f32 %v8028, 0.0
      %v8065 = vmax.f32 %v8029, 0.0
      %v8066 = vmax.f32 %v8030, 0.0
      %v8067 = vmax.f32 %v8031, 0.0
      %v8068 = vmax.f32 %v8032, 0.0
      %v8069 = vmax.f32 %v8033, 0.0
      %v8070 = vmax.f32 %v8034, 0.0
      %v8071 = vmax.f32 %v8035, 0.0
      %v8072 = vmax.f32 %v8036, 0.0
      %v8073 = vmax.f32 %v8037, 0.0
      %v8074 = vmax.f32 %v8038, 0.0
      %v8075 = vmax.f32 %v8039, 0.0
      %v8076 = vmax.f32 %v8040, 0.0
      %v8077 = vmax.f32 %v8041, 0.0
      %v8078 = vmax.f32 %v8042, 0.0
      %v8079 = vmax.f32 %v8043, 0.0
      %v8080 = vmax.f32 %v8044, 0.0
      %v8081 = vmax.f32 %v8045, 0.0
      %v8082 = vmax.f32 %v8046, 0.0
      %v8083 = vmax.f32 %v8047, 0.0
      %v8084 = vmax.f32 %v8048, 0.0
      %v8085 = vmax.f32 %v8049, 0.0
      %v8086 = vmax.f32 %v8050, 0.0
      %v8087 = vmax.f32 %v8051, 0.0
      %v8088 = vmax.f32 %v8052, 0.0
      %v8089 = vmax.f32 %v8053, 0.0
      %v8090 = vmax.f32 %v8054, 0.0
      %v8091 = vmax.f32 %v8055, 0.0
      %v8092 = vmax.f32 %v8056, 0.0
      %v8093 = vmax.f32 %v8057, 0.0
      %v8094 = vmax.f32 %v8058, 0.0
      %v8095 = vmax.f32 %v8059, 0.0
      %v8096 = vmax.f32 %v8060, 0.0
      %v8097 = vmax.f32 %v8061, 0.0
      %v8098 = vmax.f32 %v8062, 0.0
      %v8099 = vmax.f32 %v8063, 0.0
      %v8100 = vld [vmem:[%s6] sm:$0xff]
      %v8101 = vld [vmem:[%s6 + $0x8] sm:$0xff]
      %v8102 = vld [vmem:[%s6 + $0x10] sm:$0xff]
      %v8103 = vld [vmem:[%s6 + $0x18] sm:$0xff]
      %v8104 = vld [vmem:[%s6 + $0x20] sm:$0xff]
      %v8105 = vld [vmem:[%s6 + $0x28] sm:$0xff]
      %v8106 = vld [vmem:[%s6 + $0x30] sm:$0xff]
      %v8107 = vld [vmem:[%s6 + $0x38] sm:$0xff]
      %v8108 = vld [vmem:[%s5] sm:$0xff]
      %v8109 = vld [vmem:[%s5 + $0x8] sm:$0xff]
      %v8110 = vld [vmem:[%s5 + $0x10] sm:$0xff]
      %v8111 = vld [vmem:[%s5 + $0x18] sm:$0xff]
      %v8112 = vld [vmem:[%s5 + $0x20] sm:$0xff]
      %v8113 = vld [vmem:[%s5 + $0x28] sm:$0xff]
      %v8114 = vld [vmem:[%s5 + $0x30] sm:$0xff]
      %v8115 = vld [vmem:[%s5 + $0x38] sm:$0xff]
      %v8116 = vld [vmem:[%s5 + $0x40] sm:$0xff]
      %v8117 = vld [vmem:[%s5 + $0x48] sm:$0xff]
      %v8118 = vld [vmem:[%s5 + $0x50] sm:$0xff]
      %v8119 = vld [vmem:[%s5 + $0x58] sm:$0xff]
      %v8120 = vld [vmem:[%s5 + $0x60] sm:$0xff]
      %v8121 = vld [vmem:[%s5 + $0x68] sm:$0xff]
      %v8122 = vld [vmem:[%s5 + $0x70] sm:$0xff]
      %v8123 = vld [vmem:[%s5 + $0x78] sm:$0xff]
      %v8124 = vld [vmem:[%s5 + $0x80] sm:$0xff]
      %v8125 = vld [vmem:[%s5 + $0x88] sm:$0xff]
      %v8126 = vld [vmem:[%s5 + $0x90] sm:$0xff]
      %v8127 = vld [vmem:[%s5 + $0x98] sm:$0xff]
      %v8128 = vld [vmem:[%s5 + $0xa0] sm:$0xff]
      %v8129 = vld [vmem:[%s5 + $0xa8] sm:$0xff]
      %v8130 = vld [vmem:[%s5 + $0xb0] sm:$0xff]
      %v8131 = vld [vmem:[%s5 + $0xb8] sm:$0xff]
      %vm8132 = vcmask 261120
      %v8134 = vsel %vm8132, %v8110, 0
      %v8137 = vsel %vm8132, %v8113, 0
      %v8140 = vsel %vm8132, %v8116, 0
      %v8143 = vsel %vm8132, %v8119, 0
      %v8146 = vsel %vm8132, %v8122, 0
      %v8149 = vsel %vm8132, %v8125, 0
      %v8152 = vsel %vm8132, %v8128, 0
      %v8155 = vsel %vm8132, %v8131, 0
      %8157 = vmatprep.subr.mxu0 0.0
      %8158 = vmatpush1.msra.mxu0 %v8079
      %8159 = vmatprep.subr.mxu0 0.0
      %8160 = vmatpush1.msra.mxu0 %v8078
      %8161 = vmatprep.subr.mxu0 0.0
      %8162 = vmatpush1.msra.mxu0 %v8077
      %8163 = vmatprep.subr.mxu0 0.0
      %8164 = vmatpush1.msra.mxu0 %v8076
      %8165 = vmatprep.subr.mxu0 0.0
      %8166 = vmatpush1.msra.mxu0 %v8075
      %8167 = vmatprep.subr.mxu0 0.0
      %8168 = vmatpush1.msra.mxu0 %v8074
      %8169 = vmatprep.subr.mxu0 0.0
      %8170 = vmatpush1.msra.mxu0 %v8073
      %8171 = vmatprep.subr.mxu0 0.0
      %8172 = vmatpush1.msra.mxu0 %v8072
      %8173 = vmatprep.subr.mxu0 0.0
      %8174 = vmatpush1.msra.mxu0 %v8071
      %8175 = vmatprep.subr.mxu0 0.0
      %8176 = vmatpush1.msra.mxu0 %v8070
      %8177 = vmatprep.subr.mxu0 0.0
      %8178 = vmatpush1.msra.mxu0 %v8069
      %8179 = vmatprep.subr.mxu0 0.0
      %8180 = vmatpush1.msra.mxu0 %v8068
      %8181 = vmatprep.subr.mxu0 0.0
      %8182 = vmatpush1.msra.mxu0 %v8067
      %8183 = vmatprep.subr.mxu0 0.0
      %8184 = vmatpush1.msra.mxu0 %v8066
      %8185 = vmatprep.subr.mxu0 0.0
      %8186 = vmatpush1.msra.mxu0 %v8065
      %8187 = vmatprep.subr.mxu0 0.0
      %8188 = vmatpush1.msra.mxu0 %v8064
      %8189 = vmatprep.subr.mxu0 0.0
      %8190 = vmatpush2.msra.mxu0 %v8095
      %8191 = vmatprep.subr.mxu0 0.0
      %8192 = vmatpush2.msra.mxu0 %v8094
      %8193 = vmatprep.subr.mxu0 0.0
      %8194 = vmatpush2.msra.mxu0 %v8093
      %8195 = vmatprep.subr.mxu0 0.0
      %8196 = vmatpush2.msra.mxu0 %v8092
      %8197 = vmatprep.subr.mxu0 0.0
      %8198 = vmatpush2.msra.mxu0 %v8091
      %8199 = vmatprep.subr.mxu0 0.0
      %8200 = vmatpush2.msra.mxu0 %v8090
      %8201 = vmatprep.subr.mxu0 0.0
      %8202 = vmatpush2.msra.mxu0 %v8089
      %8203 = vmatprep.subr.mxu0 0.0
      %8204 = vmatpush2.msra.mxu0 %v8088
      %8205 = vmatprep.subr.mxu0 0.0
      %8206 = vmatpush2.msra.mxu0 %v8087
      %8207 = vmatprep.subr.mxu0 0.0
      %8208 = vmatpush2.msra.mxu0 %v8086
      %8209 = vmatprep.subr.mxu0 0.0
      %8210 = vmatpush2.msra.mxu0 %v8085
      %8211 = vmatprep.subr.mxu0 0.0
      %8212 = vmatpush2.msra.mxu0 %v8084
      %8213 = vmatprep.subr.mxu0 0.0
      %8214 = vmatpush2.msra.mxu0 %v8083
      %8215 = vmatprep.subr.mxu0 0.0
      %8216 = vmatpush2.msra.mxu0 %v8082
      %8217 = vmatprep.subr.mxu0 0.0
      %8218 = vmatpush2.msra.mxu0 %v8081
      %8219 = vmatprep.subr.mxu0 0.0
      %8220 = vmatpush2.msra.mxu0 %v8080
      %8221 = vmatprep.mubr.f32.mxu0 %v8109
      %8222 = vmatmul.mubr.f32.gmra.mxu0 %v8108
      %v8223 = vpop.f32.mrf.mxu0
      %v8224 = vadd.f32 0.0, %v8223
      %v8225 = vpop.f32.mrf.mxu0
      %8226 = vmatprep.mubr.f32.mxu0 %v8112
      %8227 = vmatmul.mubr.f32.gmra.mxu0 %v8111
      %v8228 = vpop.f32.mrf.mxu0
      %v8229 = vadd.f32 0.0, %v8228
      %v8230 = vpop.f32.mrf.mxu0
      %8231 = vmatprep.mubr.f32.mxu0 %v8115
      %8232 = vmatmul.mubr.f32.gmra.mxu0 %v8114
      %v8233 = vpop.f32.mrf.mxu0
      %v8234 = vadd.f32 0.0, %v8233
      %v8235 = vpop.f32.mrf.mxu0
      %8236 = vmatprep.mubr.f32.mxu0 %v8118
      %8237 = vmatmul.mubr.f32.gmra.mxu0 %v8117
      %v8238 = vpop.f32.mrf.mxu0
      %v8239 = vadd.f32 0.0, %v8238
      %v8240 = vpop.f32.mrf.mxu0
      %8241 = vmatprep.mubr.f32.mxu0 %v8121
      %8242 = vmatmul.mubr.f32.gmra.mxu0 %v8120
      %v8243 = vpop.f32.mrf.mxu0
      %v8244 = vadd.f32 0.0, %v8243
      %v8245 = vpop.f32.mrf.mxu0
      %8246 = vmatprep.mubr.f32.mxu0 %v8124
      %8247 = vmatmul.mubr.f32.gmra.mxu0 %v8123
      %v8248 = vpop.f32.mrf.mxu0
      %v8249 = vadd.f32 0.0, %v8248
      %v8250 = vpop.f32.mrf.mxu0
      %8251 = vmatprep.mubr.f32.mxu0 %v8127
      %8252 = vmatmul.mubr.f32.gmra.mxu0 %v8126
      %v8253 = vpop.f32.mrf.mxu0
      %v8254 = vadd.f32 0.0, %v8253
      %v8255 = vpop.f32.mrf.mxu0
      %8256 = vmatprep.mubr.f32.mxu0 %v8130
      %8257 = vmatmul.mubr.f32.gmra.mxu0 %v8129
      %v8258 = vpop.f32.mrf.mxu0
      %v8259 = vadd.f32 0.0, %v8258
      %v8260 = vpop.f32.mrf.mxu0
      %8261 = vdwg.mxu0
      %8262 = vmatprep.subr.mxu0 0.0
      %8263 = vmatpush1.msra.mxu0 0.0
      %8264 = vmatprep.subr.mxu0 0.0
      %8265 = vmatpush1.msra.mxu0 0.0
      %8266 = vmatprep.subr.mxu0 0.0
      %8267 = vmatpush1.msra.mxu0 0.0
      %8268 = vmatprep.subr.mxu0 0.0
      %8269 = vmatpush1.msra.mxu0 0.0
      %8270 = vmatprep.subr.mxu0 0.0
      %8271 = vmatpush1.msra.mxu0 0.0
      %8272 = vmatprep.subr.mxu0 0.0
      %8273 = vmatpush1.msra.mxu0 0.0
      %8274 = vmatprep.subr.mxu0 0.0
      %8275 = vmatpush1.msra.mxu0 0.0
      %8276 = vmatprep.subr.mxu0 0.0
      %8277 = vmatpush1.msra.mxu0 0.0
      %8278 = vmatprep.subr.mxu0 0.0
      %8279 = vmatpush1.msra.mxu0 0.0
      %8280 = vmatprep.subr.mxu0 0.0
      %8281 = vmatpush1.msra.mxu0 0.0
      %8282 = vmatprep.subr.mxu0 0.0
      %8283 = vmatpush1.msra.mxu0 0.0
      %8284 = vmatprep.subr.mxu0 0.0
      %8285 = vmatpush1.msra.mxu0 0.0
      %8286 = vmatprep.subr.mxu0 0.0
      %8287 = vmatpush1.msra.mxu0 %v8099
      %8288 = vmatprep.subr.mxu0 0.0
      %8289 = vmatpush1.msra.mxu0 %v8098
      %8290 = vmatprep.subr.mxu0 0.0
      %8291 = vmatpush1.msra.mxu0 %v8097
      %8292 = vmatprep.subr.mxu0 0.0
      %8293 = vmatpush1.msra.mxu0 %v8096
      %8294 = vmatprep.subr.mxu0 0.0
      %8295 = vmatpush2.msra.mxu0 0.0
      %8296 = vmatprep.subr.mxu0 0.0
      %8297 = vmatpush2.msra.mxu0 0.0
      %8298 = vmatprep.subr.mxu0 0.0
      %8299 = vmatpush2.msra.mxu0 0.0
      %8300 = vmatprep.subr.mxu0 0.0
      %8301 = vmatpush2.msra.mxu0 0.0
      %8302 = vmatprep.subr.mxu0 0.0
      %8303 = vmatpush2.msra.mxu0 0.0
      %8304 = vmatprep.subr.mxu0 0.0
      %8305 = vmatpush2.msra.mxu0 0.0
      %8306 = vmatprep.subr.mxu0 0.0
      %8307 = vmatpush2.msra.mxu0 0.0
      %8308 = vmatprep.subr.mxu0 0.0
      %8309 = vmatpush2.msra.mxu0 0.0
      %8310 = vmatprep.subr.mxu0 0.0
      %8311 = vmatpush2.msra.mxu0 0.0
      %8312 = vmatprep.subr.mxu0 0.0
      %8313 = vmatpush2.msra.mxu0 0.0
      %8314 = vmatprep.subr.mxu0 0.0
      %8315 = vmatpush2.msra.mxu0 0.0
      %8316 = vmatprep.subr.mxu0 0.0
      %8317 = vmatpush2.msra.mxu0 0.0
      %8318 = vmatprep.subr.mxu0 0.0
      %8319 = vmatpush2.msra.mxu0 0.0
      %8320 = vmatprep.subr.mxu0 0.0
      %8321 = vmatpush2.msra.mxu0 0.0
      %8322 = vmatprep.subr.mxu0 0.0
      %8323 = vmatpush2.msra.mxu0 0.0
      %8324 = vmatprep.subr.mxu0 0.0
      %8325 = vmatpush2.msra.mxu0 0.0
      %8326 = vmatprep.mubr.f32.mxu0 0.0
      %8327 = vmatmul.mubr.f32.gmra.mxu0 %v8134
      %v8328 = vpop.f32.mrf.mxu0
      %v8329 = vadd.f32 %v8224, %v8328
      %v8330 = vpop.f32.mrf.mxu0
      %8331 = vmatprep.mubr.f32.mxu0 0.0
      %8332 = vmatmul.mubr.f32.gmra.mxu0 %v8137
      %v8333 = vpop.f32.mrf.mxu0
      %v8334 = vadd.f32 %v8229, %v8333
      %v8335 = vpop.f32.mrf.mxu0
      %8336 = vmatprep.mubr.f32.mxu0 0.0
      %8337 = vmatmul.mubr.f32.gmra.mxu0 %v8140
      %v8338 = vpop.f32.mrf.mxu0
      %v8339 = vadd.f32 %v8234, %v8338
      %v8340 = vpop.f32.mrf.mxu0
      %8341 = vmatprep.mubr.f32.mxu0 0.0
      %8342 = vmatmul.mubr.f32.gmra.mxu0 %v8143
      %v8343 = vpop.f32.mrf.mxu0
      %v8344 = vadd.f32 %v8239, %v8343
      %v8345 = vpop.f32.mrf.mxu0
      %8346 = vmatprep.mubr.f32.mxu0 0.0
      %8347 = vmatmul.mubr.f32.gmra.mxu0 %v8146
      %v8348 = vpop.f32.mrf.mxu0
      %v8349 = vadd.f32 %v8244, %v8348
      %v8350 = vpop.f32.mrf.mxu0
      %8351 = vmatprep.mubr.f32.mxu0 0.0
      %8352 = vmatmul.mubr.f32.gmra.mxu0 %v8149
      %v8353 = vpop.f32.mrf.mxu0
      %v8354 = vadd.f32 %v8249, %v8353
      %v8355 = vpop.f32.mrf.mxu0
      %8356 = vmatprep.mubr.f32.mxu0 0.0
      %8357 = vmatmul.mubr.f32.gmra.mxu0 %v8152
      %v8358 = vpop.f32.mrf.mxu0
      %v8359 = vadd.f32 %v8254, %v8358
      %v8360 = vpop.f32.mrf.mxu0
      %8361 = vmatprep.mubr.f32.mxu0 0.0
      %8362 = vmatmul.mubr.f32.gmra.mxu0 %v8155
      %v8363 = vpop.f32.mrf.mxu0
      %v8364 = vadd.f32 %v8259, %v8363
      %v8365 = vpop.f32.mrf.mxu0
      %8366 = vdwg.mxu0
      %v8367 = vadd.f32 %v8100, %v8329
      %v8368 = vadd.f32 %v8101, %v8334
      %v8369 = vadd.f32 %v8102, %v8339
      %v8370 = vadd.f32 %v8103, %v8344
      %v8371 = vadd.f32 %v8104, %v8349
      %v8372 = vadd.f32 %v8105, %v8354
      %v8373 = vadd.f32 %v8106, %v8359
      %v8374 = vadd.f32 %v8107, %v8364
      %s8375 = scalar_lea.vmem %s5, 192
      %v8376 = vld [vmem:[%s8375] sm:$0xff]
      %v8377 = vld [vmem:[%s8375 + $0x8] sm:$0xff]
      %v8378 = vld [vmem:[%s8375 + $0x10] sm:$0xff]
      %v8379 = vld [vmem:[%s8375 + $0x18] sm:$0xff]
      %v8380 = vld [vmem:[%s8375 + $0x20] sm:$0xff]
      %v8381 = vld [vmem:[%s8375 + $0x28] sm:$0xff]
      %v8382 = vld [vmem:[%s8375 + $0x30] sm:$0xff]
      %v8383 = vld [vmem:[%s8375 + $0x38] sm:$0xff]
      %v8384 = vld [vmem:[%s8375 + $0x40] sm:$0xff]
      %v8385 = vld [vmem:[%s8375 + $0x48] sm:$0xff]
      %v8386 = vld [vmem:[%s8375 + $0x50] sm:$0xff]
      %v8387 = vld [vmem:[%s8375 + $0x58] sm:$0xff]
      %v8388 = vld [vmem:[%s8375 + $0x60] sm:$0xff]
      %v8389 = vld [vmem:[%s8375 + $0x68] sm:$0xff]
      %v8390 = vld [vmem:[%s8375 + $0x70] sm:$0xff]
      %v8391 = vld [vmem:[%s8375 + $0x78] sm:$0xff]
      %v8392 = vld [vmem:[%s8375 + $0x80] sm:$0xff]
      %v8393 = vld [vmem:[%s8375 + $0x88] sm:$0xff]
      %v8394 = vld [vmem:[%s8375 + $0x90] sm:$0xff]
      %v8395 = vld [vmem:[%s8375 + $0x98] sm:$0xff]
      %v8396 = vld [vmem:[%s8375 + $0xa0] sm:$0xff]
      %v8397 = vld [vmem:[%s8375 + $0xa8] sm:$0xff]
      %v8398 = vld [vmem:[%s8375 + $0xb0] sm:$0xff]
      %v8399 = vld [vmem:[%s8375 + $0xb8] sm:$0xff]
      %8436 = vrot.lane.b32.xlu0 %v8064, 127
      %v8437 = vpop.permute.xlu0 %8436
      %8438 = vrot.lane.b32.xlu0 %v8065, 127
      %v8439 = vpop.permute.xlu0 %8438
      %8440 = vrot.lane.b32.xlu0 %v8066, 127
      %v8441 = vpop.permute.xlu0 %8440
      %8442 = vrot.lane.b32.xlu0 %v8067, 127
      %v8443 = vpop.permute.xlu0 %8442
      %8444 = vrot.lane.b32.xlu0 %v8068, 127
      %v8445 = vpop.permute.xlu0 %8444
      %8446 = vrot.lane.b32.xlu0 %v8069, 127
      %v8447 = vpop.permute.xlu0 %8446
      %8448 = vrot.lane.b32.xlu0 %v8070, 127
      %v8449 = vpop.permute.xlu0 %8448
      %8450 = vrot.lane.b32.xlu0 %v8071, 127
      %v8451 = vpop.permute.xlu0 %8450
      %8452 = vrot.lane.b32.xlu0 %v8072, 127
      %v8453 = vpop.permute.xlu0 %8452
      %8454 = vrot.lane.b32.xlu0 %v8073, 127
      %v8455 = vpop.permute.xlu0 %8454
      %8456 = vrot.lane.b32.xlu0 %v8074, 127
      %v8457 = vpop.permute.xlu0 %8456
      %8458 = vrot.lane.b32.xlu0 %v8075, 127
      %v8459 = vpop.permute.xlu0 %8458
      %8460 = vrot.lane.b32.xlu0 %v8076, 127
      %v8461 = vpop.permute.xlu0 %8460
      %8462 = vrot.lane.b32.xlu0 %v8077, 127
      %v8463 = vpop.permute.xlu0 %8462
      %8464 = vrot.lane.b32.xlu0 %v8078, 127
      %v8465 = vpop.permute.xlu0 %8464
      %8466 = vrot.lane.b32.xlu0 %v8079, 127
      %v8467 = vpop.permute.xlu0 %8466
      %8468 = vrot.lane.b32.xlu0 %v8080, 127
      %v8469 = vpop.permute.xlu0 %8468
      %8470 = vrot.lane.b32.xlu0 %v8081, 127
      %v8471 = vpop.permute.xlu0 %8470
      %8472 = vrot.lane.b32.xlu0 %v8082, 127
      %v8473 = vpop.permute.xlu0 %8472
      %8474 = vrot.lane.b32.xlu0 %v8083, 127
      %v8475 = vpop.permute.xlu0 %8474
      %8476 = vrot.lane.b32.xlu0 %v8084, 127
      %v8477 = vpop.permute.xlu0 %8476
      %8478 = vrot.lane.b32.xlu0 %v8085, 127
      %v8479 = vpop.permute.xlu0 %8478
      %8480 = vrot.lane.b32.xlu0 %v8086, 127
      %v8481 = vpop.permute.xlu0 %8480
      %8482 = vrot.lane.b32.xlu0 %v8087, 127
      %v8483 = vpop.permute.xlu0 %8482
      %8484 = vrot.lane.b32.xlu0 %v8088, 127
      %v8485 = vpop.permute.xlu0 %8484
      %8486 = vrot.lane.b32.xlu0 %v8089, 127
      %v8487 = vpop.permute.xlu0 %8486
      %8488 = vrot.lane.b32.xlu0 %v8090, 127
      %v8489 = vpop.permute.xlu0 %8488
      %8490 = vrot.lane.b32.xlu0 %v8091, 127
      %v8491 = vpop.permute.xlu0 %8490
      %8492 = vrot.lane.b32.xlu0 %v8092, 127
      %v8493 = vpop.permute.xlu0 %8492
      %8494 = vrot.lane.b32.xlu0 %v8093, 127
      %v8495 = vpop.permute.xlu0 %8494
      %8496 = vrot.lane.b32.xlu0 %v8094, 127
      %v8497 = vpop.permute.xlu0 %8496
      %8498 = vrot.lane.b32.xlu0 %v8095, 127
      %v8499 = vpop.permute.xlu0 %8498
      %8500 = vrot.lane.b32.xlu0 %v8096, 127
      %v8501 = vpop.permute.xlu0 %8500
      %8502 = vrot.lane.b32.xlu0 %v8097, 127
      %v8503 = vpop.permute.xlu0 %8502
      %8504 = vrot.lane.b32.xlu0 %v8098, 127
      %v8505 = vpop.permute.xlu0 %8504
      %8506 = vrot.lane.b32.xlu0 %v8099, 127
      %v8507 = vpop.permute.xlu0 %8506
      %v8545 = vsel %vm8132, %v8378, 0
      %v8548 = vsel %vm8132, %v8381, 0
      %v8551 = vsel %vm8132, %v8384, 0
      %v8554 = vsel %vm8132, %v8387, 0
      %v8557 = vsel %vm8132, %v8390, 0
      %v8560 = vsel %vm8132, %v8393, 0
      %v8563 = vsel %vm8132, %v8396, 0
      %v8566 = vsel %vm8132, %v8399, 0
      %8568 = vmatprep.subr.mxu0 0.0
      %8569 = vmatpush1.msra.mxu0 %v8467
      %8570 = vmatprep.subr.mxu0 0.0
      %8571 = vmatpush1.msra.mxu0 %v8465
      %8572 = vmatprep.subr.mxu0 0.0
      %8573 = vmatpush1.msra.mxu0 %v8463
      %8574 = vmatprep.subr.mxu0 0.0
      %8575 = vmatpush1.msra.mxu0 %v8461
      %8576 = vmatprep.subr.mxu0 0.0
      %8577 = vmatpush1.msra.mxu0 %v8459
      %8578 = vmatprep.subr.mxu0 0.0
      %8579 = vmatpush1.msra.mxu0 %v8457
      %8580 = vmatprep.subr.mxu0 0.0
      %8581 = vmatpush1.msra.mxu0 %v8455
      %8582 = vmatprep.subr.mxu0 0.0
      %8583 = vmatpush1.msra.mxu0 %v8453
      %8584 = vmatprep.subr.mxu0 0.0
      %8585 = vmatpush1.msra.mxu0 %v8451
      %8586 = vmatprep.subr.mxu0 0.0
      %8587 = vmatpush1.msra.mxu0 %v8449
      %8588 = vmatprep.subr.mxu0 0.0
      %8589 = vmatpush1.msra.mxu0 %v8447
      %8590 = vmatprep.subr.mxu0 0.0
      %8591 = vmatpush1.msra.mxu0 %v8445
      %8592 = vmatprep.subr.mxu0 0.0
      %8593 = vmatpush1.msra.mxu0 %v8443
      %8594 = vmatprep.subr.mxu0 0.0
      %8595 = vmatpush1.msra.mxu0 %v8441
      %8596 = vmatprep.subr.mxu0 0.0
      %8597 = vmatpush1.msra.mxu0 %v8439
      %8598 = vmatprep.subr.mxu0 0.0
      %8599 = vmatpush1.msra.mxu0 %v8437
      %8600 = vmatprep.subr.mxu0 0.0
      %8601 = vmatpush2.msra.mxu0 %v8499
      %8602 = vmatprep.subr.mxu0 0.0
      %8603 = vmatpush2.msra.mxu0 %v8497
      %8604 = vmatprep.subr.mxu0 0.0
      %8605 = vmatpush2.msra.mxu0 %v8495
      %8606 = vmatprep.subr.mxu0 0.0
      %8607 = vmatpush2.msra.mxu0 %v8493
      %8608 = vmatprep.subr.mxu0 0.0
      %8609 = vmatpush2.msra.mxu0 %v8491
      %8610 = vmatprep.subr.mxu0 0.0
      %8611 = vmatpush2.msra.mxu0 %v8489
      %8612 = vmatprep.subr.mxu0 0.0
      %8613 = vmatpush2.msra.mxu0 %v8487
      %8614 = vmatprep.subr.mxu0 0.0
      %8615 = vmatpush2.msra.mxu0 %v8485
      %8616 = vmatprep.subr.mxu0 0.0
      %8617 = vmatpush2.msra.mxu0 %v8483
      %8618 = vmatprep.subr.mxu0 0.0
      %8619 = vmatpush2.msra.mxu0 %v8481
      %8620 = vmatprep.subr.mxu0 0.0
      %8621 = vmatpush2.msra.mxu0 %v8479
      %8622 = vmatprep.subr.mxu0 0.0
      %8623 = vmatpush2.msra.mxu0 %v8477
      %8624 = vmatprep.subr.mxu0 0.0
      %8625 = vmatpush2.msra.mxu0 %v8475
      %8626 = vmatprep.subr.mxu0 0.0
      %8627 = vmatpush2.msra.mxu0 %v8473
      %8628 = vmatprep.subr.mxu0 0.0
      %8629 = vmatpush2.msra.mxu0 %v8471
      %8630 = vmatprep.subr.mxu0 0.0
      %8631 = vmatpush2.msra.mxu0 %v8469
      %8632 = vmatprep.mubr.f32.mxu0 %v8377
      %8633 = vmatmul.mubr.f32.gmra.mxu0 %v8376
      %v8634 = vpop.f32.mrf.mxu0
      %v8635 = vadd.f32 0.0, %v8634
      %v8636 = vpop.f32.mrf.mxu0
      %8637 = vmatprep.mubr.f32.mxu0 %v8380
      %8638 = vmatmul.mubr.f32.gmra.mxu0 %v8379
      %v8639 = vpop.f32.mrf.mxu0
      %v8640 = vadd.f32 0.0, %v8639
      %v8641 = vpop.f32.mrf.mxu0
      %8642 = vmatprep.mubr.f32.mxu0 %v8383
      %8643 = vmatmul.mubr.f32.gmra.mxu0 %v8382
      %v8644 = vpop.f32.mrf.mxu0
      %v8645 = vadd.f32 0.0, %v8644
      %v8646 = vpop.f32.mrf.mxu0
      %8647 = vmatprep.mubr.f32.mxu0 %v8386
      %8648 = vmatmul.mubr.f32.gmra.mxu0 %v8385
      %v8649 = vpop.f32.mrf.mxu0
      %v8650 = vadd.f32 0.0, %v8649
      %v8651 = vpop.f32.mrf.mxu0
      %8652 = vmatprep.mubr.f32.mxu0 %v8389
      %8653 = vmatmul.mubr.f32.gmra.mxu0 %v8388
      %v8654 = vpop.f32.mrf.mxu0
      %v8655 = vadd.f32 0.0, %v8654
      %v8656 = vpop.f32.mrf.mxu0
      %8657 = vmatprep.mubr.f32.mxu0 %v8392
      %8658 = vmatmul.mubr.f32.gmra.mxu0 %v8391
      %v8659 = vpop.f32.mrf.mxu0
      %v8660 = vadd.f32 0.0, %v8659
      %v8661 = vpop.f32.mrf.mxu0
      %8662 = vmatprep.mubr.f32.mxu0 %v8395
      %8663 = vmatmul.mubr.f32.gmra.mxu0 %v8394
      %v8664 = vpop.f32.mrf.mxu0
      %v8665 = vadd.f32 0.0, %v8664
      %v8666 = vpop.f32.mrf.mxu0
      %8667 = vmatprep.mubr.f32.mxu0 %v8398
      %8668 = vmatmul.mubr.f32.gmra.mxu0 %v8397
      %v8669 = vpop.f32.mrf.mxu0
      %v8670 = vadd.f32 0.0, %v8669
      %v8671 = vpop.f32.mrf.mxu0
      %8672 = vdwg.mxu0
      %8673 = vmatprep.subr.mxu0 0.0
      %8674 = vmatpush1.msra.mxu0 0.0
      %8675 = vmatprep.subr.mxu0 0.0
      %8676 = vmatpush1.msra.mxu0 0.0
      %8677 = vmatprep.subr.mxu0 0.0
      %8678 = vmatpush1.msra.mxu0 0.0
      %8679 = vmatprep.subr.mxu0 0.0
      %8680 = vmatpush1.msra.mxu0 0.0
      %8681 = vmatprep.subr.mxu0 0.0
      %8682 = vmatpush1.msra.mxu0 0.0
      %8683 = vmatprep.subr.mxu0 0.0
      %8684 = vmatpush1.msra.mxu0 0.0
      %8685 = vmatprep.subr.mxu0 0.0
      %8686 = vmatpush1.msra.mxu0 0.0
      %8687 = vmatprep.subr.mxu0 0.0
      %8688 = vmatpush1.msra.mxu0 0.0
      %8689 = vmatprep.subr.mxu0 0.0
      %8690 = vmatpush1.msra.mxu0 0.0
      %8691 = vmatprep.subr.mxu0 0.0
      %8692 = vmatpush1.msra.mxu0 0.0
      %8693 = vmatprep.subr.mxu0 0.0
      %8694 = vmatpush1.msra.mxu0 0.0
      %8695 = vmatprep.subr.mxu0 0.0
      %8696 = vmatpush1.msra.mxu0 0.0
      %8697 = vmatprep.subr.mxu0 0.0
      %8698 = vmatpush1.msra.mxu0 %v8507
      %8699 = vmatprep.subr.mxu0 0.0
      %8700 = vmatpush1.msra.mxu0 %v8505
      %8701 = vmatprep.subr.mxu0 0.0
      %8702 = vmatpush1.msra.mxu0 %v8503
      %8703 = vmatprep.subr.mxu0 0.0
      %8704 = vmatpush1.msra.mxu0 %v8501
      %8705 = vmatprep.subr.mxu0 0.0
      %8706 = vmatpush2.msra.mxu0 0.0
      %8707 = vmatprep.subr.mxu0 0.0
      %8708 = vmatpush2.msra.mxu0 0.0
      %8709 = vmatprep.subr.mxu0 0.0
      %8710 = vmatpush2.msra.mxu0 0.0
      %8711 = vmatprep.subr.mxu0 0.0
      %8712 = vmatpush2.msra.mxu0 0.0
      %8713 = vmatprep.subr.mxu0 0.0
      %8714 = vmatpush2.msra.mxu0 0.0
      %8715 = vmatprep.subr.mxu0 0.0
      %8716 = vmatpush2.msra.mxu0 0.0
      %8717 = vmatprep.subr.mxu0 0.0
      %8718 = vmatpush2.msra.mxu0 0.0
      %8719 = vmatprep.subr.mxu0 0.0
      %8720 = vmatpush2.msra.mxu0 0.0
      %8721 = vmatprep.subr.mxu0 0.0
      %8722 = vmatpush2.msra.mxu0 0.0
      %8723 = vmatprep.subr.mxu0 0.0
      %8724 = vmatpush2.msra.mxu0 0.0
      %8725 = vmatprep.subr.mxu0 0.0
      %8726 = vmatpush2.msra.mxu0 0.0
      %8727 = vmatprep.subr.mxu0 0.0
      %8728 = vmatpush2.msra.mxu0 0.0
      %8729 = vmatprep.subr.mxu0 0.0
      %8730 = vmatpush2.msra.mxu0 0.0
      %8731 = vmatprep.subr.mxu0 0.0
      %8732 = vmatpush2.msra.mxu0 0.0
      %8733 = vmatprep.subr.mxu0 0.0
      %8734 = vmatpush2.msra.mxu0 0.0
      %8735 = vmatprep.subr.mxu0 0.0
      %8736 = vmatpush2.msra.mxu0 0.0
      %8737 = vmatprep.mubr.f32.mxu0 0.0
      %8738 = vmatmul.mubr.f32.gmra.mxu0 %v8545
      %v8739 = vpop.f32.mrf.mxu0
      %v8740 = vadd.f32 %v8635, %v8739
      %v8741 = vpop.f32.mrf.mxu0
      %8742 = vmatprep.mubr.f32.mxu0 0.0
      %8743 = vmatmul.mubr.f32.gmra.mxu0 %v8548
      %v8744 = vpop.f32.mrf.mxu0
      %v8745 = vadd.f32 %v8640, %v8744
      %v8746 = vpop.f32.mrf.mxu0
      %8747 = vmatprep.mubr.f32.mxu0 0.0
      %8748 = vmatmul.mubr.f32.gmra.mxu0 %v8551
      %v8749 = vpop.f32.mrf.mxu0
      %v8750 = vadd.f32 %v8645, %v8749
      %v8751 = vpop.f32.mrf.mxu0
      %8752 = vmatprep.mubr.f32.mxu0 0.0
      %8753 = vmatmul.mubr.f32.gmra.mxu0 %v8554
      %v8754 = vpop.f32.mrf.mxu0
      %v8755 = vadd.f32 %v8650, %v8754
      %v8756 = vpop.f32.mrf.mxu0
      %8757 = vmatprep.mubr.f32.mxu0 0.0
      %8758 = vmatmul.mubr.f32.gmra.mxu0 %v8557
      %v8759 = vpop.f32.mrf.mxu0
      %v8760 = vadd.f32 %v8655, %v8759
      %v8761 = vpop.f32.mrf.mxu0
      %8762 = vmatprep.mubr.f32.mxu0 0.0
      %8763 = vmatmul.mubr.f32.gmra.mxu0 %v8560
      %v8764 = vpop.f32.mrf.mxu0
      %v8765 = vadd.f32 %v8660, %v8764
      %v8766 = vpop.f32.mrf.mxu0
      %8767 = vmatprep.mubr.f32.mxu0 0.0
      %8768 = vmatmul.mubr.f32.gmra.mxu0 %v8563
      %v8769 = vpop.f32.mrf.mxu0
      %v8770 = vadd.f32 %v8665, %v8769
      %v8771 = vpop.f32.mrf.mxu0
      %8772 = vmatprep.mubr.f32.mxu0 0.0
      %8773 = vmatmul.mubr.f32.gmra.mxu0 %v8566
      %v8774 = vpop.f32.mrf.mxu0
      %v8775 = vadd.f32 %v8670, %v8774
      %v8776 = vpop.f32.mrf.mxu0
      %8777 = vdwg.mxu0
      %v8778 = vadd.f32 %v8367, %v8740
      %v8779 = vadd.f32 %v8368, %v8745
      %v8780 = vadd.f32 %v8369, %v8750
      %v8781 = vadd.f32 %v8370, %v8755
      %v8782 = vadd.f32 %v8371, %v8760
      %v8783 = vadd.f32 %v8372, %v8765
      %v8784 = vadd.f32 %v8373, %v8770
      %v8785 = vadd.f32 %v8374, %v8775
      %s8786 = scalar_lea.vmem %s5, 384
      %v8787 = vld [vmem:[%s8786] sm:$0xff]
      %v8788 = vld [vmem:[%s8786 + $0x8] sm:$0xff]
      %v8789 = vld [vmem:[%s8786 + $0x10] sm:$0xff]
      %v8790 = vld [vmem:[%s8786 + $0x18] sm:$0xff]
      %v8791 = vld [vmem:[%s8786 + $0x20] sm:$0xff]
      %v8792 = vld [vmem:[%s8786 + $0x28] sm:$0xff]
      %v8793 = vld [vmem:[%s8786 + $0x30] sm:$0xff]
      %v8794 = vld [vmem:[%s8786 + $0x38] sm:$0xff]
      %v8795 = vld [vmem:[%s8786 + $0x40] sm:$0xff]
      %v8796 = vld [vmem:[%s8786 + $0x48] sm:$0xff]
      %v8797 = vld [vmem:[%s8786 + $0x50] sm:$0xff]
      %v8798 = vld [vmem:[%s8786 + $0x58] sm:$0xff]
      %v8799 = vld [vmem:[%s8786 + $0x60] sm:$0xff]
      %v8800 = vld [vmem:[%s8786 + $0x68] sm:$0xff]
      %v8801 = vld [vmem:[%s8786 + $0x70] sm:$0xff]
      %v8802 = vld [vmem:[%s8786 + $0x78] sm:$0xff]
      %v8803 = vld [vmem:[%s8786 + $0x80] sm:$0xff]
      %v8804 = vld [vmem:[%s8786 + $0x88] sm:$0xff]
      %v8805 = vld [vmem:[%s8786 + $0x90] sm:$0xff]
      %v8806 = vld [vmem:[%s8786 + $0x98] sm:$0xff]
      %v8807 = vld [vmem:[%s8786 + $0xa0] sm:$0xff]
      %v8808 = vld [vmem:[%s8786 + $0xa8] sm:$0xff]
      %v8809 = vld [vmem:[%s8786 + $0xb0] sm:$0xff]
      %v8810 = vld [vmem:[%s8786 + $0xb8] sm:$0xff]
      %8811 = vrot.lane.b32.xlu0 %v8064, 126
      %v8812 = vpop.permute.xlu0 %8811
      %8813 = vrot.lane.b32.xlu0 %v8065, 126
      %v8814 = vpop.permute.xlu0 %8813
      %8815 = vrot.lane.b32.xlu0 %v8066, 126
      %v8816 = vpop.permute.xlu0 %8815
      %8817 = vrot.lane.b32.xlu0 %v8067, 126
      %v8818 = vpop.permute.xlu0 %8817
      %8819 = vrot.lane.b32.xlu0 %v8068, 126
      %v8820 = vpop.permute.xlu0 %8819
      %8821 = vrot.lane.b32.xlu0 %v8069, 126
      %v8822 = vpop.permute.xlu0 %8821
      %8823 = vrot.lane.b32.xlu0 %v8070, 126
      %v8824 = vpop.permute.xlu0 %8823
      %8825 = vrot.lane.b32.xlu0 %v8071, 126
      %v8826 = vpop.permute.xlu0 %8825
      %8827 = vrot.lane.b32.xlu0 %v8072, 126
      %v8828 = vpop.permute.xlu0 %8827
      %8829 = vrot.lane.b32.xlu0 %v8073, 126
      %v8830 = vpop.permute.xlu0 %8829
      %8831 = vrot.lane.b32.xlu0 %v8074, 126
      %v8832 = vpop.permute.xlu0 %8831
      %8833 = vrot.lane.b32.xlu0 %v8075, 126
      %v8834 = vpop.permute.xlu0 %8833
      %8835 = vrot.lane.b32.xlu0 %v8076, 126
      %v8836 = vpop.permute.xlu0 %8835
      %8837 = vrot.lane.b32.xlu0 %v8077, 126
      %v8838 = vpop.permute.xlu0 %8837
      %8839 = vrot.lane.b32.xlu0 %v8078, 126
      %v8840 = vpop.permute.xlu0 %8839
      %8841 = vrot.lane.b32.xlu0 %v8079, 126
      %v8842 = vpop.permute.xlu0 %8841
      %8843 = vrot.lane.b32.xlu0 %v8080, 126
      %v8844 = vpop.permute.xlu0 %8843
      %8845 = vrot.lane.b32.xlu0 %v8081, 126
      %v8846 = vpop.permute.xlu0 %8845
      %8847 = vrot.lane.b32.xlu0 %v8082, 126
      %v8848 = vpop.permute.xlu0 %8847
      %8849 = vrot.lane.b32.xlu0 %v8083, 126
      %v8850 = vpop.permute.xlu0 %8849
      %8851 = vrot.lane.b32.xlu0 %v8084, 126
      %v8852 = vpop.permute.xlu0 %8851
      %8853 = vrot.lane.b32.xlu0 %v8085, 126
      %v8854 = vpop.permute.xlu0 %8853
      %8855 = vrot.lane.b32.xlu0 %v8086, 126
      %v8856 = vpop.permute.xlu0 %8855
      %8857 = vrot.lane.b32.xlu0 %v8087, 126
      %v8858 = vpop.permute.xlu0 %8857
      %8859 = vrot.lane.b32.xlu0 %v8088, 126
      %v8860 = vpop.permute.xlu0 %8859
      %8861 = vrot.lane.b32.xlu0 %v8089, 126
      %v8862 = vpop.permute.xlu0 %8861
      %8863 = vrot.lane.b32.xlu0 %v8090, 126
      %v8864 = vpop.permute.xlu0 %8863
      %8865 = vrot.lane.b32.xlu0 %v8091, 126
      %v8866 = vpop.permute.xlu0 %8865
      %8867 = vrot.lane.b32.xlu0 %v8092, 126
      %v8868 = vpop.permute.xlu0 %8867
      %8869 = vrot.lane.b32.xlu0 %v8093, 126
      %v8870 = vpop.permute.xlu0 %8869
      %8871 = vrot.lane.b32.xlu0 %v8094, 126
      %v8872 = vpop.permute.xlu0 %8871
      %8873 = vrot.lane.b32.xlu0 %v8095, 126
      %v8874 = vpop.permute.xlu0 %8873
      %8875 = vrot.lane.b32.xlu0 %v8096, 126
      %v8876 = vpop.permute.xlu0 %8875
      %8877 = vrot.lane.b32.xlu0 %v8097, 126
      %v8878 = vpop.permute.xlu0 %8877
      %8879 = vrot.lane.b32.xlu0 %v8098, 126
      %v8880 = vpop.permute.xlu0 %8879
      %8881 = vrot.lane.b32.xlu0 %v8099, 126
      %v8882 = vpop.permute.xlu0 %8881
      %v8920 = vsel %vm8132, %v8789, 0
      %v8923 = vsel %vm8132, %v8792, 0
      %v8926 = vsel %vm8132, %v8795, 0
      %v8929 = vsel %vm8132, %v8798, 0
      %v8932 = vsel %vm8132, %v8801, 0
      %v8935 = vsel %vm8132, %v8804, 0
      %v8938 = vsel %vm8132, %v8807, 0
      %v8941 = vsel %vm8132, %v8810, 0
      %8943 = vmatprep.subr.mxu0 0.0
      %8944 = vmatpush1.msra.mxu0 %v8842
      %8945 = vmatprep.subr.mxu0 0.0
      %8946 = vmatpush1.msra.mxu0 %v8840
      %8947 = vmatprep.subr.mxu0 0.0
      %8948 = vmatpush1.msra.mxu0 %v8838
      %8949 = vmatprep.subr.mxu0 0.0
      %8950 = vmatpush1.msra.mxu0 %v8836
      %8951 = vmatprep.subr.mxu0 0.0
      %8952 = vmatpush1.msra.mxu0 %v8834
      %8953 = vmatprep.subr.mxu0 0.0
      %8954 = vmatpush1.msra.mxu0 %v8832
      %8955 = vmatprep.subr.mxu0 0.0
      %8956 = vmatpush1.msra.mxu0 %v8830
      %8957 = vmatprep.subr.mxu0 0.0
      %8958 = vmatpush1.msra.mxu0 %v8828
      %8959 = vmatprep.subr.mxu0 0.0
      %8960 = vmatpush1.msra.mxu0 %v8826
      %8961 = vmatprep.subr.mxu0 0.0
      %8962 = vmatpush1.msra.mxu0 %v8824
      %8963 = vmatprep.subr.mxu0 0.0
      %8964 = vmatpush1.msra.mxu0 %v8822
      %8965 = vmatprep.subr.mxu0 0.0
      %8966 = vmatpush1.msra.mxu0 %v8820
      %8967 = vmatprep.subr.mxu0 0.0
      %8968 = vmatpush1.msra.mxu0 %v8818
      %8969 = vmatprep.subr.mxu0 0.0
      %8970 = vmatpush1.msra.mxu0 %v8816
      %8971 = vmatprep.subr.mxu0 0.0
      %8972 = vmatpush1.msra.mxu0 %v8814
      %8973 = vmatprep.subr.mxu0 0.0
      %8974 = vmatpush1.msra.mxu0 %v8812
      %8975 = vmatprep.subr.mxu0 0.0
      %8976 = vmatpush2.msra.mxu0 %v8874
      %8977 = vmatprep.subr.mxu0 0.0
      %8978 = vmatpush2.msra.mxu0 %v8872
      %8979 = vmatprep.subr.mxu0 0.0
      %8980 = vmatpush2.msra.mxu0 %v8870
      %8981 = vmatprep.subr.mxu0 0.0
      %8982 = vmatpush2.msra.mxu0 %v8868
      %8983 = vmatprep.subr.mxu0 0.0
      %8984 = vmatpush2.msra.mxu0 %v8866
      %8985 = vmatprep.subr.mxu0 0.0
      %8986 = vmatpush2.msra.mxu0 %v8864
      %8987 = vmatprep.subr.mxu0 0.0
      %8988 = vmatpush2.msra.mxu0 %v8862
      %8989 = vmatprep.subr.mxu0 0.0
      %8990 = vmatpush2.msra.mxu0 %v8860
      %8991 = vmatprep.subr.mxu0 0.0
      %8992 = vmatpush2.msra.mxu0 %v8858
      %8993 = vmatprep.subr.mxu0 0.0
      %8994 = vmatpush2.msra.mxu0 %v8856
      %8995 = vmatprep.subr.mxu0 0.0
      %8996 = vmatpush2.msra.mxu0 %v8854
      %8997 = vmatprep.subr.mxu0 0.0
      %8998 = vmatpush2.msra.mxu0 %v8852
      %8999 = vmatprep.subr.mxu0 0.0
      %9000 = vmatpush2.msra.mxu0 %v8850
      %9001 = vmatprep.subr.mxu0 0.0
      %9002 = vmatpush2.msra.mxu0 %v8848
      %9003 = vmatprep.subr.mxu0 0.0
      %9004 = vmatpush2.msra.mxu0 %v8846
      %9005 = vmatprep.subr.mxu0 0.0
      %9006 = vmatpush2.msra.mxu0 %v8844
      %9007 = vmatprep.mubr.f32.mxu0 %v8788
      %9008 = vmatmul.mubr.f32.gmra.mxu0 %v8787
      %v9009 = vpop.f32.mrf.mxu0
      %v9010 = vadd.f32 0.0, %v9009
      %v9011 = vpop.f32.mrf.mxu0
      %9012 = vmatprep.mubr.f32.mxu0 %v8791
      %9013 = vmatmul.mubr.f32.gmra.mxu0 %v8790
      %v9014 = vpop.f32.mrf.mxu0
      %v9015 = vadd.f32 0.0, %v9014
      %v9016 = vpop.f32.mrf.mxu0
      %9017 = vmatprep.mubr.f32.mxu0 %v8794
      %9018 = vmatmul.mubr.f32.gmra.mxu0 %v8793
      %v9019 = vpop.f32.mrf.mxu0
      %v9020 = vadd.f32 0.0, %v9019
      %v9021 = vpop.f32.mrf.mxu0
      %9022 = vmatprep.mubr.f32.mxu0 %v8797
      %9023 = vmatmul.mubr.f32.gmra.mxu0 %v8796
      %v9024 = vpop.f32.mrf.mxu0
      %v9025 = vadd.f32 0.0, %v9024
      %v9026 = vpop.f32.mrf.mxu0
      %9027 = vmatprep.mubr.f32.mxu0 %v8800
      %9028 = vmatmul.mubr.f32.gmra.mxu0 %v8799
      %v9029 = vpop.f32.mrf.mxu0
      %v9030 = vadd.f32 0.0, %v9029
      %v9031 = vpop.f32.mrf.mxu0
      %9032 = vmatprep.mubr.f32.mxu0 %v8803
      %9033 = vmatmul.mubr.f32.gmra.mxu0 %v8802
      %v9034 = vpop.f32.mrf.mxu0
      %v9035 = vadd.f32 0.0, %v9034
      %v9036 = vpop.f32.mrf.mxu0
      %9037 = vmatprep.mubr.f32.mxu0 %v8806
      %9038 = vmatmul.mubr.f32.gmra.mxu0 %v8805
      %v9039 = vpop.f32.mrf.mxu0
      %v9040 = vadd.f32 0.0, %v9039
      %v9041 = vpop.f32.mrf.mxu0
      %9042 = vmatprep.mubr.f32.mxu0 %v8809
      %9043 = vmatmul.mubr.f32.gmra.mxu0 %v8808
      %v9044 = vpop.f32.mrf.mxu0
      %v9045 = vadd.f32 0.0, %v9044
      %v9046 = vpop.f32.mrf.mxu0
      %9047 = vdwg.mxu0
      %9048 = vmatprep.subr.mxu0 0.0
      %9049 = vmatpush1.msra.mxu0 0.0
      %9050 = vmatprep.subr.mxu0 0.0
      %9051 = vmatpush1.msra.mxu0 0.0
      %9052 = vmatprep.subr.mxu0 0.0
      %9053 = vmatpush1.msra.mxu0 0.0
      %9054 = vmatprep.subr.mxu0 0.0
      %9055 = vmatpush1.msra.mxu0 0.0
      %9056 = vmatprep.subr.mxu0 0.0
      %9057 = vmatpush1.msra.mxu0 0.0
      %9058 = vmatprep.subr.mxu0 0.0
      %9059 = vmatpush1.msra.mxu0 0.0
      %9060 = vmatprep.subr.mxu0 0.0
      %9061 = vmatpush1.msra.mxu0 0.0
      %9062 = vmatprep.subr.mxu0 0.0
      %9063 = vmatpush1.msra.mxu0 0.0
      %9064 = vmatprep.subr.mxu0 0.0
      %9065 = vmatpush1.msra.mxu0 0.0
      %9066 = vmatprep.subr.mxu0 0.0
      %9067 = vmatpush1.msra.mxu0 0.0
      %9068 = vmatprep.subr.mxu0 0.0
      %9069 = vmatpush1.msra.mxu0 0.0
      %9070 = vmatprep.subr.mxu0 0.0
      %9071 = vmatpush1.msra.mxu0 0.0
      %9072 = vmatprep.subr.mxu0 0.0
      %9073 = vmatpush1.msra.mxu0 %v8882
      %9074 = vmatprep.subr.mxu0 0.0
      %9075 = vmatpush1.msra.mxu0 %v8880
      %9076 = vmatprep.subr.mxu0 0.0
      %9077 = vmatpush1.msra.mxu0 %v8878
      %9078 = vmatprep.subr.mxu0 0.0
      %9079 = vmatpush1.msra.mxu0 %v8876
      %9080 = vmatprep.subr.mxu0 0.0
      %9081 = vmatpush2.msra.mxu0 0.0
      %9082 = vmatprep.subr.mxu0 0.0
      %9083 = vmatpush2.msra.mxu0 0.0
      %9084 = vmatprep.subr.mxu0 0.0
      %9085 = vmatpush2.msra.mxu0 0.0
      %9086 = vmatprep.subr.mxu0 0.0
      %9087 = vmatpush2.msra.mxu0 0.0
      %9088 = vmatprep.subr.mxu0 0.0
      %9089 = vmatpush2.msra.mxu0 0.0
      %9090 = vmatprep.subr.mxu0 0.0
      %9091 = vmatpush2.msra.mxu0 0.0
      %9092 = vmatprep.subr.mxu0 0.0
      %9093 = vmatpush2.msra.mxu0 0.0
      %9094 = vmatprep.subr.mxu0 0.0
      %9095 = vmatpush2.msra.mxu0 0.0
      %9096 = vmatprep.subr.mxu0 0.0
      %9097 = vmatpush2.msra.mxu0 0.0
      %9098 = vmatprep.subr.mxu0 0.0
      %9099 = vmatpush2.msra.mxu0 0.0
      %9100 = vmatprep.subr.mxu0 0.0
      %9101 = vmatpush2.msra.mxu0 0.0
      %9102 = vmatprep.subr.mxu0 0.0
      %9103 = vmatpush2.msra.mxu0 0.0
      %9104 = vmatprep.subr.mxu0 0.0
      %9105 = vmatpush2.msra.mxu0 0.0
      %9106 = vmatprep.subr.mxu0 0.0
      %9107 = vmatpush2.msra.mxu0 0.0
      %9108 = vmatprep.subr.mxu0 0.0
      %9109 = vmatpush2.msra.mxu0 0.0
      %9110 = vmatprep.subr.mxu0 0.0
      %9111 = vmatpush2.msra.mxu0 0.0
      %9112 = vmatprep.mubr.f32.mxu0 0.0
      %9113 = vmatmul.mubr.f32.gmra.mxu0 %v8920
      %v9114 = vpop.f32.mrf.mxu0
      %v9115 = vadd.f32 %v9010, %v9114
      %v9116 = vpop.f32.mrf.mxu0
      %9117 = vmatprep.mubr.f32.mxu0 0.0
      %9118 = vmatmul.mubr.f32.gmra.mxu0 %v8923
      %v9119 = vpop.f32.mrf.mxu0
      %v9120 = vadd.f32 %v9015, %v9119
      %v9121 = vpop.f32.mrf.mxu0
      %9122 = vmatprep.mubr.f32.mxu0 0.0
      %9123 = vmatmul.mubr.f32.gmra.mxu0 %v8926
      %v9124 = vpop.f32.mrf.mxu0
      %v9125 = vadd.f32 %v9020, %v9124
      %v9126 = vpop.f32.mrf.mxu0
      %9127 = vmatprep.mubr.f32.mxu0 0.0
      %9128 = vmatmul.mubr.f32.gmra.mxu0 %v8929
      %v9129 = vpop.f32.mrf.mxu0
      %v9130 = vadd.f32 %v9025, %v9129
      %v9131 = vpop.f32.mrf.mxu0
      %9132 = vmatprep.mubr.f32.mxu0 0.0
      %9133 = vmatmul.mubr.f32.gmra.mxu0 %v8932
      %v9134 = vpop.f32.mrf.mxu0
      %v9135 = vadd.f32 %v9030, %v9134
      %v9136 = vpop.f32.mrf.mxu0
      %9137 = vmatprep.mubr.f32.mxu0 0.0
      %9138 = vmatmul.mubr.f32.gmra.mxu0 %v8935
      %v9139 = vpop.f32.mrf.mxu0
      %v9140 = vadd.f32 %v9035, %v9139
      %v9141 = vpop.f32.mrf.mxu0
      %9142 = vmatprep.mubr.f32.mxu0 0.0
      %9143 = vmatmul.mubr.f32.gmra.mxu0 %v8938
      %v9144 = vpop.f32.mrf.mxu0
      %v9145 = vadd.f32 %v9040, %v9144
      %v9146 = vpop.f32.mrf.mxu0
      %9147 = vmatprep.mubr.f32.mxu0 0.0
      %9148 = vmatmul.mubr.f32.gmra.mxu0 %v8941
      %v9149 = vpop.f32.mrf.mxu0
      %v9150 = vadd.f32 %v9045, %v9149
      %v9151 = vpop.f32.mrf.mxu0
      %9152 = vdwg.mxu0
      %v9153 = vadd.f32 %v8778, %v9115
      %v9154 = vadd.f32 %v8779, %v9120
      %v9155 = vadd.f32 %v8780, %v9125
      %v9156 = vadd.f32 %v8781, %v9130
      %v9157 = vadd.f32 %v8782, %v9135
      %v9158 = vadd.f32 %v8783, %v9140
      %v9159 = vadd.f32 %v8784, %v9145
      %v9160 = vadd.f32 %v8785, %v9150
      %s9161 = scalar_lea.vmem %s5, 576
      %v9162 = vld [vmem:[%s9161] sm:$0xff]
      %v9163 = vld [vmem:[%s9161 + $0x8] sm:$0xff]
      %v9164 = vld [vmem:[%s9161 + $0x10] sm:$0xff]
      %v9165 = vld [vmem:[%s9161 + $0x18] sm:$0xff]
      %v9166 = vld [vmem:[%s9161 + $0x20] sm:$0xff]
      %v9167 = vld [vmem:[%s9161 + $0x28] sm:$0xff]
      %v9168 = vld [vmem:[%s9161 + $0x30] sm:$0xff]
      %v9169 = vld [vmem:[%s9161 + $0x38] sm:$0xff]
      %v9170 = vld [vmem:[%s9161 + $0x40] sm:$0xff]
      %v9171 = vld [vmem:[%s9161 + $0x48] sm:$0xff]
      %v9172 = vld [vmem:[%s9161 + $0x50] sm:$0xff]
      %v9173 = vld [vmem:[%s9161 + $0x58] sm:$0xff]
      %v9174 = vld [vmem:[%s9161 + $0x60] sm:$0xff]
      %v9175 = vld [vmem:[%s9161 + $0x68] sm:$0xff]
      %v9176 = vld [vmem:[%s9161 + $0x70] sm:$0xff]
      %v9177 = vld [vmem:[%s9161 + $0x78] sm:$0xff]
      %v9178 = vld [vmem:[%s9161 + $0x80] sm:$0xff]
      %v9179 = vld [vmem:[%s9161 + $0x88] sm:$0xff]
      %v9180 = vld [vmem:[%s9161 + $0x90] sm:$0xff]
      %v9181 = vld [vmem:[%s9161 + $0x98] sm:$0xff]
      %v9182 = vld [vmem:[%s9161 + $0xa0] sm:$0xff]
      %v9183 = vld [vmem:[%s9161 + $0xa8] sm:$0xff]
      %v9184 = vld [vmem:[%s9161 + $0xb0] sm:$0xff]
      %v9185 = vld [vmem:[%s9161 + $0xb8] sm:$0xff]
      %9186 = vrot.lane.b32.xlu0 %v8064, 125
      %v9187 = vpop.permute.xlu0 %9186
      %9188 = vrot.lane.b32.xlu0 %v8065, 125
      %v9189 = vpop.permute.xlu0 %9188
      %9190 = vrot.lane.b32.xlu0 %v8066, 125
      %v9191 = vpop.permute.xlu0 %9190
      %9192 = vrot.lane.b32.xlu0 %v8067, 125
      %v9193 = vpop.permute.xlu0 %9192
      %9194 = vrot.lane.b32.xlu0 %v8068, 125
      %v9195 = vpop.permute.xlu0 %9194
      %9196 = vrot.lane.b32.xlu0 %v8069, 125
      %v9197 = vpop.permute.xlu0 %9196
      %9198 = vrot.lane.b32.xlu0 %v8070, 125
      %v9199 = vpop.permute.xlu0 %9198
      %9200 = vrot.lane.b32.xlu0 %v8071, 125
      %v9201 = vpop.permute.xlu0 %9200
      %9202 = vrot.lane.b32.xlu0 %v8072, 125
      %v9203 = vpop.permute.xlu0 %9202
      %9204 = vrot.lane.b32.xlu0 %v8073, 125
      %v9205 = vpop.permute.xlu0 %9204
      %9206 = vrot.lane.b32.xlu0 %v8074, 125
      %v9207 = vpop.permute.xlu0 %9206
      %9208 = vrot.lane.b32.xlu0 %v8075, 125
      %v9209 = vpop.permute.xlu0 %9208
      %9210 = vrot.lane.b32.xlu0 %v8076, 125
      %v9211 = vpop.permute.xlu0 %9210
      %9212 = vrot.lane.b32.xlu0 %v8077, 125
      %v9213 = vpop.permute.xlu0 %9212
      %9214 = vrot.lane.b32.xlu0 %v8078, 125
      %v9215 = vpop.permute.xlu0 %9214
      %9216 = vrot.lane.b32.xlu0 %v8079, 125
      %v9217 = vpop.permute.xlu0 %9216
      %9218 = vrot.lane.b32.xlu0 %v8080, 125
      %v9219 = vpop.permute.xlu0 %9218
      %9220 = vrot.lane.b32.xlu0 %v8081, 125
      %v9221 = vpop.permute.xlu0 %9220
      %9222 = vrot.lane.b32.xlu0 %v8082, 125
      %v9223 = vpop.permute.xlu0 %9222
      %9224 = vrot.lane.b32.xlu0 %v8083, 125
      %v9225 = vpop.permute.xlu0 %9224
      %9226 = vrot.lane.b32.xlu0 %v8084, 125
      %v9227 = vpop.permute.xlu0 %9226
      %9228 = vrot.lane.b32.xlu0 %v8085, 125
      %v9229 = vpop.permute.xlu0 %9228
      %9230 = vrot.lane.b32.xlu0 %v8086, 125
      %v9231 = vpop.permute.xlu0 %9230
      %9232 = vrot.lane.b32.xlu0 %v8087, 125
      %v9233 = vpop.permute.xlu0 %9232
      %9234 = vrot.lane.b32.xlu0 %v8088, 125
      %v9235 = vpop.permute.xlu0 %9234
      %9236 = vrot.lane.b32.xlu0 %v8089, 125
      %v9237 = vpop.permute.xlu0 %9236
      %9238 = vrot.lane.b32.xlu0 %v8090, 125
      %v9239 = vpop.permute.xlu0 %9238
      %9240 = vrot.lane.b32.xlu0 %v8091, 125
      %v9241 = vpop.permute.xlu0 %9240
      %9242 = vrot.lane.b32.xlu0 %v8092, 125
      %v9243 = vpop.permute.xlu0 %9242
      %9244 = vrot.lane.b32.xlu0 %v8093, 125
      %v9245 = vpop.permute.xlu0 %9244
      %9246 = vrot.lane.b32.xlu0 %v8094, 125
      %v9247 = vpop.permute.xlu0 %9246
      %9248 = vrot.lane.b32.xlu0 %v8095, 125
      %v9249 = vpop.permute.xlu0 %9248
      %9250 = vrot.lane.b32.xlu0 %v8096, 125
      %v9251 = vpop.permute.xlu0 %9250
      %9252 = vrot.lane.b32.xlu0 %v8097, 125
      %v9253 = vpop.permute.xlu0 %9252
      %9254 = vrot.lane.b32.xlu0 %v8098, 125
      %v9255 = vpop.permute.xlu0 %9254
      %9256 = vrot.lane.b32.xlu0 %v8099, 125
      %v9257 = vpop.permute.xlu0 %9256
      %v9295 = vsel %vm8132, %v9164, 0
      %v9298 = vsel %vm8132, %v9167, 0
      %v9301 = vsel %vm8132, %v9170, 0
      %v9304 = vsel %vm8132, %v9173, 0
      %v9307 = vsel %vm8132, %v9176, 0
      %v9310 = vsel %vm8132, %v9179, 0
      %v9313 = vsel %vm8132, %v9182, 0
      %v9316 = vsel %vm8132, %v9185, 0
      %9318 = vmatprep.subr.mxu0 0.0
      %9319 = vmatpush1.msra.mxu0 %v9217
      %9320 = vmatprep.subr.mxu0 0.0
      %9321 = vmatpush1.msra.mxu0 %v9215
      %9322 = vmatprep.subr.mxu0 0.0
      %9323 = vmatpush1.msra.mxu0 %v9213
      %9324 = vmatprep.subr.mxu0 0.0
      %9325 = vmatpush1.msra.mxu0 %v9211
      %9326 = vmatprep.subr.mxu0 0.0
      %9327 = vmatpush1.msra.mxu0 %v9209
      %9328 = vmatprep.subr.mxu0 0.0
      %9329 = vmatpush1.msra.mxu0 %v9207
      %9330 = vmatprep.subr.mxu0 0.0
      %9331 = vmatpush1.msra.mxu0 %v9205
      %9332 = vmatprep.subr.mxu0 0.0
      %9333 = vmatpush1.msra.mxu0 %v9203
      %9334 = vmatprep.subr.mxu0 0.0
      %9335 = vmatpush1.msra.mxu0 %v9201
      %9336 = vmatprep.subr.mxu0 0.0
      %9337 = vmatpush1.msra.mxu0 %v9199
      %9338 = vmatprep.subr.mxu0 0.0
      %9339 = vmatpush1.msra.mxu0 %v9197
      %9340 = vmatprep.subr.mxu0 0.0
      %9341 = vmatpush1.msra.mxu0 %v9195
      %9342 = vmatprep.subr.mxu0 0.0
      %9343 = vmatpush1.msra.mxu0 %v9193
      %9344 = vmatprep.subr.mxu0 0.0
      %9345 = vmatpush1.msra.mxu0 %v9191
      %9346 = vmatprep.subr.mxu0 0.0
      %9347 = vmatpush1.msra.mxu0 %v9189
      %9348 = vmatprep.subr.mxu0 0.0
      %9349 = vmatpush1.msra.mxu0 %v9187
      %9350 = vmatprep.subr.mxu0 0.0
      %9351 = vmatpush2.msra.mxu0 %v9249
      %9352 = vmatprep.subr.mxu0 0.0
      %9353 = vmatpush2.msra.mxu0 %v9247
      %9354 = vmatprep.subr.mxu0 0.0
      %9355 = vmatpush2.msra.mxu0 %v9245
      %9356 = vmatprep.subr.mxu0 0.0
      %9357 = vmatpush2.msra.mxu0 %v9243
      %9358 = vmatprep.subr.mxu0 0.0
      %9359 = vmatpush2.msra.mxu0 %v9241
      %9360 = vmatprep.subr.mxu0 0.0
      %9361 = vmatpush2.msra.mxu0 %v9239
      %9362 = vmatprep.subr.mxu0 0.0
      %9363 = vmatpush2.msra.mxu0 %v9237
      %9364 = vmatprep.subr.mxu0 0.0
      %9365 = vmatpush2.msra.mxu0 %v9235
      %9366 = vmatprep.subr.mxu0 0.0
      %9367 = vmatpush2.msra.mxu0 %v9233
      %9368 = vmatprep.subr.mxu0 0.0
      %9369 = vmatpush2.msra.mxu0 %v9231
      %9370 = vmatprep.subr.mxu0 0.0
      %9371 = vmatpush2.msra.mxu0 %v9229
      %9372 = vmatprep.subr.mxu0 0.0
      %9373 = vmatpush2.msra.mxu0 %v9227
      %9374 = vmatprep.subr.mxu0 0.0
      %9375 = vmatpush2.msra.mxu0 %v9225
      %9376 = vmatprep.subr.mxu0 0.0
      %9377 = vmatpush2.msra.mxu0 %v9223
      %9378 = vmatprep.subr.mxu0 0.0
      %9379 = vmatpush2.msra.mxu0 %v9221
      %9380 = vmatprep.subr.mxu0 0.0
      %9381 = vmatpush2.msra.mxu0 %v9219
      %9382 = vmatprep.mubr.f32.mxu0 %v9163
      %9383 = vmatmul.mubr.f32.gmra.mxu0 %v9162
      %v9384 = vpop.f32.mrf.mxu0
      %v9385 = vadd.f32 0.0, %v9384
      %v9386 = vpop.f32.mrf.mxu0
      %9387 = vmatprep.mubr.f32.mxu0 %v9166
      %9388 = vmatmul.mubr.f32.gmra.mxu0 %v9165
      %v9389 = vpop.f32.mrf.mxu0
      %v9390 = vadd.f32 0.0, %v9389
      %v9391 = vpop.f32.mrf.mxu0
      %9392 = vmatprep.mubr.f32.mxu0 %v9169
      %9393 = vmatmul.mubr.f32.gmra.mxu0 %v9168
      %v9394 = vpop.f32.mrf.mxu0
      %v9395 = vadd.f32 0.0, %v9394
      %v9396 = vpop.f32.mrf.mxu0
      %9397 = vmatprep.mubr.f32.mxu0 %v9172
      %9398 = vmatmul.mubr.f32.gmra.mxu0 %v9171
      %v9399 = vpop.f32.mrf.mxu0
      %v9400 = vadd.f32 0.0, %v9399
      %v9401 = vpop.f32.mrf.mxu0
      %9402 = vmatprep.mubr.f32.mxu0 %v9175
      %9403 = vmatmul.mubr.f32.gmra.mxu0 %v9174
      %v9404 = vpop.f32.mrf.mxu0
      %v9405 = vadd.f32 0.0, %v9404
      %v9406 = vpop.f32.mrf.mxu0
      %9407 = vmatprep.mubr.f32.mxu0 %v9178
      %9408 = vmatmul.mubr.f32.gmra.mxu0 %v9177
      %v9409 = vpop.f32.mrf.mxu0
      %v9410 = vadd.f32 0.0, %v9409
      %v9411 = vpop.f32.mrf.mxu0
      %9412 = vmatprep.mubr.f32.mxu0 %v9181
      %9413 = vmatmul.mubr.f32.gmra.mxu0 %v9180
      %v9414 = vpop.f32.mrf.mxu0
      %v9415 = vadd.f32 0.0, %v9414
      %v9416 = vpop.f32.mrf.mxu0
      %9417 = vmatprep.mubr.f32.mxu0 %v9184
      %9418 = vmatmul.mubr.f32.gmra.mxu0 %v9183
      %v9419 = vpop.f32.mrf.mxu0
      %v9420 = vadd.f32 0.0, %v9419
      %v9421 = vpop.f32.mrf.mxu0
      %9422 = vdwg.mxu0
      %9423 = vmatprep.subr.mxu0 0.0
      %9424 = vmatpush1.msra.mxu0 0.0
      %9425 = vmatprep.subr.mxu0 0.0
      %9426 = vmatpush1.msra.mxu0 0.0
      %9427 = vmatprep.subr.mxu0 0.0
      %9428 = vmatpush1.msra.mxu0 0.0
      %9429 = vmatprep.subr.mxu0 0.0
      %9430 = vmatpush1.msra.mxu0 0.0
      %9431 = vmatprep.subr.mxu0 0.0
      %9432 = vmatpush1.msra.mxu0 0.0
      %9433 = vmatprep.subr.mxu0 0.0
      %9434 = vmatpush1.msra.mxu0 0.0
      %9435 = vmatprep.subr.mxu0 0.0
      %9436 = vmatpush1.msra.mxu0 0.0
      %9437 = vmatprep.subr.mxu0 0.0
      %9438 = vmatpush1.msra.mxu0 0.0
      %9439 = vmatprep.subr.mxu0 0.0
      %9440 = vmatpush1.msra.mxu0 0.0
      %9441 = vmatprep.subr.mxu0 0.0
      %9442 = vmatpush1.msra.mxu0 0.0
      %9443 = vmatprep.subr.mxu0 0.0
      %9444 = vmatpush1.msra.mxu0 0.0
      %9445 = vmatprep.subr.mxu0 0.0
      %9446 = vmatpush1.msra.mxu0 0.0
      %9447 = vmatprep.subr.mxu0 0.0
      %9448 = vmatpush1.msra.mxu0 %v9257
      %9449 = vmatprep.subr.mxu0 0.0
      %9450 = vmatpush1.msra.mxu0 %v9255
      %9451 = vmatprep.subr.mxu0 0.0
      %9452 = vmatpush1.msra.mxu0 %v9253
      %9453 = vmatprep.subr.mxu0 0.0
      %9454 = vmatpush1.msra.mxu0 %v9251
      %9455 = vmatprep.subr.mxu0 0.0
      %9456 = vmatpush2.msra.mxu0 0.0
      %9457 = vmatprep.subr.mxu0 0.0
      %9458 = vmatpush2.msra.mxu0 0.0
      %9459 = vmatprep.subr.mxu0 0.0
      %9460 = vmatpush2.msra.mxu0 0.0
      %9461 = vmatprep.subr.mxu0 0.0
      %9462 = vmatpush2.msra.mxu0 0.0
      %9463 = vmatprep.subr.mxu0 0.0
      %9464 = vmatpush2.msra.mxu0 0.0
      %9465 = vmatprep.subr.mxu0 0.0
      %9466 = vmatpush2.msra.mxu0 0.0
      %9467 = vmatprep.subr.mxu0 0.0
      %9468 = vmatpush2.msra.mxu0 0.0
      %9469 = vmatprep.subr.mxu0 0.0
      %9470 = vmatpush2.msra.mxu0 0.0
      %9471 = vmatprep.subr.mxu0 0.0
      %9472 = vmatpush2.msra.mxu0 0.0
      %9473 = vmatprep.subr.mxu0 0.0
      %9474 = vmatpush2.msra.mxu0 0.0
      %9475 = vmatprep.subr.mxu0 0.0
      %9476 = vmatpush2.msra.mxu0 0.0
      %9477 = vmatprep.subr.mxu0 0.0
      %9478 = vmatpush2.msra.mxu0 0.0
      %9479 = vmatprep.subr.mxu0 0.0
      %9480 = vmatpush2.msra.mxu0 0.0
      %9481 = vmatprep.subr.mxu0 0.0
      %9482 = vmatpush2.msra.mxu0 0.0
      %9483 = vmatprep.subr.mxu0 0.0
      %9484 = vmatpush2.msra.mxu0 0.0
      %9485 = vmatprep.subr.mxu0 0.0
      %9486 = vmatpush2.msra.mxu0 0.0
      %9487 = vmatprep.mubr.f32.mxu0 0.0
      %9488 = vmatmul.mubr.f32.gmra.mxu0 %v9295
      %v9489 = vpop.f32.mrf.mxu0
      %v9490 = vadd.f32 %v9385, %v9489
      %v9491 = vpop.f32.mrf.mxu0
      %9492 = vmatprep.mubr.f32.mxu0 0.0
      %9493 = vmatmul.mubr.f32.gmra.mxu0 %v9298
      %v9494 = vpop.f32.mrf.mxu0
      %v9495 = vadd.f32 %v9390, %v9494
      %v9496 = vpop.f32.mrf.mxu0
      %9497 = vmatprep.mubr.f32.mxu0 0.0
      %9498 = vmatmul.mubr.f32.gmra.mxu0 %v9301
      %v9499 = vpop.f32.mrf.mxu0
      %v9500 = vadd.f32 %v9395, %v9499
      %v9501 = vpop.f32.mrf.mxu0
      %9502 = vmatprep.mubr.f32.mxu0 0.0
      %9503 = vmatmul.mubr.f32.gmra.mxu0 %v9304
      %v9504 = vpop.f32.mrf.mxu0
      %v9505 = vadd.f32 %v9400, %v9504
      %v9506 = vpop.f32.mrf.mxu0
      %9507 = vmatprep.mubr.f32.mxu0 0.0
      %9508 = vmatmul.mubr.f32.gmra.mxu0 %v9307
      %v9509 = vpop.f32.mrf.mxu0
      %v9510 = vadd.f32 %v9405, %v9509
      %v9511 = vpop.f32.mrf.mxu0
      %9512 = vmatprep.mubr.f32.mxu0 0.0
      %9513 = vmatmul.mubr.f32.gmra.mxu0 %v9310
      %v9514 = vpop.f32.mrf.mxu0
      %v9515 = vadd.f32 %v9410, %v9514
      %v9516 = vpop.f32.mrf.mxu0
      %9517 = vmatprep.mubr.f32.mxu0 0.0
      %9518 = vmatmul.mubr.f32.gmra.mxu0 %v9313
      %v9519 = vpop.f32.mrf.mxu0
      %v9520 = vadd.f32 %v9415, %v9519
      %v9521 = vpop.f32.mrf.mxu0
      %9522 = vmatprep.mubr.f32.mxu0 0.0
      %9523 = vmatmul.mubr.f32.gmra.mxu0 %v9316
      %v9524 = vpop.f32.mrf.mxu0
      %v9525 = vadd.f32 %v9420, %v9524
      %v9526 = vpop.f32.mrf.mxu0
      %9527 = vdwg.mxu0
      %v9528 = vadd.f32 %v9153, %v9490
      %v9529 = vadd.f32 %v9154, %v9495
      %v9530 = vadd.f32 %v9155, %v9500
      %v9531 = vadd.f32 %v9156, %v9505
      %v9532 = vadd.f32 %v9157, %v9510
      %v9533 = vadd.f32 %v9158, %v9515
      %v9534 = vadd.f32 %v9159, %v9520
      %v9535 = vadd.f32 %v9160, %v9525
      %s9536 = scalar_lea.vmem %s5, 768
      %v9537 = vld [vmem:[%s9536] sm:$0xff]
      %v9538 = vld [vmem:[%s9536 + $0x8] sm:$0xff]
      %v9539 = vld [vmem:[%s9536 + $0x10] sm:$0xff]
      %v9540 = vld [vmem:[%s9536 + $0x18] sm:$0xff]
      %v9541 = vld [vmem:[%s9536 + $0x20] sm:$0xff]
      %v9542 = vld [vmem:[%s9536 + $0x28] sm:$0xff]
      %v9543 = vld [vmem:[%s9536 + $0x30] sm:$0xff]
      %v9544 = vld [vmem:[%s9536 + $0x38] sm:$0xff]
      %v9545 = vld [vmem:[%s9536 + $0x40] sm:$0xff]
      %v9546 = vld [vmem:[%s9536 + $0x48] sm:$0xff]
      %v9547 = vld [vmem:[%s9536 + $0x50] sm:$0xff]
      %v9548 = vld [vmem:[%s9536 + $0x58] sm:$0xff]
      %v9549 = vld [vmem:[%s9536 + $0x60] sm:$0xff]
      %v9550 = vld [vmem:[%s9536 + $0x68] sm:$0xff]
      %v9551 = vld [vmem:[%s9536 + $0x70] sm:$0xff]
      %v9552 = vld [vmem:[%s9536 + $0x78] sm:$0xff]
      %v9553 = vld [vmem:[%s9536 + $0x80] sm:$0xff]
      %v9554 = vld [vmem:[%s9536 + $0x88] sm:$0xff]
      %v9555 = vld [vmem:[%s9536 + $0x90] sm:$0xff]
      %v9556 = vld [vmem:[%s9536 + $0x98] sm:$0xff]
      %v9557 = vld [vmem:[%s9536 + $0xa0] sm:$0xff]
      %v9558 = vld [vmem:[%s9536 + $0xa8] sm:$0xff]
      %v9559 = vld [vmem:[%s9536 + $0xb0] sm:$0xff]
      %v9560 = vld [vmem:[%s9536 + $0xb8] sm:$0xff]
      %9561 = vrot.lane.b32.xlu0 %v8064, 124
      %v9562 = vpop.permute.xlu0 %9561
      %9563 = vrot.lane.b32.xlu0 %v8065, 124
      %v9564 = vpop.permute.xlu0 %9563
      %9565 = vrot.lane.b32.xlu0 %v8066, 124
      %v9566 = vpop.permute.xlu0 %9565
      %9567 = vrot.lane.b32.xlu0 %v8067, 124
      %v9568 = vpop.permute.xlu0 %9567
      %9569 = vrot.lane.b32.xlu0 %v8068, 124
      %v9570 = vpop.permute.xlu0 %9569
      %9571 = vrot.lane.b32.xlu0 %v8069, 124
      %v9572 = vpop.permute.xlu0 %9571
      %9573 = vrot.lane.b32.xlu0 %v8070, 124
      %v9574 = vpop.permute.xlu0 %9573
      %9575 = vrot.lane.b32.xlu0 %v8071, 124
      %v9576 = vpop.permute.xlu0 %9575
      %9577 = vrot.lane.b32.xlu0 %v8072, 124
      %v9578 = vpop.permute.xlu0 %9577
      %9579 = vrot.lane.b32.xlu0 %v8073, 124
      %v9580 = vpop.permute.xlu0 %9579
      %9581 = vrot.lane.b32.xlu0 %v8074, 124
      %v9582 = vpop.permute.xlu0 %9581
      %9583 = vrot.lane.b32.xlu0 %v8075, 124
      %v9584 = vpop.permute.xlu0 %9583
      %9585 = vrot.lane.b32.xlu0 %v8076, 124
      %v9586 = vpop.permute.xlu0 %9585
      %9587 = vrot.lane.b32.xlu0 %v8077, 124
      %v9588 = vpop.permute.xlu0 %9587
      %9589 = vrot.lane.b32.xlu0 %v8078, 124
      %v9590 = vpop.permute.xlu0 %9589
      %9591 = vrot.lane.b32.xlu0 %v8079, 124
      %v9592 = vpop.permute.xlu0 %9591
      %9593 = vrot.lane.b32.xlu0 %v8080, 124
      %v9594 = vpop.permute.xlu0 %9593
      %9595 = vrot.lane.b32.xlu0 %v8081, 124
      %v9596 = vpop.permute.xlu0 %9595
      %9597 = vrot.lane.b32.xlu0 %v8082, 124
      %v9598 = vpop.permute.xlu0 %9597
      %9599 = vrot.lane.b32.xlu0 %v8083, 124
      %v9600 = vpop.permute.xlu0 %9599
      %9601 = vrot.lane.b32.xlu0 %v8084, 124
      %v9602 = vpop.permute.xlu0 %9601
      %9603 = vrot.lane.b32.xlu0 %v8085, 124
      %v9604 = vpop.permute.xlu0 %9603
      %9605 = vrot.lane.b32.xlu0 %v8086, 124
      %v9606 = vpop.permute.xlu0 %9605
      %9607 = vrot.lane.b32.xlu0 %v8087, 124
      %v9608 = vpop.permute.xlu0 %9607
      %9609 = vrot.lane.b32.xlu0 %v8088, 124
      %v9610 = vpop.permute.xlu0 %9609
      %9611 = vrot.lane.b32.xlu0 %v8089, 124
      %v9612 = vpop.permute.xlu0 %9611
      %9613 = vrot.lane.b32.xlu0 %v8090, 124
      %v9614 = vpop.permute.xlu0 %9613
      %9615 = vrot.lane.b32.xlu0 %v8091, 124
      %v9616 = vpop.permute.xlu0 %9615
      %9617 = vrot.lane.b32.xlu0 %v8092, 124
      %v9618 = vpop.permute.xlu0 %9617
      %9619 = vrot.lane.b32.xlu0 %v8093, 124
      %v9620 = vpop.permute.xlu0 %9619
      %9621 = vrot.lane.b32.xlu0 %v8094, 124
      %v9622 = vpop.permute.xlu0 %9621
      %9623 = vrot.lane.b32.xlu0 %v8095, 124
      %v9624 = vpop.permute.xlu0 %9623
      %9625 = vrot.lane.b32.xlu0 %v8096, 124
      %v9626 = vpop.permute.xlu0 %9625
      %9627 = vrot.lane.b32.xlu0 %v8097, 124
      %v9628 = vpop.permute.xlu0 %9627
      %9629 = vrot.lane.b32.xlu0 %v8098, 124
      %v9630 = vpop.permute.xlu0 %9629
      %9631 = vrot.lane.b32.xlu0 %v8099, 124
      %v9632 = vpop.permute.xlu0 %9631
      %v9670 = vsel %vm8132, %v9539, 0
      %v9673 = vsel %vm8132, %v9542, 0
      %v9676 = vsel %vm8132, %v9545, 0
      %v9679 = vsel %vm8132, %v9548, 0
      %v9682 = vsel %vm8132, %v9551, 0
      %v9685 = vsel %vm8132, %v9554, 0
      %v9688 = vsel %vm8132, %v9557, 0
      %v9691 = vsel %vm8132, %v9560, 0
      %9693 = vmatprep.subr.mxu0 0.0
      %9694 = vmatpush1.msra.mxu0 %v9592
      %9695 = vmatprep.subr.mxu0 0.0
      %9696 = vmatpush1.msra.mxu0 %v9590
      %9697 = vmatprep.subr.mxu0 0.0
      %9698 = vmatpush1.msra.mxu0 %v9588
      %9699 = vmatprep.subr.mxu0 0.0
      %9700 = vmatpush1.msra.mxu0 %v9586
      %9701 = vmatprep.subr.mxu0 0.0
      %9702 = vmatpush1.msra.mxu0 %v9584
      %9703 = vmatprep.subr.mxu0 0.0
      %9704 = vmatpush1.msra.mxu0 %v9582
      %9705 = vmatprep.subr.mxu0 0.0
      %9706 = vmatpush1.msra.mxu0 %v9580
      %9707 = vmatprep.subr.mxu0 0.0
      %9708 = vmatpush1.msra.mxu0 %v9578
      %9709 = vmatprep.subr.mxu0 0.0
      %9710 = vmatpush1.msra.mxu0 %v9576
      %9711 = vmatprep.subr.mxu0 0.0
      %9712 = vmatpush1.msra.mxu0 %v9574
      %9713 = vmatprep.subr.mxu0 0.0
      %9714 = vmatpush1.msra.mxu0 %v9572
      %9715 = vmatprep.subr.mxu0 0.0
      %9716 = vmatpush1.msra.mxu0 %v9570
      %9717 = vmatprep.subr.mxu0 0.0
      %9718 = vmatpush1.msra.mxu0 %v9568
      %9719 = vmatprep.subr.mxu0 0.0
      %9720 = vmatpush1.msra.mxu0 %v9566
      %9721 = vmatprep.subr.mxu0 0.0
      %9722 = vmatpush1.msra.mxu0 %v9564
      %9723 = vmatprep.subr.mxu0 0.0
      %9724 = vmatpush1.msra.mxu0 %v9562
      %9725 = vmatprep.subr.mxu0 0.0
      %9726 = vmatpush2.msra.mxu0 %v9624
      %9727 = vmatprep.subr.mxu0 0.0
      %9728 = vmatpush2.msra.mxu0 %v9622
      %9729 = vmatprep.subr.mxu0 0.0
      %9730 = vmatpush2.msra.mxu0 %v9620
      %9731 = vmatprep.subr.mxu0 0.0
      %9732 = vmatpush2.msra.mxu0 %v9618
      %9733 = vmatprep.subr.mxu0 0.0
      %9734 = vmatpush2.msra.mxu0 %v9616
      %9735 = vmatprep.subr.mxu0 0.0
      %9736 = vmatpush2.msra.mxu0 %v9614
      %9737 = vmatprep.subr.mxu0 0.0
      %9738 = vmatpush2.msra.mxu0 %v9612
      %9739 = vmatprep.subr.mxu0 0.0
      %9740 = vmatpush2.msra.mxu0 %v9610
      %9741 = vmatprep.subr.mxu0 0.0
      %9742 = vmatpush2.msra.mxu0 %v9608
      %9743 = vmatprep.subr.mxu0 0.0
      %9744 = vmatpush2.msra.mxu0 %v9606
      %9745 = vmatprep.subr.mxu0 0.0
      %9746 = vmatpush2.msra.mxu0 %v9604
      %9747 = vmatprep.subr.mxu0 0.0
      %9748 = vmatpush2.msra.mxu0 %v9602
      %9749 = vmatprep.subr.mxu0 0.0
      %9750 = vmatpush2.msra.mxu0 %v9600
      %9751 = vmatprep.subr.mxu0 0.0
      %9752 = vmatpush2.msra.mxu0 %v9598
      %9753 = vmatprep.subr.mxu0 0.0
      %9754 = vmatpush2.msra.mxu0 %v9596
      %9755 = vmatprep.subr.mxu0 0.0
      %9756 = vmatpush2.msra.mxu0 %v9594
      %9757 = vmatprep.mubr.f32.mxu0 %v9538
      %9758 = vmatmul.mubr.f32.gmra.mxu0 %v9537
      %v9759 = vpop.f32.mrf.mxu0
      %v9760 = vadd.f32 0.0, %v9759
      %v9761 = vpop.f32.mrf.mxu0
      %9762 = vmatprep.mubr.f32.mxu0 %v9541
      %9763 = vmatmul.mubr.f32.gmra.mxu0 %v9540
      %v9764 = vpop.f32.mrf.mxu0
      %v9765 = vadd.f32 0.0, %v9764
      %v9766 = vpop.f32.mrf.mxu0
      %9767 = vmatprep.mubr.f32.mxu0 %v9544
      %9768 = vmatmul.mubr.f32.gmra.mxu0 %v9543
      %v9769 = vpop.f32.mrf.mxu0
      %v9770 = vadd.f32 0.0, %v9769
      %v9771 = vpop.f32.mrf.mxu0
      %9772 = vmatprep.mubr.f32.mxu0 %v9547
      %9773 = vmatmul.mubr.f32.gmra.mxu0 %v9546
      %v9774 = vpop.f32.mrf.mxu0
      %v9775 = vadd.f32 0.0, %v9774
      %v9776 = vpop.f32.mrf.mxu0
      %9777 = vmatprep.mubr.f32.mxu0 %v9550
      %9778 = vmatmul.mubr.f32.gmra.mxu0 %v9549
      %v9779 = vpop.f32.mrf.mxu0
      %v9780 = vadd.f32 0.0, %v9779
      %v9781 = vpop.f32.mrf.mxu0
      %9782 = vmatprep.mubr.f32.mxu0 %v9553
      %9783 = vmatmul.mubr.f32.gmra.mxu0 %v9552
      %v9784 = vpop.f32.mrf.mxu0
      %v9785 = vadd.f32 0.0, %v9784
      %v9786 = vpop.f32.mrf.mxu0
      %9787 = vmatprep.mubr.f32.mxu0 %v9556
      %9788 = vmatmul.mubr.f32.gmra.mxu0 %v9555
      %v9789 = vpop.f32.mrf.mxu0
      %v9790 = vadd.f32 0.0, %v9789
      %v9791 = vpop.f32.mrf.mxu0
      %9792 = vmatprep.mubr.f32.mxu0 %v9559
      %9793 = vmatmul.mubr.f32.gmra.mxu0 %v9558
      %v9794 = vpop.f32.mrf.mxu0
      %v9795 = vadd.f32 0.0, %v9794
      %v9796 = vpop.f32.mrf.mxu0
      %9797 = vdwg.mxu0
      %9798 = vmatprep.subr.mxu0 0.0
      %9799 = vmatpush1.msra.mxu0 0.0
      %9800 = vmatprep.subr.mxu0 0.0
      %9801 = vmatpush1.msra.mxu0 0.0
      %9802 = vmatprep.subr.mxu0 0.0
      %9803 = vmatpush1.msra.mxu0 0.0
      %9804 = vmatprep.subr.mxu0 0.0
      %9805 = vmatpush1.msra.mxu0 0.0
      %9806 = vmatprep.subr.mxu0 0.0
      %9807 = vmatpush1.msra.mxu0 0.0
      %9808 = vmatprep.subr.mxu0 0.0
      %9809 = vmatpush1.msra.mxu0 0.0
      %9810 = vmatprep.subr.mxu0 0.0
      %9811 = vmatpush1.msra.mxu0 0.0
      %9812 = vmatprep.subr.mxu0 0.0
      %9813 = vmatpush1.msra.mxu0 0.0
      %9814 = vmatprep.subr.mxu0 0.0
      %9815 = vmatpush1.msra.mxu0 0.0
      %9816 = vmatprep.subr.mxu0 0.0
      %9817 = vmatpush1.msra.mxu0 0.0
      %9818 = vmatprep.subr.mxu0 0.0
      %9819 = vmatpush1.msra.mxu0 0.0
      %9820 = vmatprep.subr.mxu0 0.0
      %9821 = vmatpush1.msra.mxu0 0.0
      %9822 = vmatprep.subr.mxu0 0.0
      %9823 = vmatpush1.msra.mxu0 %v9632
      %9824 = vmatprep.subr.mxu0 0.0
      %9825 = vmatpush1.msra.mxu0 %v9630
      %9826 = vmatprep.subr.mxu0 0.0
      %9827 = vmatpush1.msra.mxu0 %v9628
      %9828 = vmatprep.subr.mxu0 0.0
      %9829 = vmatpush1.msra.mxu0 %v9626
      %9830 = vmatprep.subr.mxu0 0.0
      %9831 = vmatpush2.msra.mxu0 0.0
      %9832 = vmatprep.subr.mxu0 0.0
      %9833 = vmatpush2.msra.mxu0 0.0
      %9834 = vmatprep.subr.mxu0 0.0
      %9835 = vmatpush2.msra.mxu0 0.0
      %9836 = vmatprep.subr.mxu0 0.0
      %9837 = vmatpush2.msra.mxu0 0.0
      %9838 = vmatprep.subr.mxu0 0.0
      %9839 = vmatpush2.msra.mxu0 0.0
      %9840 = vmatprep.subr.mxu0 0.0
      %9841 = vmatpush2.msra.mxu0 0.0
      %9842 = vmatprep.subr.mxu0 0.0
      %9843 = vmatpush2.msra.mxu0 0.0
      %9844 = vmatprep.subr.mxu0 0.0
      %9845 = vmatpush2.msra.mxu0 0.0
      %9846 = vmatprep.subr.mxu0 0.0
      %9847 = vmatpush2.msra.mxu0 0.0
      %9848 = vmatprep.subr.mxu0 0.0
      %9849 = vmatpush2.msra.mxu0 0.0
      %9850 = vmatprep.subr.mxu0 0.0
      %9851 = vmatpush2.msra.mxu0 0.0
      %9852 = vmatprep.subr.mxu0 0.0
      %9853 = vmatpush2.msra.mxu0 0.0
      %9854 = vmatprep.subr.mxu0 0.0
      %9855 = vmatpush2.msra.mxu0 0.0
      %9856 = vmatprep.subr.mxu0 0.0
      %9857 = vmatpush2.msra.mxu0 0.0
      %9858 = vmatprep.subr.mxu0 0.0
      %9859 = vmatpush2.msra.mxu0 0.0
      %9860 = vmatprep.subr.mxu0 0.0
      %9861 = vmatpush2.msra.mxu0 0.0
      %9862 = vmatprep.mubr.f32.mxu0 0.0
      %9863 = vmatmul.mubr.f32.gmra.mxu0 %v9670
      %v9864 = vpop.f32.mrf.mxu0
      %v9865 = vadd.f32 %v9760, %v9864
      %v9866 = vpop.f32.mrf.mxu0
      %9867 = vmatprep.mubr.f32.mxu0 0.0
      %9868 = vmatmul.mubr.f32.gmra.mxu0 %v9673
      %v9869 = vpop.f32.mrf.mxu0
      %v9870 = vadd.f32 %v9765, %v9869
      %v9871 = vpop.f32.mrf.mxu0
      %9872 = vmatprep.mubr.f32.mxu0 0.0
      %9873 = vmatmul.mubr.f32.gmra.mxu0 %v9676
      %v9874 = vpop.f32.mrf.mxu0
      %v9875 = vadd.f32 %v9770, %v9874
      %v9876 = vpop.f32.mrf.mxu0
      %9877 = vmatprep.mubr.f32.mxu0 0.0
      %9878 = vmatmul.mubr.f32.gmra.mxu0 %v9679
      %v9879 = vpop.f32.mrf.mxu0
      %v9880 = vadd.f32 %v9775, %v9879
      %v9881 = vpop.f32.mrf.mxu0
      %9882 = vmatprep.mubr.f32.mxu0 0.0
      %9883 = vmatmul.mubr.f32.gmra.mxu0 %v9682
      %v9884 = vpop.f32.mrf.mxu0
      %v9885 = vadd.f32 %v9780, %v9884
      %v9886 = vpop.f32.mrf.mxu0
      %9887 = vmatprep.mubr.f32.mxu0 0.0
      %9888 = vmatmul.mubr.f32.gmra.mxu0 %v9685
      %v9889 = vpop.f32.mrf.mxu0
      %v9890 = vadd.f32 %v9785, %v9889
      %v9891 = vpop.f32.mrf.mxu0
      %9892 = vmatprep.mubr.f32.mxu0 0.0
      %9893 = vmatmul.mubr.f32.gmra.mxu0 %v9688
      %v9894 = vpop.f32.mrf.mxu0
      %v9895 = vadd.f32 %v9790, %v9894
      %v9896 = vpop.f32.mrf.mxu0
      %9897 = vmatprep.mubr.f32.mxu0 0.0
      %9898 = vmatmul.mubr.f32.gmra.mxu0 %v9691
      %v9899 = vpop.f32.mrf.mxu0
      %v9900 = vadd.f32 %v9795, %v9899
      %v9901 = vpop.f32.mrf.mxu0
      %9902 = vdwg.mxu0
      %v9903 = vadd.f32 %v9528, %v9865
      %v9904 = vadd.f32 %v9529, %v9870
      %v9905 = vadd.f32 %v9530, %v9875
      %v9906 = vadd.f32 %v9531, %v9880
      %v9907 = vadd.f32 %v9532, %v9885
      %v9908 = vadd.f32 %v9533, %v9890
      %v9909 = vadd.f32 %v9534, %v9895
      %v9910 = vadd.f32 %v9535, %v9900
      %v9911 = vmax.f32 %v9903, 0.0
      %v9912 = vmax.f32 %v9904, 0.0
      %v9913 = vmax.f32 %v9905, 0.0
      %v9914 = vmax.f32 %v9906, 0.0
      %v9915 = vmax.f32 %v9907, 0.0
      %v9916 = vmax.f32 %v9908, 0.0
      %v9917 = vmax.f32 %v9909, 0.0
      %v9918 = vmax.f32 %v9910, 0.0
      %v9919 = vld [vmem:[%s7] sm:$0xff]
      %v9920 = vld [vmem:[%s7 + $0x8] sm:$0xff]
      %v9921 = vld [vmem:[%s8] sm:$0xff]
      %v9922 = vld [vmem:[%s8 + $0x8] sm:$0xff]
      %vm9923 = vcmask 523264
      %v9925 = vsel %vm9923, %v9919, 0
      %v9928 = vsel %vm9923, %v9920, 0
      %9930 = vmatprep.subr.mxu0 0.0
      %9931 = vmatpush1.msra.mxu0 0.0
      %9932 = vmatprep.subr.mxu0 0.0
      %9933 = vmatpush1.msra.mxu0 0.0
      %9934 = vmatprep.subr.mxu0 0.0
      %9935 = vmatpush1.msra.mxu0 0.0
      %9936 = vmatprep.subr.mxu0 0.0
      %9937 = vmatpush1.msra.mxu0 0.0
      %9938 = vmatprep.subr.mxu0 0.0
      %9939 = vmatpush1.msra.mxu0 0.0
      %9940 = vmatprep.subr.mxu0 0.0
      %9941 = vmatpush1.msra.mxu0 0.0
      %9942 = vmatprep.subr.mxu0 0.0
      %9943 = vmatpush1.msra.mxu0 0.0
      %9944 = vmatprep.subr.mxu0 0.0
      %9945 = vmatpush1.msra.mxu0 0.0
      %9946 = vmatprep.subr.mxu0 0.0
      %9947 = vmatpush1.msra.mxu0 %v9918
      %9948 = vmatprep.subr.mxu0 0.0
      %9949 = vmatpush1.msra.mxu0 %v9917
      %9950 = vmatprep.subr.mxu0 0.0
      %9951 = vmatpush1.msra.mxu0 %v9916
      %9952 = vmatprep.subr.mxu0 0.0
      %9953 = vmatpush1.msra.mxu0 %v9915
      %9954 = vmatprep.subr.mxu0 0.0
      %9955 = vmatpush1.msra.mxu0 %v9914
      %9956 = vmatprep.subr.mxu0 0.0
      %9957 = vmatpush1.msra.mxu0 %v9913
      %9958 = vmatprep.subr.mxu0 0.0
      %9959 = vmatpush1.msra.mxu0 %v9912
      %9960 = vmatprep.subr.mxu0 0.0
      %9961 = vmatpush1.msra.mxu0 %v9911
      %9962 = vmatprep.subr.mxu0 0.0
      %9963 = vmatpush2.msra.mxu0 0.0
      %9964 = vmatprep.subr.mxu0 0.0
      %9965 = vmatpush2.msra.mxu0 0.0
      %9966 = vmatprep.subr.mxu0 0.0
      %9967 = vmatpush2.msra.mxu0 0.0
      %9968 = vmatprep.subr.mxu0 0.0
      %9969 = vmatpush2.msra.mxu0 0.0
      %9970 = vmatprep.subr.mxu0 0.0
      %9971 = vmatpush2.msra.mxu0 0.0
      %9972 = vmatprep.subr.mxu0 0.0
      %9973 = vmatpush2.msra.mxu0 0.0
      %9974 = vmatprep.subr.mxu0 0.0
      %9975 = vmatpush2.msra.mxu0 0.0
      %9976 = vmatprep.subr.mxu0 0.0
      %9977 = vmatpush2.msra.mxu0 0.0
      %9978 = vmatprep.subr.mxu0 0.0
      %9979 = vmatpush2.msra.mxu0 0.0
      %9980 = vmatprep.subr.mxu0 0.0
      %9981 = vmatpush2.msra.mxu0 0.0
      %9982 = vmatprep.subr.mxu0 0.0
      %9983 = vmatpush2.msra.mxu0 0.0
      %9984 = vmatprep.subr.mxu0 0.0
      %9985 = vmatpush2.msra.mxu0 0.0
      %9986 = vmatprep.subr.mxu0 0.0
      %9987 = vmatpush2.msra.mxu0 0.0
      %9988 = vmatprep.subr.mxu0 0.0
      %9989 = vmatpush2.msra.mxu0 0.0
      %9990 = vmatprep.subr.mxu0 0.0
      %9991 = vmatpush2.msra.mxu0 0.0
      %9992 = vmatprep.subr.mxu0 0.0
      %9993 = vmatpush2.msra.mxu0 0.0
      %9994 = vmatprep.mubr.f32.mxu0 0.0
      %9995 = vmatmul.mubr.f32.gmra.mxu0 %v9925
      %v9996 = vpop.f32.mrf.mxu0
      %v9997 = vadd.f32 %v9921, %v9996
      %v9998 = vpop.f32.mrf.mxu0
      %9999 = vmatprep.mubr.f32.mxu0 0.0
      %10000 = vmatmul.mubr.f32.gmra.mxu0 %v9928
      %v10001 = vpop.f32.mrf.mxu0
      %v10002 = vadd.f32 %v9922, %v10001
      %v10003 = vpop.f32.mrf.mxu0
      %10004 = vdwg.mxu0
      %vm10005 = vcmask 7168
      %v10006 = vsel %vm10005, %v9997, -inf
      %v10007 = vsel %vm10005, %v10002, -inf
      %v10008 = vmax.f32 %v10006, %v10007
      %v10009 = vrot.slane %v10008, 4
      %v10010 = vmax.f32 %v10008, %v10009
      %v10011 = vrot.slane %v10010, 2
      %v10012 = vmax.f32 %v10010, %v10011
      %v10013 = vrot.slane %v10012, 1
      %v10014 = vmax.f32 %v10012, %v10013
      %v10015 = vsub.f32 %v9997, %v10014
      %v10016 = vsub.f32 %v10002, %v10014
      %v10017 = vmul.f32 %v10015, 1.442695
      %v10018 = vpow.pop %v10017
      %v10019 = vmul.f32 %v10016, 1.442695
      %v10020 = vpow.pop %v10019
      %v10021 = vsel %vm10005, %v10018, 0.0
      %v10022 = vsel %vm10005, %v10020, 0.0
      %v10023 = vadd.f32 %v10021, %v10022
      %v10024 = vrot.slane %v10023, 4
      %v10025 = vadd.f32 %v10023, %v10024
      %v10026 = vrot.slane %v10025, 2
      %v10027 = vadd.f32 %v10025, %v10026
      %v10028 = vrot.slane %v10027, 1
      %v10029 = vadd.f32 %v10027, %v10028
      %v10030 = vlog2.pop %v10029
      %v10031 = vmul.f32 %v10030, 0.6931472
      %v10032 = vsub.f32 %v10015, %v10031
      %v10033 = vsub.f32 %v10016, %v10031
      %10034 = vst.msk [vmem:[%s332] sm:$0xff] %vm10005, %v10032
      %10035 = vst.msk [vmem:[%s332 + $0x8] sm:$0xff] %vm10005, %v10033
      %p10036 = scmp.lt.s32.totalorder %s20, 1
      %s10037 = scalar_select %p10036, %s20, 1
      %s10038 = smul.addr %s10037, 2
      %s10039 = smul.addr %s10038, 8
      %s10040 = scalar_lea.vmem %s9, %s10039
      // Predicated region
      $region57: #{convnet_forward.1} parent=55 // pred_check
        %p10041 = pneg %p232
      $region58: #{convnet_forward.1} parent=55 // pred_check_branch
        %10043 = sbr.rel (%p10041) target = $region60
      $region59: #{convnet_forward.1} parent=55 // pred_region
        _
      $region60: #{convnet_forward.1} parent=55 // pred_fallthru
        _
    $region56: #{convnet_forward.1} parent=5 // pred_fallthru
      _
    %p10044 = scmp.le.s32.totalorder 2, %s15
    // Predicated region
    $region61: #{convnet_forward.1} parent=5 // pred_check
      %p10045 = pneg %p10044
    $region62: #{convnet_forward.1} parent=5 // pred_check_branch
      %10047 = sbr.rel (%p10045) target = $region64
    $region63: #{convnet_forward.1} parent=5 // pred_region
      %s10048 = ssub.s32 %s15, 2
      // Predicated region
      $region65: #{convnet_forward.1} parent=63 // pred_check
        %p10049 = pneg %p238
      $region66: #{convnet_forward.1} parent=63 // pred_check_branch
        %10051 = sbr.rel (%p10049) target = $region68
      $region67: #{convnet_forward.1} parent=63 // pred_region
        %p10052 = scmp.lt.s32.totalorder %s21, 1
        %s10053 = scalar_select %p10052, %s21, 1
        %s10054 = smul.addr %s10053, 2
        %s10055 = smul.addr %s10054, 8
        %s10056 = scalar_lea.vmem %s9, %s10055
      $region68: #{convnet_forward.1} parent=63 // pred_fallthru
        _
    $region64: #{convnet_forward.1} parent=5 // pred_fallthru
      _
  $region6: #{convnet_forward.1} parent=0 // loop_footer
    %s19 = sadd.s32 1, %s15
  $region7: #{convnet_forward.1} parent=0 // loop_footer_branch
    %14 = sbr.rel target = $region3
  $region8: #{convnet_forward.1} parent=0 // loop_exit
    _

</llo_original>
